<compile_context>
chip_gen: v5e
topology: v5e:2x2
jax: 0.10.0
libtpu: 0.0.40
codegen_flags: <defaults>
</compile_context>

<pallas_src>
import functools

import jax
import jax.numpy as jnp
from jax.experimental import pallas as pl
from jax.experimental.pallas import tpu as pltpu


NUM_CLASSES = 9
LANES = 128  # FC dims are zero-padded to this lane width.


# ----------------------------------------------------------------------------
# Fused kernel: conv1+pool+bias+relu -> conv2+pool+bias+relu -> flatten -> MLP.
# Single invocation (no grid); whole batch + all weights resident in VMEM.
# ----------------------------------------------------------------------------
def fused_net_kernel(x_ref, wc1_ref, bc1_ref, wc2_ref, bc2_ref,
                     wf1_ref, bf1_ref, wf2_ref, bf2_ref, wf3_ref, bf3_ref,
                     out_ref, pad1_ref, pad2_ref, *, N, H, W):
    c_in = x_ref.shape[-1]        # 3
    c1 = wc1_ref.shape[-1]        # 6
    c2 = wc2_ref.shape[-1]        # 16

    def conv3x3_pool2_bias_relu(pad_ref, w_ref, b_ref, n, h, w, cin, cout):
        # pad_ref: (n, h+2, w+2, cin), already zero-haloed.
        p = pad_ref[...]
        # im2col: 9 shifted taps lane-concatenated -> one matmul with K = 9*cin.
        cols = [p[:, dy:dy + h, dx:dx + w, :].reshape(n * h * w, cin)
                for dy in range(3) for dx in range(3)]
        patches = jnp.concatenate(cols, axis=-1)                 # (n*h*w, 9*cin)
        y = jnp.dot(patches, w_ref[...], preferred_element_type=jnp.float32)
        # 2x2 max pool, stride 2 (channels stay in the lane dim; reshapes only
        # split leading dims).  Pooling first, then bias+ReLU: bitwise identical
        # to conv->bias->relu->pool (monotone ops), but 4x fewer VPU elements.
        y = jnp.max(y.reshape(n * h, w // 2, 2, cout), axis=2)          # (n*h, w/2, cout)
        y = jnp.max(y.reshape(n * (h // 2), 2, w // 2, cout), axis=1)   # (n*h/2, w/2, cout)
        y = jnp.maximum(y + b_ref[...], 0.0)
        return y.reshape(n, h // 2, w // 2, cout)

    # ---- conv1 + pool + bias + ReLU -----------------------------------------
    pad1_ref[...] = jnp.zeros_like(pad1_ref)
    pad1_ref[:, 1:H + 1, 1:W + 1, :] = x_ref[...]                # zero halo in VMEM
    a1 = conv3x3_pool2_bias_relu(pad1_ref, wc1_ref, bc1_ref, N, H, W, c_in, c1)

    # ---- conv2 + pool + bias + ReLU -----------------------------------------
    H2, W2 = H // 2, W // 2
    pad2_ref[...] = jnp.zeros_like(pad2_ref)
    pad2_ref[:, 1:H2 + 1, 1:W2 + 1, :] = a1
    a2 = conv3x3_pool2_bias_relu(pad2_ref, wc2_ref, bc2_ref, N, H2, W2, c1, c2)

    # ---- flatten in (h, w, c) order; fc1 rows were pre-permuted so this
    #      matches torch's NCHW x.view(-1, width*height) exactly ---------------
    H4, W4 = H2 // 2, W2 // 2
    flat = jnp.concatenate(
        [a2[:, hh, ww, :] for hh in range(H4) for ww in range(W4)], axis=-1)  # (N, H*W)

    # ---- 3-layer MLP (output dims zero-padded to 128 lanes) ------------------
    h1 = jnp.dot(flat, wf1_ref[...], preferred_element_type=jnp.float32) + bf1_ref[...]
    h1 = jnp.maximum(h1, 0.0)
    h2 = jnp.dot(h1, wf2_ref[...], preferred_element_type=jnp.float32) + bf2_ref[...]
    h2 = jnp.maximum(h2, 0.0)
    out_ref[...] = (jnp.dot(h2, wf3_ref[...], preferred_element_type=jnp.float32)
                    + bf3_ref[...])                               # (N, 128) lane-dense


# ----------------------------------------------------------------------------
# Forward wrapper: one tiny input transpose + one pallas_call + logits slice.
# ----------------------------------------------------------------------------
def net_forward(x_nchw, kp):
    x = jnp.transpose(x_nchw.astype(jnp.float32), (0, 2, 3, 1))   # NCHW -> NHWC
    N, H, W, C = x.shape
    c1 = kp["wc1"].shape[-1]
    kernel = functools.partial(fused_net_kernel, N=N, H=H, W=W)
    logits_padded = pl.pallas_call(
        kernel,
        out_shape=jax.ShapeDtypeStruct((N, LANES), jnp.float32),
        scratch_shapes=[
            pltpu.VMEM((N, H + 2, W + 2, C), jnp.float32),               # conv1 halo
            pltpu.VMEM((N, H // 2 + 2, W // 2 + 2, c1), jnp.float32),    # conv2 halo
        ],
        compiler_params=pltpu.CompilerParams(vmem_limit_bytes=32 * 1024 * 1024),
    )(x, kp["wc1"], kp["bc1"], kp["wc2"], kp["bc2"],
      kp["wf1"], kp["bf1"], kp["wf2"], kp["bf2"], kp["wf3"], kp["bf3"])
    return logits_padded[:, :NUM_CLASSES]


# ----------------------------------------------------------------------------
# Parameter handling.
#   init_params: deterministic PyTorch-layout / PyTorch-style uniform init.
#   prepare_params: one-time conversion to the kernel layouts:
#     - conv weights (Cout,Cin,3,3) -> (9*Cin, Cout) im2col layout
#     - fc weights transposed to (in, out); fc1 rows permuted from the NCHW
#       flatten order to the kernel's NHWC flatten order
#     - fc output dims zero-padded to 128 lanes (exact: padded cols/rows are 0)
# ----------------------------------------------------------------------------
def init_params(key, width, height, num_classes):
    ks = jax.random.split(key, 10)

    def u(k, shape, fan_in):
        b = 1.0 / (fan_in ** 0.5)
        return jax.random.uniform(k, shape, jnp.float32, -b, b)

    feat = width * height
    return {
        "conv1.weight": u(ks[0], (6, 3, 3, 3), 3 * 9),
        "conv1.bias":   u(ks[1], (6,), 3 * 9),
        "conv2.weight": u(ks[2], (16, 6, 3, 3), 6 * 9),
        "conv2.bias":   u(ks[3], (16,), 6 * 9),
        "fc1.weight":   u(ks[4], (120, feat), feat),
        "fc1.bias":     u(ks[5], (120,), feat),
        "fc2.weight":   u(ks[6], (84, 120), 120),
        "fc2.bias":     u(ks[7], (84,), 120),
        "fc3.weight":   u(ks[8], (num_classes, 84), 84),
        "fc3.bias":     u(ks[9], (num_classes,), 84),
    }


def prepare_params(p, width, height):
    def conv_w(w):  # (Cout, Cin, 3, 3) -> (9*Cin, Cout), rows in (ky, kx, cin) order
        cout, cin = w.shape[0], w.shape[1]
        return jnp.transpose(w, (2, 3, 1, 0)).reshape(9 * cin, cout)

    def pad2d(w, rows, cols):
        return jnp.pad(w, ((0, rows - w.shape[0]), (0, cols - w.shape[1])))

    h4, w4 = height // 4, width // 4
    feat = width * height  # == 16 * h4 * w4
    # fc1: torch row index is c*(h4*w4) + h*w4 + w (NCHW flatten); permute to the
    # kernel's NHWC flatten index h*(w4*16) + w*16 + c.
    wf1 = p["fc1.weight"].T                                        # (feat, 120)
    wf1 = wf1.reshape(16, h4, w4, -1).transpose(1, 2, 0, 3).reshape(feat, -1)
    return {
        "wc1": conv_w(p["conv1.weight"]), "bc1": p["conv1.bias"][None, :],
        "wc2": conv_w(p["conv2.weight"]), "bc2": p["conv2.bias"][None, :],
        "wf1": pad2d(wf1, feat, LANES),
        "bf1": pad2d(p["fc1.bias"][None, :], 1, LANES),
        "wf2": pad2d(p["fc2.weight"].T, LANES, LANES),
        "bf2": pad2d(p["fc2.bias"][None, :], 1, LANES),
        "wf3": pad2d(p["fc3.weight"].T, LANES, LANES),
        "bf3": pad2d(p["fc3.bias"][None, :], 1, LANES),
    }


if __name__ == "__main__":
    # Small shapes consistent with the module: fc1 in_features = width*height
    # (= 16 * (H/4) * (W/4)), so any H, W divisible by 4 work; use 16x16,
    # batch=2, 3 channels.
    width = height = 16
    batch = 2

    key = jax.random.PRNGKey(0)
    kx, kp_key = jax.random.split(key)
    x = jax.random.normal(kx, (batch, 3, height, width), jnp.float32)

    torch_params = init_params(kp_key, width, height, NUM_CLASSES)
    kparams = prepare_params(torch_params, width, height)

    fwd = jax.jit(net_forward)
    out = jax.block_until_ready(fwd(x, kparams))
    assert out.shape == (batch, NUM_CLASSES), out.shape
    print("KERNEL_OK")
</pallas_src>

<mosaic_0001>
module attributes {stable_mosaic.version = 11 : i64} {
  func.func @fused_net_kernel(%arg0: memref<2x16x16x3xf32, #tpu.memory_space<vmem>>, %arg1: memref<27x6xf32, #tpu.memory_space<vmem>>, %arg2: memref<1x6xf32, #tpu.memory_space<vmem>>, %arg3: memref<54x16xf32, #tpu.memory_space<vmem>>, %arg4: memref<1x16xf32, #tpu.memory_space<vmem>>, %arg5: memref<256x128xf32, #tpu.memory_space<vmem>>, %arg6: memref<1x128xf32, #tpu.memory_space<vmem>>, %arg7: memref<128x128xf32, #tpu.memory_space<vmem>>, %arg8: memref<1x128xf32, #tpu.memory_space<vmem>>, %arg9: memref<128x128xf32, #tpu.memory_space<vmem>>, %arg10: memref<1x128xf32, #tpu.memory_space<vmem>>, %arg11: memref<2x128xf32, #tpu.memory_space<vmem>>, %arg12: memref<2x18x18x3xf32, #tpu.memory_space<vmem>>, %arg13: memref<2x10x10x6xf32, #tpu.memory_space<vmem>>) attributes {dimension_semantics = [], scalar_prefetch = 0 : i64, scratch_operands = 2 : i64, tpu.core_type = #tpu.core_type<tc>} {
    %cst = arith.constant 0.000000e+00 : f32
    %0 = vector.broadcast %cst : f32 to vector<2x18x18x3xf32>
    %c0 = arith.constant 0 : index
    %c0_0 = arith.constant 0 : index
    %c0_1 = arith.constant 0 : index
    %c0_2 = arith.constant 0 : index
    %1 = vector.load %arg12[%c0, %c0_0, %c0_1, %c0_2] : memref<2x18x18x3xf32, #tpu.memory_space<vmem>>, vector<2x18x18x3xf32>
    tpu.vector_store %arg12[%c0, %c0_0, %c0_1, %c0_2], %0 {strides = array<i32>} : memref<2x18x18x3xf32, #tpu.memory_space<vmem>>, vector<2x18x18x3xf32>,
    %c0_3 = arith.constant 0 : index
    %c0_4 = arith.constant 0 : index
    %c0_5 = arith.constant 0 : index
    %c0_6 = arith.constant 0 : index
    %2 = vector.load %arg0[%c0_3, %c0_4, %c0_5, %c0_6] : memref<2x16x16x3xf32, #tpu.memory_space<vmem>>, vector<2x16x16x3xf32>
    %c0_7 = arith.constant 0 : index
    %c1 = arith.constant 1 : index
    %c1_8 = arith.constant 1 : index
    %c0_9 = arith.constant 0 : index
    %3 = vector.load %arg12[%c0_7, %c1, %c1_8, %c0_9] : memref<2x18x18x3xf32, #tpu.memory_space<vmem>>, vector<2x16x16x3xf32>
    tpu.vector_store %arg12[%c0_7, %c1, %c1_8, %c0_9], %2 {strides = array<i32>} : memref<2x18x18x3xf32, #tpu.memory_space<vmem>>, vector<2x16x16x3xf32>,
    %c0_10 = arith.constant 0 : index
    %c0_11 = arith.constant 0 : index
    %c0_12 = arith.constant 0 : index
    %c0_13 = arith.constant 0 : index
    %4 = vector.load %arg12[%c0_10, %c0_11, %c0_12, %c0_13] : memref<2x18x18x3xf32, #tpu.memory_space<vmem>>, vector<2x18x18x3xf32>
    %5 = vector.extract_strided_slice %4 {offsets = [0, 0, 0, 0], sizes = [2, 16, 16, 3], strides = [1, 1, 1, 1]} : vector<2x18x18x3xf32> to vector<2x16x16x3xf32>
    %6 = vector.shape_cast %5 : vector<2x16x16x3xf32> to vector<512x3xf32>
    %7 = vector.extract_strided_slice %4 {offsets = [0, 0, 1, 0], sizes = [2, 16, 16, 3], strides = [1, 1, 1, 1]} : vector<2x18x18x3xf32> to vector<2x16x16x3xf32>
    %8 = vector.shape_cast %7 : vector<2x16x16x3xf32> to vector<512x3xf32>
    %9 = vector.extract_strided_slice %4 {offsets = [0, 0, 2, 0], sizes = [2, 16, 16, 3], strides = [1, 1, 1, 1]} : vector<2x18x18x3xf32> to vector<2x16x16x3xf32>
    %10 = vector.shape_cast %9 : vector<2x16x16x3xf32> to vector<512x3xf32>
    %11 = vector.extract_strided_slice %4 {offsets = [0, 1, 0, 0], sizes = [2, 16, 16, 3], strides = [1, 1, 1, 1]} : vector<2x18x18x3xf32> to vector<2x16x16x3xf32>
    %12 = vector.shape_cast %11 : vector<2x16x16x3xf32> to vector<512x3xf32>
    %13 = vector.extract_strided_slice %4 {offsets = [0, 1, 1, 0], sizes = [2, 16, 16, 3], strides = [1, 1, 1, 1]} : vector<2x18x18x3xf32> to vector<2x16x16x3xf32>
    %14 = vector.shape_cast %13 : vector<2x16x16x3xf32> to vector<512x3xf32>
    %15 = vector.extract_strided_slice %4 {offsets = [0, 1, 2, 0], sizes = [2, 16, 16, 3], strides = [1, 1, 1, 1]} : vector<2x18x18x3xf32> to vector<2x16x16x3xf32>
    %16 = vector.shape_cast %15 : vector<2x16x16x3xf32> to vector<512x3xf32>
    %17 = vector.extract_strided_slice %4 {offsets = [0, 2, 0, 0], sizes = [2, 16, 16, 3], strides = [1, 1, 1, 1]} : vector<2x18x18x3xf32> to vector<2x16x16x3xf32>
    %18 = vector.shape_cast %17 : vector<2x16x16x3xf32> to vector<512x3xf32>
    %19 = vector.extract_strided_slice %4 {offsets = [0, 2, 1, 0], sizes = [2, 16, 16, 3], strides = [1, 1, 1, 1]} : vector<2x18x18x3xf32> to vector<2x16x16x3xf32>
    %20 = vector.shape_cast %19 : vector<2x16x16x3xf32> to vector<512x3xf32>
    %21 = vector.extract_strided_slice %4 {offsets = [0, 2, 2, 0], sizes = [2, 16, 16, 3], strides = [1, 1, 1, 1]} : vector<2x18x18x3xf32> to vector<2x16x16x3xf32>
    %22 = vector.shape_cast %21 : vector<2x16x16x3xf32> to vector<512x3xf32>
    %23 = tpu.concatenate %6, %8, %10, %12, %14, %16, %18, %20, %22 in 1 : vector<512x3xf32>, vector<512x3xf32>, vector<512x3xf32>, vector<512x3xf32>, vector<512x3xf32>, vector<512x3xf32>, vector<512x3xf32>, vector<512x3xf32>, vector<512x3xf32> -> vector<512x27xf32>
    %c0_14 = arith.constant 0 : index
    %c0_15 = arith.constant 0 : index
    %24 = vector.load %arg1[%c0_14, %c0_15] : memref<27x6xf32, #tpu.memory_space<vmem>>, vector<27x6xf32>
    %cst_16 = arith.constant dense<0.000000e+00> : vector<512x6xf32>
    %25 = tpu.matmul %23, %24, %cst_16 {dimension_numbers = #tpu.dot_dimension_numbers<[1], [0], [0], [1], [0, 0, 1, 1], [], []>} : vector<512x27xf32>, vector<27x6xf32>, vector<512x6xf32> -> vector<512x6xf32>
    %26 = vector.shape_cast %25 : vector<512x6xf32> to vector<32x8x2x6xf32>
    %cst_17 = arith.constant dense<0xFF800000> : vector<32x8x6xf32>
    %27 = vector.multi_reduction <maximumf>, %26, %cst_17 [2] : vector<32x8x2x6xf32> to vector<32x8x6xf32>
    %28 = vector.shape_cast %27 : vector<32x8x6xf32> to vector<16x2x8x6xf32>
    %cst_18 = arith.constant dense<0xFF800000> : vector<16x8x6xf32>
    %29 = vector.multi_reduction <maximumf>, %28, %cst_18 [1] : vector<16x2x8x6xf32> to vector<16x8x6xf32>
    %c0_19 = arith.constant 0 : index
    %c0_20 = arith.constant 0 : index
    %30 = vector.load %arg2[%c0_19, %c0_20] : memref<1x6xf32, #tpu.memory_space<vmem>>, vector<1x6xf32>
    %31 = vector.shape_cast %30 : vector<1x6xf32> to vector<1x1x6xf32>
    %32 = vector.broadcast %31 : vector<1x1x6xf32> to vector<16x8x6xf32>
    %33 = arith.addf %29, %32 : vector<16x8x6xf32>
    %cst_21 = arith.constant 0.000000e+00 : f32
    %34 = vector.broadcast %cst_21 : f32 to vector<16x8x6xf32>
    %35 = arith.maximumf %33, %34 : vector<16x8x6xf32>
    %36 = vector.shape_cast %35 : vector<16x8x6xf32> to vector<2x8x8x6xf32>
    %cst_22 = arith.constant 0.000000e+00 : f32
    %37 = vector.broadcast %cst_22 : f32 to vector<2x10x10x6xf32>
    %c0_23 = arith.constant 0 : index
    %c0_24 = arith.constant 0 : index
    %c0_25 = arith.constant 0 : index
    %c0_26 = arith.constant 0 : index
    %38 = vector.load %arg13[%c0_23, %c0_24, %c0_25, %c0_26] : memref<2x10x10x6xf32, #tpu.memory_space<vmem>>, vector<2x10x10x6xf32>
    tpu.vector_store %arg13[%c0_23, %c0_24, %c0_25, %c0_26], %37 {strides = array<i32>} : memref<2x10x10x6xf32, #tpu.memory_space<vmem>>, vector<2x10x10x6xf32>,
    %c0_27 = arith.constant 0 : index
    %c1_28 = arith.constant 1 : index
    %c1_29 = arith.constant 1 : index
    %c0_30 = arith.constant 0 : index
    %39 = vector.load %arg13[%c0_27, %c1_28, %c1_29, %c0_30] : memref<2x10x10x6xf32, #tpu.memory_space<vmem>>, vector<2x8x8x6xf32>
    tpu.vector_store %arg13[%c0_27, %c1_28, %c1_29, %c0_30], %36 {strides = array<i32>} : memref<2x10x10x6xf32, #tpu.memory_space<vmem>>, vector<2x8x8x6xf32>,
    %c0_31 = arith.constant 0 : index
    %c0_32 = arith.constant 0 : index
    %c0_33 = arith.constant 0 : index
    %c0_34 = arith.constant 0 : index
    %40 = vector.load %arg13[%c0_31, %c0_32, %c0_33, %c0_34] : memref<2x10x10x6xf32, #tpu.memory_space<vmem>>, vector<2x10x10x6xf32>
    %41 = vector.extract_strided_slice %40 {offsets = [0, 0, 0, 0], sizes = [2, 8, 8, 6], strides = [1, 1, 1, 1]} : vector<2x10x10x6xf32> to vector<2x8x8x6xf32>
    %42 = vector.shape_cast %41 : vector<2x8x8x6xf32> to vector<128x6xf32>
    %43 = vector.extract_strided_slice %40 {offsets = [0, 0, 1, 0], sizes = [2, 8, 8, 6], strides = [1, 1, 1, 1]} : vector<2x10x10x6xf32> to vector<2x8x8x6xf32>
    %44 = vector.shape_cast %43 : vector<2x8x8x6xf32> to vector<128x6xf32>
    %45 = vector.extract_strided_slice %40 {offsets = [0, 0, 2, 0], sizes = [2, 8, 8, 6], strides = [1, 1, 1, 1]} : vector<2x10x10x6xf32> to vector<2x8x8x6xf32>
    %46 = vector.shape_cast %45 : vector<2x8x8x6xf32> to vector<128x6xf32>
    %47 = vector.extract_strided_slice %40 {offsets = [0, 1, 0, 0], sizes = [2, 8, 8, 6], strides = [1, 1, 1, 1]} : vector<2x10x10x6xf32> to vector<2x8x8x6xf32>
    %48 = vector.shape_cast %47 : vector<2x8x8x6xf32> to vector<128x6xf32>
    %49 = vector.extract_strided_slice %40 {offsets = [0, 1, 1, 0], sizes = [2, 8, 8, 6], strides = [1, 1, 1, 1]} : vector<2x10x10x6xf32> to vector<2x8x8x6xf32>
    %50 = vector.shape_cast %49 : vector<2x8x8x6xf32> to vector<128x6xf32>
    %51 = vector.extract_strided_slice %40 {offsets = [0, 1, 2, 0], sizes = [2, 8, 8, 6], strides = [1, 1, 1, 1]} : vector<2x10x10x6xf32> to vector<2x8x8x6xf32>
    %52 = vector.shape_cast %51 : vector<2x8x8x6xf32> to vector<128x6xf32>
    %53 = vector.extract_strided_slice %40 {offsets = [0, 2, 0, 0], sizes = [2, 8, 8, 6], strides = [1, 1, 1, 1]} : vector<2x10x10x6xf32> to vector<2x8x8x6xf32>
    %54 = vector.shape_cast %53 : vector<2x8x8x6xf32> to vector<128x6xf32>
    %55 = vector.extract_strided_slice %40 {offsets = [0, 2, 1, 0], sizes = [2, 8, 8, 6], strides = [1, 1, 1, 1]} : vector<2x10x10x6xf32> to vector<2x8x8x6xf32>
    %56 = vector.shape_cast %55 : vector<2x8x8x6xf32> to vector<128x6xf32>
    %57 = vector.extract_strided_slice %40 {offsets = [0, 2, 2, 0], sizes = [2, 8, 8, 6], strides = [1, 1, 1, 1]} : vector<2x10x10x6xf32> to vector<2x8x8x6xf32>
    %58 = vector.shape_cast %57 : vector<2x8x8x6xf32> to vector<128x6xf32>
    %59 = tpu.concatenate %42, %44, %46, %48, %50, %52, %54, %56, %58 in 1 : vector<128x6xf32>, vector<128x6xf32>, vector<128x6xf32>, vector<128x6xf32>, vector<128x6xf32>, vector<128x6xf32>, vector<128x6xf32>, vector<128x6xf32>, vector<128x6xf32> -> vector<128x54xf32>
    %c0_35 = arith.constant 0 : index
    %c0_36 = arith.constant 0 : index
    %60 = vector.load %arg3[%c0_35, %c0_36] : memref<54x16xf32, #tpu.memory_space<vmem>>, vector<54x16xf32>
    %cst_37 = arith.constant dense<0.000000e+00> : vector<128x16xf32>
    %61 = tpu.matmul %59, %60, %cst_37 {dimension_numbers = #tpu.dot_dimension_numbers<[1], [0], [0], [1], [0, 0, 1, 1], [], []>} : vector<128x54xf32>, vector<54x16xf32>, vector<128x16xf32> -> vector<128x16xf32>
    %62 = vector.shape_cast %61 : vector<128x16xf32> to vector<16x4x2x16xf32>
    %cst_38 = arith.constant dense<0xFF800000> : vector<16x4x16xf32>
    %63 = vector.multi_reduction <maximumf>, %62, %cst_38 [2] : vector<16x4x2x16xf32> to vector<16x4x16xf32>
    %64 = vector.shape_cast %63 : vector<16x4x16xf32> to vector<8x2x4x16xf32>
    %cst_39 = arith.constant dense<0xFF800000> : vector<8x4x16xf32>
    %65 = vector.multi_reduction <maximumf>, %64, %cst_39 [1] : vector<8x2x4x16xf32> to vector<8x4x16xf32>
    %c0_40 = arith.constant 0 : index
    %c0_41 = arith.constant 0 : index
    %66 = vector.load %arg4[%c0_40, %c0_41] : memref<1x16xf32, #tpu.memory_space<vmem>>, vector<1x16xf32>
    %67 = vector.shape_cast %66 : vector<1x16xf32> to vector<1x1x16xf32>
    %68 = vector.broadcast %67 : vector<1x1x16xf32> to vector<8x4x16xf32>
    %69 = arith.addf %65, %68 : vector<8x4x16xf32>
    %cst_42 = arith.constant 0.000000e+00 : f32
    %70 = vector.broadcast %cst_42 : f32 to vector<8x4x16xf32>
    %71 = arith.maximumf %69, %70 : vector<8x4x16xf32>
    %72 = vector.shape_cast %71 : vector<8x4x16xf32> to vector<2x4x4x16xf32>
    %73 = vector.extract_strided_slice %72 {offsets = [0, 0, 0, 0], sizes = [2, 1, 1, 16], strides = [1, 1, 1, 1]} : vector<2x4x4x16xf32> to vector<2x1x1x16xf32>
    %74 = vector.shape_cast %73 : vector<2x1x1x16xf32> to vector<2x16xf32>
    %75 = vector.extract_strided_slice %72 {offsets = [0, 0, 1, 0], sizes = [2, 1, 1, 16], strides = [1, 1, 1, 1]} : vector<2x4x4x16xf32> to vector<2x1x1x16xf32>
    %76 = vector.shape_cast %75 : vector<2x1x1x16xf32> to vector<2x16xf32>
    %77 = vector.extract_strided_slice %72 {offsets = [0, 0, 2, 0], sizes = [2, 1, 1, 16], strides = [1, 1, 1, 1]} : vector<2x4x4x16xf32> to vector<2x1x1x16xf32>
    %78 = vector.shape_cast %77 : vector<2x1x1x16xf32> to vector<2x16xf32>
    %79 = vector.extract_strided_slice %72 {offsets = [0, 0, 3, 0], sizes = [2, 1, 1, 16], strides = [1, 1, 1, 1]} : vector<2x4x4x16xf32> to vector<2x1x1x16xf32>
    %80 = vector.shape_cast %79 : vector<2x1x1x16xf32> to vector<2x16xf32>
    %81 = vector.extract_strided_slice %72 {offsets = [0, 1, 0, 0], sizes = [2, 1, 1, 16], strides = [1, 1, 1, 1]} : vector<2x4x4x16xf32> to vector<2x1x1x16xf32>
    %82 = vector.shape_cast %81 : vector<2x1x1x16xf32> to vector<2x16xf32>
    %83 = vector.extract_strided_slice %72 {offsets = [0, 1, 1, 0], sizes = [2, 1, 1, 16], strides = [1, 1, 1, 1]} : vector<2x4x4x16xf32> to vector<2x1x1x16xf32>
    %84 = vector.shape_cast %83 : vector<2x1x1x16xf32> to vector<2x16xf32>
    %85 = vector.extract_strided_slice %72 {offsets = [0, 1, 2, 0], sizes = [2, 1, 1, 16], strides = [1, 1, 1, 1]} : vector<2x4x4x16xf32> to vector<2x1x1x16xf32>
    %86 = vector.shape_cast %85 : vector<2x1x1x16xf32> to vector<2x16xf32>
    %87 = vector.extract_strided_slice %72 {offsets = [0, 1, 3, 0], sizes = [2, 1, 1, 16], strides = [1, 1, 1, 1]} : vector<2x4x4x16xf32> to vector<2x1x1x16xf32>
    %88 = vector.shape_cast %87 : vector<2x1x1x16xf32> to vector<2x16xf32>
    %89 = vector.extract_strided_slice %72 {offsets = [0, 2, 0, 0], sizes = [2, 1, 1, 16], strides = [1, 1, 1, 1]} : vector<2x4x4x16xf32> to vector<2x1x1x16xf32>
    %90 = vector.shape_cast %89 : vector<2x1x1x16xf32> to vector<2x16xf32>
    %91 = vector.extract_strided_slice %72 {offsets = [0, 2, 1, 0], sizes = [2, 1, 1, 16], strides = [1, 1, 1, 1]} : vector<2x4x4x16xf32> to vector<2x1x1x16xf32>
    %92 = vector.shape_cast %91 : vector<2x1x1x16xf32> to vector<2x16xf32>
    %93 = vector.extract_strided_slice %72 {offsets = [0, 2, 2, 0], sizes = [2, 1, 1, 16], strides = [1, 1, 1, 1]} : vector<2x4x4x16xf32> to vector<2x1x1x16xf32>
    %94 = vector.shape_cast %93 : vector<2x1x1x16xf32> to vector<2x16xf32>
    %95 = vector.extract_strided_slice %72 {offsets = [0, 2, 3, 0], sizes = [2, 1, 1, 16], strides = [1, 1, 1, 1]} : vector<2x4x4x16xf32> to vector<2x1x1x16xf32>
    %96 = vector.shape_cast %95 : vector<2x1x1x16xf32> to vector<2x16xf32>
    %97 = vector.extract_strided_slice %72 {offsets = [0, 3, 0, 0], sizes = [2, 1, 1, 16], strides = [1, 1, 1, 1]} : vector<2x4x4x16xf32> to vector<2x1x1x16xf32>
    %98 = vector.shape_cast %97 : vector<2x1x1x16xf32> to vector<2x16xf32>
    %99 = vector.extract_strided_slice %72 {offsets = [0, 3, 1, 0], sizes = [2, 1, 1, 16], strides = [1, 1, 1, 1]} : vector<2x4x4x16xf32> to vector<2x1x1x16xf32>
    %100 = vector.shape_cast %99 : vector<2x1x1x16xf32> to vector<2x16xf32>
    %101 = vector.extract_strided_slice %72 {offsets = [0, 3, 2, 0], sizes = [2, 1, 1, 16], strides = [1, 1, 1, 1]} : vector<2x4x4x16xf32> to vector<2x1x1x16xf32>
    %102 = vector.shape_cast %101 : vector<2x1x1x16xf32> to vector<2x16xf32>
    %103 = vector.extract_strided_slice %72 {offsets = [0, 3, 3, 0], sizes = [2, 1, 1, 16], strides = [1, 1, 1, 1]} : vector<2x4x4x16xf32> to vector<2x1x1x16xf32>
    %104 = vector.shape_cast %103 : vector<2x1x1x16xf32> to vector<2x16xf32>
    %105 = tpu.concatenate %74, %76, %78, %80, %82, %84, %86, %88, %90, %92, %94, %96, %98, %100, %102, %104 in 1 : vector<2x16xf32>, vector<2x16xf32>, vector<2x16xf32>, vector<2x16xf32>, vector<2x16xf32>, vector<2x16xf32>, vector<2x16xf32>, vector<2x16xf32>, vector<2x16xf32>, vector<2x16xf32>, vector<2x16xf32>, vector<2x16xf32>, vector<2x16xf32>, vector<2x16xf32>, vector<2x16xf32>, vector<2x16xf32> -> vector<2x256xf32>
    %c0_43 = arith.constant 0 : index
    %c0_44 = arith.constant 0 : index
    %106 = vector.load %arg5[%c0_43, %c0_44] : memref<256x128xf32, #tpu.memory_space<vmem>>, vector<256x128xf32>
    %cst_45 = arith.constant dense<0.000000e+00> : vector<2x128xf32>
    %107 = tpu.matmul %105, %106, %cst_45 {dimension_numbers = #tpu.dot_dimension_numbers<[1], [0], [0], [1], [0, 0, 1, 1], [], []>} : vector<2x256xf32>, vector<256x128xf32>, vector<2x128xf32> -> vector<2x128xf32>
    %c0_46 = arith.constant 0 : index
    %c0_47 = arith.constant 0 : index
    %108 = vector.load %arg6[%c0_46, %c0_47] : memref<1x128xf32, #tpu.memory_space<vmem>>, vector<1x128xf32>
    %109 = vector.broadcast %108 : vector<1x128xf32> to vector<2x128xf32>
    %110 = arith.addf %107, %109 : vector<2x128xf32>
    %cst_48 = arith.constant 0.000000e+00 : f32
    %111 = vector.broadcast %cst_48 : f32 to vector<2x128xf32>
    %112 = arith.maximumf %110, %111 : vector<2x128xf32>
    %c0_49 = arith.constant 0 : index
    %c0_50 = arith.constant 0 : index
    %113 = vector.load %arg7[%c0_49, %c0_50] : memref<128x128xf32, #tpu.memory_space<vmem>>, vector<128x128xf32>
    %cst_51 = arith.constant dense<0.000000e+00> : vector<2x128xf32>
    %114 = tpu.matmul %112, %113, %cst_51 {dimension_numbers = #tpu.dot_dimension_numbers<[1], [0], [0], [1], [0, 0, 1, 1], [], []>} : vector<2x128xf32>, vector<128x128xf32>, vector<2x128xf32> -> vector<2x128xf32>
    %c0_52 = arith.constant 0 : index
    %c0_53 = arith.constant 0 : index
    %115 = vector.load %arg8[%c0_52, %c0_53] : memref<1x128xf32, #tpu.memory_space<vmem>>, vector<1x128xf32>
    %116 = vector.broadcast %115 : vector<1x128xf32> to vector<2x128xf32>
    %117 = arith.addf %114, %116 : vector<2x128xf32>
    %cst_54 = arith.constant 0.000000e+00 : f32
    %118 = vector.broadcast %cst_54 : f32 to vector<2x128xf32>
    %119 = arith.maximumf %117, %118 : vector<2x128xf32>
    %c0_55 = arith.constant 0 : index
    %c0_56 = arith.constant 0 : index
    %120 = vector.load %arg9[%c0_55, %c0_56] : memref<128x128xf32, #tpu.memory_space<vmem>>, vector<128x128xf32>
    %cst_57 = arith.constant dense<0.000000e+00> : vector<2x128xf32>
    %121 = tpu.matmul %119, %120, %cst_57 {dimension_numbers = #tpu.dot_dimension_numbers<[1], [0], [0], [1], [0, 0, 1, 1], [], []>} : vector<2x128xf32>, vector<128x128xf32>, vector<2x128xf32> -> vector<2x128xf32>
    %c0_58 = arith.constant 0 : index
    %c0_59 = arith.constant 0 : index
    %122 = vector.load %arg10[%c0_58, %c0_59] : memref<1x128xf32, #tpu.memory_space<vmem>>, vector<1x128xf32>
    %123 = vector.broadcast %122 : vector<1x128xf32> to vector<2x128xf32>
    %124 = arith.addf %121, %123 : vector<2x128xf32>
    %c0_60 = arith.constant 0 : index
    %c0_61 = arith.constant 0 : index
    %125 = vector.load %arg11[%c0_60, %c0_61] : memref<2x128xf32, #tpu.memory_space<vmem>>, vector<2x128xf32>
    tpu.vector_store %arg11[%c0_60, %c0_61], %124 {strides = array<i32>} : memref<2x128xf32, #tpu.memory_space<vmem>>, vector<2x128xf32>,
    return
  }
}

</mosaic_0001>

<llo_original>
// kernel: net_forward.1
$region0: #{net_forward.1}
  #allocation0 [shape = 'u32[]', space=smem, size = 0x4, offset = 0x4, fixed_abs, tag = 'smem constant byte address 0x4 - core index']
  #allocation1 [shape = 'u32[72,128]{1,0:T(1,128)}', space=vmem, size = 0x9000, scoped, tag = 'internal scratch']
  #allocation2 [shape = 'f32[2,18,18,3]{3,2,1,0:T(8,128)}', space=vmem, size = 0x6c000, scoped, tag = 'scratch operand']
  #allocation3 [shape = 'f32[2,10,10,6]{3,2,1,0:T(8,128)}', space=vmem, size = 0x28000, scoped, tag = 'scratch operand']
  %s0 = inlined_call_operand.vmem [shape: f32[2,16,16,3], index: 0, kind: input, shape index: {}]
  %s1 = inlined_call_operand.vmem [shape: f32[27,6], index: 1, kind: input, shape index: {}]
  %s2 = inlined_call_operand.vmem [shape: f32[1,6], index: 2, kind: input, shape index: {}]
  %s3 = inlined_call_operand.vmem [shape: f32[54,16], index: 3, kind: input, shape index: {}]
  %s4 = inlined_call_operand.vmem [shape: f32[1,16], index: 4, kind: input, shape index: {}]
  %s5 = inlined_call_operand.vmem [shape: f32[256,128], index: 5, kind: input, shape index: {}]
  %s6 = inlined_call_operand.vmem [shape: f32[1,128], index: 6, kind: input, shape index: {}]
  %s7 = inlined_call_operand.vmem [shape: f32[128,128], index: 7, kind: input, shape index: {}]
  %s8 = inlined_call_operand.vmem [shape: f32[1,128], index: 8, kind: input, shape index: {}]
  %s9 = inlined_call_operand.vmem [shape: f32[128,128], index: 9, kind: input, shape index: {}]
  %s10 = inlined_call_operand.vmem [shape: f32[1,128], index: 10, kind: input, shape index: {}]
  %s11 = inlined_call_operand.hbm [shape: f32[2,128], index: 11, kind: output, shape index: {}]
  %s12 = sld [smem:[#allocation0]]
  $region54: #{net_forward.1} parent=0
    _
  %s14 = ssub.s32 1, %s12
  %s15 = scalar_select 0, %s14, %s12
  $region1: #{net_forward.1} parent=0
    #allocation4 [shape = 'u8[1024]{0}', space=vmem, size = 0x400, scoped, tag = 'output window, operand 0, single buffered']
    #allocation5 [shape = 's32[1]{0}', space=sflag, size = 0x4, scoped, tag = 'scoped memory for net_forward.1']
    %16 = vsyncpa [#allocation5], 0
    // Predicated region
    $region2: #{net_forward.1} parent=1 // pred_check
      _
    $region3: #{net_forward.1} parent=1 // pred_check_branch
      %18 = sbr.rel (0) target = $region5
    $region4: #{net_forward.1} parent=1 // pred_region
      _
    $region5: #{net_forward.1} parent=1 // pred_fallthru
      _
    // Predicated region
    $region6: #{net_forward.1} parent=1 // pred_check
      _
    $region7: #{net_forward.1} parent=1 // pred_check_branch
      %20 = sbr.rel (0) target = $region9
    $region8: #{net_forward.1} parent=1 // pred_region
      _
    $region9: #{net_forward.1} parent=1 // pred_fallthru
      _
    // Predicated region
    $region10: #{net_forward.1} parent=1 // pred_check
      _
    $region11: #{net_forward.1} parent=1 // pred_check_branch
      %22 = sbr.rel (0) target = $region13
    $region12: #{net_forward.1} parent=1 // pred_region
      _
    $region13: #{net_forward.1} parent=1 // pred_fallthru
      _
    // Predicated region
    $region14: #{net_forward.1} parent=1 // pred_check
      _
    $region15: #{net_forward.1} parent=1 // pred_check_branch
      %24 = sbr.rel (0) target = $region17
    $region16: #{net_forward.1} parent=1 // pred_region
      _
    $region17: #{net_forward.1} parent=1 // pred_fallthru
      _
    // Predicated region
    $region18: #{net_forward.1} parent=1 // pred_check
      _
    $region19: #{net_forward.1} parent=1 // pred_check_branch
      %26 = sbr.rel (0) target = $region21
    $region20: #{net_forward.1} parent=1 // pred_region
      _
    $region21: #{net_forward.1} parent=1 // pred_fallthru
      _
    // Predicated region
    $region22: #{net_forward.1} parent=1 // pred_check
      _
    $region23: #{net_forward.1} parent=1 // pred_check_branch
      %28 = sbr.rel (0) target = $region25
    $region24: #{net_forward.1} parent=1 // pred_region
      _
    $region25: #{net_forward.1} parent=1 // pred_fallthru
      _
    // Predicated region
    $region26: #{net_forward.1} parent=1 // pred_check
      _
    $region27: #{net_forward.1} parent=1 // pred_check_branch
      %30 = sbr.rel (0) target = $region29
    $region28: #{net_forward.1} parent=1 // pred_region
      _
    $region29: #{net_forward.1} parent=1 // pred_fallthru
      _
    // Predicated region
    $region30: #{net_forward.1} parent=1 // pred_check
      _
    $region31: #{net_forward.1} parent=1 // pred_check_branch
      %32 = sbr.rel (0) target = $region33
    $region32: #{net_forward.1} parent=1 // pred_region
      _
    $region33: #{net_forward.1} parent=1 // pred_fallthru
      _
    // Predicated region
    $region34: #{net_forward.1} parent=1 // pred_check
      _
    $region35: #{net_forward.1} parent=1 // pred_check_branch
      %34 = sbr.rel (0) target = $region37
    $region36: #{net_forward.1} parent=1 // pred_region
      _
    $region37: #{net_forward.1} parent=1 // pred_fallthru
      _
    // Predicated region
    $region38: #{net_forward.1} parent=1 // pred_check
      _
    $region39: #{net_forward.1} parent=1 // pred_check_branch
      %36 = sbr.rel (0) target = $region41
    $region40: #{net_forward.1} parent=1 // pred_region
      _
    $region41: #{net_forward.1} parent=1 // pred_fallthru
      _
    // Predicated region
    $region42: #{net_forward.1} parent=1 // pred_check
      _
    $region43: #{net_forward.1} parent=1 // pred_check_branch
      %38 = sbr.rel (0) target = $region45
    $region44: #{net_forward.1} parent=1 // pred_region
      _
    $region45: #{net_forward.1} parent=1 // pred_fallthru
      _
    %vm39 = vcmask 23552
    %40 = vst.msk [vmem:[#allocation2] sm:$0xff] %vm39, 0.0
    %41 = vst.msk [vmem:[#allocation2 + $0x8] sm:$0xff] %vm39, 0.0
    %vm42 = vcmask 17408
    %43 = vst.msk [vmem:[#allocation2 + $0x10] sm:$0x3] %vm42, 0.0
    %44 = vst.msk [vmem:[#allocation2 + $0x18] sm:$0xff] %vm39, 0.0
    %45 = vst.msk [vmem:[#allocation2 + $0x20] sm:$0xff] %vm39, 0.0
    %46 = vst.msk [vmem:[#allocation2 + $0x28] sm:$0x3] %vm42, 0.0
    %47 = vst.msk [vmem:[#allocation2 + $0x30] sm:$0xff] %vm39, 0.0
    %48 = vst.msk [vmem:[#allocation2 + $0x38] sm:$0xff] %vm39, 0.0
    %49 = vst.msk [vmem:[#allocation2 + $0x40] sm:$0x3] %vm42, 0.0
    %50 = vst.msk [vmem:[#allocation2 + $0x48] sm:$0xff] %vm39, 0.0
    %51 = vst.msk [vmem:[#allocation2 + $0x50] sm:$0xff] %vm39, 0.0
    %52 = vst.msk [vmem:[#allocation2 + $0x58] sm:$0x3] %vm42, 0.0
    %53 = vst.msk [vmem:[#allocation2 + $0x60] sm:$0xff] %vm39, 0.0
    %54 = vst.msk [vmem:[#allocation2 + $0x68] sm:$0xff] %vm39, 0.0
    %55 = vst.msk [vmem:[#allocation2 + $0x70] sm:$0x3] %vm42, 0.0
    %56 = vst.msk [vmem:[#allocation2 + $0x78] sm:$0xff] %vm39, 0.0
    %57 = vst.msk [vmem:[#allocation2 + $0x80] sm:$0xff] %vm39, 0.0
    %58 = vst.msk [vmem:[#allocation2 + $0x88] sm:$0x3] %vm42, 0.0
    %59 = vst.msk [vmem:[#allocation2 + $0x90] sm:$0xff] %vm39, 0.0
    %60 = vst.msk [vmem:[#allocation2 + $0x98] sm:$0xff] %vm39, 0.0
    %61 = vst.msk [vmem:[#allocation2 + $0xa0] sm:$0x3] %vm42, 0.0
    %62 = vst.msk [vmem:[#allocation2 + $0xa8] sm:$0xff] %vm39, 0.0
    %63 = vst.msk [vmem:[#allocation2 + $0xb0] sm:$0xff] %vm39, 0.0
    %64 = vst.msk [vmem:[#allocation2 + $0xb8] sm:$0x3] %vm42, 0.0
    %65 = vst.msk [vmem:[#allocation2 + $0xc0] sm:$0xff] %vm39, 0.0
    %66 = vst.msk [vmem:[#allocation2 + $0xc8] sm:$0xff] %vm39, 0.0
    %67 = vst.msk [vmem:[#allocation2 + $0xd0] sm:$0x3] %vm42, 0.0
    %68 = vst.msk [vmem:[#allocation2 + $0xd8] sm:$0xff] %vm39, 0.0
    %69 = vst.msk [vmem:[#allocation2 + $0xe0] sm:$0xff] %vm39, 0.0
    %70 = vst.msk [vmem:[#allocation2 + $0xe8] sm:$0x3] %vm42, 0.0
    %71 = vst.msk [vmem:[#allocation2 + $0xf0] sm:$0xff] %vm39, 0.0
    %72 = vst.msk [vmem:[#allocation2 + $0xf8] sm:$0xff] %vm39, 0.0
    %73 = vst.msk [vmem:[#allocation2 + $0x100] sm:$0x3] %vm42, 0.0
    %74 = vst.msk [vmem:[#allocation2 + $0x108] sm:$0xff] %vm39, 0.0
    %75 = vst.msk [vmem:[#allocation2 + $0x110] sm:$0xff] %vm39, 0.0
    %76 = vst.msk [vmem:[#allocation2 + $0x118] sm:$0x3] %vm42, 0.0
    %77 = vst.msk [vmem:[#allocation2 + $0x120] sm:$0xff] %vm39, 0.0
    %78 = vst.msk [vmem:[#allocation2 + $0x128] sm:$0xff] %vm39, 0.0
    %79 = vst.msk [vmem:[#allocation2 + $0x130] sm:$0x3] %vm42, 0.0
    %80 = vst.msk [vmem:[#allocation2 + $0x138] sm:$0xff] %vm39, 0.0
    %81 = vst.msk [vmem:[#allocation2 + $0x140] sm:$0xff] %vm39, 0.0
    %82 = vst.msk [vmem:[#allocation2 + $0x148] sm:$0x3] %vm42, 0.0
    %83 = vst.msk [vmem:[#allocation2 + $0x150] sm:$0xff] %vm39, 0.0
    %84 = vst.msk [vmem:[#allocation2 + $0x158] sm:$0xff] %vm39, 0.0
    %85 = vst.msk [vmem:[#allocation2 + $0x160] sm:$0x3] %vm42, 0.0
    %86 = vst.msk [vmem:[#allocation2 + $0x168] sm:$0xff] %vm39, 0.0
    %87 = vst.msk [vmem:[#allocation2 + $0x170] sm:$0xff] %vm39, 0.0
    %88 = vst.msk [vmem:[#allocation2 + $0x178] sm:$0x3] %vm42, 0.0
    %89 = vst.msk [vmem:[#allocation2 + $0x180] sm:$0xff] %vm39, 0.0
    %90 = vst.msk [vmem:[#allocation2 + $0x188] sm:$0xff] %vm39, 0.0
    %91 = vst.msk [vmem:[#allocation2 + $0x190] sm:$0x3] %vm42, 0.0
    %92 = vst.msk [vmem:[#allocation2 + $0x198] sm:$0xff] %vm39, 0.0
    %93 = vst.msk [vmem:[#allocation2 + $0x1a0] sm:$0xff] %vm39, 0.0
    %94 = vst.msk [vmem:[#allocation2 + $0x1a8] sm:$0x3] %vm42, 0.0
    %95 = vst.msk [vmem:[#allocation2 + $0x1b0] sm:$0xff] %vm39, 0.0
    %96 = vst.msk [vmem:[#allocation2 + $0x1b8] sm:$0xff] %vm39, 0.0
    %97 = vst.msk [vmem:[#allocation2 + $0x1c0] sm:$0x3] %vm42, 0.0
    %98 = vst.msk [vmem:[#allocation2 + $0x1c8] sm:$0xff] %vm39, 0.0
    %99 = vst.msk [vmem:[#allocation2 + $0x1d0] sm:$0xff] %vm39, 0.0
    %100 = vst.msk [vmem:[#allocation2 + $0x1d8] sm:$0x3] %vm42, 0.0
    %101 = vst.msk [vmem:[#allocation2 + $0x1e0] sm:$0xff] %vm39, 0.0
    %102 = vst.msk [vmem:[#allocation2 + $0x1e8] sm:$0xff] %vm39, 0.0
    %103 = vst.msk [vmem:[#allocation2 + $0x1f0] sm:$0x3] %vm42, 0.0
    %104 = vst.msk [vmem:[#allocation2 + $0x1f8] sm:$0xff] %vm39, 0.0
    %105 = vst.msk [vmem:[#allocation2 + $0x200] sm:$0xff] %vm39, 0.0
    %106 = vst.msk [vmem:[#allocation2 + $0x208] sm:$0x3] %vm42, 0.0
    %107 = vst.msk [vmem:[#allocation2 + $0x210] sm:$0xff] %vm39, 0.0
    %108 = vst.msk [vmem:[#allocation2 + $0x218] sm:$0xff] %vm39, 0.0
    %109 = vst.msk [vmem:[#allocation2 + $0x220] sm:$0x3] %vm42, 0.0
    %110 = vst.msk [vmem:[#allocation2 + $0x228] sm:$0xff] %vm39, 0.0
    %111 = vst.msk [vmem:[#allocation2 + $0x230] sm:$0xff] %vm39, 0.0
    %112 = vst.msk [vmem:[#allocation2 + $0x238] sm:$0x3] %vm42, 0.0
    %113 = vst.msk [vmem:[#allocation2 + $0x240] sm:$0xff] %vm39, 0.0
    %114 = vst.msk [vmem:[#allocation2 + $0x248] sm:$0xff] %vm39, 0.0
    %115 = vst.msk [vmem:[#allocation2 + $0x250] sm:$0x3] %vm42, 0.0
    %116 = vst.msk [vmem:[#allocation2 + $0x258] sm:$0xff] %vm39, 0.0
    %117 = vst.msk [vmem:[#allocation2 + $0x260] sm:$0xff] %vm39, 0.0
    %118 = vst.msk [vmem:[#allocation2 + $0x268] sm:$0x3] %vm42, 0.0
    %119 = vst.msk [vmem:[#allocation2 + $0x270] sm:$0xff] %vm39, 0.0
    %120 = vst.msk [vmem:[#allocation2 + $0x278] sm:$0xff] %vm39, 0.0
    %121 = vst.msk [vmem:[#allocation2 + $0x280] sm:$0x3] %vm42, 0.0
    %122 = vst.msk [vmem:[#allocation2 + $0x288] sm:$0xff] %vm39, 0.0
    %123 = vst.msk [vmem:[#allocation2 + $0x290] sm:$0xff] %vm39, 0.0
    %124 = vst.msk [vmem:[#allocation2 + $0x298] sm:$0x3] %vm42, 0.0
    %125 = vst.msk [vmem:[#allocation2 + $0x2a0] sm:$0xff] %vm39, 0.0
    %126 = vst.msk [vmem:[#allocation2 + $0x2a8] sm:$0xff] %vm39, 0.0
    %127 = vst.msk [vmem:[#allocation2 + $0x2b0] sm:$0x3] %vm42, 0.0
    %128 = vst.msk [vmem:[#allocation2 + $0x2b8] sm:$0xff] %vm39, 0.0
    %129 = vst.msk [vmem:[#allocation2 + $0x2c0] sm:$0xff] %vm39, 0.0
    %130 = vst.msk [vmem:[#allocation2 + $0x2c8] sm:$0x3] %vm42, 0.0
    %131 = vst.msk [vmem:[#allocation2 + $0x2d0] sm:$0xff] %vm39, 0.0
    %132 = vst.msk [vmem:[#allocation2 + $0x2d8] sm:$0xff] %vm39, 0.0
    %133 = vst.msk [vmem:[#allocation2 + $0x2e0] sm:$0x3] %vm42, 0.0
    %134 = vst.msk [vmem:[#allocation2 + $0x2e8] sm:$0xff] %vm39, 0.0
    %135 = vst.msk [vmem:[#allocation2 + $0x2f0] sm:$0xff] %vm39, 0.0
    %136 = vst.msk [vmem:[#allocation2 + $0x2f8] sm:$0x3] %vm42, 0.0
    %137 = vst.msk [vmem:[#allocation2 + $0x300] sm:$0xff] %vm39, 0.0
    %138 = vst.msk [vmem:[#allocation2 + $0x308] sm:$0xff] %vm39, 0.0
    %139 = vst.msk [vmem:[#allocation2 + $0x310] sm:$0x3] %vm42, 0.0
    %140 = vst.msk [vmem:[#allocation2 + $0x318] sm:$0xff] %vm39, 0.0
    %141 = vst.msk [vmem:[#allocation2 + $0x320] sm:$0xff] %vm39, 0.0
    %142 = vst.msk [vmem:[#allocation2 + $0x328] sm:$0x3] %vm42, 0.0
    %143 = vst.msk [vmem:[#allocation2 + $0x330] sm:$0xff] %vm39, 0.0
    %144 = vst.msk [vmem:[#allocation2 + $0x338] sm:$0xff] %vm39, 0.0
    %145 = vst.msk [vmem:[#allocation2 + $0x340] sm:$0x3] %vm42, 0.0
    %146 = vst.msk [vmem:[#allocation2 + $0x348] sm:$0xff] %vm39, 0.0
    %147 = vst.msk [vmem:[#allocation2 + $0x350] sm:$0xff] %vm39, 0.0
    %148 = vst.msk [vmem:[#allocation2 + $0x358] sm:$0x3] %vm42, 0.0
    %v149 = vld [vmem:[%s0] sm:$0xff]
    %v150 = vld [vmem:[%s0 + $0x8] sm:$0xff]
    %v151 = vld [vmem:[%s0 + $0x10] sm:$0xff]
    %v152 = vld [vmem:[%s0 + $0x18] sm:$0xff]
    %v153 = vld [vmem:[%s0 + $0x20] sm:$0xff]
    %v154 = vld [vmem:[%s0 + $0x28] sm:$0xff]
    %v155 = vld [vmem:[%s0 + $0x30] sm:$0xff]
    %v156 = vld [vmem:[%s0 + $0x38] sm:$0xff]
    %v157 = vld [vmem:[%s0 + $0x40] sm:$0xff]
    %v158 = vld [vmem:[%s0 + $0x48] sm:$0xff]
    %v159 = vld [vmem:[%s0 + $0x50] sm:$0xff]
    %v160 = vld [vmem:[%s0 + $0x58] sm:$0xff]
    %v161 = vld [vmem:[%s0 + $0x60] sm:$0xff]
    %v162 = vld [vmem:[%s0 + $0x68] sm:$0xff]
    %v163 = vld [vmem:[%s0 + $0x70] sm:$0xff]
    %v164 = vld [vmem:[%s0 + $0x78] sm:$0xff]
    %v165 = vld [vmem:[%s0 + $0x80] sm:$0xff]
    %v166 = vld [vmem:[%s0 + $0x88] sm:$0xff]
    %v167 = vld [vmem:[%s0 + $0x90] sm:$0xff]
    %v168 = vld [vmem:[%s0 + $0x98] sm:$0xff]
    %v169 = vld [vmem:[%s0 + $0xa0] sm:$0xff]
    %v170 = vld [vmem:[%s0 + $0xa8] sm:$0xff]
    %v171 = vld [vmem:[%s0 + $0xb0] sm:$0xff]
    %v172 = vld [vmem:[%s0 + $0xb8] sm:$0xff]
    %v173 = vld [vmem:[%s0 + $0xc0] sm:$0xff]
    %v174 = vld [vmem:[%s0 + $0xc8] sm:$0xff]
    %v175 = vld [vmem:[%s0 + $0xd0] sm:$0xff]
    %v176 = vld [vmem:[%s0 + $0xd8] sm:$0xff]
    %v177 = vld [vmem:[%s0 + $0xe0] sm:$0xff]
    %v178 = vld [vmem:[%s0 + $0xe8] sm:$0xff]
    %v179 = vld [vmem:[%s0 + $0xf0] sm:$0xff]
    %v180 = vld [vmem:[%s0 + $0xf8] sm:$0xff]
    %v181 = vld [vmem:[%s0 + $0x100] sm:$0xff]
    %v182 = vld [vmem:[%s0 + $0x108] sm:$0xff]
    %v183 = vld [vmem:[%s0 + $0x110] sm:$0xff]
    %v184 = vld [vmem:[%s0 + $0x118] sm:$0xff]
    %v185 = vld [vmem:[%s0 + $0x120] sm:$0xff]
    %v186 = vld [vmem:[%s0 + $0x128] sm:$0xff]
    %v187 = vld [vmem:[%s0 + $0x130] sm:$0xff]
    %v188 = vld [vmem:[%s0 + $0x138] sm:$0xff]
    %v189 = vld [vmem:[%s0 + $0x140] sm:$0xff]
    %v190 = vld [vmem:[%s0 + $0x148] sm:$0xff]
    %v191 = vld [vmem:[%s0 + $0x150] sm:$0xff]
    %v192 = vld [vmem:[%s0 + $0x158] sm:$0xff]
    %v193 = vld [vmem:[%s0 + $0x160] sm:$0xff]
    %v194 = vld [vmem:[%s0 + $0x168] sm:$0xff]
    %v195 = vld [vmem:[%s0 + $0x170] sm:$0xff]
    %v196 = vld [vmem:[%s0 + $0x178] sm:$0xff]
    %v197 = vld [vmem:[%s0 + $0x180] sm:$0xff]
    %v198 = vld [vmem:[%s0 + $0x188] sm:$0xff]
    %v199 = vld [vmem:[%s0 + $0x190] sm:$0xff]
    %v200 = vld [vmem:[%s0 + $0x198] sm:$0xff]
    %v201 = vld [vmem:[%s0 + $0x1a0] sm:$0xff]
    %v202 = vld [vmem:[%s0 + $0x1a8] sm:$0xff]
    %v203 = vld [vmem:[%s0 + $0x1b0] sm:$0xff]
    %v204 = vld [vmem:[%s0 + $0x1b8] sm:$0xff]
    %v205 = vld [vmem:[%s0 + $0x1c0] sm:$0xff]
    %v206 = vld [vmem:[%s0 + $0x1c8] sm:$0xff]
    %v207 = vld [vmem:[%s0 + $0x1d0] sm:$0xff]
    %v208 = vld [vmem:[%s0 + $0x1d8] sm:$0xff]
    %v209 = vld [vmem:[%s0 + $0x1e0] sm:$0xff]
    %v210 = vld [vmem:[%s0 + $0x1e8] sm:$0xff]
    %v211 = vld [vmem:[%s0 + $0x1f0] sm:$0xff]
    %v212 = vld [vmem:[%s0 + $0x1f8] sm:$0xff]
    %s213 = scalar_lea.vmem [#allocation2], 24
    %214 = vst.msk [vmem:[%s213 + $0x1] sm:$0xff] %vm39, %v149
    %215 = vst.msk [vmem:[%s213 + $0x9] sm:$0xff] %vm39, %v150
    %216 = vst.msk [vmem:[%s213 + $0x19] sm:$0xff] %vm39, %v151
    %217 = vst.msk [vmem:[%s213 + $0x21] sm:$0xff] %vm39, %v152
    %218 = vst.msk [vmem:[%s213 + $0x31] sm:$0xff] %vm39, %v153
    %219 = vst.msk [vmem:[%s213 + $0x39] sm:$0xff] %vm39, %v154
    %220 = vst.msk [vmem:[%s213 + $0x49] sm:$0xff] %vm39, %v155
    %221 = vst.msk [vmem:[%s213 + $0x51] sm:$0xff] %vm39, %v156
    %222 = vst.msk [vmem:[%s213 + $0x61] sm:$0xff] %vm39, %v157
    %223 = vst.msk [vmem:[%s213 + $0x69] sm:$0xff] %vm39, %v158
    %224 = vst.msk [vmem:[%s213 + $0x79] sm:$0xff] %vm39, %v159
    %225 = vst.msk [vmem:[%s213 + $0x81] sm:$0xff] %vm39, %v160
    %226 = vst.msk [vmem:[%s213 + $0x91] sm:$0xff] %vm39, %v161
    %227 = vst.msk [vmem:[%s213 + $0x99] sm:$0xff] %vm39, %v162
    %228 = vst.msk [vmem:[%s213 + $0xa9] sm:$0xff] %vm39, %v163
    %229 = vst.msk [vmem:[%s213 + $0xb1] sm:$0xff] %vm39, %v164
    %230 = vst.msk [vmem:[%s213 + $0xc1] sm:$0xff] %vm39, %v165
    %231 = vst.msk [vmem:[%s213 + $0xc9] sm:$0xff] %vm39, %v166
    %232 = vst.msk [vmem:[%s213 + $0xd9] sm:$0xff] %vm39, %v167
    %233 = vst.msk [vmem:[%s213 + $0xe1] sm:$0xff] %vm39, %v168
    %234 = vst.msk [vmem:[%s213 + $0xf1] sm:$0xff] %vm39, %v169
    %235 = vst.msk [vmem:[%s213 + $0xf9] sm:$0xff] %vm39, %v170
    %236 = vst.msk [vmem:[%s213 + $0x109] sm:$0xff] %vm39, %v171
    %237 = vst.msk [vmem:[%s213 + $0x111] sm:$0xff] %vm39, %v172
    %238 = vst.msk [vmem:[%s213 + $0x121] sm:$0xff] %vm39, %v173
    %239 = vst.msk [vmem:[%s213 + $0x129] sm:$0xff] %vm39, %v174
    %240 = vst.msk [vmem:[%s213 + $0x139] sm:$0xff] %vm39, %v175
    %241 = vst.msk [vmem:[%s213 + $0x141] sm:$0xff] %vm39, %v176
    %242 = vst.msk [vmem:[%s213 + $0x151] sm:$0xff] %vm39, %v177
    %243 = vst.msk [vmem:[%s213 + $0x159] sm:$0xff] %vm39, %v178
    %244 = vst.msk [vmem:[%s213 + $0x169] sm:$0xff] %vm39, %v179
    %245 = vst.msk [vmem:[%s213 + $0x171] sm:$0xff] %vm39, %v180
    %246 = vst.msk [vmem:[%s213 + $0x1b1] sm:$0xff] %vm39, %v181
    %247 = vst.msk [vmem:[%s213 + $0x1b9] sm:$0xff] %vm39, %v182
    %248 = vst.msk [vmem:[%s213 + $0x1c9] sm:$0xff] %vm39, %v183
    %249 = vst.msk [vmem:[%s213 + $0x1d1] sm:$0xff] %vm39, %v184
    %250 = vst.msk [vmem:[%s213 + $0x1e1] sm:$0xff] %vm39, %v185
    %251 = vst.msk [vmem:[%s213 + $0x1e9] sm:$0xff] %vm39, %v186
    %252 = vst.msk [vmem:[%s213 + $0x1f9] sm:$0xff] %vm39, %v187
    %253 = vst.msk [vmem:[%s213 + $0x201] sm:$0xff] %vm39, %v188
    %254 = vst.msk [vmem:[%s213 + $0x211] sm:$0xff] %vm39, %v189
    %255 = vst.msk [vmem:[%s213 + $0x219] sm:$0xff] %vm39, %v190
    %256 = vst.msk [vmem:[%s213 + $0x229] sm:$0xff] %vm39, %v191
    %257 = vst.msk [vmem:[%s213 + $0x231] sm:$0xff] %vm39, %v192
    %258 = vst.msk [vmem:[%s213 + $0x241] sm:$0xff] %vm39, %v193
    %259 = vst.msk [vmem:[%s213 + $0x249] sm:$0xff] %vm39, %v194
    %260 = vst.msk [vmem:[%s213 + $0x259] sm:$0xff] %vm39, %v195
    %261 = vst.msk [vmem:[%s213 + $0x261] sm:$0xff] %vm39, %v196
    %262 = vst.msk [vmem:[%s213 + $0x271] sm:$0xff] %vm39, %v197
    %263 = vst.msk [vmem:[%s213 + $0x279] sm:$0xff] %vm39, %v198
    %264 = vst.msk [vmem:[%s213 + $0x289] sm:$0xff] %vm39, %v199
    %265 = vst.msk [vmem:[%s213 + $0x291] sm:$0xff] %vm39, %v200
    %266 = vst.msk [vmem:[%s213 + $0x2a1] sm:$0xff] %vm39, %v201
    %267 = vst.msk [vmem:[%s213 + $0x2a9] sm:$0xff] %vm39, %v202
    %268 = vst.msk [vmem:[%s213 + $0x2b9] sm:$0xff] %vm39, %v203
    %269 = vst.msk [vmem:[%s213 + $0x2c1] sm:$0xff] %vm39, %v204
    %270 = vst.msk [vmem:[%s213 + $0x2d1] sm:$0xff] %vm39, %v205
    %271 = vst.msk [vmem:[%s213 + $0x2d9] sm:$0xff] %vm39, %v206
    %272 = vst.msk [vmem:[%s213 + $0x2e9] sm:$0xff] %vm39, %v207
    %273 = vst.msk [vmem:[%s213 + $0x2f1] sm:$0xff] %vm39, %v208
    %274 = vst.msk [vmem:[%s213 + $0x301] sm:$0xff] %vm39, %v209
    %275 = vst.msk [vmem:[%s213 + $0x309] sm:$0xff] %vm39, %v210
    %276 = vst.msk [vmem:[%s213 + $0x319] sm:$0xff] %vm39, %v211
    %277 = vst.msk [vmem:[%s213 + $0x321] sm:$0xff] %vm39, %v212
    %v278 = vld [vmem:[#allocation2] sm:$0xff]
    %v279 = vld [vmem:[#allocation2 + $0x8] sm:$0xff]
    %v280 = vld [vmem:[#allocation2 + $0x10] sm:$0x3]
    %v281 = vld [vmem:[#allocation2 + $0x18] sm:$0xff]
    %v282 = vld [vmem:[#allocation2 + $0x20] sm:$0xff]
    %v283 = vld [vmem:[#allocation2 + $0x28] sm:$0x3]
    %v284 = vld [vmem:[#allocation2 + $0x30] sm:$0xff]
    %v285 = vld [vmem:[#allocation2 + $0x38] sm:$0xff]
    %v286 = vld [vmem:[#allocation2 + $0x40] sm:$0x3]
    %v287 = vld [vmem:[#allocation2 + $0x48] sm:$0xff]
    %v288 = vld [vmem:[#allocation2 + $0x50] sm:$0xff]
    %v289 = vld [vmem:[#allocation2 + $0x58] sm:$0x3]
    %v290 = vld [vmem:[#allocation2 + $0x60] sm:$0xff]
    %v291 = vld [vmem:[#allocation2 + $0x68] sm:$0xff]
    %v292 = vld [vmem:[#allocation2 + $0x70] sm:$0x3]
    %v293 = vld [vmem:[#allocation2 + $0x78] sm:$0xff]
    %v294 = vld [vmem:[#allocation2 + $0x80] sm:$0xff]
    %v295 = vld [vmem:[#allocation2 + $0x88] sm:$0x3]
    %v296 = vld [vmem:[#allocation2 + $0x90] sm:$0xff]
    %v297 = vld [vmem:[#allocation2 + $0x98] sm:$0xff]
    %v298 = vld [vmem:[#allocation2 + $0xa0] sm:$0x3]
    %v299 = vld [vmem:[#allocation2 + $0xa8] sm:$0xff]
    %v300 = vld [vmem:[#allocation2 + $0xb0] sm:$0xff]
    %v301 = vld [vmem:[#allocation2 + $0xb8] sm:$0x3]
    %v302 = vld [vmem:[#allocation2 + $0xc0] sm:$0xff]
    %v303 = vld [vmem:[#allocation2 + $0xc8] sm:$0xff]
    %v304 = vld [vmem:[#allocation2 + $0xd0] sm:$0x3]
    %v305 = vld [vmem:[#allocation2 + $0xd8] sm:$0xff]
    %v306 = vld [vmem:[#allocation2 + $0xe0] sm:$0xff]
    %v307 = vld [vmem:[#allocation2 + $0xe8] sm:$0x3]
    %v308 = vld [vmem:[#allocation2 + $0xf0] sm:$0xff]
    %v309 = vld [vmem:[#allocation2 + $0xf8] sm:$0xff]
    %v310 = vld [vmem:[#allocation2 + $0x100] sm:$0x3]
    %v311 = vld [vmem:[#allocation2 + $0x108] sm:$0xff]
    %v312 = vld [vmem:[#allocation2 + $0x110] sm:$0xff]
    %v313 = vld [vmem:[#allocation2 + $0x118] sm:$0x3]
    %v314 = vld [vmem:[#allocation2 + $0x120] sm:$0xff]
    %v315 = vld [vmem:[#allocation2 + $0x128] sm:$0xff]
    %v316 = vld [vmem:[#allocation2 + $0x130] sm:$0x3]
    %v317 = vld [vmem:[#allocation2 + $0x138] sm:$0xff]
    %v318 = vld [vmem:[#allocation2 + $0x140] sm:$0xff]
    %v319 = vld [vmem:[#allocation2 + $0x148] sm:$0x3]
    %v320 = vld [vmem:[#allocation2 + $0x150] sm:$0xff]
    %v321 = vld [vmem:[#allocation2 + $0x158] sm:$0xff]
    %v322 = vld [vmem:[#allocation2 + $0x160] sm:$0x3]
    %v323 = vld [vmem:[#allocation2 + $0x168] sm:$0xff]
    %v324 = vld [vmem:[#allocation2 + $0x170] sm:$0xff]
    %v325 = vld [vmem:[#allocation2 + $0x178] sm:$0x3]
    %v326 = vld [vmem:[#allocation2 + $0x180] sm:$0xff]
    %v327 = vld [vmem:[#allocation2 + $0x188] sm:$0xff]
    %v328 = vld [vmem:[#allocation2 + $0x190] sm:$0x3]
    %v329 = vld [vmem:[#allocation2 + $0x198] sm:$0xff]
    %v330 = vld [vmem:[#allocation2 + $0x1a0] sm:$0xff]
    %v331 = vld [vmem:[#allocation2 + $0x1a8] sm:$0x3]
    %v332 = vld [vmem:[#allocation2 + $0x1b0] sm:$0xff]
    %v333 = vld [vmem:[#allocation2 + $0x1b8] sm:$0xff]
    %v334 = vld [vmem:[#allocation2 + $0x1c0] sm:$0x3]
    %v335 = vld [vmem:[#allocation2 + $0x1c8] sm:$0xff]
    %v336 = vld [vmem:[#allocation2 + $0x1d0] sm:$0xff]
    %v337 = vld [vmem:[#allocation2 + $0x1d8] sm:$0x3]
    %v338 = vld [vmem:[#allocation2 + $0x1e0] sm:$0xff]
    %v339 = vld [vmem:[#allocation2 + $0x1e8] sm:$0xff]
    %v340 = vld [vmem:[#allocation2 + $0x1f0] sm:$0x3]
    %v341 = vld [vmem:[#allocation2 + $0x1f8] sm:$0xff]
    %v342 = vld [vmem:[#allocation2 + $0x200] sm:$0xff]
    %v343 = vld [vmem:[#allocation2 + $0x208] sm:$0x3]
    %v344 = vld [vmem:[#allocation2 + $0x210] sm:$0xff]
    %v345 = vld [vmem:[#allocation2 + $0x218] sm:$0xff]
    %v346 = vld [vmem:[#allocation2 + $0x220] sm:$0x3]
    %v347 = vld [vmem:[#allocation2 + $0x228] sm:$0xff]
    %v348 = vld [vmem:[#allocation2 + $0x230] sm:$0xff]
    %v349 = vld [vmem:[#allocation2 + $0x238] sm:$0x3]
    %v350 = vld [vmem:[#allocation2 + $0x240] sm:$0xff]
    %v351 = vld [vmem:[#allocation2 + $0x248] sm:$0xff]
    %v352 = vld [vmem:[#allocation2 + $0x250] sm:$0x3]
    %v353 = vld [vmem:[#allocation2 + $0x258] sm:$0xff]
    %v354 = vld [vmem:[#allocation2 + $0x260] sm:$0xff]
    %v355 = vld [vmem:[#allocation2 + $0x268] sm:$0x3]
    %v356 = vld [vmem:[#allocation2 + $0x270] sm:$0xff]
    %v357 = vld [vmem:[#allocation2 + $0x278] sm:$0xff]
    %v358 = vld [vmem:[#allocation2 + $0x280] sm:$0x3]
    %v359 = vld [vmem:[#allocation2 + $0x288] sm:$0xff]
    %v360 = vld [vmem:[#allocation2 + $0x290] sm:$0xff]
    %v361 = vld [vmem:[#allocation2 + $0x298] sm:$0x3]
    %v362 = vld [vmem:[#allocation2 + $0x2a0] sm:$0xff]
    %v363 = vld [vmem:[#allocation2 + $0x2a8] sm:$0xff]
    %v364 = vld [vmem:[#allocation2 + $0x2b0] sm:$0x3]
    %v365 = vld [vmem:[#allocation2 + $0x2b8] sm:$0xff]
    %v366 = vld [vmem:[#allocation2 + $0x2c0] sm:$0xff]
    %v367 = vld [vmem:[#allocation2 + $0x2c8] sm:$0x3]
    %v368 = vld [vmem:[#allocation2 + $0x2d0] sm:$0xff]
    %v369 = vld [vmem:[#allocation2 + $0x2d8] sm:$0xff]
    %v370 = vld [vmem:[#allocation2 + $0x2e0] sm:$0x3]
    %v371 = vld [vmem:[#allocation2 + $0x2e8] sm:$0xff]
    %v372 = vld [vmem:[#allocation2 + $0x2f0] sm:$0xff]
    %v373 = vld [vmem:[#allocation2 + $0x2f8] sm:$0x3]
    %v374 = vld [vmem:[#allocation2 + $0x300] sm:$0xff]
    %v375 = vld [vmem:[#allocation2 + $0x308] sm:$0xff]
    %v376 = vld [vmem:[#allocation2 + $0x310] sm:$0x3]
    %v377 = vld [vmem:[#allocation2 + $0x318] sm:$0xff]
    %v378 = vld [vmem:[#allocation2 + $0x320] sm:$0xff]
    %v379 = vld [vmem:[#allocation2 + $0x328] sm:$0x3]
    %v380 = vld [vmem:[#allocation2 + $0x330] sm:$0xff]
    %v381 = vld [vmem:[#allocation2 + $0x338] sm:$0xff]
    %v382 = vld [vmem:[#allocation2 + $0x340] sm:$0x3]
    %v383 = vld [vmem:[#allocation2 + $0x348] sm:$0xff]
    %v384 = vld [vmem:[#allocation2 + $0x350] sm:$0xff]
    %v385 = vld [vmem:[#allocation2 + $0x358] sm:$0x3]
    %vm482 = vcmask 1046528
    %v483 = vrot.slane %v278, 1
    %v484 = vrot.slane %v279, 1
    %v485 = vsel %vm482, %v483, %v484
    %v486 = vrot.slane %v280, 1
    %v487 = vsel %vm482, %v484, %v486
    %v488 = vrot.slane %v281, 1
    %v489 = vrot.slane %v282, 1
    %v490 = vsel %vm482, %v488, %v489
    %v491 = vrot.slane %v283, 1
    %v492 = vsel %vm482, %v489, %v491
    %v493 = vrot.slane %v284, 1
    %v494 = vrot.slane %v285, 1
    %v495 = vsel %vm482, %v493, %v494
    %v496 = vrot.slane %v286, 1
    %v497 = vsel %vm482, %v494, %v496
    %v498 = vrot.slane %v287, 1
    %v499 = vrot.slane %v288, 1
    %v500 = vsel %vm482, %v498, %v499
    %v501 = vrot.slane %v289, 1
    %v502 = vsel %vm482, %v499, %v501
    %v503 = vrot.slane %v290, 1
    %v504 = vrot.slane %v291, 1
    %v505 = vsel %vm482, %v503, %v504
    %v506 = vrot.slane %v292, 1
    %v507 = vsel %vm482, %v504, %v506
    %v508 = vrot.slane %v293, 1
    %v509 = vrot.slane %v294, 1
    %v510 = vsel %vm482, %v508, %v509
    %v511 = vrot.slane %v295, 1
    %v512 = vsel %vm482, %v509, %v511
    %v513 = vrot.slane %v296, 1
    %v514 = vrot.slane %v297, 1
    %v515 = vsel %vm482, %v513, %v514
    %v516 = vrot.slane %v298, 1
    %v517 = vsel %vm482, %v514, %v516
    %v518 = vrot.slane %v299, 1
    %v519 = vrot.slane %v300, 1
    %v520 = vsel %vm482, %v518, %v519
    %v521 = vrot.slane %v301, 1
    %v522 = vsel %vm482, %v519, %v521
    %v523 = vrot.slane %v302, 1
    %v524 = vrot.slane %v303, 1
    %v525 = vsel %vm482, %v523, %v524
    %v526 = vrot.slane %v304, 1
    %v527 = vsel %vm482, %v524, %v526
    %v528 = vrot.slane %v305, 1
    %v529 = vrot.slane %v306, 1
    %v530 = vsel %vm482, %v528, %v529
    %v531 = vrot.slane %v307, 1
    %v532 = vsel %vm482, %v529, %v531
    %v533 = vrot.slane %v308, 1
    %v534 = vrot.slane %v309, 1
    %v535 = vsel %vm482, %v533, %v534
    %v536 = vrot.slane %v310, 1
    %v537 = vsel %vm482, %v534, %v536
    %v538 = vrot.slane %v311, 1
    %v539 = vrot.slane %v312, 1
    %v540 = vsel %vm482, %v538, %v539
    %v541 = vrot.slane %v313, 1
    %v542 = vsel %vm482, %v539, %v541
    %v543 = vrot.slane %v314, 1
    %v544 = vrot.slane %v315, 1
    %v545 = vsel %vm482, %v543, %v544
    %v546 = vrot.slane %v316, 1
    %v547 = vsel %vm482, %v544, %v546
    %v548 = vrot.slane %v317, 1
    %v549 = vrot.slane %v318, 1
    %v550 = vsel %vm482, %v548, %v549
    %v551 = vrot.slane %v319, 1
    %v552 = vsel %vm482, %v549, %v551
    %v553 = vrot.slane %v320, 1
    %v554 = vrot.slane %v321, 1
    %v555 = vsel %vm482, %v553, %v554
    %v556 = vrot.slane %v322, 1
    %v557 = vsel %vm482, %v554, %v556
    %v558 = vrot.slane %v323, 1
    %v559 = vrot.slane %v324, 1
    %v560 = vsel %vm482, %v558, %v559
    %v561 = vrot.slane %v325, 1
    %v562 = vsel %vm482, %v559, %v561
    %v563 = vrot.slane %v332, 1
    %v564 = vrot.slane %v333, 1
    %v565 = vsel %vm482, %v563, %v564
    %v566 = vrot.slane %v334, 1
    %v567 = vsel %vm482, %v564, %v566
    %v568 = vrot.slane %v335, 1
    %v569 = vrot.slane %v336, 1
    %v570 = vsel %vm482, %v568, %v569
    %v571 = vrot.slane %v337, 1
    %v572 = vsel %vm482, %v569, %v571
    %v573 = vrot.slane %v338, 1
    %v574 = vrot.slane %v339, 1
    %v575 = vsel %vm482, %v573, %v574
    %v576 = vrot.slane %v340, 1
    %v577 = vsel %vm482, %v574, %v576
    %v578 = vrot.slane %v341, 1
    %v579 = vrot.slane %v342, 1
    %v580 = vsel %vm482, %v578, %v579
    %v581 = vrot.slane %v343, 1
    %v582 = vsel %vm482, %v579, %v581
    %v583 = vrot.slane %v344, 1
    %v584 = vrot.slane %v345, 1
    %v585 = vsel %vm482, %v583, %v584
    %v586 = vrot.slane %v346, 1
    %v587 = vsel %vm482, %v584, %v586
    %v588 = vrot.slane %v347, 1
    %v589 = vrot.slane %v348, 1
    %v590 = vsel %vm482, %v588, %v589
    %v591 = vrot.slane %v349, 1
    %v592 = vsel %vm482, %v589, %v591
    %v593 = vrot.slane %v350, 1
    %v594 = vrot.slane %v351, 1
    %v595 = vsel %vm482, %v593, %v594
    %v596 = vrot.slane %v352, 1
    %v597 = vsel %vm482, %v594, %v596
    %v598 = vrot.slane %v353, 1
    %v599 = vrot.slane %v354, 1
    %v600 = vsel %vm482, %v598, %v599
    %v601 = vrot.slane %v355, 1
    %v602 = vsel %vm482, %v599, %v601
    %v603 = vrot.slane %v356, 1
    %v604 = vrot.slane %v357, 1
    %v605 = vsel %vm482, %v603, %v604
    %v606 = vrot.slane %v358, 1
    %v607 = vsel %vm482, %v604, %v606
    %v608 = vrot.slane %v359, 1
    %v609 = vrot.slane %v360, 1
    %v610 = vsel %vm482, %v608, %v609
    %v611 = vrot.slane %v361, 1
    %v612 = vsel %vm482, %v609, %v611
    %v613 = vrot.slane %v362, 1
    %v614 = vrot.slane %v363, 1
    %v615 = vsel %vm482, %v613, %v614
    %v616 = vrot.slane %v364, 1
    %v617 = vsel %vm482, %v614, %v616
    %v618 = vrot.slane %v365, 1
    %v619 = vrot.slane %v366, 1
    %v620 = vsel %vm482, %v618, %v619
    %v621 = vrot.slane %v367, 1
    %v622 = vsel %vm482, %v619, %v621
    %v623 = vrot.slane %v368, 1
    %v624 = vrot.slane %v369, 1
    %v625 = vsel %vm482, %v623, %v624
    %v626 = vrot.slane %v370, 1
    %v627 = vsel %vm482, %v624, %v626
    %v628 = vrot.slane %v371, 1
    %v629 = vrot.slane %v372, 1
    %v630 = vsel %vm482, %v628, %v629
    %v631 = vrot.slane %v373, 1
    %v632 = vsel %vm482, %v629, %v631
    %v633 = vrot.slane %v374, 1
    %v634 = vrot.slane %v375, 1
    %v635 = vsel %vm482, %v633, %v634
    %v636 = vrot.slane %v376, 1
    %v637 = vsel %vm482, %v634, %v636
    %v638 = vrot.slane %v377, 1
    %v639 = vrot.slane %v378, 1
    %v640 = vsel %vm482, %v638, %v639
    %v641 = vrot.slane %v379, 1
    %v642 = vsel %vm482, %v639, %v641
    %vm643 = vcmask 1045504
    %v644 = vrot.slane %v278, 2
    %v645 = vrot.slane %v279, 2
    %v646 = vsel %vm643, %v644, %v645
    %v647 = vrot.slane %v280, 2
    %v648 = vsel %vm643, %v645, %v647
    %v649 = vrot.slane %v281, 2
    %v650 = vrot.slane %v282, 2
    %v651 = vsel %vm643, %v649, %v650
    %v652 = vrot.slane %v283, 2
    %v653 = vsel %vm643, %v650, %v652
    %v654 = vrot.slane %v284, 2
    %v655 = vrot.slane %v285, 2
    %v656 = vsel %vm643, %v654, %v655
    %v657 = vrot.slane %v286, 2
    %v658 = vsel %vm643, %v655, %v657
    %v659 = vrot.slane %v287, 2
    %v660 = vrot.slane %v288, 2
    %v661 = vsel %vm643, %v659, %v660
    %v662 = vrot.slane %v289, 2
    %v663 = vsel %vm643, %v660, %v662
    %v664 = vrot.slane %v290, 2
    %v665 = vrot.slane %v291, 2
    %v666 = vsel %vm643, %v664, %v665
    %v667 = vrot.slane %v292, 2
    %v668 = vsel %vm643, %v665, %v667
    %v669 = vrot.slane %v293, 2
    %v670 = vrot.slane %v294, 2
    %v671 = vsel %vm643, %v669, %v670
    %v672 = vrot.slane %v295, 2
    %v673 = vsel %vm643, %v670, %v672
    %v674 = vrot.slane %v296, 2
    %v675 = vrot.slane %v297, 2
    %v676 = vsel %vm643, %v674, %v675
    %v677 = vrot.slane %v298, 2
    %v678 = vsel %vm643, %v675, %v677
    %v679 = vrot.slane %v299, 2
    %v680 = vrot.slane %v300, 2
    %v681 = vsel %vm643, %v679, %v680
    %v682 = vrot.slane %v301, 2
    %v683 = vsel %vm643, %v680, %v682
    %v684 = vrot.slane %v302, 2
    %v685 = vrot.slane %v303, 2
    %v686 = vsel %vm643, %v684, %v685
    %v687 = vrot.slane %v304, 2
    %v688 = vsel %vm643, %v685, %v687
    %v689 = vrot.slane %v305, 2
    %v690 = vrot.slane %v306, 2
    %v691 = vsel %vm643, %v689, %v690
    %v692 = vrot.slane %v307, 2
    %v693 = vsel %vm643, %v690, %v692
    %v694 = vrot.slane %v308, 2
    %v695 = vrot.slane %v309, 2
    %v696 = vsel %vm643, %v694, %v695
    %v697 = vrot.slane %v310, 2
    %v698 = vsel %vm643, %v695, %v697
    %v699 = vrot.slane %v311, 2
    %v700 = vrot.slane %v312, 2
    %v701 = vsel %vm643, %v699, %v700
    %v702 = vrot.slane %v313, 2
    %v703 = vsel %vm643, %v700, %v702
    %v704 = vrot.slane %v314, 2
    %v705 = vrot.slane %v315, 2
    %v706 = vsel %vm643, %v704, %v705
    %v707 = vrot.slane %v316, 2
    %v708 = vsel %vm643, %v705, %v707
    %v709 = vrot.slane %v317, 2
    %v710 = vrot.slane %v318, 2
    %v711 = vsel %vm643, %v709, %v710
    %v712 = vrot.slane %v319, 2
    %v713 = vsel %vm643, %v710, %v712
    %v714 = vrot.slane %v320, 2
    %v715 = vrot.slane %v321, 2
    %v716 = vsel %vm643, %v714, %v715
    %v717 = vrot.slane %v322, 2
    %v718 = vsel %vm643, %v715, %v717
    %v719 = vrot.slane %v323, 2
    %v720 = vrot.slane %v324, 2
    %v721 = vsel %vm643, %v719, %v720
    %v722 = vrot.slane %v325, 2
    %v723 = vsel %vm643, %v720, %v722
    %v724 = vrot.slane %v332, 2
    %v725 = vrot.slane %v333, 2
    %v726 = vsel %vm643, %v724, %v725
    %v727 = vrot.slane %v334, 2
    %v728 = vsel %vm643, %v725, %v727
    %v729 = vrot.slane %v335, 2
    %v730 = vrot.slane %v336, 2
    %v731 = vsel %vm643, %v729, %v730
    %v732 = vrot.slane %v337, 2
    %v733 = vsel %vm643, %v730, %v732
    %v734 = vrot.slane %v338, 2
    %v735 = vrot.slane %v339, 2
    %v736 = vsel %vm643, %v734, %v735
    %v737 = vrot.slane %v340, 2
    %v738 = vsel %vm643, %v735, %v737
    %v739 = vrot.slane %v341, 2
    %v740 = vrot.slane %v342, 2
    %v741 = vsel %vm643, %v739, %v740
    %v742 = vrot.slane %v343, 2
    %v743 = vsel %vm643, %v740, %v742
    %v744 = vrot.slane %v344, 2
    %v745 = vrot.slane %v345, 2
    %v746 = vsel %vm643, %v744, %v745
    %v747 = vrot.slane %v346, 2
    %v748 = vsel %vm643, %v745, %v747
    %v749 = vrot.slane %v347, 2
    %v750 = vrot.slane %v348, 2
    %v751 = vsel %vm643, %v749, %v750
    %v752 = vrot.slane %v349, 2
    %v753 = vsel %vm643, %v750, %v752
    %v754 = vrot.slane %v350, 2
    %v755 = vrot.slane %v351, 2
    %v756 = vsel %vm643, %v754, %v755
    %v757 = vrot.slane %v352, 2
    %v758 = vsel %vm643, %v755, %v757
    %v759 = vrot.slane %v353, 2
    %v760 = vrot.slane %v354, 2
    %v761 = vsel %vm643, %v759, %v760
    %v762 = vrot.slane %v355, 2
    %v763 = vsel %vm643, %v760, %v762
    %v764 = vrot.slane %v356, 2
    %v765 = vrot.slane %v357, 2
    %v766 = vsel %vm643, %v764, %v765
    %v767 = vrot.slane %v358, 2
    %v768 = vsel %vm643, %v765, %v767
    %v769 = vrot.slane %v359, 2
    %v770 = vrot.slane %v360, 2
    %v771 = vsel %vm643, %v769, %v770
    %v772 = vrot.slane %v361, 2
    %v773 = vsel %vm643, %v770, %v772
    %v774 = vrot.slane %v362, 2
    %v775 = vrot.slane %v363, 2
    %v776 = vsel %vm643, %v774, %v775
    %v777 = vrot.slane %v364, 2
    %v778 = vsel %vm643, %v775, %v777
    %v779 = vrot.slane %v365, 2
    %v780 = vrot.slane %v366, 2
    %v781 = vsel %vm643, %v779, %v780
    %v782 = vrot.slane %v367, 2
    %v783 = vsel %vm643, %v780, %v782
    %v784 = vrot.slane %v368, 2
    %v785 = vrot.slane %v369, 2
    %v786 = vsel %vm643, %v784, %v785
    %v787 = vrot.slane %v370, 2
    %v788 = vsel %vm643, %v785, %v787
    %v789 = vrot.slane %v371, 2
    %v790 = vrot.slane %v372, 2
    %v791 = vsel %vm643, %v789, %v790
    %v792 = vrot.slane %v373, 2
    %v793 = vsel %vm643, %v790, %v792
    %v794 = vrot.slane %v374, 2
    %v795 = vrot.slane %v375, 2
    %v796 = vsel %vm643, %v794, %v795
    %v797 = vrot.slane %v376, 2
    %v798 = vsel %vm643, %v795, %v797
    %v799 = vrot.slane %v377, 2
    %v800 = vrot.slane %v378, 2
    %v801 = vsel %vm643, %v799, %v800
    %v802 = vrot.slane %v379, 2
    %v803 = vsel %vm643, %v800, %v802
    %v810 = vrot.slane %v326, 1
    %v811 = vrot.slane %v327, 1
    %v812 = vsel %vm482, %v810, %v811
    %v813 = vrot.slane %v328, 1
    %v814 = vsel %vm482, %v811, %v813
    %v815 = vrot.slane %v380, 1
    %v816 = vrot.slane %v381, 1
    %v817 = vsel %vm482, %v815, %v816
    %v818 = vrot.slane %v382, 1
    %v819 = vsel %vm482, %v816, %v818
    %v820 = vrot.slane %v326, 2
    %v821 = vrot.slane %v327, 2
    %v822 = vsel %vm643, %v820, %v821
    %v823 = vrot.slane %v328, 2
    %v824 = vsel %vm643, %v821, %v823
    %v825 = vrot.slane %v380, 2
    %v826 = vrot.slane %v381, 2
    %v827 = vsel %vm643, %v825, %v826
    %v828 = vrot.slane %v382, 2
    %v829 = vsel %vm643, %v826, %v828
    %v836 = vrot.slane %v329, 1
    %v837 = vrot.slane %v330, 1
    %v838 = vsel %vm482, %v836, %v837
    %v839 = vrot.slane %v331, 1
    %v840 = vsel %vm482, %v837, %v839
    %v841 = vrot.slane %v383, 1
    %v842 = vrot.slane %v384, 1
    %v843 = vsel %vm482, %v841, %v842
    %v844 = vrot.slane %v385, 1
    %v845 = vsel %vm482, %v842, %v844
    %v846 = vrot.slane %v329, 2
    %v847 = vrot.slane %v330, 2
    %v848 = vsel %vm643, %v846, %v847
    %v849 = vrot.slane %v331, 2
    %v850 = vsel %vm643, %v847, %v849
    %v851 = vrot.slane %v383, 2
    %v852 = vrot.slane %v384, 2
    %v853 = vsel %vm643, %v851, %v852
    %v854 = vrot.slane %v385, 2
    %v855 = vsel %vm643, %v852, %v854
    %856 = vrot.lane.b32.xlu0 %v485, 3
    %v857 = vpop.permute.xlu0 %856
    %858 = vrot.lane.b32.xlu0 %v487, 3
    %v859 = vpop.permute.xlu0 %858
    %860 = vrot.lane.b32.xlu0 %v490, 3
    %v861 = vpop.permute.xlu0 %860
    %862 = vrot.lane.b32.xlu0 %v492, 3
    %v863 = vpop.permute.xlu0 %862
    %864 = vrot.lane.b32.xlu0 %v495, 3
    %v865 = vpop.permute.xlu0 %864
    %866 = vrot.lane.b32.xlu0 %v497, 3
    %v867 = vpop.permute.xlu0 %866
    %868 = vrot.lane.b32.xlu0 %v500, 3
    %v869 = vpop.permute.xlu0 %868
    %870 = vrot.lane.b32.xlu0 %v502, 3
    %v871 = vpop.permute.xlu0 %870
    %872 = vrot.lane.b32.xlu0 %v505, 3
    %v873 = vpop.permute.xlu0 %872
    %874 = vrot.lane.b32.xlu0 %v507, 3
    %v875 = vpop.permute.xlu0 %874
    %876 = vrot.lane.b32.xlu0 %v510, 3
    %v877 = vpop.permute.xlu0 %876
    %878 = vrot.lane.b32.xlu0 %v512, 3
    %v879 = vpop.permute.xlu0 %878
    %880 = vrot.lane.b32.xlu0 %v515, 3
    %v881 = vpop.permute.xlu0 %880
    %882 = vrot.lane.b32.xlu0 %v517, 3
    %v883 = vpop.permute.xlu0 %882
    %884 = vrot.lane.b32.xlu0 %v520, 3
    %v885 = vpop.permute.xlu0 %884
    %886 = vrot.lane.b32.xlu0 %v522, 3
    %v887 = vpop.permute.xlu0 %886
    %888 = vrot.lane.b32.xlu0 %v525, 3
    %v889 = vpop.permute.xlu0 %888
    %890 = vrot.lane.b32.xlu0 %v527, 3
    %v891 = vpop.permute.xlu0 %890
    %892 = vrot.lane.b32.xlu0 %v530, 3
    %v893 = vpop.permute.xlu0 %892
    %894 = vrot.lane.b32.xlu0 %v532, 3
    %v895 = vpop.permute.xlu0 %894
    %896 = vrot.lane.b32.xlu0 %v535, 3
    %v897 = vpop.permute.xlu0 %896
    %898 = vrot.lane.b32.xlu0 %v537, 3
    %v899 = vpop.permute.xlu0 %898
    %900 = vrot.lane.b32.xlu0 %v540, 3
    %v901 = vpop.permute.xlu0 %900
    %902 = vrot.lane.b32.xlu0 %v542, 3
    %v903 = vpop.permute.xlu0 %902
    %904 = vrot.lane.b32.xlu0 %v545, 3
    %v905 = vpop.permute.xlu0 %904
    %906 = vrot.lane.b32.xlu0 %v547, 3
    %v907 = vpop.permute.xlu0 %906
    %908 = vrot.lane.b32.xlu0 %v550, 3
    %v909 = vpop.permute.xlu0 %908
    %910 = vrot.lane.b32.xlu0 %v552, 3
    %v911 = vpop.permute.xlu0 %910
    %912 = vrot.lane.b32.xlu0 %v555, 3
    %v913 = vpop.permute.xlu0 %912
    %914 = vrot.lane.b32.xlu0 %v557, 3
    %v915 = vpop.permute.xlu0 %914
    %916 = vrot.lane.b32.xlu0 %v560, 3
    %v917 = vpop.permute.xlu0 %916
    %918 = vrot.lane.b32.xlu0 %v562, 3
    %v919 = vpop.permute.xlu0 %918
    %920 = vrot.lane.b32.xlu0 %v565, 3
    %v921 = vpop.permute.xlu0 %920
    %922 = vrot.lane.b32.xlu0 %v567, 3
    %v923 = vpop.permute.xlu0 %922
    %924 = vrot.lane.b32.xlu0 %v570, 3
    %v925 = vpop.permute.xlu0 %924
    %926 = vrot.lane.b32.xlu0 %v572, 3
    %v927 = vpop.permute.xlu0 %926
    %928 = vrot.lane.b32.xlu0 %v575, 3
    %v929 = vpop.permute.xlu0 %928
    %930 = vrot.lane.b32.xlu0 %v577, 3
    %v931 = vpop.permute.xlu0 %930
    %932 = vrot.lane.b32.xlu0 %v580, 3
    %v933 = vpop.permute.xlu0 %932
    %934 = vrot.lane.b32.xlu0 %v582, 3
    %v935 = vpop.permute.xlu0 %934
    %936 = vrot.lane.b32.xlu0 %v585, 3
    %v937 = vpop.permute.xlu0 %936
    %938 = vrot.lane.b32.xlu0 %v587, 3
    %v939 = vpop.permute.xlu0 %938
    %940 = vrot.lane.b32.xlu0 %v590, 3
    %v941 = vpop.permute.xlu0 %940
    %942 = vrot.lane.b32.xlu0 %v592, 3
    %v943 = vpop.permute.xlu0 %942
    %944 = vrot.lane.b32.xlu0 %v595, 3
    %v945 = vpop.permute.xlu0 %944
    %946 = vrot.lane.b32.xlu0 %v597, 3
    %v947 = vpop.permute.xlu0 %946
    %948 = vrot.lane.b32.xlu0 %v600, 3
    %v949 = vpop.permute.xlu0 %948
    %950 = vrot.lane.b32.xlu0 %v602, 3
    %v951 = vpop.permute.xlu0 %950
    %952 = vrot.lane.b32.xlu0 %v605, 3
    %v953 = vpop.permute.xlu0 %952
    %954 = vrot.lane.b32.xlu0 %v607, 3
    %v955 = vpop.permute.xlu0 %954
    %956 = vrot.lane.b32.xlu0 %v610, 3
    %v957 = vpop.permute.xlu0 %956
    %958 = vrot.lane.b32.xlu0 %v612, 3
    %v959 = vpop.permute.xlu0 %958
    %960 = vrot.lane.b32.xlu0 %v615, 3
    %v961 = vpop.permute.xlu0 %960
    %962 = vrot.lane.b32.xlu0 %v617, 3
    %v963 = vpop.permute.xlu0 %962
    %964 = vrot.lane.b32.xlu0 %v620, 3
    %v965 = vpop.permute.xlu0 %964
    %966 = vrot.lane.b32.xlu0 %v622, 3
    %v967 = vpop.permute.xlu0 %966
    %968 = vrot.lane.b32.xlu0 %v625, 3
    %v969 = vpop.permute.xlu0 %968
    %970 = vrot.lane.b32.xlu0 %v627, 3
    %v971 = vpop.permute.xlu0 %970
    %972 = vrot.lane.b32.xlu0 %v630, 3
    %v973 = vpop.permute.xlu0 %972
    %974 = vrot.lane.b32.xlu0 %v632, 3
    %v975 = vpop.permute.xlu0 %974
    %976 = vrot.lane.b32.xlu0 %v635, 3
    %v977 = vpop.permute.xlu0 %976
    %978 = vrot.lane.b32.xlu0 %v637, 3
    %v979 = vpop.permute.xlu0 %978
    %980 = vrot.lane.b32.xlu0 %v640, 3
    %v981 = vpop.permute.xlu0 %980
    %982 = vrot.lane.b32.xlu0 %v642, 3
    %v983 = vpop.permute.xlu0 %982
    %1048 = vrot.lane.b32.xlu0 %v646, 6
    %v1049 = vpop.permute.xlu0 %1048
    %1050 = vrot.lane.b32.xlu0 %v648, 6
    %v1051 = vpop.permute.xlu0 %1050
    %1052 = vrot.lane.b32.xlu0 %v651, 6
    %v1053 = vpop.permute.xlu0 %1052
    %1054 = vrot.lane.b32.xlu0 %v653, 6
    %v1055 = vpop.permute.xlu0 %1054
    %1056 = vrot.lane.b32.xlu0 %v656, 6
    %v1057 = vpop.permute.xlu0 %1056
    %1058 = vrot.lane.b32.xlu0 %v658, 6
    %v1059 = vpop.permute.xlu0 %1058
    %1060 = vrot.lane.b32.xlu0 %v661, 6
    %v1061 = vpop.permute.xlu0 %1060
    %1062 = vrot.lane.b32.xlu0 %v663, 6
    %v1063 = vpop.permute.xlu0 %1062
    %1064 = vrot.lane.b32.xlu0 %v666, 6
    %v1065 = vpop.permute.xlu0 %1064
    %1066 = vrot.lane.b32.xlu0 %v668, 6
    %v1067 = vpop.permute.xlu0 %1066
    %1068 = vrot.lane.b32.xlu0 %v671, 6
    %v1069 = vpop.permute.xlu0 %1068
    %1070 = vrot.lane.b32.xlu0 %v673, 6
    %v1071 = vpop.permute.xlu0 %1070
    %1072 = vrot.lane.b32.xlu0 %v676, 6
    %v1073 = vpop.permute.xlu0 %1072
    %1074 = vrot.lane.b32.xlu0 %v678, 6
    %v1075 = vpop.permute.xlu0 %1074
    %1076 = vrot.lane.b32.xlu0 %v681, 6
    %v1077 = vpop.permute.xlu0 %1076
    %1078 = vrot.lane.b32.xlu0 %v683, 6
    %v1079 = vpop.permute.xlu0 %1078
    %1080 = vrot.lane.b32.xlu0 %v686, 6
    %v1081 = vpop.permute.xlu0 %1080
    %1082 = vrot.lane.b32.xlu0 %v688, 6
    %v1083 = vpop.permute.xlu0 %1082
    %1084 = vrot.lane.b32.xlu0 %v691, 6
    %v1085 = vpop.permute.xlu0 %1084
    %1086 = vrot.lane.b32.xlu0 %v693, 6
    %v1087 = vpop.permute.xlu0 %1086
    %1088 = vrot.lane.b32.xlu0 %v696, 6
    %v1089 = vpop.permute.xlu0 %1088
    %1090 = vrot.lane.b32.xlu0 %v698, 6
    %v1091 = vpop.permute.xlu0 %1090
    %1092 = vrot.lane.b32.xlu0 %v701, 6
    %v1093 = vpop.permute.xlu0 %1092
    %1094 = vrot.lane.b32.xlu0 %v703, 6
    %v1095 = vpop.permute.xlu0 %1094
    %1096 = vrot.lane.b32.xlu0 %v706, 6
    %v1097 = vpop.permute.xlu0 %1096
    %1098 = vrot.lane.b32.xlu0 %v708, 6
    %v1099 = vpop.permute.xlu0 %1098
    %1100 = vrot.lane.b32.xlu0 %v711, 6
    %v1101 = vpop.permute.xlu0 %1100
    %1102 = vrot.lane.b32.xlu0 %v713, 6
    %v1103 = vpop.permute.xlu0 %1102
    %1104 = vrot.lane.b32.xlu0 %v716, 6
    %v1105 = vpop.permute.xlu0 %1104
    %1106 = vrot.lane.b32.xlu0 %v718, 6
    %v1107 = vpop.permute.xlu0 %1106
    %1108 = vrot.lane.b32.xlu0 %v721, 6
    %v1109 = vpop.permute.xlu0 %1108
    %1110 = vrot.lane.b32.xlu0 %v723, 6
    %v1111 = vpop.permute.xlu0 %1110
    %1112 = vrot.lane.b32.xlu0 %v726, 6
    %v1113 = vpop.permute.xlu0 %1112
    %1114 = vrot.lane.b32.xlu0 %v728, 6
    %v1115 = vpop.permute.xlu0 %1114
    %1116 = vrot.lane.b32.xlu0 %v731, 6
    %v1117 = vpop.permute.xlu0 %1116
    %1118 = vrot.lane.b32.xlu0 %v733, 6
    %v1119 = vpop.permute.xlu0 %1118
    %1120 = vrot.lane.b32.xlu0 %v736, 6
    %v1121 = vpop.permute.xlu0 %1120
    %1122 = vrot.lane.b32.xlu0 %v738, 6
    %v1123 = vpop.permute.xlu0 %1122
    %1124 = vrot.lane.b32.xlu0 %v741, 6
    %v1125 = vpop.permute.xlu0 %1124
    %1126 = vrot.lane.b32.xlu0 %v743, 6
    %v1127 = vpop.permute.xlu0 %1126
    %1128 = vrot.lane.b32.xlu0 %v746, 6
    %v1129 = vpop.permute.xlu0 %1128
    %1130 = vrot.lane.b32.xlu0 %v748, 6
    %v1131 = vpop.permute.xlu0 %1130
    %1132 = vrot.lane.b32.xlu0 %v751, 6
    %v1133 = vpop.permute.xlu0 %1132
    %1134 = vrot.lane.b32.xlu0 %v753, 6
    %v1135 = vpop.permute.xlu0 %1134
    %1136 = vrot.lane.b32.xlu0 %v756, 6
    %v1137 = vpop.permute.xlu0 %1136
    %1138 = vrot.lane.b32.xlu0 %v758, 6
    %v1139 = vpop.permute.xlu0 %1138
    %1140 = vrot.lane.b32.xlu0 %v761, 6
    %v1141 = vpop.permute.xlu0 %1140
    %1142 = vrot.lane.b32.xlu0 %v763, 6
    %v1143 = vpop.permute.xlu0 %1142
    %1144 = vrot.lane.b32.xlu0 %v766, 6
    %v1145 = vpop.permute.xlu0 %1144
    %1146 = vrot.lane.b32.xlu0 %v768, 6
    %v1147 = vpop.permute.xlu0 %1146
    %1148 = vrot.lane.b32.xlu0 %v771, 6
    %v1149 = vpop.permute.xlu0 %1148
    %1150 = vrot.lane.b32.xlu0 %v773, 6
    %v1151 = vpop.permute.xlu0 %1150
    %1152 = vrot.lane.b32.xlu0 %v776, 6
    %v1153 = vpop.permute.xlu0 %1152
    %1154 = vrot.lane.b32.xlu0 %v778, 6
    %v1155 = vpop.permute.xlu0 %1154
    %1156 = vrot.lane.b32.xlu0 %v781, 6
    %v1157 = vpop.permute.xlu0 %1156
    %1158 = vrot.lane.b32.xlu0 %v783, 6
    %v1159 = vpop.permute.xlu0 %1158
    %1160 = vrot.lane.b32.xlu0 %v786, 6
    %v1161 = vpop.permute.xlu0 %1160
    %1162 = vrot.lane.b32.xlu0 %v788, 6
    %v1163 = vpop.permute.xlu0 %1162
    %1164 = vrot.lane.b32.xlu0 %v791, 6
    %v1165 = vpop.permute.xlu0 %1164
    %1166 = vrot.lane.b32.xlu0 %v793, 6
    %v1167 = vpop.permute.xlu0 %1166
    %1168 = vrot.lane.b32.xlu0 %v796, 6
    %v1169 = vpop.permute.xlu0 %1168
    %1170 = vrot.lane.b32.xlu0 %v798, 6
    %v1171 = vpop.permute.xlu0 %1170
    %1172 = vrot.lane.b32.xlu0 %v801, 6
    %v1173 = vpop.permute.xlu0 %1172
    %1174 = vrot.lane.b32.xlu0 %v803, 6
    %v1175 = vpop.permute.xlu0 %1174
    %1240 = vrot.lane.b32.xlu0 %v281, 9
    %v1241 = vpop.permute.xlu0 %1240
    %1242 = vrot.lane.b32.xlu0 %v282, 9
    %v1243 = vpop.permute.xlu0 %1242
    %1244 = vrot.lane.b32.xlu0 %v284, 9
    %v1245 = vpop.permute.xlu0 %1244
    %1246 = vrot.lane.b32.xlu0 %v285, 9
    %v1247 = vpop.permute.xlu0 %1246
    %1248 = vrot.lane.b32.xlu0 %v287, 9
    %v1249 = vpop.permute.xlu0 %1248
    %1250 = vrot.lane.b32.xlu0 %v288, 9
    %v1251 = vpop.permute.xlu0 %1250
    %1252 = vrot.lane.b32.xlu0 %v290, 9
    %v1253 = vpop.permute.xlu0 %1252
    %1254 = vrot.lane.b32.xlu0 %v291, 9
    %v1255 = vpop.permute.xlu0 %1254
    %1256 = vrot.lane.b32.xlu0 %v293, 9
    %v1257 = vpop.permute.xlu0 %1256
    %1258 = vrot.lane.b32.xlu0 %v294, 9
    %v1259 = vpop.permute.xlu0 %1258
    %1260 = vrot.lane.b32.xlu0 %v296, 9
    %v1261 = vpop.permute.xlu0 %1260
    %1262 = vrot.lane.b32.xlu0 %v297, 9
    %v1263 = vpop.permute.xlu0 %1262
    %1264 = vrot.lane.b32.xlu0 %v299, 9
    %v1265 = vpop.permute.xlu0 %1264
    %1266 = vrot.lane.b32.xlu0 %v300, 9
    %v1267 = vpop.permute.xlu0 %1266
    %1268 = vrot.lane.b32.xlu0 %v302, 9
    %v1269 = vpop.permute.xlu0 %1268
    %1270 = vrot.lane.b32.xlu0 %v303, 9
    %v1271 = vpop.permute.xlu0 %1270
    %1272 = vrot.lane.b32.xlu0 %v305, 9
    %v1273 = vpop.permute.xlu0 %1272
    %1274 = vrot.lane.b32.xlu0 %v306, 9
    %v1275 = vpop.permute.xlu0 %1274
    %1276 = vrot.lane.b32.xlu0 %v308, 9
    %v1277 = vpop.permute.xlu0 %1276
    %1278 = vrot.lane.b32.xlu0 %v309, 9
    %v1279 = vpop.permute.xlu0 %1278
    %1280 = vrot.lane.b32.xlu0 %v311, 9
    %v1281 = vpop.permute.xlu0 %1280
    %1282 = vrot.lane.b32.xlu0 %v312, 9
    %v1283 = vpop.permute.xlu0 %1282
    %1284 = vrot.lane.b32.xlu0 %v314, 9
    %v1285 = vpop.permute.xlu0 %1284
    %1286 = vrot.lane.b32.xlu0 %v315, 9
    %v1287 = vpop.permute.xlu0 %1286
    %1288 = vrot.lane.b32.xlu0 %v317, 9
    %v1289 = vpop.permute.xlu0 %1288
    %1290 = vrot.lane.b32.xlu0 %v318, 9
    %v1291 = vpop.permute.xlu0 %1290
    %1292 = vrot.lane.b32.xlu0 %v320, 9
    %v1293 = vpop.permute.xlu0 %1292
    %1294 = vrot.lane.b32.xlu0 %v321, 9
    %v1295 = vpop.permute.xlu0 %1294
    %1296 = vrot.lane.b32.xlu0 %v323, 9
    %v1297 = vpop.permute.xlu0 %1296
    %1298 = vrot.lane.b32.xlu0 %v324, 9
    %v1299 = vpop.permute.xlu0 %1298
    %1300 = vrot.lane.b32.xlu0 %v326, 9
    %v1301 = vpop.permute.xlu0 %1300
    %1302 = vrot.lane.b32.xlu0 %v327, 9
    %v1303 = vpop.permute.xlu0 %1302
    %1304 = vrot.lane.b32.xlu0 %v335, 9
    %v1305 = vpop.permute.xlu0 %1304
    %1306 = vrot.lane.b32.xlu0 %v336, 9
    %v1307 = vpop.permute.xlu0 %1306
    %1308 = vrot.lane.b32.xlu0 %v338, 9
    %v1309 = vpop.permute.xlu0 %1308
    %1310 = vrot.lane.b32.xlu0 %v339, 9
    %v1311 = vpop.permute.xlu0 %1310
    %1312 = vrot.lane.b32.xlu0 %v341, 9
    %v1313 = vpop.permute.xlu0 %1312
    %1314 = vrot.lane.b32.xlu0 %v342, 9
    %v1315 = vpop.permute.xlu0 %1314
    %1316 = vrot.lane.b32.xlu0 %v344, 9
    %v1317 = vpop.permute.xlu0 %1316
    %1318 = vrot.lane.b32.xlu0 %v345, 9
    %v1319 = vpop.permute.xlu0 %1318
    %1320 = vrot.lane.b32.xlu0 %v347, 9
    %v1321 = vpop.permute.xlu0 %1320
    %1322 = vrot.lane.b32.xlu0 %v348, 9
    %v1323 = vpop.permute.xlu0 %1322
    %1324 = vrot.lane.b32.xlu0 %v350, 9
    %v1325 = vpop.permute.xlu0 %1324
    %1326 = vrot.lane.b32.xlu0 %v351, 9
    %v1327 = vpop.permute.xlu0 %1326
    %1328 = vrot.lane.b32.xlu0 %v353, 9
    %v1329 = vpop.permute.xlu0 %1328
    %1330 = vrot.lane.b32.xlu0 %v354, 9
    %v1331 = vpop.permute.xlu0 %1330
    %1332 = vrot.lane.b32.xlu0 %v356, 9
    %v1333 = vpop.permute.xlu0 %1332
    %1334 = vrot.lane.b32.xlu0 %v357, 9
    %v1335 = vpop.permute.xlu0 %1334
    %1336 = vrot.lane.b32.xlu0 %v359, 9
    %v1337 = vpop.permute.xlu0 %1336
    %1338 = vrot.lane.b32.xlu0 %v360, 9
    %v1339 = vpop.permute.xlu0 %1338
    %1340 = vrot.lane.b32.xlu0 %v362, 9
    %v1341 = vpop.permute.xlu0 %1340
    %1342 = vrot.lane.b32.xlu0 %v363, 9
    %v1343 = vpop.permute.xlu0 %1342
    %1344 = vrot.lane.b32.xlu0 %v365, 9
    %v1345 = vpop.permute.xlu0 %1344
    %1346 = vrot.lane.b32.xlu0 %v366, 9
    %v1347 = vpop.permute.xlu0 %1346
    %1348 = vrot.lane.b32.xlu0 %v368, 9
    %v1349 = vpop.permute.xlu0 %1348
    %1350 = vrot.lane.b32.xlu0 %v369, 9
    %v1351 = vpop.permute.xlu0 %1350
    %1352 = vrot.lane.b32.xlu0 %v371, 9
    %v1353 = vpop.permute.xlu0 %1352
    %1354 = vrot.lane.b32.xlu0 %v372, 9
    %v1355 = vpop.permute.xlu0 %1354
    %1356 = vrot.lane.b32.xlu0 %v374, 9
    %v1357 = vpop.permute.xlu0 %1356
    %1358 = vrot.lane.b32.xlu0 %v375, 9
    %v1359 = vpop.permute.xlu0 %1358
    %1360 = vrot.lane.b32.xlu0 %v377, 9
    %v1361 = vpop.permute.xlu0 %1360
    %1362 = vrot.lane.b32.xlu0 %v378, 9
    %v1363 = vpop.permute.xlu0 %1362
    %1364 = vrot.lane.b32.xlu0 %v380, 9
    %v1365 = vpop.permute.xlu0 %1364
    %1366 = vrot.lane.b32.xlu0 %v381, 9
    %v1367 = vpop.permute.xlu0 %1366
    %1432 = vrot.lane.b32.xlu0 %v490, 12
    %v1433 = vpop.permute.xlu0 %1432
    %1434 = vrot.lane.b32.xlu0 %v492, 12
    %v1435 = vpop.permute.xlu0 %1434
    %1436 = vrot.lane.b32.xlu0 %v495, 12
    %v1437 = vpop.permute.xlu0 %1436
    %1438 = vrot.lane.b32.xlu0 %v497, 12
    %v1439 = vpop.permute.xlu0 %1438
    %1440 = vrot.lane.b32.xlu0 %v500, 12
    %v1441 = vpop.permute.xlu0 %1440
    %1442 = vrot.lane.b32.xlu0 %v502, 12
    %v1443 = vpop.permute.xlu0 %1442
    %1444 = vrot.lane.b32.xlu0 %v505, 12
    %v1445 = vpop.permute.xlu0 %1444
    %1446 = vrot.lane.b32.xlu0 %v507, 12
    %v1447 = vpop.permute.xlu0 %1446
    %1448 = vrot.lane.b32.xlu0 %v510, 12
    %v1449 = vpop.permute.xlu0 %1448
    %1450 = vrot.lane.b32.xlu0 %v512, 12
    %v1451 = vpop.permute.xlu0 %1450
    %1452 = vrot.lane.b32.xlu0 %v515, 12
    %v1453 = vpop.permute.xlu0 %1452
    %1454 = vrot.lane.b32.xlu0 %v517, 12
    %v1455 = vpop.permute.xlu0 %1454
    %1456 = vrot.lane.b32.xlu0 %v520, 12
    %v1457 = vpop.permute.xlu0 %1456
    %1458 = vrot.lane.b32.xlu0 %v522, 12
    %v1459 = vpop.permute.xlu0 %1458
    %1460 = vrot.lane.b32.xlu0 %v525, 12
    %v1461 = vpop.permute.xlu0 %1460
    %1462 = vrot.lane.b32.xlu0 %v527, 12
    %v1463 = vpop.permute.xlu0 %1462
    %1464 = vrot.lane.b32.xlu0 %v530, 12
    %v1465 = vpop.permute.xlu0 %1464
    %1466 = vrot.lane.b32.xlu0 %v532, 12
    %v1467 = vpop.permute.xlu0 %1466
    %1468 = vrot.lane.b32.xlu0 %v535, 12
    %v1469 = vpop.permute.xlu0 %1468
    %1470 = vrot.lane.b32.xlu0 %v537, 12
    %v1471 = vpop.permute.xlu0 %1470
    %1472 = vrot.lane.b32.xlu0 %v540, 12
    %v1473 = vpop.permute.xlu0 %1472
    %1474 = vrot.lane.b32.xlu0 %v542, 12
    %v1475 = vpop.permute.xlu0 %1474
    %1476 = vrot.lane.b32.xlu0 %v545, 12
    %v1477 = vpop.permute.xlu0 %1476
    %1478 = vrot.lane.b32.xlu0 %v547, 12
    %v1479 = vpop.permute.xlu0 %1478
    %1480 = vrot.lane.b32.xlu0 %v550, 12
    %v1481 = vpop.permute.xlu0 %1480
    %1482 = vrot.lane.b32.xlu0 %v552, 12
    %v1483 = vpop.permute.xlu0 %1482
    %1484 = vrot.lane.b32.xlu0 %v555, 12
    %v1485 = vpop.permute.xlu0 %1484
    %1486 = vrot.lane.b32.xlu0 %v557, 12
    %v1487 = vpop.permute.xlu0 %1486
    %1488 = vrot.lane.b32.xlu0 %v560, 12
    %v1489 = vpop.permute.xlu0 %1488
    %1490 = vrot.lane.b32.xlu0 %v562, 12
    %v1491 = vpop.permute.xlu0 %1490
    %1492 = vrot.lane.b32.xlu0 %v812, 12
    %v1493 = vpop.permute.xlu0 %1492
    %1494 = vrot.lane.b32.xlu0 %v814, 12
    %v1495 = vpop.permute.xlu0 %1494
    %1496 = vrot.lane.b32.xlu0 %v570, 12
    %v1497 = vpop.permute.xlu0 %1496
    %1498 = vrot.lane.b32.xlu0 %v572, 12
    %v1499 = vpop.permute.xlu0 %1498
    %1500 = vrot.lane.b32.xlu0 %v575, 12
    %v1501 = vpop.permute.xlu0 %1500
    %1502 = vrot.lane.b32.xlu0 %v577, 12
    %v1503 = vpop.permute.xlu0 %1502
    %1504 = vrot.lane.b32.xlu0 %v580, 12
    %v1505 = vpop.permute.xlu0 %1504
    %1506 = vrot.lane.b32.xlu0 %v582, 12
    %v1507 = vpop.permute.xlu0 %1506
    %1508 = vrot.lane.b32.xlu0 %v585, 12
    %v1509 = vpop.permute.xlu0 %1508
    %1510 = vrot.lane.b32.xlu0 %v587, 12
    %v1511 = vpop.permute.xlu0 %1510
    %1512 = vrot.lane.b32.xlu0 %v590, 12
    %v1513 = vpop.permute.xlu0 %1512
    %1514 = vrot.lane.b32.xlu0 %v592, 12
    %v1515 = vpop.permute.xlu0 %1514
    %1516 = vrot.lane.b32.xlu0 %v595, 12
    %v1517 = vpop.permute.xlu0 %1516
    %1518 = vrot.lane.b32.xlu0 %v597, 12
    %v1519 = vpop.permute.xlu0 %1518
    %1520 = vrot.lane.b32.xlu0 %v600, 12
    %v1521 = vpop.permute.xlu0 %1520
    %1522 = vrot.lane.b32.xlu0 %v602, 12
    %v1523 = vpop.permute.xlu0 %1522
    %1524 = vrot.lane.b32.xlu0 %v605, 12
    %v1525 = vpop.permute.xlu0 %1524
    %1526 = vrot.lane.b32.xlu0 %v607, 12
    %v1527 = vpop.permute.xlu0 %1526
    %1528 = vrot.lane.b32.xlu0 %v610, 12
    %v1529 = vpop.permute.xlu0 %1528
    %1530 = vrot.lane.b32.xlu0 %v612, 12
    %v1531 = vpop.permute.xlu0 %1530
    %1532 = vrot.lane.b32.xlu0 %v615, 12
    %v1533 = vpop.permute.xlu0 %1532
    %1534 = vrot.lane.b32.xlu0 %v617, 12
    %v1535 = vpop.permute.xlu0 %1534
    %1536 = vrot.lane.b32.xlu0 %v620, 12
    %v1537 = vpop.permute.xlu0 %1536
    %1538 = vrot.lane.b32.xlu0 %v622, 12
    %v1539 = vpop.permute.xlu0 %1538
    %1540 = vrot.lane.b32.xlu0 %v625, 12
    %v1541 = vpop.permute.xlu0 %1540
    %1542 = vrot.lane.b32.xlu0 %v627, 12
    %v1543 = vpop.permute.xlu0 %1542
    %1544 = vrot.lane.b32.xlu0 %v630, 12
    %v1545 = vpop.permute.xlu0 %1544
    %1546 = vrot.lane.b32.xlu0 %v632, 12
    %v1547 = vpop.permute.xlu0 %1546
    %1548 = vrot.lane.b32.xlu0 %v635, 12
    %v1549 = vpop.permute.xlu0 %1548
    %1550 = vrot.lane.b32.xlu0 %v637, 12
    %v1551 = vpop.permute.xlu0 %1550
    %1552 = vrot.lane.b32.xlu0 %v640, 12
    %v1553 = vpop.permute.xlu0 %1552
    %1554 = vrot.lane.b32.xlu0 %v642, 12
    %v1555 = vpop.permute.xlu0 %1554
    %1556 = vrot.lane.b32.xlu0 %v817, 12
    %v1557 = vpop.permute.xlu0 %1556
    %1558 = vrot.lane.b32.xlu0 %v819, 12
    %v1559 = vpop.permute.xlu0 %1558
    %1624 = vrot.lane.b32.xlu0 %v651, 15
    %v1625 = vpop.permute.xlu0 %1624
    %1626 = vrot.lane.b32.xlu0 %v653, 15
    %v1627 = vpop.permute.xlu0 %1626
    %1628 = vrot.lane.b32.xlu0 %v656, 15
    %v1629 = vpop.permute.xlu0 %1628
    %1630 = vrot.lane.b32.xlu0 %v658, 15
    %v1631 = vpop.permute.xlu0 %1630
    %1632 = vrot.lane.b32.xlu0 %v661, 15
    %v1633 = vpop.permute.xlu0 %1632
    %1634 = vrot.lane.b32.xlu0 %v663, 15
    %v1635 = vpop.permute.xlu0 %1634
    %1636 = vrot.lane.b32.xlu0 %v666, 15
    %v1637 = vpop.permute.xlu0 %1636
    %1638 = vrot.lane.b32.xlu0 %v668, 15
    %v1639 = vpop.permute.xlu0 %1638
    %1640 = vrot.lane.b32.xlu0 %v671, 15
    %v1641 = vpop.permute.xlu0 %1640
    %1642 = vrot.lane.b32.xlu0 %v673, 15
    %v1643 = vpop.permute.xlu0 %1642
    %1644 = vrot.lane.b32.xlu0 %v676, 15
    %v1645 = vpop.permute.xlu0 %1644
    %1646 = vrot.lane.b32.xlu0 %v678, 15
    %v1647 = vpop.permute.xlu0 %1646
    %1648 = vrot.lane.b32.xlu0 %v681, 15
    %v1649 = vpop.permute.xlu0 %1648
    %1650 = vrot.lane.b32.xlu0 %v683, 15
    %v1651 = vpop.permute.xlu0 %1650
    %1652 = vrot.lane.b32.xlu0 %v686, 15
    %v1653 = vpop.permute.xlu0 %1652
    %1654 = vrot.lane.b32.xlu0 %v688, 15
    %v1655 = vpop.permute.xlu0 %1654
    %1656 = vrot.lane.b32.xlu0 %v691, 15
    %v1657 = vpop.permute.xlu0 %1656
    %1658 = vrot.lane.b32.xlu0 %v693, 15
    %v1659 = vpop.permute.xlu0 %1658
    %1660 = vrot.lane.b32.xlu0 %v696, 15
    %v1661 = vpop.permute.xlu0 %1660
    %1662 = vrot.lane.b32.xlu0 %v698, 15
    %v1663 = vpop.permute.xlu0 %1662
    %1664 = vrot.lane.b32.xlu0 %v701, 15
    %v1665 = vpop.permute.xlu0 %1664
    %1666 = vrot.lane.b32.xlu0 %v703, 15
    %v1667 = vpop.permute.xlu0 %1666
    %1668 = vrot.lane.b32.xlu0 %v706, 15
    %v1669 = vpop.permute.xlu0 %1668
    %1670 = vrot.lane.b32.xlu0 %v708, 15
    %v1671 = vpop.permute.xlu0 %1670
    %1672 = vrot.lane.b32.xlu0 %v711, 15
    %v1673 = vpop.permute.xlu0 %1672
    %1674 = vrot.lane.b32.xlu0 %v713, 15
    %v1675 = vpop.permute.xlu0 %1674
    %1676 = vrot.lane.b32.xlu0 %v716, 15
    %v1677 = vpop.permute.xlu0 %1676
    %1678 = vrot.lane.b32.xlu0 %v718, 15
    %v1679 = vpop.permute.xlu0 %1678
    %1680 = vrot.lane.b32.xlu0 %v721, 15
    %v1681 = vpop.permute.xlu0 %1680
    %1682 = vrot.lane.b32.xlu0 %v723, 15
    %v1683 = vpop.permute.xlu0 %1682
    %1684 = vrot.lane.b32.xlu0 %v822, 15
    %v1685 = vpop.permute.xlu0 %1684
    %1686 = vrot.lane.b32.xlu0 %v824, 15
    %v1687 = vpop.permute.xlu0 %1686
    %1688 = vrot.lane.b32.xlu0 %v731, 15
    %v1689 = vpop.permute.xlu0 %1688
    %1690 = vrot.lane.b32.xlu0 %v733, 15
    %v1691 = vpop.permute.xlu0 %1690
    %1692 = vrot.lane.b32.xlu0 %v736, 15
    %v1693 = vpop.permute.xlu0 %1692
    %1694 = vrot.lane.b32.xlu0 %v738, 15
    %v1695 = vpop.permute.xlu0 %1694
    %1696 = vrot.lane.b32.xlu0 %v741, 15
    %v1697 = vpop.permute.xlu0 %1696
    %1698 = vrot.lane.b32.xlu0 %v743, 15
    %v1699 = vpop.permute.xlu0 %1698
    %1700 = vrot.lane.b32.xlu0 %v746, 15
    %v1701 = vpop.permute.xlu0 %1700
    %1702 = vrot.lane.b32.xlu0 %v748, 15
    %v1703 = vpop.permute.xlu0 %1702
    %1704 = vrot.lane.b32.xlu0 %v751, 15
    %v1705 = vpop.permute.xlu0 %1704
    %1706 = vrot.lane.b32.xlu0 %v753, 15
    %v1707 = vpop.permute.xlu0 %1706
    %1708 = vrot.lane.b32.xlu0 %v756, 15
    %v1709 = vpop.permute.xlu0 %1708
    %1710 = vrot.lane.b32.xlu0 %v758, 15
    %v1711 = vpop.permute.xlu0 %1710
    %1712 = vrot.lane.b32.xlu0 %v761, 15
    %v1713 = vpop.permute.xlu0 %1712
    %1714 = vrot.lane.b32.xlu0 %v763, 15
    %v1715 = vpop.permute.xlu0 %1714
    %1716 = vrot.lane.b32.xlu0 %v766, 15
    %v1717 = vpop.permute.xlu0 %1716
    %1718 = vrot.lane.b32.xlu0 %v768, 15
    %v1719 = vpop.permute.xlu0 %1718
    %1720 = vrot.lane.b32.xlu0 %v771, 15
    %v1721 = vpop.permute.xlu0 %1720
    %1722 = vrot.lane.b32.xlu0 %v773, 15
    %v1723 = vpop.permute.xlu0 %1722
    %1724 = vrot.lane.b32.xlu0 %v776, 15
    %v1725 = vpop.permute.xlu0 %1724
    %1726 = vrot.lane.b32.xlu0 %v778, 15
    %v1727 = vpop.permute.xlu0 %1726
    %1728 = vrot.lane.b32.xlu0 %v781, 15
    %v1729 = vpop.permute.xlu0 %1728
    %1730 = vrot.lane.b32.xlu0 %v783, 15
    %v1731 = vpop.permute.xlu0 %1730
    %1732 = vrot.lane.b32.xlu0 %v786, 15
    %v1733 = vpop.permute.xlu0 %1732
    %1734 = vrot.lane.b32.xlu0 %v788, 15
    %v1735 = vpop.permute.xlu0 %1734
    %1736 = vrot.lane.b32.xlu0 %v791, 15
    %v1737 = vpop.permute.xlu0 %1736
    %1738 = vrot.lane.b32.xlu0 %v793, 15
    %v1739 = vpop.permute.xlu0 %1738
    %1740 = vrot.lane.b32.xlu0 %v796, 15
    %v1741 = vpop.permute.xlu0 %1740
    %1742 = vrot.lane.b32.xlu0 %v798, 15
    %v1743 = vpop.permute.xlu0 %1742
    %1744 = vrot.lane.b32.xlu0 %v801, 15
    %v1745 = vpop.permute.xlu0 %1744
    %1746 = vrot.lane.b32.xlu0 %v803, 15
    %v1747 = vpop.permute.xlu0 %1746
    %1748 = vrot.lane.b32.xlu0 %v827, 15
    %v1749 = vpop.permute.xlu0 %1748
    %1750 = vrot.lane.b32.xlu0 %v829, 15
    %v1751 = vpop.permute.xlu0 %1750
    %1816 = vrot.lane.b32.xlu0 %v284, 18
    %v1817 = vpop.permute.xlu0 %1816
    %1818 = vrot.lane.b32.xlu0 %v285, 18
    %v1819 = vpop.permute.xlu0 %1818
    %1820 = vrot.lane.b32.xlu0 %v287, 18
    %v1821 = vpop.permute.xlu0 %1820
    %1822 = vrot.lane.b32.xlu0 %v288, 18
    %v1823 = vpop.permute.xlu0 %1822
    %1824 = vrot.lane.b32.xlu0 %v290, 18
    %v1825 = vpop.permute.xlu0 %1824
    %1826 = vrot.lane.b32.xlu0 %v291, 18
    %v1827 = vpop.permute.xlu0 %1826
    %1828 = vrot.lane.b32.xlu0 %v293, 18
    %v1829 = vpop.permute.xlu0 %1828
    %1830 = vrot.lane.b32.xlu0 %v294, 18
    %v1831 = vpop.permute.xlu0 %1830
    %1832 = vrot.lane.b32.xlu0 %v296, 18
    %v1833 = vpop.permute.xlu0 %1832
    %1834 = vrot.lane.b32.xlu0 %v297, 18
    %v1835 = vpop.permute.xlu0 %1834
    %1836 = vrot.lane.b32.xlu0 %v299, 18
    %v1837 = vpop.permute.xlu0 %1836
    %1838 = vrot.lane.b32.xlu0 %v300, 18
    %v1839 = vpop.permute.xlu0 %1838
    %1840 = vrot.lane.b32.xlu0 %v302, 18
    %v1841 = vpop.permute.xlu0 %1840
    %1842 = vrot.lane.b32.xlu0 %v303, 18
    %v1843 = vpop.permute.xlu0 %1842
    %1844 = vrot.lane.b32.xlu0 %v305, 18
    %v1845 = vpop.permute.xlu0 %1844
    %1846 = vrot.lane.b32.xlu0 %v306, 18
    %v1847 = vpop.permute.xlu0 %1846
    %1848 = vrot.lane.b32.xlu0 %v308, 18
    %v1849 = vpop.permute.xlu0 %1848
    %1850 = vrot.lane.b32.xlu0 %v309, 18
    %v1851 = vpop.permute.xlu0 %1850
    %1852 = vrot.lane.b32.xlu0 %v311, 18
    %v1853 = vpop.permute.xlu0 %1852
    %1854 = vrot.lane.b32.xlu0 %v312, 18
    %v1855 = vpop.permute.xlu0 %1854
    %1856 = vrot.lane.b32.xlu0 %v314, 18
    %v1857 = vpop.permute.xlu0 %1856
    %1858 = vrot.lane.b32.xlu0 %v315, 18
    %v1859 = vpop.permute.xlu0 %1858
    %1860 = vrot.lane.b32.xlu0 %v317, 18
    %v1861 = vpop.permute.xlu0 %1860
    %1862 = vrot.lane.b32.xlu0 %v318, 18
    %v1863 = vpop.permute.xlu0 %1862
    %1864 = vrot.lane.b32.xlu0 %v320, 18
    %v1865 = vpop.permute.xlu0 %1864
    %1866 = vrot.lane.b32.xlu0 %v321, 18
    %v1867 = vpop.permute.xlu0 %1866
    %1868 = vrot.lane.b32.xlu0 %v323, 18
    %v1869 = vpop.permute.xlu0 %1868
    %1870 = vrot.lane.b32.xlu0 %v324, 18
    %v1871 = vpop.permute.xlu0 %1870
    %1872 = vrot.lane.b32.xlu0 %v326, 18
    %v1873 = vpop.permute.xlu0 %1872
    %1874 = vrot.lane.b32.xlu0 %v327, 18
    %v1875 = vpop.permute.xlu0 %1874
    %1876 = vrot.lane.b32.xlu0 %v329, 18
    %v1877 = vpop.permute.xlu0 %1876
    %1878 = vrot.lane.b32.xlu0 %v330, 18
    %v1879 = vpop.permute.xlu0 %1878
    %1880 = vrot.lane.b32.xlu0 %v338, 18
    %v1881 = vpop.permute.xlu0 %1880
    %1882 = vrot.lane.b32.xlu0 %v339, 18
    %v1883 = vpop.permute.xlu0 %1882
    %1884 = vrot.lane.b32.xlu0 %v341, 18
    %v1885 = vpop.permute.xlu0 %1884
    %1886 = vrot.lane.b32.xlu0 %v342, 18
    %v1887 = vpop.permute.xlu0 %1886
    %1888 = vrot.lane.b32.xlu0 %v344, 18
    %v1889 = vpop.permute.xlu0 %1888
    %1890 = vrot.lane.b32.xlu0 %v345, 18
    %v1891 = vpop.permute.xlu0 %1890
    %1892 = vrot.lane.b32.xlu0 %v347, 18
    %v1893 = vpop.permute.xlu0 %1892
    %1894 = vrot.lane.b32.xlu0 %v348, 18
    %v1895 = vpop.permute.xlu0 %1894
    %1896 = vrot.lane.b32.xlu0 %v350, 18
    %v1897 = vpop.permute.xlu0 %1896
    %1898 = vrot.lane.b32.xlu0 %v351, 18
    %v1899 = vpop.permute.xlu0 %1898
    %1900 = vrot.lane.b32.xlu0 %v353, 18
    %v1901 = vpop.permute.xlu0 %1900
    %1902 = vrot.lane.b32.xlu0 %v354, 18
    %v1903 = vpop.permute.xlu0 %1902
    %1904 = vrot.lane.b32.xlu0 %v356, 18
    %v1905 = vpop.permute.xlu0 %1904
    %1906 = vrot.lane.b32.xlu0 %v357, 18
    %v1907 = vpop.permute.xlu0 %1906
    %1908 = vrot.lane.b32.xlu0 %v359, 18
    %v1909 = vpop.permute.xlu0 %1908
    %1910 = vrot.lane.b32.xlu0 %v360, 18
    %v1911 = vpop.permute.xlu0 %1910
    %1912 = vrot.lane.b32.xlu0 %v362, 18
    %v1913 = vpop.permute.xlu0 %1912
    %1914 = vrot.lane.b32.xlu0 %v363, 18
    %v1915 = vpop.permute.xlu0 %1914
    %1916 = vrot.lane.b32.xlu0 %v365, 18
    %v1917 = vpop.permute.xlu0 %1916
    %1918 = vrot.lane.b32.xlu0 %v366, 18
    %v1919 = vpop.permute.xlu0 %1918
    %1920 = vrot.lane.b32.xlu0 %v368, 18
    %v1921 = vpop.permute.xlu0 %1920
    %1922 = vrot.lane.b32.xlu0 %v369, 18
    %v1923 = vpop.permute.xlu0 %1922
    %1924 = vrot.lane.b32.xlu0 %v371, 18
    %v1925 = vpop.permute.xlu0 %1924
    %1926 = vrot.lane.b32.xlu0 %v372, 18
    %v1927 = vpop.permute.xlu0 %1926
    %1928 = vrot.lane.b32.xlu0 %v374, 18
    %v1929 = vpop.permute.xlu0 %1928
    %1930 = vrot.lane.b32.xlu0 %v375, 18
    %v1931 = vpop.permute.xlu0 %1930
    %1932 = vrot.lane.b32.xlu0 %v377, 18
    %v1933 = vpop.permute.xlu0 %1932
    %1934 = vrot.lane.b32.xlu0 %v378, 18
    %v1935 = vpop.permute.xlu0 %1934
    %1936 = vrot.lane.b32.xlu0 %v380, 18
    %v1937 = vpop.permute.xlu0 %1936
    %1938 = vrot.lane.b32.xlu0 %v381, 18
    %v1939 = vpop.permute.xlu0 %1938
    %1940 = vrot.lane.b32.xlu0 %v383, 18
    %v1941 = vpop.permute.xlu0 %1940
    %1942 = vrot.lane.b32.xlu0 %v384, 18
    %v1943 = vpop.permute.xlu0 %1942
    %2008 = vrot.lane.b32.xlu0 %v495, 21
    %v2009 = vpop.permute.xlu0 %2008
    %2010 = vrot.lane.b32.xlu0 %v497, 21
    %v2011 = vpop.permute.xlu0 %2010
    %2012 = vrot.lane.b32.xlu0 %v500, 21
    %v2013 = vpop.permute.xlu0 %2012
    %2014 = vrot.lane.b32.xlu0 %v502, 21
    %v2015 = vpop.permute.xlu0 %2014
    %2016 = vrot.lane.b32.xlu0 %v505, 21
    %v2017 = vpop.permute.xlu0 %2016
    %2018 = vrot.lane.b32.xlu0 %v507, 21
    %v2019 = vpop.permute.xlu0 %2018
    %2020 = vrot.lane.b32.xlu0 %v510, 21
    %v2021 = vpop.permute.xlu0 %2020
    %2022 = vrot.lane.b32.xlu0 %v512, 21
    %v2023 = vpop.permute.xlu0 %2022
    %2024 = vrot.lane.b32.xlu0 %v515, 21
    %v2025 = vpop.permute.xlu0 %2024
    %2026 = vrot.lane.b32.xlu0 %v517, 21
    %v2027 = vpop.permute.xlu0 %2026
    %2028 = vrot.lane.b32.xlu0 %v520, 21
    %v2029 = vpop.permute.xlu0 %2028
    %2030 = vrot.lane.b32.xlu0 %v522, 21
    %v2031 = vpop.permute.xlu0 %2030
    %2032 = vrot.lane.b32.xlu0 %v525, 21
    %v2033 = vpop.permute.xlu0 %2032
    %2034 = vrot.lane.b32.xlu0 %v527, 21
    %v2035 = vpop.permute.xlu0 %2034
    %2036 = vrot.lane.b32.xlu0 %v530, 21
    %v2037 = vpop.permute.xlu0 %2036
    %2038 = vrot.lane.b32.xlu0 %v532, 21
    %v2039 = vpop.permute.xlu0 %2038
    %2040 = vrot.lane.b32.xlu0 %v535, 21
    %v2041 = vpop.permute.xlu0 %2040
    %2042 = vrot.lane.b32.xlu0 %v537, 21
    %v2043 = vpop.permute.xlu0 %2042
    %2044 = vrot.lane.b32.xlu0 %v540, 21
    %v2045 = vpop.permute.xlu0 %2044
    %2046 = vrot.lane.b32.xlu0 %v542, 21
    %v2047 = vpop.permute.xlu0 %2046
    %2048 = vrot.lane.b32.xlu0 %v545, 21
    %v2049 = vpop.permute.xlu0 %2048
    %2050 = vrot.lane.b32.xlu0 %v547, 21
    %v2051 = vpop.permute.xlu0 %2050
    %2052 = vrot.lane.b32.xlu0 %v550, 21
    %v2053 = vpop.permute.xlu0 %2052
    %2054 = vrot.lane.b32.xlu0 %v552, 21
    %v2055 = vpop.permute.xlu0 %2054
    %2056 = vrot.lane.b32.xlu0 %v555, 21
    %v2057 = vpop.permute.xlu0 %2056
    %2058 = vrot.lane.b32.xlu0 %v557, 21
    %v2059 = vpop.permute.xlu0 %2058
    %2060 = vrot.lane.b32.xlu0 %v560, 21
    %v2061 = vpop.permute.xlu0 %2060
    %2062 = vrot.lane.b32.xlu0 %v562, 21
    %v2063 = vpop.permute.xlu0 %2062
    %2064 = vrot.lane.b32.xlu0 %v812, 21
    %v2065 = vpop.permute.xlu0 %2064
    %2066 = vrot.lane.b32.xlu0 %v814, 21
    %v2067 = vpop.permute.xlu0 %2066
    %2068 = vrot.lane.b32.xlu0 %v838, 21
    %v2069 = vpop.permute.xlu0 %2068
    %2070 = vrot.lane.b32.xlu0 %v840, 21
    %v2071 = vpop.permute.xlu0 %2070
    %2072 = vrot.lane.b32.xlu0 %v575, 21
    %v2073 = vpop.permute.xlu0 %2072
    %2074 = vrot.lane.b32.xlu0 %v577, 21
    %v2075 = vpop.permute.xlu0 %2074
    %2076 = vrot.lane.b32.xlu0 %v580, 21
    %v2077 = vpop.permute.xlu0 %2076
    %2078 = vrot.lane.b32.xlu0 %v582, 21
    %v2079 = vpop.permute.xlu0 %2078
    %2080 = vrot.lane.b32.xlu0 %v585, 21
    %v2081 = vpop.permute.xlu0 %2080
    %2082 = vrot.lane.b32.xlu0 %v587, 21
    %v2083 = vpop.permute.xlu0 %2082
    %2084 = vrot.lane.b32.xlu0 %v590, 21
    %v2085 = vpop.permute.xlu0 %2084
    %2086 = vrot.lane.b32.xlu0 %v592, 21
    %v2087 = vpop.permute.xlu0 %2086
    %2088 = vrot.lane.b32.xlu0 %v595, 21
    %v2089 = vpop.permute.xlu0 %2088
    %2090 = vrot.lane.b32.xlu0 %v597, 21
    %v2091 = vpop.permute.xlu0 %2090
    %2092 = vrot.lane.b32.xlu0 %v600, 21
    %v2093 = vpop.permute.xlu0 %2092
    %2094 = vrot.lane.b32.xlu0 %v602, 21
    %v2095 = vpop.permute.xlu0 %2094
    %2096 = vrot.lane.b32.xlu0 %v605, 21
    %v2097 = vpop.permute.xlu0 %2096
    %2098 = vrot.lane.b32.xlu0 %v607, 21
    %v2099 = vpop.permute.xlu0 %2098
    %2100 = vrot.lane.b32.xlu0 %v610, 21
    %v2101 = vpop.permute.xlu0 %2100
    %2102 = vrot.lane.b32.xlu0 %v612, 21
    %v2103 = vpop.permute.xlu0 %2102
    %2104 = vrot.lane.b32.xlu0 %v615, 21
    %v2105 = vpop.permute.xlu0 %2104
    %2106 = vrot.lane.b32.xlu0 %v617, 21
    %v2107 = vpop.permute.xlu0 %2106
    %2108 = vrot.lane.b32.xlu0 %v620, 21
    %v2109 = vpop.permute.xlu0 %2108
    %2110 = vrot.lane.b32.xlu0 %v622, 21
    %v2111 = vpop.permute.xlu0 %2110
    %2112 = vrot.lane.b32.xlu0 %v625, 21
    %v2113 = vpop.permute.xlu0 %2112
    %2114 = vrot.lane.b32.xlu0 %v627, 21
    %v2115 = vpop.permute.xlu0 %2114
    %2116 = vrot.lane.b32.xlu0 %v630, 21
    %v2117 = vpop.permute.xlu0 %2116
    %2118 = vrot.lane.b32.xlu0 %v632, 21
    %v2119 = vpop.permute.xlu0 %2118
    %2120 = vrot.lane.b32.xlu0 %v635, 21
    %v2121 = vpop.permute.xlu0 %2120
    %2122 = vrot.lane.b32.xlu0 %v637, 21
    %v2123 = vpop.permute.xlu0 %2122
    %2124 = vrot.lane.b32.xlu0 %v640, 21
    %v2125 = vpop.permute.xlu0 %2124
    %2126 = vrot.lane.b32.xlu0 %v642, 21
    %v2127 = vpop.permute.xlu0 %2126
    %2128 = vrot.lane.b32.xlu0 %v817, 21
    %v2129 = vpop.permute.xlu0 %2128
    %2130 = vrot.lane.b32.xlu0 %v819, 21
    %v2131 = vpop.permute.xlu0 %2130
    %2132 = vrot.lane.b32.xlu0 %v843, 21
    %v2133 = vpop.permute.xlu0 %2132
    %2134 = vrot.lane.b32.xlu0 %v845, 21
    %v2135 = vpop.permute.xlu0 %2134
    %2200 = vrot.lane.b32.xlu0 %v656, 24
    %v2201 = vpop.permute.xlu0 %2200
    %2202 = vrot.lane.b32.xlu0 %v658, 24
    %v2203 = vpop.permute.xlu0 %2202
    %2204 = vrot.lane.b32.xlu0 %v661, 24
    %v2205 = vpop.permute.xlu0 %2204
    %2206 = vrot.lane.b32.xlu0 %v663, 24
    %v2207 = vpop.permute.xlu0 %2206
    %2208 = vrot.lane.b32.xlu0 %v666, 24
    %v2209 = vpop.permute.xlu0 %2208
    %2210 = vrot.lane.b32.xlu0 %v668, 24
    %v2211 = vpop.permute.xlu0 %2210
    %2212 = vrot.lane.b32.xlu0 %v671, 24
    %v2213 = vpop.permute.xlu0 %2212
    %2214 = vrot.lane.b32.xlu0 %v673, 24
    %v2215 = vpop.permute.xlu0 %2214
    %2216 = vrot.lane.b32.xlu0 %v676, 24
    %v2217 = vpop.permute.xlu0 %2216
    %2218 = vrot.lane.b32.xlu0 %v678, 24
    %v2219 = vpop.permute.xlu0 %2218
    %2220 = vrot.lane.b32.xlu0 %v681, 24
    %v2221 = vpop.permute.xlu0 %2220
    %2222 = vrot.lane.b32.xlu0 %v683, 24
    %v2223 = vpop.permute.xlu0 %2222
    %2224 = vrot.lane.b32.xlu0 %v686, 24
    %v2225 = vpop.permute.xlu0 %2224
    %2226 = vrot.lane.b32.xlu0 %v688, 24
    %v2227 = vpop.permute.xlu0 %2226
    %2228 = vrot.lane.b32.xlu0 %v691, 24
    %v2229 = vpop.permute.xlu0 %2228
    %2230 = vrot.lane.b32.xlu0 %v693, 24
    %v2231 = vpop.permute.xlu0 %2230
    %2232 = vrot.lane.b32.xlu0 %v696, 24
    %v2233 = vpop.permute.xlu0 %2232
    %2234 = vrot.lane.b32.xlu0 %v698, 24
    %v2235 = vpop.permute.xlu0 %2234
    %2236 = vrot.lane.b32.xlu0 %v701, 24
    %v2237 = vpop.permute.xlu0 %2236
    %2238 = vrot.lane.b32.xlu0 %v703, 24
    %v2239 = vpop.permute.xlu0 %2238
    %2240 = vrot.lane.b32.xlu0 %v706, 24
    %v2241 = vpop.permute.xlu0 %2240
    %2242 = vrot.lane.b32.xlu0 %v708, 24
    %v2243 = vpop.permute.xlu0 %2242
    %2244 = vrot.lane.b32.xlu0 %v711, 24
    %v2245 = vpop.permute.xlu0 %2244
    %2246 = vrot.lane.b32.xlu0 %v713, 24
    %v2247 = vpop.permute.xlu0 %2246
    %2248 = vrot.lane.b32.xlu0 %v716, 24
    %v2249 = vpop.permute.xlu0 %2248
    %2250 = vrot.lane.b32.xlu0 %v718, 24
    %v2251 = vpop.permute.xlu0 %2250
    %2252 = vrot.lane.b32.xlu0 %v721, 24
    %v2253 = vpop.permute.xlu0 %2252
    %2254 = vrot.lane.b32.xlu0 %v723, 24
    %v2255 = vpop.permute.xlu0 %2254
    %2256 = vrot.lane.b32.xlu0 %v822, 24
    %v2257 = vpop.permute.xlu0 %2256
    %2258 = vrot.lane.b32.xlu0 %v824, 24
    %v2259 = vpop.permute.xlu0 %2258
    %2260 = vrot.lane.b32.xlu0 %v848, 24
    %v2261 = vpop.permute.xlu0 %2260
    %2262 = vrot.lane.b32.xlu0 %v850, 24
    %v2263 = vpop.permute.xlu0 %2262
    %2264 = vrot.lane.b32.xlu0 %v736, 24
    %v2265 = vpop.permute.xlu0 %2264
    %2266 = vrot.lane.b32.xlu0 %v738, 24
    %v2267 = vpop.permute.xlu0 %2266
    %2268 = vrot.lane.b32.xlu0 %v741, 24
    %v2269 = vpop.permute.xlu0 %2268
    %2270 = vrot.lane.b32.xlu0 %v743, 24
    %v2271 = vpop.permute.xlu0 %2270
    %2272 = vrot.lane.b32.xlu0 %v746, 24
    %v2273 = vpop.permute.xlu0 %2272
    %2274 = vrot.lane.b32.xlu0 %v748, 24
    %v2275 = vpop.permute.xlu0 %2274
    %2276 = vrot.lane.b32.xlu0 %v751, 24
    %v2277 = vpop.permute.xlu0 %2276
    %2278 = vrot.lane.b32.xlu0 %v753, 24
    %v2279 = vpop.permute.xlu0 %2278
    %2280 = vrot.lane.b32.xlu0 %v756, 24
    %v2281 = vpop.permute.xlu0 %2280
    %2282 = vrot.lane.b32.xlu0 %v758, 24
    %v2283 = vpop.permute.xlu0 %2282
    %2284 = vrot.lane.b32.xlu0 %v761, 24
    %v2285 = vpop.permute.xlu0 %2284
    %2286 = vrot.lane.b32.xlu0 %v763, 24
    %v2287 = vpop.permute.xlu0 %2286
    %2288 = vrot.lane.b32.xlu0 %v766, 24
    %v2289 = vpop.permute.xlu0 %2288
    %2290 = vrot.lane.b32.xlu0 %v768, 24
    %v2291 = vpop.permute.xlu0 %2290
    %2292 = vrot.lane.b32.xlu0 %v771, 24
    %v2293 = vpop.permute.xlu0 %2292
    %2294 = vrot.lane.b32.xlu0 %v773, 24
    %v2295 = vpop.permute.xlu0 %2294
    %2296 = vrot.lane.b32.xlu0 %v776, 24
    %v2297 = vpop.permute.xlu0 %2296
    %2298 = vrot.lane.b32.xlu0 %v778, 24
    %v2299 = vpop.permute.xlu0 %2298
    %2300 = vrot.lane.b32.xlu0 %v781, 24
    %v2301 = vpop.permute.xlu0 %2300
    %2302 = vrot.lane.b32.xlu0 %v783, 24
    %v2303 = vpop.permute.xlu0 %2302
    %2304 = vrot.lane.b32.xlu0 %v786, 24
    %v2305 = vpop.permute.xlu0 %2304
    %2306 = vrot.lane.b32.xlu0 %v788, 24
    %v2307 = vpop.permute.xlu0 %2306
    %2308 = vrot.lane.b32.xlu0 %v791, 24
    %v2309 = vpop.permute.xlu0 %2308
    %2310 = vrot.lane.b32.xlu0 %v793, 24
    %v2311 = vpop.permute.xlu0 %2310
    %2312 = vrot.lane.b32.xlu0 %v796, 24
    %v2313 = vpop.permute.xlu0 %2312
    %2314 = vrot.lane.b32.xlu0 %v798, 24
    %v2315 = vpop.permute.xlu0 %2314
    %2316 = vrot.lane.b32.xlu0 %v801, 24
    %v2317 = vpop.permute.xlu0 %2316
    %2318 = vrot.lane.b32.xlu0 %v803, 24
    %v2319 = vpop.permute.xlu0 %2318
    %2320 = vrot.lane.b32.xlu0 %v827, 24
    %v2321 = vpop.permute.xlu0 %2320
    %2322 = vrot.lane.b32.xlu0 %v829, 24
    %v2323 = vpop.permute.xlu0 %2322
    %2324 = vrot.lane.b32.xlu0 %v853, 24
    %v2325 = vpop.permute.xlu0 %2324
    %2326 = vrot.lane.b32.xlu0 %v855, 24
    %v2327 = vpop.permute.xlu0 %2326
    %v2392 = vsel %vm39, %v278, %v857
    %v2393 = vsel %vm39, %v279, %v859
    %v2394 = vsel %vm39, %v281, %v861
    %v2395 = vsel %vm39, %v282, %v863
    %v2396 = vsel %vm39, %v284, %v865
    %v2397 = vsel %vm39, %v285, %v867
    %v2398 = vsel %vm39, %v287, %v869
    %v2399 = vsel %vm39, %v288, %v871
    %v2400 = vsel %vm39, %v290, %v873
    %v2401 = vsel %vm39, %v291, %v875
    %v2402 = vsel %vm39, %v293, %v877
    %v2403 = vsel %vm39, %v294, %v879
    %v2404 = vsel %vm39, %v296, %v881
    %v2405 = vsel %vm39, %v297, %v883
    %v2406 = vsel %vm39, %v299, %v885
    %v2407 = vsel %vm39, %v300, %v887
    %v2408 = vsel %vm39, %v302, %v889
    %v2409 = vsel %vm39, %v303, %v891
    %v2410 = vsel %vm39, %v305, %v893
    %v2411 = vsel %vm39, %v306, %v895
    %v2412 = vsel %vm39, %v308, %v897
    %v2413 = vsel %vm39, %v309, %v899
    %v2414 = vsel %vm39, %v311, %v901
    %v2415 = vsel %vm39, %v312, %v903
    %v2416 = vsel %vm39, %v314, %v905
    %v2417 = vsel %vm39, %v315, %v907
    %v2418 = vsel %vm39, %v317, %v909
    %v2419 = vsel %vm39, %v318, %v911
    %v2420 = vsel %vm39, %v320, %v913
    %v2421 = vsel %vm39, %v321, %v915
    %v2422 = vsel %vm39, %v323, %v917
    %v2423 = vsel %vm39, %v324, %v919
    %v2424 = vsel %vm39, %v332, %v921
    %v2425 = vsel %vm39, %v333, %v923
    %v2426 = vsel %vm39, %v335, %v925
    %v2427 = vsel %vm39, %v336, %v927
    %v2428 = vsel %vm39, %v338, %v929
    %v2429 = vsel %vm39, %v339, %v931
    %v2430 = vsel %vm39, %v341, %v933
    %v2431 = vsel %vm39, %v342, %v935
    %v2432 = vsel %vm39, %v344, %v937
    %v2433 = vsel %vm39, %v345, %v939
    %v2434 = vsel %vm39, %v347, %v941
    %v2435 = vsel %vm39, %v348, %v943
    %v2436 = vsel %vm39, %v350, %v945
    %v2437 = vsel %vm39, %v351, %v947
    %v2438 = vsel %vm39, %v353, %v949
    %v2439 = vsel %vm39, %v354, %v951
    %v2440 = vsel %vm39, %v356, %v953
    %v2441 = vsel %vm39, %v357, %v955
    %v2442 = vsel %vm39, %v359, %v957
    %v2443 = vsel %vm39, %v360, %v959
    %v2444 = vsel %vm39, %v362, %v961
    %v2445 = vsel %vm39, %v363, %v963
    %v2446 = vsel %vm39, %v365, %v965
    %v2447 = vsel %vm39, %v366, %v967
    %v2448 = vsel %vm39, %v368, %v969
    %v2449 = vsel %vm39, %v369, %v971
    %v2450 = vsel %vm39, %v371, %v973
    %v2451 = vsel %vm39, %v372, %v975
    %v2452 = vsel %vm39, %v374, %v977
    %v2453 = vsel %vm39, %v375, %v979
    %v2454 = vsel %vm39, %v377, %v981
    %v2455 = vsel %vm39, %v378, %v983
    %vm2456 = vcmask 48128
    %v2457 = vsel %vm2456, %v2392, %v1049
    %v2458 = vsel %vm2456, %v2393, %v1051
    %v2459 = vsel %vm2456, %v2394, %v1053
    %v2460 = vsel %vm2456, %v2395, %v1055
    %v2461 = vsel %vm2456, %v2396, %v1057
    %v2462 = vsel %vm2456, %v2397, %v1059
    %v2463 = vsel %vm2456, %v2398, %v1061
    %v2464 = vsel %vm2456, %v2399, %v1063
    %v2465 = vsel %vm2456, %v2400, %v1065
    %v2466 = vsel %vm2456, %v2401, %v1067
    %v2467 = vsel %vm2456, %v2402, %v1069
    %v2468 = vsel %vm2456, %v2403, %v1071
    %v2469 = vsel %vm2456, %v2404, %v1073
    %v2470 = vsel %vm2456, %v2405, %v1075
    %v2471 = vsel %vm2456, %v2406, %v1077
    %v2472 = vsel %vm2456, %v2407, %v1079
    %v2473 = vsel %vm2456, %v2408, %v1081
    %v2474 = vsel %vm2456, %v2409, %v1083
    %v2475 = vsel %vm2456, %v2410, %v1085
    %v2476 = vsel %vm2456, %v2411, %v1087
    %v2477 = vsel %vm2456, %v2412, %v1089
    %v2478 = vsel %vm2456, %v2413, %v1091
    %v2479 = vsel %vm2456, %v2414, %v1093
    %v2480 = vsel %vm2456, %v2415, %v1095
    %v2481 = vsel %vm2456, %v2416, %v1097
    %v2482 = vsel %vm2456, %v2417, %v1099
    %v2483 = vsel %vm2456, %v2418, %v1101
    %v2484 = vsel %vm2456, %v2419, %v1103
    %v2485 = vsel %vm2456, %v2420, %v1105
    %v2486 = vsel %vm2456, %v2421, %v1107
    %v2487 = vsel %vm2456, %v2422, %v1109
    %v2488 = vsel %vm2456, %v2423, %v1111
    %v2489 = vsel %vm2456, %v2424, %v1113
    %v2490 = vsel %vm2456, %v2425, %v1115
    %v2491 = vsel %vm2456, %v2426, %v1117
    %v2492 = vsel %vm2456, %v2427, %v1119
    %v2493 = vsel %vm2456, %v2428, %v1121
    %v2494 = vsel %vm2456, %v2429, %v1123
    %v2495 = vsel %vm2456, %v2430, %v1125
    %v2496 = vsel %vm2456, %v2431, %v1127
    %v2497 = vsel %vm2456, %v2432, %v1129
    %v2498 = vsel %vm2456, %v2433, %v1131
    %v2499 = vsel %vm2456, %v2434, %v1133
    %v2500 = vsel %vm2456, %v2435, %v1135
    %v2501 = vsel %vm2456, %v2436, %v1137
    %v2502 = vsel %vm2456, %v2437, %v1139
    %v2503 = vsel %vm2456, %v2438, %v1141
    %v2504 = vsel %vm2456, %v2439, %v1143
    %v2505 = vsel %vm2456, %v2440, %v1145
    %v2506 = vsel %vm2456, %v2441, %v1147
    %v2507 = vsel %vm2456, %v2442, %v1149
    %v2508 = vsel %vm2456, %v2443, %v1151
    %v2509 = vsel %vm2456, %v2444, %v1153
    %v2510 = vsel %vm2456, %v2445, %v1155
    %v2511 = vsel %vm2456, %v2446, %v1157
    %v2512 = vsel %vm2456, %v2447, %v1159
    %v2513 = vsel %vm2456, %v2448, %v1161
    %v2514 = vsel %vm2456, %v2449, %v1163
    %v2515 = vsel %vm2456, %v2450, %v1165
    %v2516 = vsel %vm2456, %v2451, %v1167
    %v2517 = vsel %vm2456, %v2452, %v1169
    %v2518 = vsel %vm2456, %v2453, %v1171
    %v2519 = vsel %vm2456, %v2454, %v1173
    %v2520 = vsel %vm2456, %v2455, %v1175
    %vm2521 = vcmask 72704
    %v2522 = vsel %vm2521, %v2457, %v1241
    %v2523 = vsel %vm2521, %v2458, %v1243
    %v2524 = vsel %vm2521, %v2459, %v1245
    %v2525 = vsel %vm2521, %v2460, %v1247
    %v2526 = vsel %vm2521, %v2461, %v1249
    %v2527 = vsel %vm2521, %v2462, %v1251
    %v2528 = vsel %vm2521, %v2463, %v1253
    %v2529 = vsel %vm2521, %v2464, %v1255
    %v2530 = vsel %vm2521, %v2465, %v1257
    %v2531 = vsel %vm2521, %v2466, %v1259
    %v2532 = vsel %vm2521, %v2467, %v1261
    %v2533 = vsel %vm2521, %v2468, %v1263
    %v2534 = vsel %vm2521, %v2469, %v1265
    %v2535 = vsel %vm2521, %v2470, %v1267
    %v2536 = vsel %vm2521, %v2471, %v1269
    %v2537 = vsel %vm2521, %v2472, %v1271
    %v2538 = vsel %vm2521, %v2473, %v1273
    %v2539 = vsel %vm2521, %v2474, %v1275
    %v2540 = vsel %vm2521, %v2475, %v1277
    %v2541 = vsel %vm2521, %v2476, %v1279
    %v2542 = vsel %vm2521, %v2477, %v1281
    %v2543 = vsel %vm2521, %v2478, %v1283
    %v2544 = vsel %vm2521, %v2479, %v1285
    %v2545 = vsel %vm2521, %v2480, %v1287
    %v2546 = vsel %vm2521, %v2481, %v1289
    %v2547 = vsel %vm2521, %v2482, %v1291
    %v2548 = vsel %vm2521, %v2483, %v1293
    %v2549 = vsel %vm2521, %v2484, %v1295
    %v2550 = vsel %vm2521, %v2485, %v1297
    %v2551 = vsel %vm2521, %v2486, %v1299
    %v2552 = vsel %vm2521, %v2487, %v1301
    %v2553 = vsel %vm2521, %v2488, %v1303
    %v2554 = vsel %vm2521, %v2489, %v1305
    %v2555 = vsel %vm2521, %v2490, %v1307
    %v2556 = vsel %vm2521, %v2491, %v1309
    %v2557 = vsel %vm2521, %v2492, %v1311
    %v2558 = vsel %vm2521, %v2493, %v1313
    %v2559 = vsel %vm2521, %v2494, %v1315
    %v2560 = vsel %vm2521, %v2495, %v1317
    %v2561 = vsel %vm2521, %v2496, %v1319
    %v2562 = vsel %vm2521, %v2497, %v1321
    %v2563 = vsel %vm2521, %v2498, %v1323
    %v2564 = vsel %vm2521, %v2499, %v1325
    %v2565 = vsel %vm2521, %v2500, %v1327
    %v2566 = vsel %vm2521, %v2501, %v1329
    %v2567 = vsel %vm2521, %v2502, %v1331
    %v2568 = vsel %vm2521, %v2503, %v1333
    %v2569 = vsel %vm2521, %v2504, %v1335
    %v2570 = vsel %vm2521, %v2505, %v1337
    %v2571 = vsel %vm2521, %v2506, %v1339
    %v2572 = vsel %vm2521, %v2507, %v1341
    %v2573 = vsel %vm2521, %v2508, %v1343
    %v2574 = vsel %vm2521, %v2509, %v1345
    %v2575 = vsel %vm2521, %v2510, %v1347
    %v2576 = vsel %vm2521, %v2511, %v1349
    %v2577 = vsel %vm2521, %v2512, %v1351
    %v2578 = vsel %vm2521, %v2513, %v1353
    %v2579 = vsel %vm2521, %v2514, %v1355
    %v2580 = vsel %vm2521, %v2515, %v1357
    %v2581 = vsel %vm2521, %v2516, %v1359
    %v2582 = vsel %vm2521, %v2517, %v1361
    %v2583 = vsel %vm2521, %v2518, %v1363
    %v2584 = vsel %vm2521, %v2519, %v1365
    %v2585 = vsel %vm2521, %v2520, %v1367
    %vm2586 = vcmask 97280
    %v2587 = vsel %vm2586, %v2522, %v1433
    %v2588 = vsel %vm2586, %v2523, %v1435
    %v2589 = vsel %vm2586, %v2524, %v1437
    %v2590 = vsel %vm2586, %v2525, %v1439
    %v2591 = vsel %vm2586, %v2526, %v1441
    %v2592 = vsel %vm2586, %v2527, %v1443
    %v2593 = vsel %vm2586, %v2528, %v1445
    %v2594 = vsel %vm2586, %v2529, %v1447
    %v2595 = vsel %vm2586, %v2530, %v1449
    %v2596 = vsel %vm2586, %v2531, %v1451
    %v2597 = vsel %vm2586, %v2532, %v1453
    %v2598 = vsel %vm2586, %v2533, %v1455
    %v2599 = vsel %vm2586, %v2534, %v1457
    %v2600 = vsel %vm2586, %v2535, %v1459
    %v2601 = vsel %vm2586, %v2536, %v1461
    %v2602 = vsel %vm2586, %v2537, %v1463
    %v2603 = vsel %vm2586, %v2538, %v1465
    %v2604 = vsel %vm2586, %v2539, %v1467
    %v2605 = vsel %vm2586, %v2540, %v1469
    %v2606 = vsel %vm2586, %v2541, %v1471
    %v2607 = vsel %vm2586, %v2542, %v1473
    %v2608 = vsel %vm2586, %v2543, %v1475
    %v2609 = vsel %vm2586, %v2544, %v1477
    %v2610 = vsel %vm2586, %v2545, %v1479
    %v2611 = vsel %vm2586, %v2546, %v1481
    %v2612 = vsel %vm2586, %v2547, %v1483
    %v2613 = vsel %vm2586, %v2548, %v1485
    %v2614 = vsel %vm2586, %v2549, %v1487
    %v2615 = vsel %vm2586, %v2550, %v1489
    %v2616 = vsel %vm2586, %v2551, %v1491
    %v2617 = vsel %vm2586, %v2552, %v1493
    %v2618 = vsel %vm2586, %v2553, %v1495
    %v2619 = vsel %vm2586, %v2554, %v1497
    %v2620 = vsel %vm2586, %v2555, %v1499
    %v2621 = vsel %vm2586, %v2556, %v1501
    %v2622 = vsel %vm2586, %v2557, %v1503
    %v2623 = vsel %vm2586, %v2558, %v1505
    %v2624 = vsel %vm2586, %v2559, %v1507
    %v2625 = vsel %vm2586, %v2560, %v1509
    %v2626 = vsel %vm2586, %v2561, %v1511
    %v2627 = vsel %vm2586, %v2562, %v1513
    %v2628 = vsel %vm2586, %v2563, %v1515
    %v2629 = vsel %vm2586, %v2564, %v1517
    %v2630 = vsel %vm2586, %v2565, %v1519
    %v2631 = vsel %vm2586, %v2566, %v1521
    %v2632 = vsel %vm2586, %v2567, %v1523
    %v2633 = vsel %vm2586, %v2568, %v1525
    %v2634 = vsel %vm2586, %v2569, %v1527
    %v2635 = vsel %vm2586, %v2570, %v1529
    %v2636 = vsel %vm2586, %v2571, %v1531
    %v2637 = vsel %vm2586, %v2572, %v1533
    %v2638 = vsel %vm2586, %v2573, %v1535
    %v2639 = vsel %vm2586, %v2574, %v1537
    %v2640 = vsel %vm2586, %v2575, %v1539
    %v2641 = vsel %vm2586, %v2576, %v1541
    %v2642 = vsel %vm2586, %v2577, %v1543
    %v2643 = vsel %vm2586, %v2578, %v1545
    %v2644 = vsel %vm2586, %v2579, %v1547
    %v2645 = vsel %vm2586, %v2580, %v1549
    %v2646 = vsel %vm2586, %v2581, %v1551
    %v2647 = vsel %vm2586, %v2582, %v1553
    %v2648 = vsel %vm2586, %v2583, %v1555
    %v2649 = vsel %vm2586, %v2584, %v1557
    %v2650 = vsel %vm2586, %v2585, %v1559
    %vm2651 = vcmask 121856
    %v2652 = vsel %vm2651, %v2587, %v1625
    %v2653 = vsel %vm2651, %v2588, %v1627
    %v2654 = vsel %vm2651, %v2589, %v1629
    %v2655 = vsel %vm2651, %v2590, %v1631
    %v2656 = vsel %vm2651, %v2591, %v1633
    %v2657 = vsel %vm2651, %v2592, %v1635
    %v2658 = vsel %vm2651, %v2593, %v1637
    %v2659 = vsel %vm2651, %v2594, %v1639
    %v2660 = vsel %vm2651, %v2595, %v1641
    %v2661 = vsel %vm2651, %v2596, %v1643
    %v2662 = vsel %vm2651, %v2597, %v1645
    %v2663 = vsel %vm2651, %v2598, %v1647
    %v2664 = vsel %vm2651, %v2599, %v1649
    %v2665 = vsel %vm2651, %v2600, %v1651
    %v2666 = vsel %vm2651, %v2601, %v1653
    %v2667 = vsel %vm2651, %v2602, %v1655
    %v2668 = vsel %vm2651, %v2603, %v1657
    %v2669 = vsel %vm2651, %v2604, %v1659
    %v2670 = vsel %vm2651, %v2605, %v1661
    %v2671 = vsel %vm2651, %v2606, %v1663
    %v2672 = vsel %vm2651, %v2607, %v1665
    %v2673 = vsel %vm2651, %v2608, %v1667
    %v2674 = vsel %vm2651, %v2609, %v1669
    %v2675 = vsel %vm2651, %v2610, %v1671
    %v2676 = vsel %vm2651, %v2611, %v1673
    %v2677 = vsel %vm2651, %v2612, %v1675
    %v2678 = vsel %vm2651, %v2613, %v1677
    %v2679 = vsel %vm2651, %v2614, %v1679
    %v2680 = vsel %vm2651, %v2615, %v1681
    %v2681 = vsel %vm2651, %v2616, %v1683
    %v2682 = vsel %vm2651, %v2617, %v1685
    %v2683 = vsel %vm2651, %v2618, %v1687
    %v2684 = vsel %vm2651, %v2619, %v1689
    %v2685 = vsel %vm2651, %v2620, %v1691
    %v2686 = vsel %vm2651, %v2621, %v1693
    %v2687 = vsel %vm2651, %v2622, %v1695
    %v2688 = vsel %vm2651, %v2623, %v1697
    %v2689 = vsel %vm2651, %v2624, %v1699
    %v2690 = vsel %vm2651, %v2625, %v1701
    %v2691 = vsel %vm2651, %v2626, %v1703
    %v2692 = vsel %vm2651, %v2627, %v1705
    %v2693 = vsel %vm2651, %v2628, %v1707
    %v2694 = vsel %vm2651, %v2629, %v1709
    %v2695 = vsel %vm2651, %v2630, %v1711
    %v2696 = vsel %vm2651, %v2631, %v1713
    %v2697 = vsel %vm2651, %v2632, %v1715
    %v2698 = vsel %vm2651, %v2633, %v1717
    %v2699 = vsel %vm2651, %v2634, %v1719
    %v2700 = vsel %vm2651, %v2635, %v1721
    %v2701 = vsel %vm2651, %v2636, %v1723
    %v2702 = vsel %vm2651, %v2637, %v1725
    %v2703 = vsel %vm2651, %v2638, %v1727
    %v2704 = vsel %vm2651, %v2639, %v1729
    %v2705 = vsel %vm2651, %v2640, %v1731
    %v2706 = vsel %vm2651, %v2641, %v1733
    %v2707 = vsel %vm2651, %v2642, %v1735
    %v2708 = vsel %vm2651, %v2643, %v1737
    %v2709 = vsel %vm2651, %v2644, %v1739
    %v2710 = vsel %vm2651, %v2645, %v1741
    %v2711 = vsel %vm2651, %v2646, %v1743
    %v2712 = vsel %vm2651, %v2647, %v1745
    %v2713 = vsel %vm2651, %v2648, %v1747
    %v2714 = vsel %vm2651, %v2649, %v1749
    %v2715 = vsel %vm2651, %v2650, %v1751
    %vm2716 = vcmask 146432
    %v2717 = vsel %vm2716, %v2652, %v1817
    %v2718 = vsel %vm2716, %v2653, %v1819
    %v2719 = vsel %vm2716, %v2654, %v1821
    %v2720 = vsel %vm2716, %v2655, %v1823
    %v2721 = vsel %vm2716, %v2656, %v1825
    %v2722 = vsel %vm2716, %v2657, %v1827
    %v2723 = vsel %vm2716, %v2658, %v1829
    %v2724 = vsel %vm2716, %v2659, %v1831
    %v2725 = vsel %vm2716, %v2660, %v1833
    %v2726 = vsel %vm2716, %v2661, %v1835
    %v2727 = vsel %vm2716, %v2662, %v1837
    %v2728 = vsel %vm2716, %v2663, %v1839
    %v2729 = vsel %vm2716, %v2664, %v1841
    %v2730 = vsel %vm2716, %v2665, %v1843
    %v2731 = vsel %vm2716, %v2666, %v1845
    %v2732 = vsel %vm2716, %v2667, %v1847
    %v2733 = vsel %vm2716, %v2668, %v1849
    %v2734 = vsel %vm2716, %v2669, %v1851
    %v2735 = vsel %vm2716, %v2670, %v1853
    %v2736 = vsel %vm2716, %v2671, %v1855
    %v2737 = vsel %vm2716, %v2672, %v1857
    %v2738 = vsel %vm2716, %v2673, %v1859
    %v2739 = vsel %vm2716, %v2674, %v1861
    %v2740 = vsel %vm2716, %v2675, %v1863
    %v2741 = vsel %vm2716, %v2676, %v1865
    %v2742 = vsel %vm2716, %v2677, %v1867
    %v2743 = vsel %vm2716, %v2678, %v1869
    %v2744 = vsel %vm2716, %v2679, %v1871
    %v2745 = vsel %vm2716, %v2680, %v1873
    %v2746 = vsel %vm2716, %v2681, %v1875
    %v2747 = vsel %vm2716, %v2682, %v1877
    %v2748 = vsel %vm2716, %v2683, %v1879
    %v2749 = vsel %vm2716, %v2684, %v1881
    %v2750 = vsel %vm2716, %v2685, %v1883
    %v2751 = vsel %vm2716, %v2686, %v1885
    %v2752 = vsel %vm2716, %v2687, %v1887
    %v2753 = vsel %vm2716, %v2688, %v1889
    %v2754 = vsel %vm2716, %v2689, %v1891
    %v2755 = vsel %vm2716, %v2690, %v1893
    %v2756 = vsel %vm2716, %v2691, %v1895
    %v2757 = vsel %vm2716, %v2692, %v1897
    %v2758 = vsel %vm2716, %v2693, %v1899
    %v2759 = vsel %vm2716, %v2694, %v1901
    %v2760 = vsel %vm2716, %v2695, %v1903
    %v2761 = vsel %vm2716, %v2696, %v1905
    %v2762 = vsel %vm2716, %v2697, %v1907
    %v2763 = vsel %vm2716, %v2698, %v1909
    %v2764 = vsel %vm2716, %v2699, %v1911
    %v2765 = vsel %vm2716, %v2700, %v1913
    %v2766 = vsel %vm2716, %v2701, %v1915
    %v2767 = vsel %vm2716, %v2702, %v1917
    %v2768 = vsel %vm2716, %v2703, %v1919
    %v2769 = vsel %vm2716, %v2704, %v1921
    %v2770 = vsel %vm2716, %v2705, %v1923
    %v2771 = vsel %vm2716, %v2706, %v1925
    %v2772 = vsel %vm2716, %v2707, %v1927
    %v2773 = vsel %vm2716, %v2708, %v1929
    %v2774 = vsel %vm2716, %v2709, %v1931
    %v2775 = vsel %vm2716, %v2710, %v1933
    %v2776 = vsel %vm2716, %v2711, %v1935
    %v2777 = vsel %vm2716, %v2712, %v1937
    %v2778 = vsel %vm2716, %v2713, %v1939
    %v2779 = vsel %vm2716, %v2714, %v1941
    %v2780 = vsel %vm2716, %v2715, %v1943
    %vm2781 = vcmask 171008
    %v2782 = vsel %vm2781, %v2717, %v2009
    %v2783 = vsel %vm2781, %v2718, %v2011
    %v2784 = vsel %vm2781, %v2719, %v2013
    %v2785 = vsel %vm2781, %v2720, %v2015
    %v2786 = vsel %vm2781, %v2721, %v2017
    %v2787 = vsel %vm2781, %v2722, %v2019
    %v2788 = vsel %vm2781, %v2723, %v2021
    %v2789 = vsel %vm2781, %v2724, %v2023
    %v2790 = vsel %vm2781, %v2725, %v2025
    %v2791 = vsel %vm2781, %v2726, %v2027
    %v2792 = vsel %vm2781, %v2727, %v2029
    %v2793 = vsel %vm2781, %v2728, %v2031
    %v2794 = vsel %vm2781, %v2729, %v2033
    %v2795 = vsel %vm2781, %v2730, %v2035
    %v2796 = vsel %vm2781, %v2731, %v2037
    %v2797 = vsel %vm2781, %v2732, %v2039
    %v2798 = vsel %vm2781, %v2733, %v2041
    %v2799 = vsel %vm2781, %v2734, %v2043
    %v2800 = vsel %vm2781, %v2735, %v2045
    %v2801 = vsel %vm2781, %v2736, %v2047
    %v2802 = vsel %vm2781, %v2737, %v2049
    %v2803 = vsel %vm2781, %v2738, %v2051
    %v2804 = vsel %vm2781, %v2739, %v2053
    %v2805 = vsel %vm2781, %v2740, %v2055
    %v2806 = vsel %vm2781, %v2741, %v2057
    %v2807 = vsel %vm2781, %v2742, %v2059
    %v2808 = vsel %vm2781, %v2743, %v2061
    %v2809 = vsel %vm2781, %v2744, %v2063
    %v2810 = vsel %vm2781, %v2745, %v2065
    %v2811 = vsel %vm2781, %v2746, %v2067
    %v2812 = vsel %vm2781, %v2747, %v2069
    %v2813 = vsel %vm2781, %v2748, %v2071
    %v2814 = vsel %vm2781, %v2749, %v2073
    %v2815 = vsel %vm2781, %v2750, %v2075
    %v2816 = vsel %vm2781, %v2751, %v2077
    %v2817 = vsel %vm2781, %v2752, %v2079
    %v2818 = vsel %vm2781, %v2753, %v2081
    %v2819 = vsel %vm2781, %v2754, %v2083
    %v2820 = vsel %vm2781, %v2755, %v2085
    %v2821 = vsel %vm2781, %v2756, %v2087
    %v2822 = vsel %vm2781, %v2757, %v2089
    %v2823 = vsel %vm2781, %v2758, %v2091
    %v2824 = vsel %vm2781, %v2759, %v2093
    %v2825 = vsel %vm2781, %v2760, %v2095
    %v2826 = vsel %vm2781, %v2761, %v2097
    %v2827 = vsel %vm2781, %v2762, %v2099
    %v2828 = vsel %vm2781, %v2763, %v2101
    %v2829 = vsel %vm2781, %v2764, %v2103
    %v2830 = vsel %vm2781, %v2765, %v2105
    %v2831 = vsel %vm2781, %v2766, %v2107
    %v2832 = vsel %vm2781, %v2767, %v2109
    %v2833 = vsel %vm2781, %v2768, %v2111
    %v2834 = vsel %vm2781, %v2769, %v2113
    %v2835 = vsel %vm2781, %v2770, %v2115
    %v2836 = vsel %vm2781, %v2771, %v2117
    %v2837 = vsel %vm2781, %v2772, %v2119
    %v2838 = vsel %vm2781, %v2773, %v2121
    %v2839 = vsel %vm2781, %v2774, %v2123
    %v2840 = vsel %vm2781, %v2775, %v2125
    %v2841 = vsel %vm2781, %v2776, %v2127
    %v2842 = vsel %vm2781, %v2777, %v2129
    %v2843 = vsel %vm2781, %v2778, %v2131
    %v2844 = vsel %vm2781, %v2779, %v2133
    %v2845 = vsel %vm2781, %v2780, %v2135
    %vm2846 = vcmask 195584
    %v2847 = vsel %vm2846, %v2782, %v2201
    %v2848 = vsel %vm2846, %v2783, %v2203
    %v2849 = vsel %vm2846, %v2784, %v2205
    %v2850 = vsel %vm2846, %v2785, %v2207
    %v2851 = vsel %vm2846, %v2786, %v2209
    %v2852 = vsel %vm2846, %v2787, %v2211
    %v2853 = vsel %vm2846, %v2788, %v2213
    %v2854 = vsel %vm2846, %v2789, %v2215
    %v2855 = vsel %vm2846, %v2790, %v2217
    %v2856 = vsel %vm2846, %v2791, %v2219
    %v2857 = vsel %vm2846, %v2792, %v2221
    %v2858 = vsel %vm2846, %v2793, %v2223
    %v2859 = vsel %vm2846, %v2794, %v2225
    %v2860 = vsel %vm2846, %v2795, %v2227
    %v2861 = vsel %vm2846, %v2796, %v2229
    %v2862 = vsel %vm2846, %v2797, %v2231
    %v2863 = vsel %vm2846, %v2798, %v2233
    %v2864 = vsel %vm2846, %v2799, %v2235
    %v2865 = vsel %vm2846, %v2800, %v2237
    %v2866 = vsel %vm2846, %v2801, %v2239
    %v2867 = vsel %vm2846, %v2802, %v2241
    %v2868 = vsel %vm2846, %v2803, %v2243
    %v2869 = vsel %vm2846, %v2804, %v2245
    %v2870 = vsel %vm2846, %v2805, %v2247
    %v2871 = vsel %vm2846, %v2806, %v2249
    %v2872 = vsel %vm2846, %v2807, %v2251
    %v2873 = vsel %vm2846, %v2808, %v2253
    %v2874 = vsel %vm2846, %v2809, %v2255
    %v2875 = vsel %vm2846, %v2810, %v2257
    %v2876 = vsel %vm2846, %v2811, %v2259
    %v2877 = vsel %vm2846, %v2812, %v2261
    %v2878 = vsel %vm2846, %v2813, %v2263
    %v2879 = vsel %vm2846, %v2814, %v2265
    %v2880 = vsel %vm2846, %v2815, %v2267
    %v2881 = vsel %vm2846, %v2816, %v2269
    %v2882 = vsel %vm2846, %v2817, %v2271
    %v2883 = vsel %vm2846, %v2818, %v2273
    %v2884 = vsel %vm2846, %v2819, %v2275
    %v2885 = vsel %vm2846, %v2820, %v2277
    %v2886 = vsel %vm2846, %v2821, %v2279
    %v2887 = vsel %vm2846, %v2822, %v2281
    %v2888 = vsel %vm2846, %v2823, %v2283
    %v2889 = vsel %vm2846, %v2824, %v2285
    %v2890 = vsel %vm2846, %v2825, %v2287
    %v2891 = vsel %vm2846, %v2826, %v2289
    %v2892 = vsel %vm2846, %v2827, %v2291
    %v2893 = vsel %vm2846, %v2828, %v2293
    %v2894 = vsel %vm2846, %v2829, %v2295
    %v2895 = vsel %vm2846, %v2830, %v2297
    %v2896 = vsel %vm2846, %v2831, %v2299
    %v2897 = vsel %vm2846, %v2832, %v2301
    %v2898 = vsel %vm2846, %v2833, %v2303
    %v2899 = vsel %vm2846, %v2834, %v2305
    %v2900 = vsel %vm2846, %v2835, %v2307
    %v2901 = vsel %vm2846, %v2836, %v2309
    %v2902 = vsel %vm2846, %v2837, %v2311
    %v2903 = vsel %vm2846, %v2838, %v2313
    %v2904 = vsel %vm2846, %v2839, %v2315
    %v2905 = vsel %vm2846, %v2840, %v2317
    %v2906 = vsel %vm2846, %v2841, %v2319
    %v2907 = vsel %vm2846, %v2842, %v2321
    %v2908 = vsel %vm2846, %v2843, %v2323
    %v2909 = vsel %vm2846, %v2844, %v2325
    %v2910 = vsel %vm2846, %v2845, %v2327
    %v2911 = vld [vmem:[%s1] sm:$0xff]
    %v2912 = vld [vmem:[%s1 + $0x8] sm:$0xff]
    %v2913 = vld [vmem:[%s1 + $0x10] sm:$0xff]
    %v2914 = vld [vmem:[%s1 + $0x18] sm:$0x7]
    %vm2915 = vcmask 220160
    %v2917 = vsel %vm2915, %v2847, 0
    %v2920 = vsel %vm2915, %v2848, 0
    %v2923 = vsel %vm2915, %v2849, 0
    %v2926 = vsel %vm2915, %v2850, 0
    %v2929 = vsel %vm2915, %v2851, 0
    %v2932 = vsel %vm2915, %v2852, 0
    %v2935 = vsel %vm2915, %v2853, 0
    %v2938 = vsel %vm2915, %v2854, 0
    %v2941 = vsel %vm2915, %v2855, 0
    %v2944 = vsel %vm2915, %v2856, 0
    %v2947 = vsel %vm2915, %v2857, 0
    %v2950 = vsel %vm2915, %v2858, 0
    %v2953 = vsel %vm2915, %v2859, 0
    %v2956 = vsel %vm2915, %v2860, 0
    %v2959 = vsel %vm2915, %v2861, 0
    %v2962 = vsel %vm2915, %v2862, 0
    %v2965 = vsel %vm2915, %v2863, 0
    %v2968 = vsel %vm2915, %v2864, 0
    %v2971 = vsel %vm2915, %v2865, 0
    %v2974 = vsel %vm2915, %v2866, 0
    %v2977 = vsel %vm2915, %v2867, 0
    %v2980 = vsel %vm2915, %v2868, 0
    %v2983 = vsel %vm2915, %v2869, 0
    %v2986 = vsel %vm2915, %v2870, 0
    %v2989 = vsel %vm2915, %v2871, 0
    %v2992 = vsel %vm2915, %v2872, 0
    %v2995 = vsel %vm2915, %v2873, 0
    %v2998 = vsel %vm2915, %v2874, 0
    %v3001 = vsel %vm2915, %v2875, 0
    %v3004 = vsel %vm2915, %v2876, 0
    %v3007 = vsel %vm2915, %v2877, 0
    %v3010 = vsel %vm2915, %v2878, 0
    %v3013 = vsel %vm2915, %v2879, 0
    %v3016 = vsel %vm2915, %v2880, 0
    %v3019 = vsel %vm2915, %v2881, 0
    %v3022 = vsel %vm2915, %v2882, 0
    %v3025 = vsel %vm2915, %v2883, 0
    %v3028 = vsel %vm2915, %v2884, 0
    %v3031 = vsel %vm2915, %v2885, 0
    %v3034 = vsel %vm2915, %v2886, 0
    %v3037 = vsel %vm2915, %v2887, 0
    %v3040 = vsel %vm2915, %v2888, 0
    %v3043 = vsel %vm2915, %v2889, 0
    %v3046 = vsel %vm2915, %v2890, 0
    %v3049 = vsel %vm2915, %v2891, 0
    %v3052 = vsel %vm2915, %v2892, 0
    %v3055 = vsel %vm2915, %v2893, 0
    %v3058 = vsel %vm2915, %v2894, 0
    %v3061 = vsel %vm2915, %v2895, 0
    %v3064 = vsel %vm2915, %v2896, 0
    %v3067 = vsel %vm2915, %v2897, 0
    %v3070 = vsel %vm2915, %v2898, 0
    %v3073 = vsel %vm2915, %v2899, 0
    %v3076 = vsel %vm2915, %v2900, 0
    %v3079 = vsel %vm2915, %v2901, 0
    %v3082 = vsel %vm2915, %v2902, 0
    %v3085 = vsel %vm2915, %v2903, 0
    %v3088 = vsel %vm2915, %v2904, 0
    %v3091 = vsel %vm2915, %v2905, 0
    %v3094 = vsel %vm2915, %v2906, 0
    %v3097 = vsel %vm2915, %v2907, 0
    %v3100 = vsel %vm2915, %v2908, 0
    %v3103 = vsel %vm2915, %v2909, 0
    %v3106 = vsel %vm2915, %v2910, 0
    %vm3108 = vcmask 1042432
    %v3110 = vsel %vm3108, %v2914, 0
    %3112 = vmatpush.msra.mxu0 0.0
    %3113 = vmatpush.msra.mxu0 0.0
    %3114 = vmatpush.msra.mxu0 0.0
    %3115 = vmatpush.msra.mxu0 0.0
    %3116 = vmatpush.msra.mxu0 0.0
    %3117 = vmatpush.msra.mxu0 0.0
    %3118 = vmatpush.msra.mxu0 0.0
    %3119 = vmatpush.msra.mxu0 0.0
    %3120 = vmatpush.msra.mxu0 0.0
    %3121 = vmatpush.msra.mxu0 0.0
    %3122 = vmatpush.msra.mxu0 0.0
    %3123 = vmatpush.msra.mxu0 0.0
    %3124 = vmatpush.msra.mxu0 %v3110
    %3125 = vmatpush.msra.mxu0 %v2913
    %3126 = vmatpush.msra.mxu0 %v2912
    %3127 = vmatpush.msra.mxu0 %v2911
    %3128 = vmatmul.f32.gmra.mxu0 %v2917
    %v3129 = vpop.f32.mrf.mxu0
    %v3130 = vadd.f32 0.0, %v3129
    %3131 = vmatmul.f32.gmra.mxu0 %v2920
    %v3132 = vpop.f32.mrf.mxu0
    %v3133 = vadd.f32 0.0, %v3132
    %3134 = vmatmul.f32.gmra.mxu0 %v2923
    %v3135 = vpop.f32.mrf.mxu0
    %v3136 = vadd.f32 0.0, %v3135
    %3137 = vmatmul.f32.gmra.mxu0 %v2926
    %v3138 = vpop.f32.mrf.mxu0
    %v3139 = vadd.f32 0.0, %v3138
    %3140 = vmatmul.f32.gmra.mxu0 %v2929
    %v3141 = vpop.f32.mrf.mxu0
    %v3142 = vadd.f32 0.0, %v3141
    %3143 = vmatmul.f32.gmra.mxu0 %v2932
    %v3144 = vpop.f32.mrf.mxu0
    %v3145 = vadd.f32 0.0, %v3144
    %3146 = vmatmul.f32.gmra.mxu0 %v2935
    %v3147 = vpop.f32.mrf.mxu0
    %v3148 = vadd.f32 0.0, %v3147
    %3149 = vmatmul.f32.gmra.mxu0 %v2938
    %v3150 = vpop.f32.mrf.mxu0
    %v3151 = vadd.f32 0.0, %v3150
    %3152 = vmatmul.f32.gmra.mxu0 %v2941
    %v3153 = vpop.f32.mrf.mxu0
    %v3154 = vadd.f32 0.0, %v3153
    %3155 = vmatmul.f32.gmra.mxu0 %v2944
    %v3156 = vpop.f32.mrf.mxu0
    %v3157 = vadd.f32 0.0, %v3156
    %3158 = vmatmul.f32.gmra.mxu0 %v2947
    %v3159 = vpop.f32.mrf.mxu0
    %v3160 = vadd.f32 0.0, %v3159
    %3161 = vmatmul.f32.gmra.mxu0 %v2950
    %v3162 = vpop.f32.mrf.mxu0
    %v3163 = vadd.f32 0.0, %v3162
    %3164 = vmatmul.f32.gmra.mxu0 %v2953
    %v3165 = vpop.f32.mrf.mxu0
    %v3166 = vadd.f32 0.0, %v3165
    %3167 = vmatmul.f32.gmra.mxu0 %v2956
    %v3168 = vpop.f32.mrf.mxu0
    %v3169 = vadd.f32 0.0, %v3168
    %3170 = vmatmul.f32.gmra.mxu0 %v2959
    %v3171 = vpop.f32.mrf.mxu0
    %v3172 = vadd.f32 0.0, %v3171
    %3173 = vmatmul.f32.gmra.mxu0 %v2962
    %v3174 = vpop.f32.mrf.mxu0
    %v3175 = vadd.f32 0.0, %v3174
    %3176 = vmatmul.f32.gmra.mxu0 %v2965
    %v3177 = vpop.f32.mrf.mxu0
    %v3178 = vadd.f32 0.0, %v3177
    %3179 = vmatmul.f32.gmra.mxu0 %v2968
    %v3180 = vpop.f32.mrf.mxu0
    %v3181 = vadd.f32 0.0, %v3180
    %3182 = vmatmul.f32.gmra.mxu0 %v2971
    %v3183 = vpop.f32.mrf.mxu0
    %v3184 = vadd.f32 0.0, %v3183
    %3185 = vmatmul.f32.gmra.mxu0 %v2974
    %v3186 = vpop.f32.mrf.mxu0
    %v3187 = vadd.f32 0.0, %v3186
    %3188 = vmatmul.f32.gmra.mxu0 %v2977
    %v3189 = vpop.f32.mrf.mxu0
    %v3190 = vadd.f32 0.0, %v3189
    %3191 = vmatmul.f32.gmra.mxu0 %v2980
    %v3192 = vpop.f32.mrf.mxu0
    %v3193 = vadd.f32 0.0, %v3192
    %3194 = vmatmul.f32.gmra.mxu0 %v2983
    %v3195 = vpop.f32.mrf.mxu0
    %v3196 = vadd.f32 0.0, %v3195
    %3197 = vmatmul.f32.gmra.mxu0 %v2986
    %v3198 = vpop.f32.mrf.mxu0
    %v3199 = vadd.f32 0.0, %v3198
    %3200 = vmatmul.f32.gmra.mxu0 %v2989
    %v3201 = vpop.f32.mrf.mxu0
    %v3202 = vadd.f32 0.0, %v3201
    %3203 = vmatmul.f32.gmra.mxu0 %v2992
    %v3204 = vpop.f32.mrf.mxu0
    %v3205 = vadd.f32 0.0, %v3204
    %3206 = vmatmul.f32.gmra.mxu0 %v2995
    %v3207 = vpop.f32.mrf.mxu0
    %v3208 = vadd.f32 0.0, %v3207
    %3209 = vmatmul.f32.gmra.mxu0 %v2998
    %v3210 = vpop.f32.mrf.mxu0
    %v3211 = vadd.f32 0.0, %v3210
    %3212 = vmatmul.f32.gmra.mxu0 %v3001
    %v3213 = vpop.f32.mrf.mxu0
    %v3214 = vadd.f32 0.0, %v3213
    %3215 = vmatmul.f32.gmra.mxu0 %v3004
    %v3216 = vpop.f32.mrf.mxu0
    %v3217 = vadd.f32 0.0, %v3216
    %3218 = vmatmul.f32.gmra.mxu0 %v3007
    %v3219 = vpop.f32.mrf.mxu0
    %v3220 = vadd.f32 0.0, %v3219
    %3221 = vmatmul.f32.gmra.mxu0 %v3010
    %v3222 = vpop.f32.mrf.mxu0
    %v3223 = vadd.f32 0.0, %v3222
    %3224 = vmatmul.f32.gmra.mxu0 %v3013
    %v3225 = vpop.f32.mrf.mxu0
    %v3226 = vadd.f32 0.0, %v3225
    %3227 = vmatmul.f32.gmra.mxu0 %v3016
    %v3228 = vpop.f32.mrf.mxu0
    %v3229 = vadd.f32 0.0, %v3228
    %3230 = vmatmul.f32.gmra.mxu0 %v3019
    %v3231 = vpop.f32.mrf.mxu0
    %v3232 = vadd.f32 0.0, %v3231
    %3233 = vmatmul.f32.gmra.mxu0 %v3022
    %v3234 = vpop.f32.mrf.mxu0
    %v3235 = vadd.f32 0.0, %v3234
    %3236 = vmatmul.f32.gmra.mxu0 %v3025
    %v3237 = vpop.f32.mrf.mxu0
    %v3238 = vadd.f32 0.0, %v3237
    %3239 = vmatmul.f32.gmra.mxu0 %v3028
    %v3240 = vpop.f32.mrf.mxu0
    %v3241 = vadd.f32 0.0, %v3240
    %3242 = vmatmul.f32.gmra.mxu0 %v3031
    %v3243 = vpop.f32.mrf.mxu0
    %v3244 = vadd.f32 0.0, %v3243
    %3245 = vmatmul.f32.gmra.mxu0 %v3034
    %v3246 = vpop.f32.mrf.mxu0
    %v3247 = vadd.f32 0.0, %v3246
    %3248 = vmatmul.f32.gmra.mxu0 %v3037
    %v3249 = vpop.f32.mrf.mxu0
    %v3250 = vadd.f32 0.0, %v3249
    %3251 = vmatmul.f32.gmra.mxu0 %v3040
    %v3252 = vpop.f32.mrf.mxu0
    %v3253 = vadd.f32 0.0, %v3252
    %3254 = vmatmul.f32.gmra.mxu0 %v3043
    %v3255 = vpop.f32.mrf.mxu0
    %v3256 = vadd.f32 0.0, %v3255
    %3257 = vmatmul.f32.gmra.mxu0 %v3046
    %v3258 = vpop.f32.mrf.mxu0
    %v3259 = vadd.f32 0.0, %v3258
    %3260 = vmatmul.f32.gmra.mxu0 %v3049
    %v3261 = vpop.f32.mrf.mxu0
    %v3262 = vadd.f32 0.0, %v3261
    %3263 = vmatmul.f32.gmra.mxu0 %v3052
    %v3264 = vpop.f32.mrf.mxu0
    %v3265 = vadd.f32 0.0, %v3264
    %3266 = vmatmul.f32.gmra.mxu0 %v3055
    %v3267 = vpop.f32.mrf.mxu0
    %v3268 = vadd.f32 0.0, %v3267
    %3269 = vmatmul.f32.gmra.mxu0 %v3058
    %v3270 = vpop.f32.mrf.mxu0
    %v3271 = vadd.f32 0.0, %v3270
    %3272 = vmatmul.f32.gmra.mxu0 %v3061
    %v3273 = vpop.f32.mrf.mxu0
    %v3274 = vadd.f32 0.0, %v3273
    %3275 = vmatmul.f32.gmra.mxu0 %v3064
    %v3276 = vpop.f32.mrf.mxu0
    %v3277 = vadd.f32 0.0, %v3276
    %3278 = vmatmul.f32.gmra.mxu0 %v3067
    %v3279 = vpop.f32.mrf.mxu0
    %v3280 = vadd.f32 0.0, %v3279
    %3281 = vmatmul.f32.gmra.mxu0 %v3070
    %v3282 = vpop.f32.mrf.mxu0
    %v3283 = vadd.f32 0.0, %v3282
    %3284 = vmatmul.f32.gmra.mxu0 %v3073
    %v3285 = vpop.f32.mrf.mxu0
    %v3286 = vadd.f32 0.0, %v3285
    %3287 = vmatmul.f32.gmra.mxu0 %v3076
    %v3288 = vpop.f32.mrf.mxu0
    %v3289 = vadd.f32 0.0, %v3288
    %3290 = vmatmul.f32.gmra.mxu0 %v3079
    %v3291 = vpop.f32.mrf.mxu0
    %v3292 = vadd.f32 0.0, %v3291
    %3293 = vmatmul.f32.gmra.mxu0 %v3082
    %v3294 = vpop.f32.mrf.mxu0
    %v3295 = vadd.f32 0.0, %v3294
    %3296 = vmatmul.f32.gmra.mxu0 %v3085
    %v3297 = vpop.f32.mrf.mxu0
    %v3298 = vadd.f32 0.0, %v3297
    %3299 = vmatmul.f32.gmra.mxu0 %v3088
    %v3300 = vpop.f32.mrf.mxu0
    %v3301 = vadd.f32 0.0, %v3300
    %3302 = vmatmul.f32.gmra.mxu0 %v3091
    %v3303 = vpop.f32.mrf.mxu0
    %v3304 = vadd.f32 0.0, %v3303
    %3305 = vmatmul.f32.gmra.mxu0 %v3094
    %v3306 = vpop.f32.mrf.mxu0
    %v3307 = vadd.f32 0.0, %v3306
    %3308 = vmatmul.f32.gmra.mxu0 %v3097
    %v3309 = vpop.f32.mrf.mxu0
    %v3310 = vadd.f32 0.0, %v3309
    %3311 = vmatmul.f32.gmra.mxu0 %v3100
    %v3312 = vpop.f32.mrf.mxu0
    %v3313 = vadd.f32 0.0, %v3312
    %3314 = vmatmul.f32.gmra.mxu0 %v3103
    %v3315 = vpop.f32.mrf.mxu0
    %v3316 = vadd.f32 0.0, %v3315
    %3317 = vmatmul.f32.gmra.mxu0 %v3106
    %v3318 = vpop.f32.mrf.mxu0
    %v3319 = vadd.f32 0.0, %v3318
    %3320 = vdwg.mxu0
    %v3385 = vrot.slane %v3130, 2
    %v3386 = vrot.slane %v3130, 4
    %v3387 = vrot.slane %v3130, 6
    %v3388 = vrot.slane %v3133, 2
    %v3389 = vrot.slane %v3133, 4
    %v3390 = vrot.slane %v3133, 6
    %v3391 = vrot.slane %v3136, 2
    %v3392 = vrot.slane %v3136, 4
    %v3393 = vrot.slane %v3136, 6
    %v3394 = vrot.slane %v3139, 2
    %v3395 = vrot.slane %v3139, 4
    %v3396 = vrot.slane %v3139, 6
    %v3397 = vrot.slane %v3142, 2
    %v3398 = vrot.slane %v3142, 4
    %v3399 = vrot.slane %v3142, 6
    %v3400 = vrot.slane %v3145, 2
    %v3401 = vrot.slane %v3145, 4
    %v3402 = vrot.slane %v3145, 6
    %v3403 = vrot.slane %v3148, 2
    %v3404 = vrot.slane %v3148, 4
    %v3405 = vrot.slane %v3148, 6
    %v3406 = vrot.slane %v3151, 2
    %v3407 = vrot.slane %v3151, 4
    %v3408 = vrot.slane %v3151, 6
    %v3409 = vrot.slane %v3154, 2
    %v3410 = vrot.slane %v3154, 4
    %v3411 = vrot.slane %v3154, 6
    %v3412 = vrot.slane %v3157, 2
    %v3413 = vrot.slane %v3157, 4
    %v3414 = vrot.slane %v3157, 6
    %v3415 = vrot.slane %v3160, 2
    %v3416 = vrot.slane %v3160, 4
    %v3417 = vrot.slane %v3160, 6
    %v3418 = vrot.slane %v3163, 2
    %v3419 = vrot.slane %v3163, 4
    %v3420 = vrot.slane %v3163, 6
    %v3421 = vrot.slane %v3166, 2
    %v3422 = vrot.slane %v3166, 4
    %v3423 = vrot.slane %v3166, 6
    %v3424 = vrot.slane %v3169, 2
    %v3425 = vrot.slane %v3169, 4
    %v3426 = vrot.slane %v3169, 6
    %v3427 = vrot.slane %v3172, 2
    %v3428 = vrot.slane %v3172, 4
    %v3429 = vrot.slane %v3172, 6
    %v3430 = vrot.slane %v3175, 2
    %v3431 = vrot.slane %v3175, 4
    %v3432 = vrot.slane %v3175, 6
    %v3433 = vrot.slane %v3178, 2
    %v3434 = vrot.slane %v3178, 4
    %v3435 = vrot.slane %v3178, 6
    %v3436 = vrot.slane %v3181, 2
    %v3437 = vrot.slane %v3181, 4
    %v3438 = vrot.slane %v3181, 6
    %v3439 = vrot.slane %v3184, 2
    %v3440 = vrot.slane %v3184, 4
    %v3441 = vrot.slane %v3184, 6
    %v3442 = vrot.slane %v3187, 2
    %v3443 = vrot.slane %v3187, 4
    %v3444 = vrot.slane %v3187, 6
    %v3445 = vrot.slane %v3190, 2
    %v3446 = vrot.slane %v3190, 4
    %v3447 = vrot.slane %v3190, 6
    %v3448 = vrot.slane %v3193, 2
    %v3449 = vrot.slane %v3193, 4
    %v3450 = vrot.slane %v3193, 6
    %v3451 = vrot.slane %v3196, 2
    %v3452 = vrot.slane %v3196, 4
    %v3453 = vrot.slane %v3196, 6
    %v3454 = vrot.slane %v3199, 2
    %v3455 = vrot.slane %v3199, 4
    %v3456 = vrot.slane %v3199, 6
    %v3457 = vrot.slane %v3202, 2
    %v3458 = vrot.slane %v3202, 4
    %v3459 = vrot.slane %v3202, 6
    %v3460 = vrot.slane %v3205, 2
    %v3461 = vrot.slane %v3205, 4
    %v3462 = vrot.slane %v3205, 6
    %v3463 = vrot.slane %v3208, 2
    %v3464 = vrot.slane %v3208, 4
    %v3465 = vrot.slane %v3208, 6
    %v3466 = vrot.slane %v3211, 2
    %v3467 = vrot.slane %v3211, 4
    %v3468 = vrot.slane %v3211, 6
    %v3469 = vrot.slane %v3214, 2
    %v3470 = vrot.slane %v3214, 4
    %v3471 = vrot.slane %v3214, 6
    %v3472 = vrot.slane %v3217, 2
    %v3473 = vrot.slane %v3217, 4
    %v3474 = vrot.slane %v3217, 6
    %v3475 = vrot.slane %v3220, 2
    %v3476 = vrot.slane %v3220, 4
    %v3477 = vrot.slane %v3220, 6
    %v3478 = vrot.slane %v3223, 2
    %v3479 = vrot.slane %v3223, 4
    %v3480 = vrot.slane %v3223, 6
    %v3481 = vrot.slane %v3226, 2
    %v3482 = vrot.slane %v3226, 4
    %v3483 = vrot.slane %v3226, 6
    %v3484 = vrot.slane %v3229, 2
    %v3485 = vrot.slane %v3229, 4
    %v3486 = vrot.slane %v3229, 6
    %v3487 = vrot.slane %v3232, 2
    %v3488 = vrot.slane %v3232, 4
    %v3489 = vrot.slane %v3232, 6
    %v3490 = vrot.slane %v3235, 2
    %v3491 = vrot.slane %v3235, 4
    %v3492 = vrot.slane %v3235, 6
    %v3493 = vrot.slane %v3238, 2
    %v3494 = vrot.slane %v3238, 4
    %v3495 = vrot.slane %v3238, 6
    %v3496 = vrot.slane %v3241, 2
    %v3497 = vrot.slane %v3241, 4
    %v3498 = vrot.slane %v3241, 6
    %v3499 = vrot.slane %v3244, 2
    %v3500 = vrot.slane %v3244, 4
    %v3501 = vrot.slane %v3244, 6
    %v3502 = vrot.slane %v3247, 2
    %v3503 = vrot.slane %v3247, 4
    %v3504 = vrot.slane %v3247, 6
    %v3505 = vrot.slane %v3250, 2
    %v3506 = vrot.slane %v3250, 4
    %v3507 = vrot.slane %v3250, 6
    %v3508 = vrot.slane %v3253, 2
    %v3509 = vrot.slane %v3253, 4
    %v3510 = vrot.slane %v3253, 6
    %v3511 = vrot.slane %v3256, 2
    %v3512 = vrot.slane %v3256, 4
    %v3513 = vrot.slane %v3256, 6
    %v3514 = vrot.slane %v3259, 2
    %v3515 = vrot.slane %v3259, 4
    %v3516 = vrot.slane %v3259, 6
    %v3517 = vrot.slane %v3262, 2
    %v3518 = vrot.slane %v3262, 4
    %v3519 = vrot.slane %v3262, 6
    %v3520 = vrot.slane %v3265, 2
    %v3521 = vrot.slane %v3265, 4
    %v3522 = vrot.slane %v3265, 6
    %v3523 = vrot.slane %v3268, 2
    %v3524 = vrot.slane %v3268, 4
    %v3525 = vrot.slane %v3268, 6
    %v3526 = vrot.slane %v3271, 2
    %v3527 = vrot.slane %v3271, 4
    %v3528 = vrot.slane %v3271, 6
    %v3529 = vrot.slane %v3274, 2
    %v3530 = vrot.slane %v3274, 4
    %v3531 = vrot.slane %v3274, 6
    %v3532 = vrot.slane %v3277, 2
    %v3533 = vrot.slane %v3277, 4
    %v3534 = vrot.slane %v3277, 6
    %v3535 = vrot.slane %v3280, 2
    %v3536 = vrot.slane %v3280, 4
    %v3537 = vrot.slane %v3280, 6
    %v3538 = vrot.slane %v3283, 2
    %v3539 = vrot.slane %v3283, 4
    %v3540 = vrot.slane %v3283, 6
    %v3541 = vrot.slane %v3286, 2
    %v3542 = vrot.slane %v3286, 4
    %v3543 = vrot.slane %v3286, 6
    %v3544 = vrot.slane %v3289, 2
    %v3545 = vrot.slane %v3289, 4
    %v3546 = vrot.slane %v3289, 6
    %v3547 = vrot.slane %v3292, 2
    %v3548 = vrot.slane %v3292, 4
    %v3549 = vrot.slane %v3292, 6
    %v3550 = vrot.slane %v3295, 2
    %v3551 = vrot.slane %v3295, 4
    %v3552 = vrot.slane %v3295, 6
    %v3553 = vrot.slane %v3298, 2
    %v3554 = vrot.slane %v3298, 4
    %v3555 = vrot.slane %v3298, 6
    %v3556 = vrot.slane %v3301, 2
    %v3557 = vrot.slane %v3301, 4
    %v3558 = vrot.slane %v3301, 6
    %v3559 = vrot.slane %v3304, 2
    %v3560 = vrot.slane %v3304, 4
    %v3561 = vrot.slane %v3304, 6
    %v3562 = vrot.slane %v3307, 2
    %v3563 = vrot.slane %v3307, 4
    %v3564 = vrot.slane %v3307, 6
    %v3565 = vrot.slane %v3310, 2
    %v3566 = vrot.slane %v3310, 4
    %v3567 = vrot.slane %v3310, 6
    %v3568 = vrot.slane %v3313, 2
    %v3569 = vrot.slane %v3313, 4
    %v3570 = vrot.slane %v3313, 6
    %v3571 = vrot.slane %v3316, 2
    %v3572 = vrot.slane %v3316, 4
    %v3573 = vrot.slane %v3316, 6
    %v3574 = vrot.slane %v3319, 2
    %v3575 = vrot.slane %v3319, 4
    %v3576 = vrot.slane %v3319, 6
    %vm3769 = vcmask 41984
    %v3770 = vsel %vm3769, %v3130, -inf
    %v3771 = vrot.slane %v3770, 4
    %v3772 = vmax.f32 %v3770, %v3771
    %v3773 = vrot.slane %v3772, 2
    %v3774 = vmax.f32 %v3772, %v3773
    %v3775 = vrot.slane %v3774, 1
    %v3776 = vmax.f32 %v3774, %v3775
    %v3777 = vsel %vm3769, %v3385, -inf
    %v3778 = vrot.slane %v3777, 4
    %v3779 = vmax.f32 %v3777, %v3778
    %v3780 = vrot.slane %v3779, 2
    %v3781 = vmax.f32 %v3779, %v3780
    %v3782 = vrot.slane %v3781, 1
    %v3783 = vmax.f32 %v3781, %v3782
    %v3784 = vsel %vm3769, %v3386, -inf
    %v3785 = vrot.slane %v3784, 4
    %v3786 = vmax.f32 %v3784, %v3785
    %v3787 = vrot.slane %v3786, 2
    %v3788 = vmax.f32 %v3786, %v3787
    %v3789 = vrot.slane %v3788, 1
    %v3790 = vmax.f32 %v3788, %v3789
    %v3791 = vsel %vm3769, %v3387, -inf
    %v3792 = vrot.slane %v3791, 4
    %v3793 = vmax.f32 %v3791, %v3792
    %v3794 = vrot.slane %v3793, 2
    %v3795 = vmax.f32 %v3793, %v3794
    %v3796 = vrot.slane %v3795, 1
    %v3797 = vmax.f32 %v3795, %v3796
    %v3798 = vsel %vm3769, %v3133, -inf
    %v3799 = vrot.slane %v3798, 4
    %v3800 = vmax.f32 %v3798, %v3799
    %v3801 = vrot.slane %v3800, 2
    %v3802 = vmax.f32 %v3800, %v3801
    %v3803 = vrot.slane %v3802, 1
    %v3804 = vmax.f32 %v3802, %v3803
    %v3805 = vsel %vm3769, %v3388, -inf
    %v3806 = vrot.slane %v3805, 4
    %v3807 = vmax.f32 %v3805, %v3806
    %v3808 = vrot.slane %v3807, 2
    %v3809 = vmax.f32 %v3807, %v3808
    %v3810 = vrot.slane %v3809, 1
    %v3811 = vmax.f32 %v3809, %v3810
    %v3812 = vsel %vm3769, %v3389, -inf
    %v3813 = vrot.slane %v3812, 4
    %v3814 = vmax.f32 %v3812, %v3813
    %v3815 = vrot.slane %v3814, 2
    %v3816 = vmax.f32 %v3814, %v3815
    %v3817 = vrot.slane %v3816, 1
    %v3818 = vmax.f32 %v3816, %v3817
    %v3819 = vsel %vm3769, %v3390, -inf
    %v3820 = vrot.slane %v3819, 4
    %v3821 = vmax.f32 %v3819, %v3820
    %v3822 = vrot.slane %v3821, 2
    %v3823 = vmax.f32 %v3821, %v3822
    %v3824 = vrot.slane %v3823, 1
    %v3825 = vmax.f32 %v3823, %v3824
    %v3826 = vsel %vm3769, %v3136, -inf
    %v3827 = vrot.slane %v3826, 4
    %v3828 = vmax.f32 %v3826, %v3827
    %v3829 = vrot.slane %v3828, 2
    %v3830 = vmax.f32 %v3828, %v3829
    %v3831 = vrot.slane %v3830, 1
    %v3832 = vmax.f32 %v3830, %v3831
    %v3833 = vsel %vm3769, %v3391, -inf
    %v3834 = vrot.slane %v3833, 4
    %v3835 = vmax.f32 %v3833, %v3834
    %v3836 = vrot.slane %v3835, 2
    %v3837 = vmax.f32 %v3835, %v3836
    %v3838 = vrot.slane %v3837, 1
    %v3839 = vmax.f32 %v3837, %v3838
    %v3840 = vsel %vm3769, %v3392, -inf
    %v3841 = vrot.slane %v3840, 4
    %v3842 = vmax.f32 %v3840, %v3841
    %v3843 = vrot.slane %v3842, 2
    %v3844 = vmax.f32 %v3842, %v3843
    %v3845 = vrot.slane %v3844, 1
    %v3846 = vmax.f32 %v3844, %v3845
    %v3847 = vsel %vm3769, %v3393, -inf
    %v3848 = vrot.slane %v3847, 4
    %v3849 = vmax.f32 %v3847, %v3848
    %v3850 = vrot.slane %v3849, 2
    %v3851 = vmax.f32 %v3849, %v3850
    %v3852 = vrot.slane %v3851, 1
    %v3853 = vmax.f32 %v3851, %v3852
    %v3854 = vsel %vm3769, %v3139, -inf
    %v3855 = vrot.slane %v3854, 4
    %v3856 = vmax.f32 %v3854, %v3855
    %v3857 = vrot.slane %v3856, 2
    %v3858 = vmax.f32 %v3856, %v3857
    %v3859 = vrot.slane %v3858, 1
    %v3860 = vmax.f32 %v3858, %v3859
    %v3861 = vsel %vm3769, %v3394, -inf
    %v3862 = vrot.slane %v3861, 4
    %v3863 = vmax.f32 %v3861, %v3862
    %v3864 = vrot.slane %v3863, 2
    %v3865 = vmax.f32 %v3863, %v3864
    %v3866 = vrot.slane %v3865, 1
    %v3867 = vmax.f32 %v3865, %v3866
    %v3868 = vsel %vm3769, %v3395, -inf
    %v3869 = vrot.slane %v3868, 4
    %v3870 = vmax.f32 %v3868, %v3869
    %v3871 = vrot.slane %v3870, 2
    %v3872 = vmax.f32 %v3870, %v3871
    %v3873 = vrot.slane %v3872, 1
    %v3874 = vmax.f32 %v3872, %v3873
    %v3875 = vsel %vm3769, %v3396, -inf
    %v3876 = vrot.slane %v3875, 4
    %v3877 = vmax.f32 %v3875, %v3876
    %v3878 = vrot.slane %v3877, 2
    %v3879 = vmax.f32 %v3877, %v3878
    %v3880 = vrot.slane %v3879, 1
    %v3881 = vmax.f32 %v3879, %v3880
    %v3882 = vsel %vm3769, %v3142, -inf
    %v3883 = vrot.slane %v3882, 4
    %v3884 = vmax.f32 %v3882, %v3883
    %v3885 = vrot.slane %v3884, 2
    %v3886 = vmax.f32 %v3884, %v3885
    %v3887 = vrot.slane %v3886, 1
    %v3888 = vmax.f32 %v3886, %v3887
    %v3889 = vsel %vm3769, %v3397, -inf
    %v3890 = vrot.slane %v3889, 4
    %v3891 = vmax.f32 %v3889, %v3890
    %v3892 = vrot.slane %v3891, 2
    %v3893 = vmax.f32 %v3891, %v3892
    %v3894 = vrot.slane %v3893, 1
    %v3895 = vmax.f32 %v3893, %v3894
    %v3896 = vsel %vm3769, %v3398, -inf
    %v3897 = vrot.slane %v3896, 4
    %v3898 = vmax.f32 %v3896, %v3897
    %v3899 = vrot.slane %v3898, 2
    %v3900 = vmax.f32 %v3898, %v3899
    %v3901 = vrot.slane %v3900, 1
    %v3902 = vmax.f32 %v3900, %v3901
    %v3903 = vsel %vm3769, %v3399, -inf
    %v3904 = vrot.slane %v3903, 4
    %v3905 = vmax.f32 %v3903, %v3904
    %v3906 = vrot.slane %v3905, 2
    %v3907 = vmax.f32 %v3905, %v3906
    %v3908 = vrot.slane %v3907, 1
    %v3909 = vmax.f32 %v3907, %v3908
    %v3910 = vsel %vm3769, %v3145, -inf
    %v3911 = vrot.slane %v3910, 4
    %v3912 = vmax.f32 %v3910, %v3911
    %v3913 = vrot.slane %v3912, 2
    %v3914 = vmax.f32 %v3912, %v3913
    %v3915 = vrot.slane %v3914, 1
    %v3916 = vmax.f32 %v3914, %v3915
    %v3917 = vsel %vm3769, %v3400, -inf
    %v3918 = vrot.slane %v3917, 4
    %v3919 = vmax.f32 %v3917, %v3918
    %v3920 = vrot.slane %v3919, 2
    %v3921 = vmax.f32 %v3919, %v3920
    %v3922 = vrot.slane %v3921, 1
    %v3923 = vmax.f32 %v3921, %v3922
    %v3924 = vsel %vm3769, %v3401, -inf
    %v3925 = vrot.slane %v3924, 4
    %v3926 = vmax.f32 %v3924, %v3925
    %v3927 = vrot.slane %v3926, 2
    %v3928 = vmax.f32 %v3926, %v3927
    %v3929 = vrot.slane %v3928, 1
    %v3930 = vmax.f32 %v3928, %v3929
    %v3931 = vsel %vm3769, %v3402, -inf
    %v3932 = vrot.slane %v3931, 4
    %v3933 = vmax.f32 %v3931, %v3932
    %v3934 = vrot.slane %v3933, 2
    %v3935 = vmax.f32 %v3933, %v3934
    %v3936 = vrot.slane %v3935, 1
    %v3937 = vmax.f32 %v3935, %v3936
    %v3938 = vsel %vm3769, %v3148, -inf
    %v3939 = vrot.slane %v3938, 4
    %v3940 = vmax.f32 %v3938, %v3939
    %v3941 = vrot.slane %v3940, 2
    %v3942 = vmax.f32 %v3940, %v3941
    %v3943 = vrot.slane %v3942, 1
    %v3944 = vmax.f32 %v3942, %v3943
    %v3945 = vsel %vm3769, %v3403, -inf
    %v3946 = vrot.slane %v3945, 4
    %v3947 = vmax.f32 %v3945, %v3946
    %v3948 = vrot.slane %v3947, 2
    %v3949 = vmax.f32 %v3947, %v3948
    %v3950 = vrot.slane %v3949, 1
    %v3951 = vmax.f32 %v3949, %v3950
    %v3952 = vsel %vm3769, %v3404, -inf
    %v3953 = vrot.slane %v3952, 4
    %v3954 = vmax.f32 %v3952, %v3953
    %v3955 = vrot.slane %v3954, 2
    %v3956 = vmax.f32 %v3954, %v3955
    %v3957 = vrot.slane %v3956, 1
    %v3958 = vmax.f32 %v3956, %v3957
    %v3959 = vsel %vm3769, %v3405, -inf
    %v3960 = vrot.slane %v3959, 4
    %v3961 = vmax.f32 %v3959, %v3960
    %v3962 = vrot.slane %v3961, 2
    %v3963 = vmax.f32 %v3961, %v3962
    %v3964 = vrot.slane %v3963, 1
    %v3965 = vmax.f32 %v3963, %v3964
    %v3966 = vsel %vm3769, %v3151, -inf
    %v3967 = vrot.slane %v3966, 4
    %v3968 = vmax.f32 %v3966, %v3967
    %v3969 = vrot.slane %v3968, 2
    %v3970 = vmax.f32 %v3968, %v3969
    %v3971 = vrot.slane %v3970, 1
    %v3972 = vmax.f32 %v3970, %v3971
    %v3973 = vsel %vm3769, %v3406, -inf
    %v3974 = vrot.slane %v3973, 4
    %v3975 = vmax.f32 %v3973, %v3974
    %v3976 = vrot.slane %v3975, 2
    %v3977 = vmax.f32 %v3975, %v3976
    %v3978 = vrot.slane %v3977, 1
    %v3979 = vmax.f32 %v3977, %v3978
    %v3980 = vsel %vm3769, %v3407, -inf
    %v3981 = vrot.slane %v3980, 4
    %v3982 = vmax.f32 %v3980, %v3981
    %v3983 = vrot.slane %v3982, 2
    %v3984 = vmax.f32 %v3982, %v3983
    %v3985 = vrot.slane %v3984, 1
    %v3986 = vmax.f32 %v3984, %v3985
    %v3987 = vsel %vm3769, %v3408, -inf
    %v3988 = vrot.slane %v3987, 4
    %v3989 = vmax.f32 %v3987, %v3988
    %v3990 = vrot.slane %v3989, 2
    %v3991 = vmax.f32 %v3989, %v3990
    %v3992 = vrot.slane %v3991, 1
    %v3993 = vmax.f32 %v3991, %v3992
    %v3994 = vsel %vm3769, %v3154, -inf
    %v3995 = vrot.slane %v3994, 4
    %v3996 = vmax.f32 %v3994, %v3995
    %v3997 = vrot.slane %v3996, 2
    %v3998 = vmax.f32 %v3996, %v3997
    %v3999 = vrot.slane %v3998, 1
    %v4000 = vmax.f32 %v3998, %v3999
    %v4001 = vsel %vm3769, %v3409, -inf
    %v4002 = vrot.slane %v4001, 4
    %v4003 = vmax.f32 %v4001, %v4002
    %v4004 = vrot.slane %v4003, 2
    %v4005 = vmax.f32 %v4003, %v4004
    %v4006 = vrot.slane %v4005, 1
    %v4007 = vmax.f32 %v4005, %v4006
    %v4008 = vsel %vm3769, %v3410, -inf
    %v4009 = vrot.slane %v4008, 4
    %v4010 = vmax.f32 %v4008, %v4009
    %v4011 = vrot.slane %v4010, 2
    %v4012 = vmax.f32 %v4010, %v4011
    %v4013 = vrot.slane %v4012, 1
    %v4014 = vmax.f32 %v4012, %v4013
    %v4015 = vsel %vm3769, %v3411, -inf
    %v4016 = vrot.slane %v4015, 4
    %v4017 = vmax.f32 %v4015, %v4016
    %v4018 = vrot.slane %v4017, 2
    %v4019 = vmax.f32 %v4017, %v4018
    %v4020 = vrot.slane %v4019, 1
    %v4021 = vmax.f32 %v4019, %v4020
    %v4022 = vsel %vm3769, %v3157, -inf
    %v4023 = vrot.slane %v4022, 4
    %v4024 = vmax.f32 %v4022, %v4023
    %v4025 = vrot.slane %v4024, 2
    %v4026 = vmax.f32 %v4024, %v4025
    %v4027 = vrot.slane %v4026, 1
    %v4028 = vmax.f32 %v4026, %v4027
    %v4029 = vsel %vm3769, %v3412, -inf
    %v4030 = vrot.slane %v4029, 4
    %v4031 = vmax.f32 %v4029, %v4030
    %v4032 = vrot.slane %v4031, 2
    %v4033 = vmax.f32 %v4031, %v4032
    %v4034 = vrot.slane %v4033, 1
    %v4035 = vmax.f32 %v4033, %v4034
    %v4036 = vsel %vm3769, %v3413, -inf
    %v4037 = vrot.slane %v4036, 4
    %v4038 = vmax.f32 %v4036, %v4037
    %v4039 = vrot.slane %v4038, 2
    %v4040 = vmax.f32 %v4038, %v4039
    %v4041 = vrot.slane %v4040, 1
    %v4042 = vmax.f32 %v4040, %v4041
    %v4043 = vsel %vm3769, %v3414, -inf
    %v4044 = vrot.slane %v4043, 4
    %v4045 = vmax.f32 %v4043, %v4044
    %v4046 = vrot.slane %v4045, 2
    %v4047 = vmax.f32 %v4045, %v4046
    %v4048 = vrot.slane %v4047, 1
    %v4049 = vmax.f32 %v4047, %v4048
    %v4050 = vsel %vm3769, %v3160, -inf
    %v4051 = vrot.slane %v4050, 4
    %v4052 = vmax.f32 %v4050, %v4051
    %v4053 = vrot.slane %v4052, 2
    %v4054 = vmax.f32 %v4052, %v4053
    %v4055 = vrot.slane %v4054, 1
    %v4056 = vmax.f32 %v4054, %v4055
    %v4057 = vsel %vm3769, %v3415, -inf
    %v4058 = vrot.slane %v4057, 4
    %v4059 = vmax.f32 %v4057, %v4058
    %v4060 = vrot.slane %v4059, 2
    %v4061 = vmax.f32 %v4059, %v4060
    %v4062 = vrot.slane %v4061, 1
    %v4063 = vmax.f32 %v4061, %v4062
    %v4064 = vsel %vm3769, %v3416, -inf
    %v4065 = vrot.slane %v4064, 4
    %v4066 = vmax.f32 %v4064, %v4065
    %v4067 = vrot.slane %v4066, 2
    %v4068 = vmax.f32 %v4066, %v4067
    %v4069 = vrot.slane %v4068, 1
    %v4070 = vmax.f32 %v4068, %v4069
    %v4071 = vsel %vm3769, %v3417, -inf
    %v4072 = vrot.slane %v4071, 4
    %v4073 = vmax.f32 %v4071, %v4072
    %v4074 = vrot.slane %v4073, 2
    %v4075 = vmax.f32 %v4073, %v4074
    %v4076 = vrot.slane %v4075, 1
    %v4077 = vmax.f32 %v4075, %v4076
    %v4078 = vsel %vm3769, %v3163, -inf
    %v4079 = vrot.slane %v4078, 4
    %v4080 = vmax.f32 %v4078, %v4079
    %v4081 = vrot.slane %v4080, 2
    %v4082 = vmax.f32 %v4080, %v4081
    %v4083 = vrot.slane %v4082, 1
    %v4084 = vmax.f32 %v4082, %v4083
    %v4085 = vsel %vm3769, %v3418, -inf
    %v4086 = vrot.slane %v4085, 4
    %v4087 = vmax.f32 %v4085, %v4086
    %v4088 = vrot.slane %v4087, 2
    %v4089 = vmax.f32 %v4087, %v4088
    %v4090 = vrot.slane %v4089, 1
    %v4091 = vmax.f32 %v4089, %v4090
    %v4092 = vsel %vm3769, %v3419, -inf
    %v4093 = vrot.slane %v4092, 4
    %v4094 = vmax.f32 %v4092, %v4093
    %v4095 = vrot.slane %v4094, 2
    %v4096 = vmax.f32 %v4094, %v4095
    %v4097 = vrot.slane %v4096, 1
    %v4098 = vmax.f32 %v4096, %v4097
    %v4099 = vsel %vm3769, %v3420, -inf
    %v4100 = vrot.slane %v4099, 4
    %v4101 = vmax.f32 %v4099, %v4100
    %v4102 = vrot.slane %v4101, 2
    %v4103 = vmax.f32 %v4101, %v4102
    %v4104 = vrot.slane %v4103, 1
    %v4105 = vmax.f32 %v4103, %v4104
    %v4106 = vsel %vm3769, %v3166, -inf
    %v4107 = vrot.slane %v4106, 4
    %v4108 = vmax.f32 %v4106, %v4107
    %v4109 = vrot.slane %v4108, 2
    %v4110 = vmax.f32 %v4108, %v4109
    %v4111 = vrot.slane %v4110, 1
    %v4112 = vmax.f32 %v4110, %v4111
    %v4113 = vsel %vm3769, %v3421, -inf
    %v4114 = vrot.slane %v4113, 4
    %v4115 = vmax.f32 %v4113, %v4114
    %v4116 = vrot.slane %v4115, 2
    %v4117 = vmax.f32 %v4115, %v4116
    %v4118 = vrot.slane %v4117, 1
    %v4119 = vmax.f32 %v4117, %v4118
    %v4120 = vsel %vm3769, %v3422, -inf
    %v4121 = vrot.slane %v4120, 4
    %v4122 = vmax.f32 %v4120, %v4121
    %v4123 = vrot.slane %v4122, 2
    %v4124 = vmax.f32 %v4122, %v4123
    %v4125 = vrot.slane %v4124, 1
    %v4126 = vmax.f32 %v4124, %v4125
    %v4127 = vsel %vm3769, %v3423, -inf
    %v4128 = vrot.slane %v4127, 4
    %v4129 = vmax.f32 %v4127, %v4128
    %v4130 = vrot.slane %v4129, 2
    %v4131 = vmax.f32 %v4129, %v4130
    %v4132 = vrot.slane %v4131, 1
    %v4133 = vmax.f32 %v4131, %v4132
    %v4134 = vsel %vm3769, %v3169, -inf
    %v4135 = vrot.slane %v4134, 4
    %v4136 = vmax.f32 %v4134, %v4135
    %v4137 = vrot.slane %v4136, 2
    %v4138 = vmax.f32 %v4136, %v4137
    %v4139 = vrot.slane %v4138, 1
    %v4140 = vmax.f32 %v4138, %v4139
    %v4141 = vsel %vm3769, %v3424, -inf
    %v4142 = vrot.slane %v4141, 4
    %v4143 = vmax.f32 %v4141, %v4142
    %v4144 = vrot.slane %v4143, 2
    %v4145 = vmax.f32 %v4143, %v4144
    %v4146 = vrot.slane %v4145, 1
    %v4147 = vmax.f32 %v4145, %v4146
    %v4148 = vsel %vm3769, %v3425, -inf
    %v4149 = vrot.slane %v4148, 4
    %v4150 = vmax.f32 %v4148, %v4149
    %v4151 = vrot.slane %v4150, 2
    %v4152 = vmax.f32 %v4150, %v4151
    %v4153 = vrot.slane %v4152, 1
    %v4154 = vmax.f32 %v4152, %v4153
    %v4155 = vsel %vm3769, %v3426, -inf
    %v4156 = vrot.slane %v4155, 4
    %v4157 = vmax.f32 %v4155, %v4156
    %v4158 = vrot.slane %v4157, 2
    %v4159 = vmax.f32 %v4157, %v4158
    %v4160 = vrot.slane %v4159, 1
    %v4161 = vmax.f32 %v4159, %v4160
    %v4162 = vsel %vm3769, %v3172, -inf
    %v4163 = vrot.slane %v4162, 4
    %v4164 = vmax.f32 %v4162, %v4163
    %v4165 = vrot.slane %v4164, 2
    %v4166 = vmax.f32 %v4164, %v4165
    %v4167 = vrot.slane %v4166, 1
    %v4168 = vmax.f32 %v4166, %v4167
    %v4169 = vsel %vm3769, %v3427, -inf
    %v4170 = vrot.slane %v4169, 4
    %v4171 = vmax.f32 %v4169, %v4170
    %v4172 = vrot.slane %v4171, 2
    %v4173 = vmax.f32 %v4171, %v4172
    %v4174 = vrot.slane %v4173, 1
    %v4175 = vmax.f32 %v4173, %v4174
    %v4176 = vsel %vm3769, %v3428, -inf
    %v4177 = vrot.slane %v4176, 4
    %v4178 = vmax.f32 %v4176, %v4177
    %v4179 = vrot.slane %v4178, 2
    %v4180 = vmax.f32 %v4178, %v4179
    %v4181 = vrot.slane %v4180, 1
    %v4182 = vmax.f32 %v4180, %v4181
    %v4183 = vsel %vm3769, %v3429, -inf
    %v4184 = vrot.slane %v4183, 4
    %v4185 = vmax.f32 %v4183, %v4184
    %v4186 = vrot.slane %v4185, 2
    %v4187 = vmax.f32 %v4185, %v4186
    %v4188 = vrot.slane %v4187, 1
    %v4189 = vmax.f32 %v4187, %v4188
    %v4190 = vsel %vm3769, %v3175, -inf
    %v4191 = vrot.slane %v4190, 4
    %v4192 = vmax.f32 %v4190, %v4191
    %v4193 = vrot.slane %v4192, 2
    %v4194 = vmax.f32 %v4192, %v4193
    %v4195 = vrot.slane %v4194, 1
    %v4196 = vmax.f32 %v4194, %v4195
    %v4197 = vsel %vm3769, %v3430, -inf
    %v4198 = vrot.slane %v4197, 4
    %v4199 = vmax.f32 %v4197, %v4198
    %v4200 = vrot.slane %v4199, 2
    %v4201 = vmax.f32 %v4199, %v4200
    %v4202 = vrot.slane %v4201, 1
    %v4203 = vmax.f32 %v4201, %v4202
    %v4204 = vsel %vm3769, %v3431, -inf
    %v4205 = vrot.slane %v4204, 4
    %v4206 = vmax.f32 %v4204, %v4205
    %v4207 = vrot.slane %v4206, 2
    %v4208 = vmax.f32 %v4206, %v4207
    %v4209 = vrot.slane %v4208, 1
    %v4210 = vmax.f32 %v4208, %v4209
    %v4211 = vsel %vm3769, %v3432, -inf
    %v4212 = vrot.slane %v4211, 4
    %v4213 = vmax.f32 %v4211, %v4212
    %v4214 = vrot.slane %v4213, 2
    %v4215 = vmax.f32 %v4213, %v4214
    %v4216 = vrot.slane %v4215, 1
    %v4217 = vmax.f32 %v4215, %v4216
    %v4218 = vsel %vm3769, %v3178, -inf
    %v4219 = vrot.slane %v4218, 4
    %v4220 = vmax.f32 %v4218, %v4219
    %v4221 = vrot.slane %v4220, 2
    %v4222 = vmax.f32 %v4220, %v4221
    %v4223 = vrot.slane %v4222, 1
    %v4224 = vmax.f32 %v4222, %v4223
    %v4225 = vsel %vm3769, %v3433, -inf
    %v4226 = vrot.slane %v4225, 4
    %v4227 = vmax.f32 %v4225, %v4226
    %v4228 = vrot.slane %v4227, 2
    %v4229 = vmax.f32 %v4227, %v4228
    %v4230 = vrot.slane %v4229, 1
    %v4231 = vmax.f32 %v4229, %v4230
    %v4232 = vsel %vm3769, %v3434, -inf
    %v4233 = vrot.slane %v4232, 4
    %v4234 = vmax.f32 %v4232, %v4233
    %v4235 = vrot.slane %v4234, 2
    %v4236 = vmax.f32 %v4234, %v4235
    %v4237 = vrot.slane %v4236, 1
    %v4238 = vmax.f32 %v4236, %v4237
    %v4239 = vsel %vm3769, %v3435, -inf
    %v4240 = vrot.slane %v4239, 4
    %v4241 = vmax.f32 %v4239, %v4240
    %v4242 = vrot.slane %v4241, 2
    %v4243 = vmax.f32 %v4241, %v4242
    %v4244 = vrot.slane %v4243, 1
    %v4245 = vmax.f32 %v4243, %v4244
    %v4246 = vsel %vm3769, %v3181, -inf
    %v4247 = vrot.slane %v4246, 4
    %v4248 = vmax.f32 %v4246, %v4247
    %v4249 = vrot.slane %v4248, 2
    %v4250 = vmax.f32 %v4248, %v4249
    %v4251 = vrot.slane %v4250, 1
    %v4252 = vmax.f32 %v4250, %v4251
    %v4253 = vsel %vm3769, %v3436, -inf
    %v4254 = vrot.slane %v4253, 4
    %v4255 = vmax.f32 %v4253, %v4254
    %v4256 = vrot.slane %v4255, 2
    %v4257 = vmax.f32 %v4255, %v4256
    %v4258 = vrot.slane %v4257, 1
    %v4259 = vmax.f32 %v4257, %v4258
    %v4260 = vsel %vm3769, %v3437, -inf
    %v4261 = vrot.slane %v4260, 4
    %v4262 = vmax.f32 %v4260, %v4261
    %v4263 = vrot.slane %v4262, 2
    %v4264 = vmax.f32 %v4262, %v4263
    %v4265 = vrot.slane %v4264, 1
    %v4266 = vmax.f32 %v4264, %v4265
    %v4267 = vsel %vm3769, %v3438, -inf
    %v4268 = vrot.slane %v4267, 4
    %v4269 = vmax.f32 %v4267, %v4268
    %v4270 = vrot.slane %v4269, 2
    %v4271 = vmax.f32 %v4269, %v4270
    %v4272 = vrot.slane %v4271, 1
    %v4273 = vmax.f32 %v4271, %v4272
    %v4274 = vsel %vm3769, %v3184, -inf
    %v4275 = vrot.slane %v4274, 4
    %v4276 = vmax.f32 %v4274, %v4275
    %v4277 = vrot.slane %v4276, 2
    %v4278 = vmax.f32 %v4276, %v4277
    %v4279 = vrot.slane %v4278, 1
    %v4280 = vmax.f32 %v4278, %v4279
    %v4281 = vsel %vm3769, %v3439, -inf
    %v4282 = vrot.slane %v4281, 4
    %v4283 = vmax.f32 %v4281, %v4282
    %v4284 = vrot.slane %v4283, 2
    %v4285 = vmax.f32 %v4283, %v4284
    %v4286 = vrot.slane %v4285, 1
    %v4287 = vmax.f32 %v4285, %v4286
    %v4288 = vsel %vm3769, %v3440, -inf
    %v4289 = vrot.slane %v4288, 4
    %v4290 = vmax.f32 %v4288, %v4289
    %v4291 = vrot.slane %v4290, 2
    %v4292 = vmax.f32 %v4290, %v4291
    %v4293 = vrot.slane %v4292, 1
    %v4294 = vmax.f32 %v4292, %v4293
    %v4295 = vsel %vm3769, %v3441, -inf
    %v4296 = vrot.slane %v4295, 4
    %v4297 = vmax.f32 %v4295, %v4296
    %v4298 = vrot.slane %v4297, 2
    %v4299 = vmax.f32 %v4297, %v4298
    %v4300 = vrot.slane %v4299, 1
    %v4301 = vmax.f32 %v4299, %v4300
    %v4302 = vsel %vm3769, %v3187, -inf
    %v4303 = vrot.slane %v4302, 4
    %v4304 = vmax.f32 %v4302, %v4303
    %v4305 = vrot.slane %v4304, 2
    %v4306 = vmax.f32 %v4304, %v4305
    %v4307 = vrot.slane %v4306, 1
    %v4308 = vmax.f32 %v4306, %v4307
    %v4309 = vsel %vm3769, %v3442, -inf
    %v4310 = vrot.slane %v4309, 4
    %v4311 = vmax.f32 %v4309, %v4310
    %v4312 = vrot.slane %v4311, 2
    %v4313 = vmax.f32 %v4311, %v4312
    %v4314 = vrot.slane %v4313, 1
    %v4315 = vmax.f32 %v4313, %v4314
    %v4316 = vsel %vm3769, %v3443, -inf
    %v4317 = vrot.slane %v4316, 4
    %v4318 = vmax.f32 %v4316, %v4317
    %v4319 = vrot.slane %v4318, 2
    %v4320 = vmax.f32 %v4318, %v4319
    %v4321 = vrot.slane %v4320, 1
    %v4322 = vmax.f32 %v4320, %v4321
    %v4323 = vsel %vm3769, %v3444, -inf
    %v4324 = vrot.slane %v4323, 4
    %v4325 = vmax.f32 %v4323, %v4324
    %v4326 = vrot.slane %v4325, 2
    %v4327 = vmax.f32 %v4325, %v4326
    %v4328 = vrot.slane %v4327, 1
    %v4329 = vmax.f32 %v4327, %v4328
    %v4330 = vsel %vm3769, %v3190, -inf
    %v4331 = vrot.slane %v4330, 4
    %v4332 = vmax.f32 %v4330, %v4331
    %v4333 = vrot.slane %v4332, 2
    %v4334 = vmax.f32 %v4332, %v4333
    %v4335 = vrot.slane %v4334, 1
    %v4336 = vmax.f32 %v4334, %v4335
    %v4337 = vsel %vm3769, %v3445, -inf
    %v4338 = vrot.slane %v4337, 4
    %v4339 = vmax.f32 %v4337, %v4338
    %v4340 = vrot.slane %v4339, 2
    %v4341 = vmax.f32 %v4339, %v4340
    %v4342 = vrot.slane %v4341, 1
    %v4343 = vmax.f32 %v4341, %v4342
    %v4344 = vsel %vm3769, %v3446, -inf
    %v4345 = vrot.slane %v4344, 4
    %v4346 = vmax.f32 %v4344, %v4345
    %v4347 = vrot.slane %v4346, 2
    %v4348 = vmax.f32 %v4346, %v4347
    %v4349 = vrot.slane %v4348, 1
    %v4350 = vmax.f32 %v4348, %v4349
    %v4351 = vsel %vm3769, %v3447, -inf
    %v4352 = vrot.slane %v4351, 4
    %v4353 = vmax.f32 %v4351, %v4352
    %v4354 = vrot.slane %v4353, 2
    %v4355 = vmax.f32 %v4353, %v4354
    %v4356 = vrot.slane %v4355, 1
    %v4357 = vmax.f32 %v4355, %v4356
    %v4358 = vsel %vm3769, %v3193, -inf
    %v4359 = vrot.slane %v4358, 4
    %v4360 = vmax.f32 %v4358, %v4359
    %v4361 = vrot.slane %v4360, 2
    %v4362 = vmax.f32 %v4360, %v4361
    %v4363 = vrot.slane %v4362, 1
    %v4364 = vmax.f32 %v4362, %v4363
    %v4365 = vsel %vm3769, %v3448, -inf
    %v4366 = vrot.slane %v4365, 4
    %v4367 = vmax.f32 %v4365, %v4366
    %v4368 = vrot.slane %v4367, 2
    %v4369 = vmax.f32 %v4367, %v4368
    %v4370 = vrot.slane %v4369, 1
    %v4371 = vmax.f32 %v4369, %v4370
    %v4372 = vsel %vm3769, %v3449, -inf
    %v4373 = vrot.slane %v4372, 4
    %v4374 = vmax.f32 %v4372, %v4373
    %v4375 = vrot.slane %v4374, 2
    %v4376 = vmax.f32 %v4374, %v4375
    %v4377 = vrot.slane %v4376, 1
    %v4378 = vmax.f32 %v4376, %v4377
    %v4379 = vsel %vm3769, %v3450, -inf
    %v4380 = vrot.slane %v4379, 4
    %v4381 = vmax.f32 %v4379, %v4380
    %v4382 = vrot.slane %v4381, 2
    %v4383 = vmax.f32 %v4381, %v4382
    %v4384 = vrot.slane %v4383, 1
    %v4385 = vmax.f32 %v4383, %v4384
    %v4386 = vsel %vm3769, %v3196, -inf
    %v4387 = vrot.slane %v4386, 4
    %v4388 = vmax.f32 %v4386, %v4387
    %v4389 = vrot.slane %v4388, 2
    %v4390 = vmax.f32 %v4388, %v4389
    %v4391 = vrot.slane %v4390, 1
    %v4392 = vmax.f32 %v4390, %v4391
    %v4393 = vsel %vm3769, %v3451, -inf
    %v4394 = vrot.slane %v4393, 4
    %v4395 = vmax.f32 %v4393, %v4394
    %v4396 = vrot.slane %v4395, 2
    %v4397 = vmax.f32 %v4395, %v4396
    %v4398 = vrot.slane %v4397, 1
    %v4399 = vmax.f32 %v4397, %v4398
    %v4400 = vsel %vm3769, %v3452, -inf
    %v4401 = vrot.slane %v4400, 4
    %v4402 = vmax.f32 %v4400, %v4401
    %v4403 = vrot.slane %v4402, 2
    %v4404 = vmax.f32 %v4402, %v4403
    %v4405 = vrot.slane %v4404, 1
    %v4406 = vmax.f32 %v4404, %v4405
    %v4407 = vsel %vm3769, %v3453, -inf
    %v4408 = vrot.slane %v4407, 4
    %v4409 = vmax.f32 %v4407, %v4408
    %v4410 = vrot.slane %v4409, 2
    %v4411 = vmax.f32 %v4409, %v4410
    %v4412 = vrot.slane %v4411, 1
    %v4413 = vmax.f32 %v4411, %v4412
    %v4414 = vsel %vm3769, %v3199, -inf
    %v4415 = vrot.slane %v4414, 4
    %v4416 = vmax.f32 %v4414, %v4415
    %v4417 = vrot.slane %v4416, 2
    %v4418 = vmax.f32 %v4416, %v4417
    %v4419 = vrot.slane %v4418, 1
    %v4420 = vmax.f32 %v4418, %v4419
    %v4421 = vsel %vm3769, %v3454, -inf
    %v4422 = vrot.slane %v4421, 4
    %v4423 = vmax.f32 %v4421, %v4422
    %v4424 = vrot.slane %v4423, 2
    %v4425 = vmax.f32 %v4423, %v4424
    %v4426 = vrot.slane %v4425, 1
    %v4427 = vmax.f32 %v4425, %v4426
    %v4428 = vsel %vm3769, %v3455, -inf
    %v4429 = vrot.slane %v4428, 4
    %v4430 = vmax.f32 %v4428, %v4429
    %v4431 = vrot.slane %v4430, 2
    %v4432 = vmax.f32 %v4430, %v4431
    %v4433 = vrot.slane %v4432, 1
    %v4434 = vmax.f32 %v4432, %v4433
    %v4435 = vsel %vm3769, %v3456, -inf
    %v4436 = vrot.slane %v4435, 4
    %v4437 = vmax.f32 %v4435, %v4436
    %v4438 = vrot.slane %v4437, 2
    %v4439 = vmax.f32 %v4437, %v4438
    %v4440 = vrot.slane %v4439, 1
    %v4441 = vmax.f32 %v4439, %v4440
    %v4442 = vsel %vm3769, %v3202, -inf
    %v4443 = vrot.slane %v4442, 4
    %v4444 = vmax.f32 %v4442, %v4443
    %v4445 = vrot.slane %v4444, 2
    %v4446 = vmax.f32 %v4444, %v4445
    %v4447 = vrot.slane %v4446, 1
    %v4448 = vmax.f32 %v4446, %v4447
    %v4449 = vsel %vm3769, %v3457, -inf
    %v4450 = vrot.slane %v4449, 4
    %v4451 = vmax.f32 %v4449, %v4450
    %v4452 = vrot.slane %v4451, 2
    %v4453 = vmax.f32 %v4451, %v4452
    %v4454 = vrot.slane %v4453, 1
    %v4455 = vmax.f32 %v4453, %v4454
    %v4456 = vsel %vm3769, %v3458, -inf
    %v4457 = vrot.slane %v4456, 4
    %v4458 = vmax.f32 %v4456, %v4457
    %v4459 = vrot.slane %v4458, 2
    %v4460 = vmax.f32 %v4458, %v4459
    %v4461 = vrot.slane %v4460, 1
    %v4462 = vmax.f32 %v4460, %v4461
    %v4463 = vsel %vm3769, %v3459, -inf
    %v4464 = vrot.slane %v4463, 4
    %v4465 = vmax.f32 %v4463, %v4464
    %v4466 = vrot.slane %v4465, 2
    %v4467 = vmax.f32 %v4465, %v4466
    %v4468 = vrot.slane %v4467, 1
    %v4469 = vmax.f32 %v4467, %v4468
    %v4470 = vsel %vm3769, %v3205, -inf
    %v4471 = vrot.slane %v4470, 4
    %v4472 = vmax.f32 %v4470, %v4471
    %v4473 = vrot.slane %v4472, 2
    %v4474 = vmax.f32 %v4472, %v4473
    %v4475 = vrot.slane %v4474, 1
    %v4476 = vmax.f32 %v4474, %v4475
    %v4477 = vsel %vm3769, %v3460, -inf
    %v4478 = vrot.slane %v4477, 4
    %v4479 = vmax.f32 %v4477, %v4478
    %v4480 = vrot.slane %v4479, 2
    %v4481 = vmax.f32 %v4479, %v4480
    %v4482 = vrot.slane %v4481, 1
    %v4483 = vmax.f32 %v4481, %v4482
    %v4484 = vsel %vm3769, %v3461, -inf
    %v4485 = vrot.slane %v4484, 4
    %v4486 = vmax.f32 %v4484, %v4485
    %v4487 = vrot.slane %v4486, 2
    %v4488 = vmax.f32 %v4486, %v4487
    %v4489 = vrot.slane %v4488, 1
    %v4490 = vmax.f32 %v4488, %v4489
    %v4491 = vsel %vm3769, %v3462, -inf
    %v4492 = vrot.slane %v4491, 4
    %v4493 = vmax.f32 %v4491, %v4492
    %v4494 = vrot.slane %v4493, 2
    %v4495 = vmax.f32 %v4493, %v4494
    %v4496 = vrot.slane %v4495, 1
    %v4497 = vmax.f32 %v4495, %v4496
    %v4498 = vsel %vm3769, %v3208, -inf
    %v4499 = vrot.slane %v4498, 4
    %v4500 = vmax.f32 %v4498, %v4499
    %v4501 = vrot.slane %v4500, 2
    %v4502 = vmax.f32 %v4500, %v4501
    %v4503 = vrot.slane %v4502, 1
    %v4504 = vmax.f32 %v4502, %v4503
    %v4505 = vsel %vm3769, %v3463, -inf
    %v4506 = vrot.slane %v4505, 4
    %v4507 = vmax.f32 %v4505, %v4506
    %v4508 = vrot.slane %v4507, 2
    %v4509 = vmax.f32 %v4507, %v4508
    %v4510 = vrot.slane %v4509, 1
    %v4511 = vmax.f32 %v4509, %v4510
    %v4512 = vsel %vm3769, %v3464, -inf
    %v4513 = vrot.slane %v4512, 4
    %v4514 = vmax.f32 %v4512, %v4513
    %v4515 = vrot.slane %v4514, 2
    %v4516 = vmax.f32 %v4514, %v4515
    %v4517 = vrot.slane %v4516, 1
    %v4518 = vmax.f32 %v4516, %v4517
    %v4519 = vsel %vm3769, %v3465, -inf
    %v4520 = vrot.slane %v4519, 4
    %v4521 = vmax.f32 %v4519, %v4520
    %v4522 = vrot.slane %v4521, 2
    %v4523 = vmax.f32 %v4521, %v4522
    %v4524 = vrot.slane %v4523, 1
    %v4525 = vmax.f32 %v4523, %v4524
    %v4526 = vsel %vm3769, %v3211, -inf
    %v4527 = vrot.slane %v4526, 4
    %v4528 = vmax.f32 %v4526, %v4527
    %v4529 = vrot.slane %v4528, 2
    %v4530 = vmax.f32 %v4528, %v4529
    %v4531 = vrot.slane %v4530, 1
    %v4532 = vmax.f32 %v4530, %v4531
    %v4533 = vsel %vm3769, %v3466, -inf
    %v4534 = vrot.slane %v4533, 4
    %v4535 = vmax.f32 %v4533, %v4534
    %v4536 = vrot.slane %v4535, 2
    %v4537 = vmax.f32 %v4535, %v4536
    %v4538 = vrot.slane %v4537, 1
    %v4539 = vmax.f32 %v4537, %v4538
    %v4540 = vsel %vm3769, %v3467, -inf
    %v4541 = vrot.slane %v4540, 4
    %v4542 = vmax.f32 %v4540, %v4541
    %v4543 = vrot.slane %v4542, 2
    %v4544 = vmax.f32 %v4542, %v4543
    %v4545 = vrot.slane %v4544, 1
    %v4546 = vmax.f32 %v4544, %v4545
    %v4547 = vsel %vm3769, %v3468, -inf
    %v4548 = vrot.slane %v4547, 4
    %v4549 = vmax.f32 %v4547, %v4548
    %v4550 = vrot.slane %v4549, 2
    %v4551 = vmax.f32 %v4549, %v4550
    %v4552 = vrot.slane %v4551, 1
    %v4553 = vmax.f32 %v4551, %v4552
    %v4554 = vsel %vm3769, %v3214, -inf
    %v4555 = vrot.slane %v4554, 4
    %v4556 = vmax.f32 %v4554, %v4555
    %v4557 = vrot.slane %v4556, 2
    %v4558 = vmax.f32 %v4556, %v4557
    %v4559 = vrot.slane %v4558, 1
    %v4560 = vmax.f32 %v4558, %v4559
    %v4561 = vsel %vm3769, %v3469, -inf
    %v4562 = vrot.slane %v4561, 4
    %v4563 = vmax.f32 %v4561, %v4562
    %v4564 = vrot.slane %v4563, 2
    %v4565 = vmax.f32 %v4563, %v4564
    %v4566 = vrot.slane %v4565, 1
    %v4567 = vmax.f32 %v4565, %v4566
    %v4568 = vsel %vm3769, %v3470, -inf
    %v4569 = vrot.slane %v4568, 4
    %v4570 = vmax.f32 %v4568, %v4569
    %v4571 = vrot.slane %v4570, 2
    %v4572 = vmax.f32 %v4570, %v4571
    %v4573 = vrot.slane %v4572, 1
    %v4574 = vmax.f32 %v4572, %v4573
    %v4575 = vsel %vm3769, %v3471, -inf
    %v4576 = vrot.slane %v4575, 4
    %v4577 = vmax.f32 %v4575, %v4576
    %v4578 = vrot.slane %v4577, 2
    %v4579 = vmax.f32 %v4577, %v4578
    %v4580 = vrot.slane %v4579, 1
    %v4581 = vmax.f32 %v4579, %v4580
    %v4582 = vsel %vm3769, %v3217, -inf
    %v4583 = vrot.slane %v4582, 4
    %v4584 = vmax.f32 %v4582, %v4583
    %v4585 = vrot.slane %v4584, 2
    %v4586 = vmax.f32 %v4584, %v4585
    %v4587 = vrot.slane %v4586, 1
    %v4588 = vmax.f32 %v4586, %v4587
    %v4589 = vsel %vm3769, %v3472, -inf
    %v4590 = vrot.slane %v4589, 4
    %v4591 = vmax.f32 %v4589, %v4590
    %v4592 = vrot.slane %v4591, 2
    %v4593 = vmax.f32 %v4591, %v4592
    %v4594 = vrot.slane %v4593, 1
    %v4595 = vmax.f32 %v4593, %v4594
    %v4596 = vsel %vm3769, %v3473, -inf
    %v4597 = vrot.slane %v4596, 4
    %v4598 = vmax.f32 %v4596, %v4597
    %v4599 = vrot.slane %v4598, 2
    %v4600 = vmax.f32 %v4598, %v4599
    %v4601 = vrot.slane %v4600, 1
    %v4602 = vmax.f32 %v4600, %v4601
    %v4603 = vsel %vm3769, %v3474, -inf
    %v4604 = vrot.slane %v4603, 4
    %v4605 = vmax.f32 %v4603, %v4604
    %v4606 = vrot.slane %v4605, 2
    %v4607 = vmax.f32 %v4605, %v4606
    %v4608 = vrot.slane %v4607, 1
    %v4609 = vmax.f32 %v4607, %v4608
    %v4610 = vsel %vm3769, %v3220, -inf
    %v4611 = vrot.slane %v4610, 4
    %v4612 = vmax.f32 %v4610, %v4611
    %v4613 = vrot.slane %v4612, 2
    %v4614 = vmax.f32 %v4612, %v4613
    %v4615 = vrot.slane %v4614, 1
    %v4616 = vmax.f32 %v4614, %v4615
    %v4617 = vsel %vm3769, %v3475, -inf
    %v4618 = vrot.slane %v4617, 4
    %v4619 = vmax.f32 %v4617, %v4618
    %v4620 = vrot.slane %v4619, 2
    %v4621 = vmax.f32 %v4619, %v4620
    %v4622 = vrot.slane %v4621, 1
    %v4623 = vmax.f32 %v4621, %v4622
    %v4624 = vsel %vm3769, %v3476, -inf
    %v4625 = vrot.slane %v4624, 4
    %v4626 = vmax.f32 %v4624, %v4625
    %v4627 = vrot.slane %v4626, 2
    %v4628 = vmax.f32 %v4626, %v4627
    %v4629 = vrot.slane %v4628, 1
    %v4630 = vmax.f32 %v4628, %v4629
    %v4631 = vsel %vm3769, %v3477, -inf
    %v4632 = vrot.slane %v4631, 4
    %v4633 = vmax.f32 %v4631, %v4632
    %v4634 = vrot.slane %v4633, 2
    %v4635 = vmax.f32 %v4633, %v4634
    %v4636 = vrot.slane %v4635, 1
    %v4637 = vmax.f32 %v4635, %v4636
    %v4638 = vsel %vm3769, %v3223, -inf
    %v4639 = vrot.slane %v4638, 4
    %v4640 = vmax.f32 %v4638, %v4639
    %v4641 = vrot.slane %v4640, 2
    %v4642 = vmax.f32 %v4640, %v4641
    %v4643 = vrot.slane %v4642, 1
    %v4644 = vmax.f32 %v4642, %v4643
    %v4645 = vsel %vm3769, %v3478, -inf
    %v4646 = vrot.slane %v4645, 4
    %v4647 = vmax.f32 %v4645, %v4646
    %v4648 = vrot.slane %v4647, 2
    %v4649 = vmax.f32 %v4647, %v4648
    %v4650 = vrot.slane %v4649, 1
    %v4651 = vmax.f32 %v4649, %v4650
    %v4652 = vsel %vm3769, %v3479, -inf
    %v4653 = vrot.slane %v4652, 4
    %v4654 = vmax.f32 %v4652, %v4653
    %v4655 = vrot.slane %v4654, 2
    %v4656 = vmax.f32 %v4654, %v4655
    %v4657 = vrot.slane %v4656, 1
    %v4658 = vmax.f32 %v4656, %v4657
    %v4659 = vsel %vm3769, %v3480, -inf
    %v4660 = vrot.slane %v4659, 4
    %v4661 = vmax.f32 %v4659, %v4660
    %v4662 = vrot.slane %v4661, 2
    %v4663 = vmax.f32 %v4661, %v4662
    %v4664 = vrot.slane %v4663, 1
    %v4665 = vmax.f32 %v4663, %v4664
    %v4666 = vsel %vm3769, %v3226, -inf
    %v4667 = vrot.slane %v4666, 4
    %v4668 = vmax.f32 %v4666, %v4667
    %v4669 = vrot.slane %v4668, 2
    %v4670 = vmax.f32 %v4668, %v4669
    %v4671 = vrot.slane %v4670, 1
    %v4672 = vmax.f32 %v4670, %v4671
    %v4673 = vsel %vm3769, %v3481, -inf
    %v4674 = vrot.slane %v4673, 4
    %v4675 = vmax.f32 %v4673, %v4674
    %v4676 = vrot.slane %v4675, 2
    %v4677 = vmax.f32 %v4675, %v4676
    %v4678 = vrot.slane %v4677, 1
    %v4679 = vmax.f32 %v4677, %v4678
    %v4680 = vsel %vm3769, %v3482, -inf
    %v4681 = vrot.slane %v4680, 4
    %v4682 = vmax.f32 %v4680, %v4681
    %v4683 = vrot.slane %v4682, 2
    %v4684 = vmax.f32 %v4682, %v4683
    %v4685 = vrot.slane %v4684, 1
    %v4686 = vmax.f32 %v4684, %v4685
    %v4687 = vsel %vm3769, %v3483, -inf
    %v4688 = vrot.slane %v4687, 4
    %v4689 = vmax.f32 %v4687, %v4688
    %v4690 = vrot.slane %v4689, 2
    %v4691 = vmax.f32 %v4689, %v4690
    %v4692 = vrot.slane %v4691, 1
    %v4693 = vmax.f32 %v4691, %v4692
    %v4694 = vsel %vm3769, %v3229, -inf
    %v4695 = vrot.slane %v4694, 4
    %v4696 = vmax.f32 %v4694, %v4695
    %v4697 = vrot.slane %v4696, 2
    %v4698 = vmax.f32 %v4696, %v4697
    %v4699 = vrot.slane %v4698, 1
    %v4700 = vmax.f32 %v4698, %v4699
    %v4701 = vsel %vm3769, %v3484, -inf
    %v4702 = vrot.slane %v4701, 4
    %v4703 = vmax.f32 %v4701, %v4702
    %v4704 = vrot.slane %v4703, 2
    %v4705 = vmax.f32 %v4703, %v4704
    %v4706 = vrot.slane %v4705, 1
    %v4707 = vmax.f32 %v4705, %v4706
    %v4708 = vsel %vm3769, %v3485, -inf
    %v4709 = vrot.slane %v4708, 4
    %v4710 = vmax.f32 %v4708, %v4709
    %v4711 = vrot.slane %v4710, 2
    %v4712 = vmax.f32 %v4710, %v4711
    %v4713 = vrot.slane %v4712, 1
    %v4714 = vmax.f32 %v4712, %v4713
    %v4715 = vsel %vm3769, %v3486, -inf
    %v4716 = vrot.slane %v4715, 4
    %v4717 = vmax.f32 %v4715, %v4716
    %v4718 = vrot.slane %v4717, 2
    %v4719 = vmax.f32 %v4717, %v4718
    %v4720 = vrot.slane %v4719, 1
    %v4721 = vmax.f32 %v4719, %v4720
    %v4722 = vsel %vm3769, %v3232, -inf
    %v4723 = vrot.slane %v4722, 4
    %v4724 = vmax.f32 %v4722, %v4723
    %v4725 = vrot.slane %v4724, 2
    %v4726 = vmax.f32 %v4724, %v4725
    %v4727 = vrot.slane %v4726, 1
    %v4728 = vmax.f32 %v4726, %v4727
    %v4729 = vsel %vm3769, %v3487, -inf
    %v4730 = vrot.slane %v4729, 4
    %v4731 = vmax.f32 %v4729, %v4730
    %v4732 = vrot.slane %v4731, 2
    %v4733 = vmax.f32 %v4731, %v4732
    %v4734 = vrot.slane %v4733, 1
    %v4735 = vmax.f32 %v4733, %v4734
    %v4736 = vsel %vm3769, %v3488, -inf
    %v4737 = vrot.slane %v4736, 4
    %v4738 = vmax.f32 %v4736, %v4737
    %v4739 = vrot.slane %v4738, 2
    %v4740 = vmax.f32 %v4738, %v4739
    %v4741 = vrot.slane %v4740, 1
    %v4742 = vmax.f32 %v4740, %v4741
    %v4743 = vsel %vm3769, %v3489, -inf
    %v4744 = vrot.slane %v4743, 4
    %v4745 = vmax.f32 %v4743, %v4744
    %v4746 = vrot.slane %v4745, 2
    %v4747 = vmax.f32 %v4745, %v4746
    %v4748 = vrot.slane %v4747, 1
    %v4749 = vmax.f32 %v4747, %v4748
    %v4750 = vsel %vm3769, %v3235, -inf
    %v4751 = vrot.slane %v4750, 4
    %v4752 = vmax.f32 %v4750, %v4751
    %v4753 = vrot.slane %v4752, 2
    %v4754 = vmax.f32 %v4752, %v4753
    %v4755 = vrot.slane %v4754, 1
    %v4756 = vmax.f32 %v4754, %v4755
    %v4757 = vsel %vm3769, %v3490, -inf
    %v4758 = vrot.slane %v4757, 4
    %v4759 = vmax.f32 %v4757, %v4758
    %v4760 = vrot.slane %v4759, 2
    %v4761 = vmax.f32 %v4759, %v4760
    %v4762 = vrot.slane %v4761, 1
    %v4763 = vmax.f32 %v4761, %v4762
    %v4764 = vsel %vm3769, %v3491, -inf
    %v4765 = vrot.slane %v4764, 4
    %v4766 = vmax.f32 %v4764, %v4765
    %v4767 = vrot.slane %v4766, 2
    %v4768 = vmax.f32 %v4766, %v4767
    %v4769 = vrot.slane %v4768, 1
    %v4770 = vmax.f32 %v4768, %v4769
    %v4771 = vsel %vm3769, %v3492, -inf
    %v4772 = vrot.slane %v4771, 4
    %v4773 = vmax.f32 %v4771, %v4772
    %v4774 = vrot.slane %v4773, 2
    %v4775 = vmax.f32 %v4773, %v4774
    %v4776 = vrot.slane %v4775, 1
    %v4777 = vmax.f32 %v4775, %v4776
    %v4778 = vsel %vm3769, %v3238, -inf
    %v4779 = vrot.slane %v4778, 4
    %v4780 = vmax.f32 %v4778, %v4779
    %v4781 = vrot.slane %v4780, 2
    %v4782 = vmax.f32 %v4780, %v4781
    %v4783 = vrot.slane %v4782, 1
    %v4784 = vmax.f32 %v4782, %v4783
    %v4785 = vsel %vm3769, %v3493, -inf
    %v4786 = vrot.slane %v4785, 4
    %v4787 = vmax.f32 %v4785, %v4786
    %v4788 = vrot.slane %v4787, 2
    %v4789 = vmax.f32 %v4787, %v4788
    %v4790 = vrot.slane %v4789, 1
    %v4791 = vmax.f32 %v4789, %v4790
    %v4792 = vsel %vm3769, %v3494, -inf
    %v4793 = vrot.slane %v4792, 4
    %v4794 = vmax.f32 %v4792, %v4793
    %v4795 = vrot.slane %v4794, 2
    %v4796 = vmax.f32 %v4794, %v4795
    %v4797 = vrot.slane %v4796, 1
    %v4798 = vmax.f32 %v4796, %v4797
    %v4799 = vsel %vm3769, %v3495, -inf
    %v4800 = vrot.slane %v4799, 4
    %v4801 = vmax.f32 %v4799, %v4800
    %v4802 = vrot.slane %v4801, 2
    %v4803 = vmax.f32 %v4801, %v4802
    %v4804 = vrot.slane %v4803, 1
    %v4805 = vmax.f32 %v4803, %v4804
    %v4806 = vsel %vm3769, %v3241, -inf
    %v4807 = vrot.slane %v4806, 4
    %v4808 = vmax.f32 %v4806, %v4807
    %v4809 = vrot.slane %v4808, 2
    %v4810 = vmax.f32 %v4808, %v4809
    %v4811 = vrot.slane %v4810, 1
    %v4812 = vmax.f32 %v4810, %v4811
    %v4813 = vsel %vm3769, %v3496, -inf
    %v4814 = vrot.slane %v4813, 4
    %v4815 = vmax.f32 %v4813, %v4814
    %v4816 = vrot.slane %v4815, 2
    %v4817 = vmax.f32 %v4815, %v4816
    %v4818 = vrot.slane %v4817, 1
    %v4819 = vmax.f32 %v4817, %v4818
    %v4820 = vsel %vm3769, %v3497, -inf
    %v4821 = vrot.slane %v4820, 4
    %v4822 = vmax.f32 %v4820, %v4821
    %v4823 = vrot.slane %v4822, 2
    %v4824 = vmax.f32 %v4822, %v4823
    %v4825 = vrot.slane %v4824, 1
    %v4826 = vmax.f32 %v4824, %v4825
    %v4827 = vsel %vm3769, %v3498, -inf
    %v4828 = vrot.slane %v4827, 4
    %v4829 = vmax.f32 %v4827, %v4828
    %v4830 = vrot.slane %v4829, 2
    %v4831 = vmax.f32 %v4829, %v4830
    %v4832 = vrot.slane %v4831, 1
    %v4833 = vmax.f32 %v4831, %v4832
    %v4834 = vsel %vm3769, %v3244, -inf
    %v4835 = vrot.slane %v4834, 4
    %v4836 = vmax.f32 %v4834, %v4835
    %v4837 = vrot.slane %v4836, 2
    %v4838 = vmax.f32 %v4836, %v4837
    %v4839 = vrot.slane %v4838, 1
    %v4840 = vmax.f32 %v4838, %v4839
    %v4841 = vsel %vm3769, %v3499, -inf
    %v4842 = vrot.slane %v4841, 4
    %v4843 = vmax.f32 %v4841, %v4842
    %v4844 = vrot.slane %v4843, 2
    %v4845 = vmax.f32 %v4843, %v4844
    %v4846 = vrot.slane %v4845, 1
    %v4847 = vmax.f32 %v4845, %v4846
    %v4848 = vsel %vm3769, %v3500, -inf
    %v4849 = vrot.slane %v4848, 4
    %v4850 = vmax.f32 %v4848, %v4849
    %v4851 = vrot.slane %v4850, 2
    %v4852 = vmax.f32 %v4850, %v4851
    %v4853 = vrot.slane %v4852, 1
    %v4854 = vmax.f32 %v4852, %v4853
    %v4855 = vsel %vm3769, %v3501, -inf
    %v4856 = vrot.slane %v4855, 4
    %v4857 = vmax.f32 %v4855, %v4856
    %v4858 = vrot.slane %v4857, 2
    %v4859 = vmax.f32 %v4857, %v4858
    %v4860 = vrot.slane %v4859, 1
    %v4861 = vmax.f32 %v4859, %v4860
    %v4862 = vsel %vm3769, %v3247, -inf
    %v4863 = vrot.slane %v4862, 4
    %v4864 = vmax.f32 %v4862, %v4863
    %v4865 = vrot.slane %v4864, 2
    %v4866 = vmax.f32 %v4864, %v4865
    %v4867 = vrot.slane %v4866, 1
    %v4868 = vmax.f32 %v4866, %v4867
    %v4869 = vsel %vm3769, %v3502, -inf
    %v4870 = vrot.slane %v4869, 4
    %v4871 = vmax.f32 %v4869, %v4870
    %v4872 = vrot.slane %v4871, 2
    %v4873 = vmax.f32 %v4871, %v4872
    %v4874 = vrot.slane %v4873, 1
    %v4875 = vmax.f32 %v4873, %v4874
    %v4876 = vsel %vm3769, %v3503, -inf
    %v4877 = vrot.slane %v4876, 4
    %v4878 = vmax.f32 %v4876, %v4877
    %v4879 = vrot.slane %v4878, 2
    %v4880 = vmax.f32 %v4878, %v4879
    %v4881 = vrot.slane %v4880, 1
    %v4882 = vmax.f32 %v4880, %v4881
    %v4883 = vsel %vm3769, %v3504, -inf
    %v4884 = vrot.slane %v4883, 4
    %v4885 = vmax.f32 %v4883, %v4884
    %v4886 = vrot.slane %v4885, 2
    %v4887 = vmax.f32 %v4885, %v4886
    %v4888 = vrot.slane %v4887, 1
    %v4889 = vmax.f32 %v4887, %v4888
    %v4890 = vsel %vm3769, %v3250, -inf
    %v4891 = vrot.slane %v4890, 4
    %v4892 = vmax.f32 %v4890, %v4891
    %v4893 = vrot.slane %v4892, 2
    %v4894 = vmax.f32 %v4892, %v4893
    %v4895 = vrot.slane %v4894, 1
    %v4896 = vmax.f32 %v4894, %v4895
    %v4897 = vsel %vm3769, %v3505, -inf
    %v4898 = vrot.slane %v4897, 4
    %v4899 = vmax.f32 %v4897, %v4898
    %v4900 = vrot.slane %v4899, 2
    %v4901 = vmax.f32 %v4899, %v4900
    %v4902 = vrot.slane %v4901, 1
    %v4903 = vmax.f32 %v4901, %v4902
    %v4904 = vsel %vm3769, %v3506, -inf
    %v4905 = vrot.slane %v4904, 4
    %v4906 = vmax.f32 %v4904, %v4905
    %v4907 = vrot.slane %v4906, 2
    %v4908 = vmax.f32 %v4906, %v4907
    %v4909 = vrot.slane %v4908, 1
    %v4910 = vmax.f32 %v4908, %v4909
    %v4911 = vsel %vm3769, %v3507, -inf
    %v4912 = vrot.slane %v4911, 4
    %v4913 = vmax.f32 %v4911, %v4912
    %v4914 = vrot.slane %v4913, 2
    %v4915 = vmax.f32 %v4913, %v4914
    %v4916 = vrot.slane %v4915, 1
    %v4917 = vmax.f32 %v4915, %v4916
    %v4918 = vsel %vm3769, %v3253, -inf
    %v4919 = vrot.slane %v4918, 4
    %v4920 = vmax.f32 %v4918, %v4919
    %v4921 = vrot.slane %v4920, 2
    %v4922 = vmax.f32 %v4920, %v4921
    %v4923 = vrot.slane %v4922, 1
    %v4924 = vmax.f32 %v4922, %v4923
    %v4925 = vsel %vm3769, %v3508, -inf
    %v4926 = vrot.slane %v4925, 4
    %v4927 = vmax.f32 %v4925, %v4926
    %v4928 = vrot.slane %v4927, 2
    %v4929 = vmax.f32 %v4927, %v4928
    %v4930 = vrot.slane %v4929, 1
    %v4931 = vmax.f32 %v4929, %v4930
    %v4932 = vsel %vm3769, %v3509, -inf
    %v4933 = vrot.slane %v4932, 4
    %v4934 = vmax.f32 %v4932, %v4933
    %v4935 = vrot.slane %v4934, 2
    %v4936 = vmax.f32 %v4934, %v4935
    %v4937 = vrot.slane %v4936, 1
    %v4938 = vmax.f32 %v4936, %v4937
    %v4939 = vsel %vm3769, %v3510, -inf
    %v4940 = vrot.slane %v4939, 4
    %v4941 = vmax.f32 %v4939, %v4940
    %v4942 = vrot.slane %v4941, 2
    %v4943 = vmax.f32 %v4941, %v4942
    %v4944 = vrot.slane %v4943, 1
    %v4945 = vmax.f32 %v4943, %v4944
    %v4946 = vsel %vm3769, %v3256, -inf
    %v4947 = vrot.slane %v4946, 4
    %v4948 = vmax.f32 %v4946, %v4947
    %v4949 = vrot.slane %v4948, 2
    %v4950 = vmax.f32 %v4948, %v4949
    %v4951 = vrot.slane %v4950, 1
    %v4952 = vmax.f32 %v4950, %v4951
    %v4953 = vsel %vm3769, %v3511, -inf
    %v4954 = vrot.slane %v4953, 4
    %v4955 = vmax.f32 %v4953, %v4954
    %v4956 = vrot.slane %v4955, 2
    %v4957 = vmax.f32 %v4955, %v4956
    %v4958 = vrot.slane %v4957, 1
    %v4959 = vmax.f32 %v4957, %v4958
    %v4960 = vsel %vm3769, %v3512, -inf
    %v4961 = vrot.slane %v4960, 4
    %v4962 = vmax.f32 %v4960, %v4961
    %v4963 = vrot.slane %v4962, 2
    %v4964 = vmax.f32 %v4962, %v4963
    %v4965 = vrot.slane %v4964, 1
    %v4966 = vmax.f32 %v4964, %v4965
    %v4967 = vsel %vm3769, %v3513, -inf
    %v4968 = vrot.slane %v4967, 4
    %v4969 = vmax.f32 %v4967, %v4968
    %v4970 = vrot.slane %v4969, 2
    %v4971 = vmax.f32 %v4969, %v4970
    %v4972 = vrot.slane %v4971, 1
    %v4973 = vmax.f32 %v4971, %v4972
    %v4974 = vsel %vm3769, %v3259, -inf
    %v4975 = vrot.slane %v4974, 4
    %v4976 = vmax.f32 %v4974, %v4975
    %v4977 = vrot.slane %v4976, 2
    %v4978 = vmax.f32 %v4976, %v4977
    %v4979 = vrot.slane %v4978, 1
    %v4980 = vmax.f32 %v4978, %v4979
    %v4981 = vsel %vm3769, %v3514, -inf
    %v4982 = vrot.slane %v4981, 4
    %v4983 = vmax.f32 %v4981, %v4982
    %v4984 = vrot.slane %v4983, 2
    %v4985 = vmax.f32 %v4983, %v4984
    %v4986 = vrot.slane %v4985, 1
    %v4987 = vmax.f32 %v4985, %v4986
    %v4988 = vsel %vm3769, %v3515, -inf
    %v4989 = vrot.slane %v4988, 4
    %v4990 = vmax.f32 %v4988, %v4989
    %v4991 = vrot.slane %v4990, 2
    %v4992 = vmax.f32 %v4990, %v4991
    %v4993 = vrot.slane %v4992, 1
    %v4994 = vmax.f32 %v4992, %v4993
    %v4995 = vsel %vm3769, %v3516, -inf
    %v4996 = vrot.slane %v4995, 4
    %v4997 = vmax.f32 %v4995, %v4996
    %v4998 = vrot.slane %v4997, 2
    %v4999 = vmax.f32 %v4997, %v4998
    %v5000 = vrot.slane %v4999, 1
    %v5001 = vmax.f32 %v4999, %v5000
    %v5002 = vsel %vm3769, %v3262, -inf
    %v5003 = vrot.slane %v5002, 4
    %v5004 = vmax.f32 %v5002, %v5003
    %v5005 = vrot.slane %v5004, 2
    %v5006 = vmax.f32 %v5004, %v5005
    %v5007 = vrot.slane %v5006, 1
    %v5008 = vmax.f32 %v5006, %v5007
    %v5009 = vsel %vm3769, %v3517, -inf
    %v5010 = vrot.slane %v5009, 4
    %v5011 = vmax.f32 %v5009, %v5010
    %v5012 = vrot.slane %v5011, 2
    %v5013 = vmax.f32 %v5011, %v5012
    %v5014 = vrot.slane %v5013, 1
    %v5015 = vmax.f32 %v5013, %v5014
    %v5016 = vsel %vm3769, %v3518, -inf
    %v5017 = vrot.slane %v5016, 4
    %v5018 = vmax.f32 %v5016, %v5017
    %v5019 = vrot.slane %v5018, 2
    %v5020 = vmax.f32 %v5018, %v5019
    %v5021 = vrot.slane %v5020, 1
    %v5022 = vmax.f32 %v5020, %v5021
    %v5023 = vsel %vm3769, %v3519, -inf
    %v5024 = vrot.slane %v5023, 4
    %v5025 = vmax.f32 %v5023, %v5024
    %v5026 = vrot.slane %v5025, 2
    %v5027 = vmax.f32 %v5025, %v5026
    %v5028 = vrot.slane %v5027, 1
    %v5029 = vmax.f32 %v5027, %v5028
    %v5030 = vsel %vm3769, %v3265, -inf
    %v5031 = vrot.slane %v5030, 4
    %v5032 = vmax.f32 %v5030, %v5031
    %v5033 = vrot.slane %v5032, 2
    %v5034 = vmax.f32 %v5032, %v5033
    %v5035 = vrot.slane %v5034, 1
    %v5036 = vmax.f32 %v5034, %v5035
    %v5037 = vsel %vm3769, %v3520, -inf
    %v5038 = vrot.slane %v5037, 4
    %v5039 = vmax.f32 %v5037, %v5038
    %v5040 = vrot.slane %v5039, 2
    %v5041 = vmax.f32 %v5039, %v5040
    %v5042 = vrot.slane %v5041, 1
    %v5043 = vmax.f32 %v5041, %v5042
    %v5044 = vsel %vm3769, %v3521, -inf
    %v5045 = vrot.slane %v5044, 4
    %v5046 = vmax.f32 %v5044, %v5045
    %v5047 = vrot.slane %v5046, 2
    %v5048 = vmax.f32 %v5046, %v5047
    %v5049 = vrot.slane %v5048, 1
    %v5050 = vmax.f32 %v5048, %v5049
    %v5051 = vsel %vm3769, %v3522, -inf
    %v5052 = vrot.slane %v5051, 4
    %v5053 = vmax.f32 %v5051, %v5052
    %v5054 = vrot.slane %v5053, 2
    %v5055 = vmax.f32 %v5053, %v5054
    %v5056 = vrot.slane %v5055, 1
    %v5057 = vmax.f32 %v5055, %v5056
    %v5058 = vsel %vm3769, %v3268, -inf
    %v5059 = vrot.slane %v5058, 4
    %v5060 = vmax.f32 %v5058, %v5059
    %v5061 = vrot.slane %v5060, 2
    %v5062 = vmax.f32 %v5060, %v5061
    %v5063 = vrot.slane %v5062, 1
    %v5064 = vmax.f32 %v5062, %v5063
    %v5065 = vsel %vm3769, %v3523, -inf
    %v5066 = vrot.slane %v5065, 4
    %v5067 = vmax.f32 %v5065, %v5066
    %v5068 = vrot.slane %v5067, 2
    %v5069 = vmax.f32 %v5067, %v5068
    %v5070 = vrot.slane %v5069, 1
    %v5071 = vmax.f32 %v5069, %v5070
    %v5072 = vsel %vm3769, %v3524, -inf
    %v5073 = vrot.slane %v5072, 4
    %v5074 = vmax.f32 %v5072, %v5073
    %v5075 = vrot.slane %v5074, 2
    %v5076 = vmax.f32 %v5074, %v5075
    %v5077 = vrot.slane %v5076, 1
    %v5078 = vmax.f32 %v5076, %v5077
    %v5079 = vsel %vm3769, %v3525, -inf
    %v5080 = vrot.slane %v5079, 4
    %v5081 = vmax.f32 %v5079, %v5080
    %v5082 = vrot.slane %v5081, 2
    %v5083 = vmax.f32 %v5081, %v5082
    %v5084 = vrot.slane %v5083, 1
    %v5085 = vmax.f32 %v5083, %v5084
    %v5086 = vsel %vm3769, %v3271, -inf
    %v5087 = vrot.slane %v5086, 4
    %v5088 = vmax.f32 %v5086, %v5087
    %v5089 = vrot.slane %v5088, 2
    %v5090 = vmax.f32 %v5088, %v5089
    %v5091 = vrot.slane %v5090, 1
    %v5092 = vmax.f32 %v5090, %v5091
    %v5093 = vsel %vm3769, %v3526, -inf
    %v5094 = vrot.slane %v5093, 4
    %v5095 = vmax.f32 %v5093, %v5094
    %v5096 = vrot.slane %v5095, 2
    %v5097 = vmax.f32 %v5095, %v5096
    %v5098 = vrot.slane %v5097, 1
    %v5099 = vmax.f32 %v5097, %v5098
    %v5100 = vsel %vm3769, %v3527, -inf
    %v5101 = vrot.slane %v5100, 4
    %v5102 = vmax.f32 %v5100, %v5101
    %v5103 = vrot.slane %v5102, 2
    %v5104 = vmax.f32 %v5102, %v5103
    %v5105 = vrot.slane %v5104, 1
    %v5106 = vmax.f32 %v5104, %v5105
    %v5107 = vsel %vm3769, %v3528, -inf
    %v5108 = vrot.slane %v5107, 4
    %v5109 = vmax.f32 %v5107, %v5108
    %v5110 = vrot.slane %v5109, 2
    %v5111 = vmax.f32 %v5109, %v5110
    %v5112 = vrot.slane %v5111, 1
    %v5113 = vmax.f32 %v5111, %v5112
    %v5114 = vsel %vm3769, %v3274, -inf
    %v5115 = vrot.slane %v5114, 4
    %v5116 = vmax.f32 %v5114, %v5115
    %v5117 = vrot.slane %v5116, 2
    %v5118 = vmax.f32 %v5116, %v5117
    %v5119 = vrot.slane %v5118, 1
    %v5120 = vmax.f32 %v5118, %v5119
    %v5121 = vsel %vm3769, %v3529, -inf
    %v5122 = vrot.slane %v5121, 4
    %v5123 = vmax.f32 %v5121, %v5122
    %v5124 = vrot.slane %v5123, 2
    %v5125 = vmax.f32 %v5123, %v5124
    %v5126 = vrot.slane %v5125, 1
    %v5127 = vmax.f32 %v5125, %v5126
    %v5128 = vsel %vm3769, %v3530, -inf
    %v5129 = vrot.slane %v5128, 4
    %v5130 = vmax.f32 %v5128, %v5129
    %v5131 = vrot.slane %v5130, 2
    %v5132 = vmax.f32 %v5130, %v5131
    %v5133 = vrot.slane %v5132, 1
    %v5134 = vmax.f32 %v5132, %v5133
    %v5135 = vsel %vm3769, %v3531, -inf
    %v5136 = vrot.slane %v5135, 4
    %v5137 = vmax.f32 %v5135, %v5136
    %v5138 = vrot.slane %v5137, 2
    %v5139 = vmax.f32 %v5137, %v5138
    %v5140 = vrot.slane %v5139, 1
    %v5141 = vmax.f32 %v5139, %v5140
    %v5142 = vsel %vm3769, %v3277, -inf
    %v5143 = vrot.slane %v5142, 4
    %v5144 = vmax.f32 %v5142, %v5143
    %v5145 = vrot.slane %v5144, 2
    %v5146 = vmax.f32 %v5144, %v5145
    %v5147 = vrot.slane %v5146, 1
    %v5148 = vmax.f32 %v5146, %v5147
    %v5149 = vsel %vm3769, %v3532, -inf
    %v5150 = vrot.slane %v5149, 4
    %v5151 = vmax.f32 %v5149, %v5150
    %v5152 = vrot.slane %v5151, 2
    %v5153 = vmax.f32 %v5151, %v5152
    %v5154 = vrot.slane %v5153, 1
    %v5155 = vmax.f32 %v5153, %v5154
    %v5156 = vsel %vm3769, %v3533, -inf
    %v5157 = vrot.slane %v5156, 4
    %v5158 = vmax.f32 %v5156, %v5157
    %v5159 = vrot.slane %v5158, 2
    %v5160 = vmax.f32 %v5158, %v5159
    %v5161 = vrot.slane %v5160, 1
    %v5162 = vmax.f32 %v5160, %v5161
    %v5163 = vsel %vm3769, %v3534, -inf
    %v5164 = vrot.slane %v5163, 4
    %v5165 = vmax.f32 %v5163, %v5164
    %v5166 = vrot.slane %v5165, 2
    %v5167 = vmax.f32 %v5165, %v5166
    %v5168 = vrot.slane %v5167, 1
    %v5169 = vmax.f32 %v5167, %v5168
    %v5170 = vsel %vm3769, %v3280, -inf
    %v5171 = vrot.slane %v5170, 4
    %v5172 = vmax.f32 %v5170, %v5171
    %v5173 = vrot.slane %v5172, 2
    %v5174 = vmax.f32 %v5172, %v5173
    %v5175 = vrot.slane %v5174, 1
    %v5176 = vmax.f32 %v5174, %v5175
    %v5177 = vsel %vm3769, %v3535, -inf
    %v5178 = vrot.slane %v5177, 4
    %v5179 = vmax.f32 %v5177, %v5178
    %v5180 = vrot.slane %v5179, 2
    %v5181 = vmax.f32 %v5179, %v5180
    %v5182 = vrot.slane %v5181, 1
    %v5183 = vmax.f32 %v5181, %v5182
    %v5184 = vsel %vm3769, %v3536, -inf
    %v5185 = vrot.slane %v5184, 4
    %v5186 = vmax.f32 %v5184, %v5185
    %v5187 = vrot.slane %v5186, 2
    %v5188 = vmax.f32 %v5186, %v5187
    %v5189 = vrot.slane %v5188, 1
    %v5190 = vmax.f32 %v5188, %v5189
    %v5191 = vsel %vm3769, %v3537, -inf
    %v5192 = vrot.slane %v5191, 4
    %v5193 = vmax.f32 %v5191, %v5192
    %v5194 = vrot.slane %v5193, 2
    %v5195 = vmax.f32 %v5193, %v5194
    %v5196 = vrot.slane %v5195, 1
    %v5197 = vmax.f32 %v5195, %v5196
    %v5198 = vsel %vm3769, %v3283, -inf
    %v5199 = vrot.slane %v5198, 4
    %v5200 = vmax.f32 %v5198, %v5199
    %v5201 = vrot.slane %v5200, 2
    %v5202 = vmax.f32 %v5200, %v5201
    %v5203 = vrot.slane %v5202, 1
    %v5204 = vmax.f32 %v5202, %v5203
    %v5205 = vsel %vm3769, %v3538, -inf
    %v5206 = vrot.slane %v5205, 4
    %v5207 = vmax.f32 %v5205, %v5206
    %v5208 = vrot.slane %v5207, 2
    %v5209 = vmax.f32 %v5207, %v5208
    %v5210 = vrot.slane %v5209, 1
    %v5211 = vmax.f32 %v5209, %v5210
    %v5212 = vsel %vm3769, %v3539, -inf
    %v5213 = vrot.slane %v5212, 4
    %v5214 = vmax.f32 %v5212, %v5213
    %v5215 = vrot.slane %v5214, 2
    %v5216 = vmax.f32 %v5214, %v5215
    %v5217 = vrot.slane %v5216, 1
    %v5218 = vmax.f32 %v5216, %v5217
    %v5219 = vsel %vm3769, %v3540, -inf
    %v5220 = vrot.slane %v5219, 4
    %v5221 = vmax.f32 %v5219, %v5220
    %v5222 = vrot.slane %v5221, 2
    %v5223 = vmax.f32 %v5221, %v5222
    %v5224 = vrot.slane %v5223, 1
    %v5225 = vmax.f32 %v5223, %v5224
    %v5226 = vsel %vm3769, %v3286, -inf
    %v5227 = vrot.slane %v5226, 4
    %v5228 = vmax.f32 %v5226, %v5227
    %v5229 = vrot.slane %v5228, 2
    %v5230 = vmax.f32 %v5228, %v5229
    %v5231 = vrot.slane %v5230, 1
    %v5232 = vmax.f32 %v5230, %v5231
    %v5233 = vsel %vm3769, %v3541, -inf
    %v5234 = vrot.slane %v5233, 4
    %v5235 = vmax.f32 %v5233, %v5234
    %v5236 = vrot.slane %v5235, 2
    %v5237 = vmax.f32 %v5235, %v5236
    %v5238 = vrot.slane %v5237, 1
    %v5239 = vmax.f32 %v5237, %v5238
    %v5240 = vsel %vm3769, %v3542, -inf
    %v5241 = vrot.slane %v5240, 4
    %v5242 = vmax.f32 %v5240, %v5241
    %v5243 = vrot.slane %v5242, 2
    %v5244 = vmax.f32 %v5242, %v5243
    %v5245 = vrot.slane %v5244, 1
    %v5246 = vmax.f32 %v5244, %v5245
    %v5247 = vsel %vm3769, %v3543, -inf
    %v5248 = vrot.slane %v5247, 4
    %v5249 = vmax.f32 %v5247, %v5248
    %v5250 = vrot.slane %v5249, 2
    %v5251 = vmax.f32 %v5249, %v5250
    %v5252 = vrot.slane %v5251, 1
    %v5253 = vmax.f32 %v5251, %v5252
    %v5254 = vsel %vm3769, %v3289, -inf
    %v5255 = vrot.slane %v5254, 4
    %v5256 = vmax.f32 %v5254, %v5255
    %v5257 = vrot.slane %v5256, 2
    %v5258 = vmax.f32 %v5256, %v5257
    %v5259 = vrot.slane %v5258, 1
    %v5260 = vmax.f32 %v5258, %v5259
    %v5261 = vsel %vm3769, %v3544, -inf
    %v5262 = vrot.slane %v5261, 4
    %v5263 = vmax.f32 %v5261, %v5262
    %v5264 = vrot.slane %v5263, 2
    %v5265 = vmax.f32 %v5263, %v5264
    %v5266 = vrot.slane %v5265, 1
    %v5267 = vmax.f32 %v5265, %v5266
    %v5268 = vsel %vm3769, %v3545, -inf
    %v5269 = vrot.slane %v5268, 4
    %v5270 = vmax.f32 %v5268, %v5269
    %v5271 = vrot.slane %v5270, 2
    %v5272 = vmax.f32 %v5270, %v5271
    %v5273 = vrot.slane %v5272, 1
    %v5274 = vmax.f32 %v5272, %v5273
    %v5275 = vsel %vm3769, %v3546, -inf
    %v5276 = vrot.slane %v5275, 4
    %v5277 = vmax.f32 %v5275, %v5276
    %v5278 = vrot.slane %v5277, 2
    %v5279 = vmax.f32 %v5277, %v5278
    %v5280 = vrot.slane %v5279, 1
    %v5281 = vmax.f32 %v5279, %v5280
    %v5282 = vsel %vm3769, %v3292, -inf
    %v5283 = vrot.slane %v5282, 4
    %v5284 = vmax.f32 %v5282, %v5283
    %v5285 = vrot.slane %v5284, 2
    %v5286 = vmax.f32 %v5284, %v5285
    %v5287 = vrot.slane %v5286, 1
    %v5288 = vmax.f32 %v5286, %v5287
    %v5289 = vsel %vm3769, %v3547, -inf
    %v5290 = vrot.slane %v5289, 4
    %v5291 = vmax.f32 %v5289, %v5290
    %v5292 = vrot.slane %v5291, 2
    %v5293 = vmax.f32 %v5291, %v5292
    %v5294 = vrot.slane %v5293, 1
    %v5295 = vmax.f32 %v5293, %v5294
    %v5296 = vsel %vm3769, %v3548, -inf
    %v5297 = vrot.slane %v5296, 4
    %v5298 = vmax.f32 %v5296, %v5297
    %v5299 = vrot.slane %v5298, 2
    %v5300 = vmax.f32 %v5298, %v5299
    %v5301 = vrot.slane %v5300, 1
    %v5302 = vmax.f32 %v5300, %v5301
    %v5303 = vsel %vm3769, %v3549, -inf
    %v5304 = vrot.slane %v5303, 4
    %v5305 = vmax.f32 %v5303, %v5304
    %v5306 = vrot.slane %v5305, 2
    %v5307 = vmax.f32 %v5305, %v5306
    %v5308 = vrot.slane %v5307, 1
    %v5309 = vmax.f32 %v5307, %v5308
    %v5310 = vsel %vm3769, %v3295, -inf
    %v5311 = vrot.slane %v5310, 4
    %v5312 = vmax.f32 %v5310, %v5311
    %v5313 = vrot.slane %v5312, 2
    %v5314 = vmax.f32 %v5312, %v5313
    %v5315 = vrot.slane %v5314, 1
    %v5316 = vmax.f32 %v5314, %v5315
    %v5317 = vsel %vm3769, %v3550, -inf
    %v5318 = vrot.slane %v5317, 4
    %v5319 = vmax.f32 %v5317, %v5318
    %v5320 = vrot.slane %v5319, 2
    %v5321 = vmax.f32 %v5319, %v5320
    %v5322 = vrot.slane %v5321, 1
    %v5323 = vmax.f32 %v5321, %v5322
    %v5324 = vsel %vm3769, %v3551, -inf
    %v5325 = vrot.slane %v5324, 4
    %v5326 = vmax.f32 %v5324, %v5325
    %v5327 = vrot.slane %v5326, 2
    %v5328 = vmax.f32 %v5326, %v5327
    %v5329 = vrot.slane %v5328, 1
    %v5330 = vmax.f32 %v5328, %v5329
    %v5331 = vsel %vm3769, %v3552, -inf
    %v5332 = vrot.slane %v5331, 4
    %v5333 = vmax.f32 %v5331, %v5332
    %v5334 = vrot.slane %v5333, 2
    %v5335 = vmax.f32 %v5333, %v5334
    %v5336 = vrot.slane %v5335, 1
    %v5337 = vmax.f32 %v5335, %v5336
    %v5338 = vsel %vm3769, %v3298, -inf
    %v5339 = vrot.slane %v5338, 4
    %v5340 = vmax.f32 %v5338, %v5339
    %v5341 = vrot.slane %v5340, 2
    %v5342 = vmax.f32 %v5340, %v5341
    %v5343 = vrot.slane %v5342, 1
    %v5344 = vmax.f32 %v5342, %v5343
    %v5345 = vsel %vm3769, %v3553, -inf
    %v5346 = vrot.slane %v5345, 4
    %v5347 = vmax.f32 %v5345, %v5346
    %v5348 = vrot.slane %v5347, 2
    %v5349 = vmax.f32 %v5347, %v5348
    %v5350 = vrot.slane %v5349, 1
    %v5351 = vmax.f32 %v5349, %v5350
    %v5352 = vsel %vm3769, %v3554, -inf
    %v5353 = vrot.slane %v5352, 4
    %v5354 = vmax.f32 %v5352, %v5353
    %v5355 = vrot.slane %v5354, 2
    %v5356 = vmax.f32 %v5354, %v5355
    %v5357 = vrot.slane %v5356, 1
    %v5358 = vmax.f32 %v5356, %v5357
    %v5359 = vsel %vm3769, %v3555, -inf
    %v5360 = vrot.slane %v5359, 4
    %v5361 = vmax.f32 %v5359, %v5360
    %v5362 = vrot.slane %v5361, 2
    %v5363 = vmax.f32 %v5361, %v5362
    %v5364 = vrot.slane %v5363, 1
    %v5365 = vmax.f32 %v5363, %v5364
    %v5366 = vsel %vm3769, %v3301, -inf
    %v5367 = vrot.slane %v5366, 4
    %v5368 = vmax.f32 %v5366, %v5367
    %v5369 = vrot.slane %v5368, 2
    %v5370 = vmax.f32 %v5368, %v5369
    %v5371 = vrot.slane %v5370, 1
    %v5372 = vmax.f32 %v5370, %v5371
    %v5373 = vsel %vm3769, %v3556, -inf
    %v5374 = vrot.slane %v5373, 4
    %v5375 = vmax.f32 %v5373, %v5374
    %v5376 = vrot.slane %v5375, 2
    %v5377 = vmax.f32 %v5375, %v5376
    %v5378 = vrot.slane %v5377, 1
    %v5379 = vmax.f32 %v5377, %v5378
    %v5380 = vsel %vm3769, %v3557, -inf
    %v5381 = vrot.slane %v5380, 4
    %v5382 = vmax.f32 %v5380, %v5381
    %v5383 = vrot.slane %v5382, 2
    %v5384 = vmax.f32 %v5382, %v5383
    %v5385 = vrot.slane %v5384, 1
    %v5386 = vmax.f32 %v5384, %v5385
    %v5387 = vsel %vm3769, %v3558, -inf
    %v5388 = vrot.slane %v5387, 4
    %v5389 = vmax.f32 %v5387, %v5388
    %v5390 = vrot.slane %v5389, 2
    %v5391 = vmax.f32 %v5389, %v5390
    %v5392 = vrot.slane %v5391, 1
    %v5393 = vmax.f32 %v5391, %v5392
    %v5394 = vsel %vm3769, %v3304, -inf
    %v5395 = vrot.slane %v5394, 4
    %v5396 = vmax.f32 %v5394, %v5395
    %v5397 = vrot.slane %v5396, 2
    %v5398 = vmax.f32 %v5396, %v5397
    %v5399 = vrot.slane %v5398, 1
    %v5400 = vmax.f32 %v5398, %v5399
    %v5401 = vsel %vm3769, %v3559, -inf
    %v5402 = vrot.slane %v5401, 4
    %v5403 = vmax.f32 %v5401, %v5402
    %v5404 = vrot.slane %v5403, 2
    %v5405 = vmax.f32 %v5403, %v5404
    %v5406 = vrot.slane %v5405, 1
    %v5407 = vmax.f32 %v5405, %v5406
    %v5408 = vsel %vm3769, %v3560, -inf
    %v5409 = vrot.slane %v5408, 4
    %v5410 = vmax.f32 %v5408, %v5409
    %v5411 = vrot.slane %v5410, 2
    %v5412 = vmax.f32 %v5410, %v5411
    %v5413 = vrot.slane %v5412, 1
    %v5414 = vmax.f32 %v5412, %v5413
    %v5415 = vsel %vm3769, %v3561, -inf
    %v5416 = vrot.slane %v5415, 4
    %v5417 = vmax.f32 %v5415, %v5416
    %v5418 = vrot.slane %v5417, 2
    %v5419 = vmax.f32 %v5417, %v5418
    %v5420 = vrot.slane %v5419, 1
    %v5421 = vmax.f32 %v5419, %v5420
    %v5422 = vsel %vm3769, %v3307, -inf
    %v5423 = vrot.slane %v5422, 4
    %v5424 = vmax.f32 %v5422, %v5423
    %v5425 = vrot.slane %v5424, 2
    %v5426 = vmax.f32 %v5424, %v5425
    %v5427 = vrot.slane %v5426, 1
    %v5428 = vmax.f32 %v5426, %v5427
    %v5429 = vsel %vm3769, %v3562, -inf
    %v5430 = vrot.slane %v5429, 4
    %v5431 = vmax.f32 %v5429, %v5430
    %v5432 = vrot.slane %v5431, 2
    %v5433 = vmax.f32 %v5431, %v5432
    %v5434 = vrot.slane %v5433, 1
    %v5435 = vmax.f32 %v5433, %v5434
    %v5436 = vsel %vm3769, %v3563, -inf
    %v5437 = vrot.slane %v5436, 4
    %v5438 = vmax.f32 %v5436, %v5437
    %v5439 = vrot.slane %v5438, 2
    %v5440 = vmax.f32 %v5438, %v5439
    %v5441 = vrot.slane %v5440, 1
    %v5442 = vmax.f32 %v5440, %v5441
    %v5443 = vsel %vm3769, %v3564, -inf
    %v5444 = vrot.slane %v5443, 4
    %v5445 = vmax.f32 %v5443, %v5444
    %v5446 = vrot.slane %v5445, 2
    %v5447 = vmax.f32 %v5445, %v5446
    %v5448 = vrot.slane %v5447, 1
    %v5449 = vmax.f32 %v5447, %v5448
    %v5450 = vsel %vm3769, %v3310, -inf
    %v5451 = vrot.slane %v5450, 4
    %v5452 = vmax.f32 %v5450, %v5451
    %v5453 = vrot.slane %v5452, 2
    %v5454 = vmax.f32 %v5452, %v5453
    %v5455 = vrot.slane %v5454, 1
    %v5456 = vmax.f32 %v5454, %v5455
    %v5457 = vsel %vm3769, %v3565, -inf
    %v5458 = vrot.slane %v5457, 4
    %v5459 = vmax.f32 %v5457, %v5458
    %v5460 = vrot.slane %v5459, 2
    %v5461 = vmax.f32 %v5459, %v5460
    %v5462 = vrot.slane %v5461, 1
    %v5463 = vmax.f32 %v5461, %v5462
    %v5464 = vsel %vm3769, %v3566, -inf
    %v5465 = vrot.slane %v5464, 4
    %v5466 = vmax.f32 %v5464, %v5465
    %v5467 = vrot.slane %v5466, 2
    %v5468 = vmax.f32 %v5466, %v5467
    %v5469 = vrot.slane %v5468, 1
    %v5470 = vmax.f32 %v5468, %v5469
    %v5471 = vsel %vm3769, %v3567, -inf
    %v5472 = vrot.slane %v5471, 4
    %v5473 = vmax.f32 %v5471, %v5472
    %v5474 = vrot.slane %v5473, 2
    %v5475 = vmax.f32 %v5473, %v5474
    %v5476 = vrot.slane %v5475, 1
    %v5477 = vmax.f32 %v5475, %v5476
    %v5478 = vsel %vm3769, %v3313, -inf
    %v5479 = vrot.slane %v5478, 4
    %v5480 = vmax.f32 %v5478, %v5479
    %v5481 = vrot.slane %v5480, 2
    %v5482 = vmax.f32 %v5480, %v5481
    %v5483 = vrot.slane %v5482, 1
    %v5484 = vmax.f32 %v5482, %v5483
    %v5485 = vsel %vm3769, %v3568, -inf
    %v5486 = vrot.slane %v5485, 4
    %v5487 = vmax.f32 %v5485, %v5486
    %v5488 = vrot.slane %v5487, 2
    %v5489 = vmax.f32 %v5487, %v5488
    %v5490 = vrot.slane %v5489, 1
    %v5491 = vmax.f32 %v5489, %v5490
    %v5492 = vsel %vm3769, %v3569, -inf
    %v5493 = vrot.slane %v5492, 4
    %v5494 = vmax.f32 %v5492, %v5493
    %v5495 = vrot.slane %v5494, 2
    %v5496 = vmax.f32 %v5494, %v5495
    %v5497 = vrot.slane %v5496, 1
    %v5498 = vmax.f32 %v5496, %v5497
    %v5499 = vsel %vm3769, %v3570, -inf
    %v5500 = vrot.slane %v5499, 4
    %v5501 = vmax.f32 %v5499, %v5500
    %v5502 = vrot.slane %v5501, 2
    %v5503 = vmax.f32 %v5501, %v5502
    %v5504 = vrot.slane %v5503, 1
    %v5505 = vmax.f32 %v5503, %v5504
    %v5506 = vsel %vm3769, %v3316, -inf
    %v5507 = vrot.slane %v5506, 4
    %v5508 = vmax.f32 %v5506, %v5507
    %v5509 = vrot.slane %v5508, 2
    %v5510 = vmax.f32 %v5508, %v5509
    %v5511 = vrot.slane %v5510, 1
    %v5512 = vmax.f32 %v5510, %v5511
    %v5513 = vsel %vm3769, %v3571, -inf
    %v5514 = vrot.slane %v5513, 4
    %v5515 = vmax.f32 %v5513, %v5514
    %v5516 = vrot.slane %v5515, 2
    %v5517 = vmax.f32 %v5515, %v5516
    %v5518 = vrot.slane %v5517, 1
    %v5519 = vmax.f32 %v5517, %v5518
    %v5520 = vsel %vm3769, %v3572, -inf
    %v5521 = vrot.slane %v5520, 4
    %v5522 = vmax.f32 %v5520, %v5521
    %v5523 = vrot.slane %v5522, 2
    %v5524 = vmax.f32 %v5522, %v5523
    %v5525 = vrot.slane %v5524, 1
    %v5526 = vmax.f32 %v5524, %v5525
    %v5527 = vsel %vm3769, %v3573, -inf
    %v5528 = vrot.slane %v5527, 4
    %v5529 = vmax.f32 %v5527, %v5528
    %v5530 = vrot.slane %v5529, 2
    %v5531 = vmax.f32 %v5529, %v5530
    %v5532 = vrot.slane %v5531, 1
    %v5533 = vmax.f32 %v5531, %v5532
    %v5534 = vsel %vm3769, %v3319, -inf
    %v5535 = vrot.slane %v5534, 4
    %v5536 = vmax.f32 %v5534, %v5535
    %v5537 = vrot.slane %v5536, 2
    %v5538 = vmax.f32 %v5536, %v5537
    %v5539 = vrot.slane %v5538, 1
    %v5540 = vmax.f32 %v5538, %v5539
    %v5541 = vsel %vm3769, %v3574, -inf
    %v5542 = vrot.slane %v5541, 4
    %v5543 = vmax.f32 %v5541, %v5542
    %v5544 = vrot.slane %v5543, 2
    %v5545 = vmax.f32 %v5543, %v5544
    %v5546 = vrot.slane %v5545, 1
    %v5547 = vmax.f32 %v5545, %v5546
    %v5548 = vsel %vm3769, %v3575, -inf
    %v5549 = vrot.slane %v5548, 4
    %v5550 = vmax.f32 %v5548, %v5549
    %v5551 = vrot.slane %v5550, 2
    %v5552 = vmax.f32 %v5550, %v5551
    %v5553 = vrot.slane %v5552, 1
    %v5554 = vmax.f32 %v5552, %v5553
    %v5555 = vsel %vm3769, %v3576, -inf
    %v5556 = vrot.slane %v5555, 4
    %v5557 = vmax.f32 %v5555, %v5556
    %v5558 = vrot.slane %v5557, 2
    %v5559 = vmax.f32 %v5557, %v5558
    %v5560 = vrot.slane %v5559, 1
    %v5561 = vmax.f32 %v5559, %v5560
    %v5562 = vsel %vm2456, %v3776, -inf
    %v5563 = vsel %vm2456, %v3832, -inf
    %v5564 = vmax.f32 %v5562, %v5563
    %v5565 = vsel %vm2456, %v3783, -inf
    %v5566 = vsel %vm2456, %v3839, -inf
    %v5567 = vmax.f32 %v5565, %v5566
    %v5568 = vsel %vm2456, %v3790, -inf
    %v5569 = vsel %vm2456, %v3846, -inf
    %v5570 = vmax.f32 %v5568, %v5569
    %v5571 = vsel %vm2456, %v3797, -inf
    %v5572 = vsel %vm2456, %v3853, -inf
    %v5573 = vmax.f32 %v5571, %v5572
    %v5574 = vsel %vm2456, %v3804, -inf
    %v5575 = vsel %vm2456, %v3860, -inf
    %v5576 = vmax.f32 %v5574, %v5575
    %v5577 = vsel %vm2456, %v3811, -inf
    %v5578 = vsel %vm2456, %v3867, -inf
    %v5579 = vmax.f32 %v5577, %v5578
    %v5580 = vsel %vm2456, %v3818, -inf
    %v5581 = vsel %vm2456, %v3874, -inf
    %v5582 = vmax.f32 %v5580, %v5581
    %v5583 = vsel %vm2456, %v3825, -inf
    %v5584 = vsel %vm2456, %v3881, -inf
    %v5585 = vmax.f32 %v5583, %v5584
    %v5586 = vsel %vm2456, %v3888, -inf
    %v5587 = vsel %vm2456, %v3944, -inf
    %v5588 = vmax.f32 %v5586, %v5587
    %v5589 = vsel %vm2456, %v3895, -inf
    %v5590 = vsel %vm2456, %v3951, -inf
    %v5591 = vmax.f32 %v5589, %v5590
    %v5592 = vsel %vm2456, %v3902, -inf
    %v5593 = vsel %vm2456, %v3958, -inf
    %v5594 = vmax.f32 %v5592, %v5593
    %v5595 = vsel %vm2456, %v3909, -inf
    %v5596 = vsel %vm2456, %v3965, -inf
    %v5597 = vmax.f32 %v5595, %v5596
    %v5598 = vsel %vm2456, %v3916, -inf
    %v5599 = vsel %vm2456, %v3972, -inf
    %v5600 = vmax.f32 %v5598, %v5599
    %v5601 = vsel %vm2456, %v3923, -inf
    %v5602 = vsel %vm2456, %v3979, -inf
    %v5603 = vmax.f32 %v5601, %v5602
    %v5604 = vsel %vm2456, %v3930, -inf
    %v5605 = vsel %vm2456, %v3986, -inf
    %v5606 = vmax.f32 %v5604, %v5605
    %v5607 = vsel %vm2456, %v3937, -inf
    %v5608 = vsel %vm2456, %v3993, -inf
    %v5609 = vmax.f32 %v5607, %v5608
    %v5610 = vsel %vm2456, %v4000, -inf
    %v5611 = vsel %vm2456, %v4056, -inf
    %v5612 = vmax.f32 %v5610, %v5611
    %v5613 = vsel %vm2456, %v4007, -inf
    %v5614 = vsel %vm2456, %v4063, -inf
    %v5615 = vmax.f32 %v5613, %v5614
    %v5616 = vsel %vm2456, %v4014, -inf
    %v5617 = vsel %vm2456, %v4070, -inf
    %v5618 = vmax.f32 %v5616, %v5617
    %v5619 = vsel %vm2456, %v4021, -inf
    %v5620 = vsel %vm2456, %v4077, -inf
    %v5621 = vmax.f32 %v5619, %v5620
    %v5622 = vsel %vm2456, %v4028, -inf
    %v5623 = vsel %vm2456, %v4084, -inf
    %v5624 = vmax.f32 %v5622, %v5623
    %v5625 = vsel %vm2456, %v4035, -inf
    %v5626 = vsel %vm2456, %v4091, -inf
    %v5627 = vmax.f32 %v5625, %v5626
    %v5628 = vsel %vm2456, %v4042, -inf
    %v5629 = vsel %vm2456, %v4098, -inf
    %v5630 = vmax.f32 %v5628, %v5629
    %v5631 = vsel %vm2456, %v4049, -inf
    %v5632 = vsel %vm2456, %v4105, -inf
    %v5633 = vmax.f32 %v5631, %v5632
    %v5634 = vsel %vm2456, %v4112, -inf
    %v5635 = vsel %vm2456, %v4168, -inf
    %v5636 = vmax.f32 %v5634, %v5635
    %v5637 = vsel %vm2456, %v4119, -inf
    %v5638 = vsel %vm2456, %v4175, -inf
    %v5639 = vmax.f32 %v5637, %v5638
    %v5640 = vsel %vm2456, %v4126, -inf
    %v5641 = vsel %vm2456, %v4182, -inf
    %v5642 = vmax.f32 %v5640, %v5641
    %v5643 = vsel %vm2456, %v4133, -inf
    %v5644 = vsel %vm2456, %v4189, -inf
    %v5645 = vmax.f32 %v5643, %v5644
    %v5646 = vsel %vm2456, %v4140, -inf
    %v5647 = vsel %vm2456, %v4196, -inf
    %v5648 = vmax.f32 %v5646, %v5647
    %v5649 = vsel %vm2456, %v4147, -inf
    %v5650 = vsel %vm2456, %v4203, -inf
    %v5651 = vmax.f32 %v5649, %v5650
    %v5652 = vsel %vm2456, %v4154, -inf
    %v5653 = vsel %vm2456, %v4210, -inf
    %v5654 = vmax.f32 %v5652, %v5653
    %v5655 = vsel %vm2456, %v4161, -inf
    %v5656 = vsel %vm2456, %v4217, -inf
    %v5657 = vmax.f32 %v5655, %v5656
    %v5658 = vsel %vm2456, %v4224, -inf
    %v5659 = vsel %vm2456, %v4280, -inf
    %v5660 = vmax.f32 %v5658, %v5659
    %v5661 = vsel %vm2456, %v4231, -inf
    %v5662 = vsel %vm2456, %v4287, -inf
    %v5663 = vmax.f32 %v5661, %v5662
    %v5664 = vsel %vm2456, %v4238, -inf
    %v5665 = vsel %vm2456, %v4294, -inf
    %v5666 = vmax.f32 %v5664, %v5665
    %v5667 = vsel %vm2456, %v4245, -inf
    %v5668 = vsel %vm2456, %v4301, -inf
    %v5669 = vmax.f32 %v5667, %v5668
    %v5670 = vsel %vm2456, %v4252, -inf
    %v5671 = vsel %vm2456, %v4308, -inf
    %v5672 = vmax.f32 %v5670, %v5671
    %v5673 = vsel %vm2456, %v4259, -inf
    %v5674 = vsel %vm2456, %v4315, -inf
    %v5675 = vmax.f32 %v5673, %v5674
    %v5676 = vsel %vm2456, %v4266, -inf
    %v5677 = vsel %vm2456, %v4322, -inf
    %v5678 = vmax.f32 %v5676, %v5677
    %v5679 = vsel %vm2456, %v4273, -inf
    %v5680 = vsel %vm2456, %v4329, -inf
    %v5681 = vmax.f32 %v5679, %v5680
    %v5682 = vsel %vm2456, %v4336, -inf
    %v5683 = vsel %vm2456, %v4392, -inf
    %v5684 = vmax.f32 %v5682, %v5683
    %v5685 = vsel %vm2456, %v4343, -inf
    %v5686 = vsel %vm2456, %v4399, -inf
    %v5687 = vmax.f32 %v5685, %v5686
    %v5688 = vsel %vm2456, %v4350, -inf
    %v5689 = vsel %vm2456, %v4406, -inf
    %v5690 = vmax.f32 %v5688, %v5689
    %v5691 = vsel %vm2456, %v4357, -inf
    %v5692 = vsel %vm2456, %v4413, -inf
    %v5693 = vmax.f32 %v5691, %v5692
    %v5694 = vsel %vm2456, %v4364, -inf
    %v5695 = vsel %vm2456, %v4420, -inf
    %v5696 = vmax.f32 %v5694, %v5695
    %v5697 = vsel %vm2456, %v4371, -inf
    %v5698 = vsel %vm2456, %v4427, -inf
    %v5699 = vmax.f32 %v5697, %v5698
    %v5700 = vsel %vm2456, %v4378, -inf
    %v5701 = vsel %vm2456, %v4434, -inf
    %v5702 = vmax.f32 %v5700, %v5701
    %v5703 = vsel %vm2456, %v4385, -inf
    %v5704 = vsel %vm2456, %v4441, -inf
    %v5705 = vmax.f32 %v5703, %v5704
    %v5706 = vsel %vm2456, %v4448, -inf
    %v5707 = vsel %vm2456, %v4504, -inf
    %v5708 = vmax.f32 %v5706, %v5707
    %v5709 = vsel %vm2456, %v4455, -inf
    %v5710 = vsel %vm2456, %v4511, -inf
    %v5711 = vmax.f32 %v5709, %v5710
    %v5712 = vsel %vm2456, %v4462, -inf
    %v5713 = vsel %vm2456, %v4518, -inf
    %v5714 = vmax.f32 %v5712, %v5713
    %v5715 = vsel %vm2456, %v4469, -inf
    %v5716 = vsel %vm2456, %v4525, -inf
    %v5717 = vmax.f32 %v5715, %v5716
    %v5718 = vsel %vm2456, %v4476, -inf
    %v5719 = vsel %vm2456, %v4532, -inf
    %v5720 = vmax.f32 %v5718, %v5719
    %v5721 = vsel %vm2456, %v4483, -inf
    %v5722 = vsel %vm2456, %v4539, -inf
    %v5723 = vmax.f32 %v5721, %v5722
    %v5724 = vsel %vm2456, %v4490, -inf
    %v5725 = vsel %vm2456, %v4546, -inf
    %v5726 = vmax.f32 %v5724, %v5725
    %v5727 = vsel %vm2456, %v4497, -inf
    %v5728 = vsel %vm2456, %v4553, -inf
    %v5729 = vmax.f32 %v5727, %v5728
    %v5730 = vsel %vm2456, %v4560, -inf
    %v5731 = vsel %vm2456, %v4616, -inf
    %v5732 = vmax.f32 %v5730, %v5731
    %v5733 = vsel %vm2456, %v4567, -inf
    %v5734 = vsel %vm2456, %v4623, -inf
    %v5735 = vmax.f32 %v5733, %v5734
    %v5736 = vsel %vm2456, %v4574, -inf
    %v5737 = vsel %vm2456, %v4630, -inf
    %v5738 = vmax.f32 %v5736, %v5737
    %v5739 = vsel %vm2456, %v4581, -inf
    %v5740 = vsel %vm2456, %v4637, -inf
    %v5741 = vmax.f32 %v5739, %v5740
    %v5742 = vsel %vm2456, %v4588, -inf
    %v5743 = vsel %vm2456, %v4644, -inf
    %v5744 = vmax.f32 %v5742, %v5743
    %v5745 = vsel %vm2456, %v4595, -inf
    %v5746 = vsel %vm2456, %v4651, -inf
    %v5747 = vmax.f32 %v5745, %v5746
    %v5748 = vsel %vm2456, %v4602, -inf
    %v5749 = vsel %vm2456, %v4658, -inf
    %v5750 = vmax.f32 %v5748, %v5749
    %v5751 = vsel %vm2456, %v4609, -inf
    %v5752 = vsel %vm2456, %v4665, -inf
    %v5753 = vmax.f32 %v5751, %v5752
    %v5754 = vsel %vm2456, %v4672, -inf
    %v5755 = vsel %vm2456, %v4728, -inf
    %v5756 = vmax.f32 %v5754, %v5755
    %v5757 = vsel %vm2456, %v4679, -inf
    %v5758 = vsel %vm2456, %v4735, -inf
    %v5759 = vmax.f32 %v5757, %v5758
    %v5760 = vsel %vm2456, %v4686, -inf
    %v5761 = vsel %vm2456, %v4742, -inf
    %v5762 = vmax.f32 %v5760, %v5761
    %v5763 = vsel %vm2456, %v4693, -inf
    %v5764 = vsel %vm2456, %v4749, -inf
    %v5765 = vmax.f32 %v5763, %v5764
    %v5766 = vsel %vm2456, %v4700, -inf
    %v5767 = vsel %vm2456, %v4756, -inf
    %v5768 = vmax.f32 %v5766, %v5767
    %v5769 = vsel %vm2456, %v4707, -inf
    %v5770 = vsel %vm2456, %v4763, -inf
    %v5771 = vmax.f32 %v5769, %v5770
    %v5772 = vsel %vm2456, %v4714, -inf
    %v5773 = vsel %vm2456, %v4770, -inf
    %v5774 = vmax.f32 %v5772, %v5773
    %v5775 = vsel %vm2456, %v4721, -inf
    %v5776 = vsel %vm2456, %v4777, -inf
    %v5777 = vmax.f32 %v5775, %v5776
    %v5778 = vsel %vm2456, %v4784, -inf
    %v5779 = vsel %vm2456, %v4840, -inf
    %v5780 = vmax.f32 %v5778, %v5779
    %v5781 = vsel %vm2456, %v4791, -inf
    %v5782 = vsel %vm2456, %v4847, -inf
    %v5783 = vmax.f32 %v5781, %v5782
    %v5784 = vsel %vm2456, %v4798, -inf
    %v5785 = vsel %vm2456, %v4854, -inf
    %v5786 = vmax.f32 %v5784, %v5785
    %v5787 = vsel %vm2456, %v4805, -inf
    %v5788 = vsel %vm2456, %v4861, -inf
    %v5789 = vmax.f32 %v5787, %v5788
    %v5790 = vsel %vm2456, %v4812, -inf
    %v5791 = vsel %vm2456, %v4868, -inf
    %v5792 = vmax.f32 %v5790, %v5791
    %v5793 = vsel %vm2456, %v4819, -inf
    %v5794 = vsel %vm2456, %v4875, -inf
    %v5795 = vmax.f32 %v5793, %v5794
    %v5796 = vsel %vm2456, %v4826, -inf
    %v5797 = vsel %vm2456, %v4882, -inf
    %v5798 = vmax.f32 %v5796, %v5797
    %v5799 = vsel %vm2456, %v4833, -inf
    %v5800 = vsel %vm2456, %v4889, -inf
    %v5801 = vmax.f32 %v5799, %v5800
    %v5802 = vsel %vm2456, %v4896, -inf
    %v5803 = vsel %vm2456, %v4952, -inf
    %v5804 = vmax.f32 %v5802, %v5803
    %v5805 = vsel %vm2456, %v4903, -inf
    %v5806 = vsel %vm2456, %v4959, -inf
    %v5807 = vmax.f32 %v5805, %v5806
    %v5808 = vsel %vm2456, %v4910, -inf
    %v5809 = vsel %vm2456, %v4966, -inf
    %v5810 = vmax.f32 %v5808, %v5809
    %v5811 = vsel %vm2456, %v4917, -inf
    %v5812 = vsel %vm2456, %v4973, -inf
    %v5813 = vmax.f32 %v5811, %v5812
    %v5814 = vsel %vm2456, %v4924, -inf
    %v5815 = vsel %vm2456, %v4980, -inf
    %v5816 = vmax.f32 %v5814, %v5815
    %v5817 = vsel %vm2456, %v4931, -inf
    %v5818 = vsel %vm2456, %v4987, -inf
    %v5819 = vmax.f32 %v5817, %v5818
    %v5820 = vsel %vm2456, %v4938, -inf
    %v5821 = vsel %vm2456, %v4994, -inf
    %v5822 = vmax.f32 %v5820, %v5821
    %v5823 = vsel %vm2456, %v4945, -inf
    %v5824 = vsel %vm2456, %v5001, -inf
    %v5825 = vmax.f32 %v5823, %v5824
    %v5826 = vsel %vm2456, %v5008, -inf
    %v5827 = vsel %vm2456, %v5064, -inf
    %v5828 = vmax.f32 %v5826, %v5827
    %v5829 = vsel %vm2456, %v5015, -inf
    %v5830 = vsel %vm2456, %v5071, -inf
    %v5831 = vmax.f32 %v5829, %v5830
    %v5832 = vsel %vm2456, %v5022, -inf
    %v5833 = vsel %vm2456, %v5078, -inf
    %v5834 = vmax.f32 %v5832, %v5833
    %v5835 = vsel %vm2456, %v5029, -inf
    %v5836 = vsel %vm2456, %v5085, -inf
    %v5837 = vmax.f32 %v5835, %v5836
    %v5838 = vsel %vm2456, %v5036, -inf
    %v5839 = vsel %vm2456, %v5092, -inf
    %v5840 = vmax.f32 %v5838, %v5839
    %v5841 = vsel %vm2456, %v5043, -inf
    %v5842 = vsel %vm2456, %v5099, -inf
    %v5843 = vmax.f32 %v5841, %v5842
    %v5844 = vsel %vm2456, %v5050, -inf
    %v5845 = vsel %vm2456, %v5106, -inf
    %v5846 = vmax.f32 %v5844, %v5845
    %v5847 = vsel %vm2456, %v5057, -inf
    %v5848 = vsel %vm2456, %v5113, -inf
    %v5849 = vmax.f32 %v5847, %v5848
    %v5850 = vsel %vm2456, %v5120, -inf
    %v5851 = vsel %vm2456, %v5176, -inf
    %v5852 = vmax.f32 %v5850, %v5851
    %v5853 = vsel %vm2456, %v5127, -inf
    %v5854 = vsel %vm2456, %v5183, -inf
    %v5855 = vmax.f32 %v5853, %v5854
    %v5856 = vsel %vm2456, %v5134, -inf
    %v5857 = vsel %vm2456, %v5190, -inf
    %v5858 = vmax.f32 %v5856, %v5857
    %v5859 = vsel %vm2456, %v5141, -inf
    %v5860 = vsel %vm2456, %v5197, -inf
    %v5861 = vmax.f32 %v5859, %v5860
    %v5862 = vsel %vm2456, %v5148, -inf
    %v5863 = vsel %vm2456, %v5204, -inf
    %v5864 = vmax.f32 %v5862, %v5863
    %v5865 = vsel %vm2456, %v5155, -inf
    %v5866 = vsel %vm2456, %v5211, -inf
    %v5867 = vmax.f32 %v5865, %v5866
    %v5868 = vsel %vm2456, %v5162, -inf
    %v5869 = vsel %vm2456, %v5218, -inf
    %v5870 = vmax.f32 %v5868, %v5869
    %v5871 = vsel %vm2456, %v5169, -inf
    %v5872 = vsel %vm2456, %v5225, -inf
    %v5873 = vmax.f32 %v5871, %v5872
    %v5874 = vsel %vm2456, %v5232, -inf
    %v5875 = vsel %vm2456, %v5288, -inf
    %v5876 = vmax.f32 %v5874, %v5875
    %v5877 = vsel %vm2456, %v5239, -inf
    %v5878 = vsel %vm2456, %v5295, -inf
    %v5879 = vmax.f32 %v5877, %v5878
    %v5880 = vsel %vm2456, %v5246, -inf
    %v5881 = vsel %vm2456, %v5302, -inf
    %v5882 = vmax.f32 %v5880, %v5881
    %v5883 = vsel %vm2456, %v5253, -inf
    %v5884 = vsel %vm2456, %v5309, -inf
    %v5885 = vmax.f32 %v5883, %v5884
    %v5886 = vsel %vm2456, %v5260, -inf
    %v5887 = vsel %vm2456, %v5316, -inf
    %v5888 = vmax.f32 %v5886, %v5887
    %v5889 = vsel %vm2456, %v5267, -inf
    %v5890 = vsel %vm2456, %v5323, -inf
    %v5891 = vmax.f32 %v5889, %v5890
    %v5892 = vsel %vm2456, %v5274, -inf
    %v5893 = vsel %vm2456, %v5330, -inf
    %v5894 = vmax.f32 %v5892, %v5893
    %v5895 = vsel %vm2456, %v5281, -inf
    %v5896 = vsel %vm2456, %v5337, -inf
    %v5897 = vmax.f32 %v5895, %v5896
    %v5898 = vsel %vm2456, %v5344, -inf
    %v5899 = vsel %vm2456, %v5400, -inf
    %v5900 = vmax.f32 %v5898, %v5899
    %v5901 = vsel %vm2456, %v5351, -inf
    %v5902 = vsel %vm2456, %v5407, -inf
    %v5903 = vmax.f32 %v5901, %v5902
    %v5904 = vsel %vm2456, %v5358, -inf
    %v5905 = vsel %vm2456, %v5414, -inf
    %v5906 = vmax.f32 %v5904, %v5905
    %v5907 = vsel %vm2456, %v5365, -inf
    %v5908 = vsel %vm2456, %v5421, -inf
    %v5909 = vmax.f32 %v5907, %v5908
    %v5910 = vsel %vm2456, %v5372, -inf
    %v5911 = vsel %vm2456, %v5428, -inf
    %v5912 = vmax.f32 %v5910, %v5911
    %v5913 = vsel %vm2456, %v5379, -inf
    %v5914 = vsel %vm2456, %v5435, -inf
    %v5915 = vmax.f32 %v5913, %v5914
    %v5916 = vsel %vm2456, %v5386, -inf
    %v5917 = vsel %vm2456, %v5442, -inf
    %v5918 = vmax.f32 %v5916, %v5917
    %v5919 = vsel %vm2456, %v5393, -inf
    %v5920 = vsel %vm2456, %v5449, -inf
    %v5921 = vmax.f32 %v5919, %v5920
    %v5922 = vsel %vm2456, %v5456, -inf
    %v5923 = vsel %vm2456, %v5512, -inf
    %v5924 = vmax.f32 %v5922, %v5923
    %v5925 = vsel %vm2456, %v5463, -inf
    %v5926 = vsel %vm2456, %v5519, -inf
    %v5927 = vmax.f32 %v5925, %v5926
    %v5928 = vsel %vm2456, %v5470, -inf
    %v5929 = vsel %vm2456, %v5526, -inf
    %v5930 = vmax.f32 %v5928, %v5929
    %v5931 = vsel %vm2456, %v5477, -inf
    %v5932 = vsel %vm2456, %v5533, -inf
    %v5933 = vmax.f32 %v5931, %v5932
    %v5934 = vsel %vm2456, %v5484, -inf
    %v5935 = vsel %vm2456, %v5540, -inf
    %v5936 = vmax.f32 %v5934, %v5935
    %v5937 = vsel %vm2456, %v5491, -inf
    %v5938 = vsel %vm2456, %v5547, -inf
    %v5939 = vmax.f32 %v5937, %v5938
    %v5940 = vsel %vm2456, %v5498, -inf
    %v5941 = vsel %vm2456, %v5554, -inf
    %v5942 = vmax.f32 %v5940, %v5941
    %v5943 = vsel %vm2456, %v5505, -inf
    %v5944 = vsel %vm2456, %v5561, -inf
    %v5945 = vmax.f32 %v5943, %v5944
    %v5946 = vld [vmem:[%s2] sm:$0x1]
    %v5948 = vperm.slane %v5946, 0
    %v5950 = vadd.f32 %v5564, %v5948
    %v5951 = vadd.f32 %v5567, %v5948
    %v5952 = vadd.f32 %v5570, %v5948
    %v5953 = vadd.f32 %v5573, %v5948
    %v5954 = vadd.f32 %v5576, %v5948
    %v5955 = vadd.f32 %v5579, %v5948
    %v5956 = vadd.f32 %v5582, %v5948
    %v5957 = vadd.f32 %v5585, %v5948
    %v5958 = vadd.f32 %v5588, %v5948
    %v5959 = vadd.f32 %v5591, %v5948
    %v5960 = vadd.f32 %v5594, %v5948
    %v5961 = vadd.f32 %v5597, %v5948
    %v5962 = vadd.f32 %v5600, %v5948
    %v5963 = vadd.f32 %v5603, %v5948
    %v5964 = vadd.f32 %v5606, %v5948
    %v5965 = vadd.f32 %v5609, %v5948
    %v5966 = vadd.f32 %v5612, %v5948
    %v5967 = vadd.f32 %v5615, %v5948
    %v5968 = vadd.f32 %v5618, %v5948
    %v5969 = vadd.f32 %v5621, %v5948
    %v5970 = vadd.f32 %v5624, %v5948
    %v5971 = vadd.f32 %v5627, %v5948
    %v5972 = vadd.f32 %v5630, %v5948
    %v5973 = vadd.f32 %v5633, %v5948
    %v5974 = vadd.f32 %v5636, %v5948
    %v5975 = vadd.f32 %v5639, %v5948
    %v5976 = vadd.f32 %v5642, %v5948
    %v5977 = vadd.f32 %v5645, %v5948
    %v5978 = vadd.f32 %v5648, %v5948
    %v5979 = vadd.f32 %v5651, %v5948
    %v5980 = vadd.f32 %v5654, %v5948
    %v5981 = vadd.f32 %v5657, %v5948
    %v5982 = vadd.f32 %v5660, %v5948
    %v5983 = vadd.f32 %v5663, %v5948
    %v5984 = vadd.f32 %v5666, %v5948
    %v5985 = vadd.f32 %v5669, %v5948
    %v5986 = vadd.f32 %v5672, %v5948
    %v5987 = vadd.f32 %v5675, %v5948
    %v5988 = vadd.f32 %v5678, %v5948
    %v5989 = vadd.f32 %v5681, %v5948
    %v5990 = vadd.f32 %v5684, %v5948
    %v5991 = vadd.f32 %v5687, %v5948
    %v5992 = vadd.f32 %v5690, %v5948
    %v5993 = vadd.f32 %v5693, %v5948
    %v5994 = vadd.f32 %v5696, %v5948
    %v5995 = vadd.f32 %v5699, %v5948
    %v5996 = vadd.f32 %v5702, %v5948
    %v5997 = vadd.f32 %v5705, %v5948
    %v5998 = vadd.f32 %v5708, %v5948
    %v5999 = vadd.f32 %v5711, %v5948
    %v6000 = vadd.f32 %v5714, %v5948
    %v6001 = vadd.f32 %v5717, %v5948
    %v6002 = vadd.f32 %v5720, %v5948
    %v6003 = vadd.f32 %v5723, %v5948
    %v6004 = vadd.f32 %v5726, %v5948
    %v6005 = vadd.f32 %v5729, %v5948
    %v6006 = vadd.f32 %v5732, %v5948
    %v6007 = vadd.f32 %v5735, %v5948
    %v6008 = vadd.f32 %v5738, %v5948
    %v6009 = vadd.f32 %v5741, %v5948
    %v6010 = vadd.f32 %v5744, %v5948
    %v6011 = vadd.f32 %v5747, %v5948
    %v6012 = vadd.f32 %v5750, %v5948
    %v6013 = vadd.f32 %v5753, %v5948
    %v6014 = vadd.f32 %v5756, %v5948
    %v6015 = vadd.f32 %v5759, %v5948
    %v6016 = vadd.f32 %v5762, %v5948
    %v6017 = vadd.f32 %v5765, %v5948
    %v6018 = vadd.f32 %v5768, %v5948
    %v6019 = vadd.f32 %v5771, %v5948
    %v6020 = vadd.f32 %v5774, %v5948
    %v6021 = vadd.f32 %v5777, %v5948
    %v6022 = vadd.f32 %v5780, %v5948
    %v6023 = vadd.f32 %v5783, %v5948
    %v6024 = vadd.f32 %v5786, %v5948
    %v6025 = vadd.f32 %v5789, %v5948
    %v6026 = vadd.f32 %v5792, %v5948
    %v6027 = vadd.f32 %v5795, %v5948
    %v6028 = vadd.f32 %v5798, %v5948
    %v6029 = vadd.f32 %v5801, %v5948
    %v6030 = vadd.f32 %v5804, %v5948
    %v6031 = vadd.f32 %v5807, %v5948
    %v6032 = vadd.f32 %v5810, %v5948
    %v6033 = vadd.f32 %v5813, %v5948
    %v6034 = vadd.f32 %v5816, %v5948
    %v6035 = vadd.f32 %v5819, %v5948
    %v6036 = vadd.f32 %v5822, %v5948
    %v6037 = vadd.f32 %v5825, %v5948
    %v6038 = vadd.f32 %v5828, %v5948
    %v6039 = vadd.f32 %v5831, %v5948
    %v6040 = vadd.f32 %v5834, %v5948
    %v6041 = vadd.f32 %v5837, %v5948
    %v6042 = vadd.f32 %v5840, %v5948
    %v6043 = vadd.f32 %v5843, %v5948
    %v6044 = vadd.f32 %v5846, %v5948
    %v6045 = vadd.f32 %v5849, %v5948
    %v6046 = vadd.f32 %v5852, %v5948
    %v6047 = vadd.f32 %v5855, %v5948
    %v6048 = vadd.f32 %v5858, %v5948
    %v6049 = vadd.f32 %v5861, %v5948
    %v6050 = vadd.f32 %v5864, %v5948
    %v6051 = vadd.f32 %v5867, %v5948
    %v6052 = vadd.f32 %v5870, %v5948
    %v6053 = vadd.f32 %v5873, %v5948
    %v6054 = vadd.f32 %v5876, %v5948
    %v6055 = vadd.f32 %v5879, %v5948
    %v6056 = vadd.f32 %v5882, %v5948
    %v6057 = vadd.f32 %v5885, %v5948
    %v6058 = vadd.f32 %v5888, %v5948
    %v6059 = vadd.f32 %v5891, %v5948
    %v6060 = vadd.f32 %v5894, %v5948
    %v6061 = vadd.f32 %v5897, %v5948
    %v6062 = vadd.f32 %v5900, %v5948
    %v6063 = vadd.f32 %v5903, %v5948
    %v6064 = vadd.f32 %v5906, %v5948
    %v6065 = vadd.f32 %v5909, %v5948
    %v6066 = vadd.f32 %v5912, %v5948
    %v6067 = vadd.f32 %v5915, %v5948
    %v6068 = vadd.f32 %v5918, %v5948
    %v6069 = vadd.f32 %v5921, %v5948
    %v6070 = vadd.f32 %v5924, %v5948
    %v6071 = vadd.f32 %v5927, %v5948
    %v6072 = vadd.f32 %v5930, %v5948
    %v6073 = vadd.f32 %v5933, %v5948
    %v6074 = vadd.f32 %v5936, %v5948
    %v6075 = vadd.f32 %v5939, %v5948
    %v6076 = vadd.f32 %v5942, %v5948
    %v6077 = vadd.f32 %v5945, %v5948
    %v6078 = vmax.f32 %v5950, 0.0
    %v6079 = vmax.f32 %v5951, 0.0
    %v6080 = vmax.f32 %v5952, 0.0
    %v6081 = vmax.f32 %v5953, 0.0
    %v6082 = vmax.f32 %v5954, 0.0
    %v6083 = vmax.f32 %v5955, 0.0
    %v6084 = vmax.f32 %v5956, 0.0
    %v6085 = vmax.f32 %v5957, 0.0
    %v6086 = vmax.f32 %v5958, 0.0
    %v6087 = vmax.f32 %v5959, 0.0
    %v6088 = vmax.f32 %v5960, 0.0
    %v6089 = vmax.f32 %v5961, 0.0
    %v6090 = vmax.f32 %v5962, 0.0
    %v6091 = vmax.f32 %v5963, 0.0
    %v6092 = vmax.f32 %v5964, 0.0
    %v6093 = vmax.f32 %v5965, 0.0
    %v6094 = vmax.f32 %v5966, 0.0
    %v6095 = vmax.f32 %v5967, 0.0
    %v6096 = vmax.f32 %v5968, 0.0
    %v6097 = vmax.f32 %v5969, 0.0
    %v6098 = vmax.f32 %v5970, 0.0
    %v6099 = vmax.f32 %v5971, 0.0
    %v6100 = vmax.f32 %v5972, 0.0
    %v6101 = vmax.f32 %v5973, 0.0
    %v6102 = vmax.f32 %v5974, 0.0
    %v6103 = vmax.f32 %v5975, 0.0
    %v6104 = vmax.f32 %v5976, 0.0
    %v6105 = vmax.f32 %v5977, 0.0
    %v6106 = vmax.f32 %v5978, 0.0
    %v6107 = vmax.f32 %v5979, 0.0
    %v6108 = vmax.f32 %v5980, 0.0
    %v6109 = vmax.f32 %v5981, 0.0
    %v6110 = vmax.f32 %v5982, 0.0
    %v6111 = vmax.f32 %v5983, 0.0
    %v6112 = vmax.f32 %v5984, 0.0
    %v6113 = vmax.f32 %v5985, 0.0
    %v6114 = vmax.f32 %v5986, 0.0
    %v6115 = vmax.f32 %v5987, 0.0
    %v6116 = vmax.f32 %v5988, 0.0
    %v6117 = vmax.f32 %v5989, 0.0
    %v6118 = vmax.f32 %v5990, 0.0
    %v6119 = vmax.f32 %v5991, 0.0
    %v6120 = vmax.f32 %v5992, 0.0
    %v6121 = vmax.f32 %v5993, 0.0
    %v6122 = vmax.f32 %v5994, 0.0
    %v6123 = vmax.f32 %v5995, 0.0
    %v6124 = vmax.f32 %v5996, 0.0
    %v6125 = vmax.f32 %v5997, 0.0
    %v6126 = vmax.f32 %v5998, 0.0
    %v6127 = vmax.f32 %v5999, 0.0
    %v6128 = vmax.f32 %v6000, 0.0
    %v6129 = vmax.f32 %v6001, 0.0
    %v6130 = vmax.f32 %v6002, 0.0
    %v6131 = vmax.f32 %v6003, 0.0
    %v6132 = vmax.f32 %v6004, 0.0
    %v6133 = vmax.f32 %v6005, 0.0
    %v6134 = vmax.f32 %v6006, 0.0
    %v6135 = vmax.f32 %v6007, 0.0
    %v6136 = vmax.f32 %v6008, 0.0
    %v6137 = vmax.f32 %v6009, 0.0
    %v6138 = vmax.f32 %v6010, 0.0
    %v6139 = vmax.f32 %v6011, 0.0
    %v6140 = vmax.f32 %v6012, 0.0
    %v6141 = vmax.f32 %v6013, 0.0
    %v6142 = vmax.f32 %v6014, 0.0
    %v6143 = vmax.f32 %v6015, 0.0
    %v6144 = vmax.f32 %v6016, 0.0
    %v6145 = vmax.f32 %v6017, 0.0
    %v6146 = vmax.f32 %v6018, 0.0
    %v6147 = vmax.f32 %v6019, 0.0
    %v6148 = vmax.f32 %v6020, 0.0
    %v6149 = vmax.f32 %v6021, 0.0
    %v6150 = vmax.f32 %v6022, 0.0
    %v6151 = vmax.f32 %v6023, 0.0
    %v6152 = vmax.f32 %v6024, 0.0
    %v6153 = vmax.f32 %v6025, 0.0
    %v6154 = vmax.f32 %v6026, 0.0
    %v6155 = vmax.f32 %v6027, 0.0
    %v6156 = vmax.f32 %v6028, 0.0
    %v6157 = vmax.f32 %v6029, 0.0
    %v6158 = vmax.f32 %v6030, 0.0
    %v6159 = vmax.f32 %v6031, 0.0
    %v6160 = vmax.f32 %v6032, 0.0
    %v6161 = vmax.f32 %v6033, 0.0
    %v6162 = vmax.f32 %v6034, 0.0
    %v6163 = vmax.f32 %v6035, 0.0
    %v6164 = vmax.f32 %v6036, 0.0
    %v6165 = vmax.f32 %v6037, 0.0
    %v6166 = vmax.f32 %v6038, 0.0
    %v6167 = vmax.f32 %v6039, 0.0
    %v6168 = vmax.f32 %v6040, 0.0
    %v6169 = vmax.f32 %v6041, 0.0
    %v6170 = vmax.f32 %v6042, 0.0
    %v6171 = vmax.f32 %v6043, 0.0
    %v6172 = vmax.f32 %v6044, 0.0
    %v6173 = vmax.f32 %v6045, 0.0
    %v6174 = vmax.f32 %v6046, 0.0
    %v6175 = vmax.f32 %v6047, 0.0
    %v6176 = vmax.f32 %v6048, 0.0
    %v6177 = vmax.f32 %v6049, 0.0
    %v6178 = vmax.f32 %v6050, 0.0
    %v6179 = vmax.f32 %v6051, 0.0
    %v6180 = vmax.f32 %v6052, 0.0
    %v6181 = vmax.f32 %v6053, 0.0
    %v6182 = vmax.f32 %v6054, 0.0
    %v6183 = vmax.f32 %v6055, 0.0
    %v6184 = vmax.f32 %v6056, 0.0
    %v6185 = vmax.f32 %v6057, 0.0
    %v6186 = vmax.f32 %v6058, 0.0
    %v6187 = vmax.f32 %v6059, 0.0
    %v6188 = vmax.f32 %v6060, 0.0
    %v6189 = vmax.f32 %v6061, 0.0
    %v6190 = vmax.f32 %v6062, 0.0
    %v6191 = vmax.f32 %v6063, 0.0
    %v6192 = vmax.f32 %v6064, 0.0
    %v6193 = vmax.f32 %v6065, 0.0
    %v6194 = vmax.f32 %v6066, 0.0
    %v6195 = vmax.f32 %v6067, 0.0
    %v6196 = vmax.f32 %v6068, 0.0
    %v6197 = vmax.f32 %v6069, 0.0
    %v6198 = vmax.f32 %v6070, 0.0
    %v6199 = vmax.f32 %v6071, 0.0
    %v6200 = vmax.f32 %v6072, 0.0
    %v6201 = vmax.f32 %v6073, 0.0
    %v6202 = vmax.f32 %v6074, 0.0
    %v6203 = vmax.f32 %v6075, 0.0
    %v6204 = vmax.f32 %v6076, 0.0
    %v6205 = vmax.f32 %v6077, 0.0
    %6206 = vst.msk [vmem:[#allocation3] sm:$0xff] %vm2456, 0.0
    %6207 = vst.msk [vmem:[#allocation3 + $0x8] sm:$0x3] %vm3769, 0.0
    %6208 = vst.msk [vmem:[#allocation3 + $0x10] sm:$0xff] %vm2456, 0.0
    %6209 = vst.msk [vmem:[#allocation3 + $0x18] sm:$0x3] %vm3769, 0.0
    %6210 = vst.msk [vmem:[#allocation3 + $0x20] sm:$0xff] %vm2456, 0.0
    %6211 = vst.msk [vmem:[#allocation3 + $0x28] sm:$0x3] %vm3769, 0.0
    %6212 = vst.msk [vmem:[#allocation3 + $0x30] sm:$0xff] %vm2456, 0.0
    %6213 = vst.msk [vmem:[#allocation3 + $0x38] sm:$0x3] %vm3769, 0.0
    %6214 = vst.msk [vmem:[#allocation3 + $0x40] sm:$0xff] %vm2456, 0.0
    %6215 = vst.msk [vmem:[#allocation3 + $0x48] sm:$0x3] %vm3769, 0.0
    %6216 = vst.msk [vmem:[#allocation3 + $0x50] sm:$0xff] %vm2456, 0.0
    %6217 = vst.msk [vmem:[#allocation3 + $0x58] sm:$0x3] %vm3769, 0.0
    %6218 = vst.msk [vmem:[#allocation3 + $0x60] sm:$0xff] %vm2456, 0.0
    %6219 = vst.msk [vmem:[#allocation3 + $0x68] sm:$0x3] %vm3769, 0.0
    %6220 = vst.msk [vmem:[#allocation3 + $0x70] sm:$0xff] %vm2456, 0.0
    %6221 = vst.msk [vmem:[#allocation3 + $0x78] sm:$0x3] %vm3769, 0.0
    %6222 = vst.msk [vmem:[#allocation3 + $0x80] sm:$0xff] %vm2456, 0.0
    %6223 = vst.msk [vmem:[#allocation3 + $0x88] sm:$0x3] %vm3769, 0.0
    %6224 = vst.msk [vmem:[#allocation3 + $0x90] sm:$0xff] %vm2456, 0.0
    %6225 = vst.msk [vmem:[#allocation3 + $0x98] sm:$0x3] %vm3769, 0.0
    %6226 = vst.msk [vmem:[#allocation3 + $0xa0] sm:$0xff] %vm2456, 0.0
    %6227 = vst.msk [vmem:[#allocation3 + $0xa8] sm:$0x3] %vm3769, 0.0
    %6228 = vst.msk [vmem:[#allocation3 + $0xb0] sm:$0xff] %vm2456, 0.0
    %6229 = vst.msk [vmem:[#allocation3 + $0xb8] sm:$0x3] %vm3769, 0.0
    %6230 = vst.msk [vmem:[#allocation3 + $0xc0] sm:$0xff] %vm2456, 0.0
    %6231 = vst.msk [vmem:[#allocation3 + $0xc8] sm:$0x3] %vm3769, 0.0
    %6232 = vst.msk [vmem:[#allocation3 + $0xd0] sm:$0xff] %vm2456, 0.0
    %6233 = vst.msk [vmem:[#allocation3 + $0xd8] sm:$0x3] %vm3769, 0.0
    %6234 = vst.msk [vmem:[#allocation3 + $0xe0] sm:$0xff] %vm2456, 0.0
    %6235 = vst.msk [vmem:[#allocation3 + $0xe8] sm:$0x3] %vm3769, 0.0
    %6236 = vst.msk [vmem:[#allocation3 + $0xf0] sm:$0xff] %vm2456, 0.0
    %6237 = vst.msk [vmem:[#allocation3 + $0xf8] sm:$0x3] %vm3769, 0.0
    %6238 = vst.msk [vmem:[#allocation3 + $0x100] sm:$0xff] %vm2456, 0.0
    %6239 = vst.msk [vmem:[#allocation3 + $0x108] sm:$0x3] %vm3769, 0.0
    %6240 = vst.msk [vmem:[#allocation3 + $0x110] sm:$0xff] %vm2456, 0.0
    %6241 = vst.msk [vmem:[#allocation3 + $0x118] sm:$0x3] %vm3769, 0.0
    %6242 = vst.msk [vmem:[#allocation3 + $0x120] sm:$0xff] %vm2456, 0.0
    %6243 = vst.msk [vmem:[#allocation3 + $0x128] sm:$0x3] %vm3769, 0.0
    %6244 = vst.msk [vmem:[#allocation3 + $0x130] sm:$0xff] %vm2456, 0.0
    %6245 = vst.msk [vmem:[#allocation3 + $0x138] sm:$0x3] %vm3769, 0.0
    %v6374 = vrot.slane %v6079, 7
    %vm6375 = vcmask 1041409
    %v6376 = vsel %vm6375, %v6374, %v6078
    %v6377 = vrot.slane %v6080, 6
    %vm6378 = vcmask 1042434
    %v6379 = vsel %vm6378, %v6377, %v6376
    %v6380 = vrot.slane %v6081, 5
    %vm6381 = vcmask 1043459
    %v6382 = vsel %vm6381, %v6380, %v6379
    %v6383 = vrot.slane %v6082, 4
    %vm6384 = vcmask 1044484
    %v6385 = vsel %vm6384, %v6383, %v6382
    %v6386 = vrot.slane %v6083, 3
    %vm6387 = vcmask 1045509
    %v6388 = vsel %vm6387, %v6386, %v6385
    %v6389 = vrot.slane %v6084, 2
    %vm6390 = vcmask 1046534
    %v6391 = vsel %vm6390, %v6389, %v6388
    %v6392 = vrot.slane %v6085, 1
    %vm6393 = vcmask 1047559
    %v6394 = vsel %vm6393, %v6392, %v6391
    %v6395 = vrot.slane %v6087, 7
    %v6396 = vsel %vm6375, %v6395, %v6086
    %v6397 = vrot.slane %v6088, 6
    %v6398 = vsel %vm6378, %v6397, %v6396
    %v6399 = vrot.slane %v6089, 5
    %v6400 = vsel %vm6381, %v6399, %v6398
    %v6401 = vrot.slane %v6090, 4
    %v6402 = vsel %vm6384, %v6401, %v6400
    %v6403 = vrot.slane %v6091, 3
    %v6404 = vsel %vm6387, %v6403, %v6402
    %v6405 = vrot.slane %v6092, 2
    %v6406 = vsel %vm6390, %v6405, %v6404
    %v6407 = vrot.slane %v6093, 1
    %v6408 = vsel %vm6393, %v6407, %v6406
    %v6409 = vrot.slane %v6095, 7
    %v6410 = vsel %vm6375, %v6409, %v6094
    %v6411 = vrot.slane %v6096, 6
    %v6412 = vsel %vm6378, %v6411, %v6410
    %v6413 = vrot.slane %v6097, 5
    %v6414 = vsel %vm6381, %v6413, %v6412
    %v6415 = vrot.slane %v6098, 4
    %v6416 = vsel %vm6384, %v6415, %v6414
    %v6417 = vrot.slane %v6099, 3
    %v6418 = vsel %vm6387, %v6417, %v6416
    %v6419 = vrot.slane %v6100, 2
    %v6420 = vsel %vm6390, %v6419, %v6418
    %v6421 = vrot.slane %v6101, 1
    %v6422 = vsel %vm6393, %v6421, %v6420
    %v6423 = vrot.slane %v6103, 7
    %v6424 = vsel %vm6375, %v6423, %v6102
    %v6425 = vrot.slane %v6104, 6
    %v6426 = vsel %vm6378, %v6425, %v6424
    %v6427 = vrot.slane %v6105, 5
    %v6428 = vsel %vm6381, %v6427, %v6426
    %v6429 = vrot.slane %v6106, 4
    %v6430 = vsel %vm6384, %v6429, %v6428
    %v6431 = vrot.slane %v6107, 3
    %v6432 = vsel %vm6387, %v6431, %v6430
    %v6433 = vrot.slane %v6108, 2
    %v6434 = vsel %vm6390, %v6433, %v6432
    %v6435 = vrot.slane %v6109, 1
    %v6436 = vsel %vm6393, %v6435, %v6434
    %v6437 = vrot.slane %v6111, 7
    %v6438 = vsel %vm6375, %v6437, %v6110
    %v6439 = vrot.slane %v6112, 6
    %v6440 = vsel %vm6378, %v6439, %v6438
    %v6441 = vrot.slane %v6113, 5
    %v6442 = vsel %vm6381, %v6441, %v6440
    %v6443 = vrot.slane %v6114, 4
    %v6444 = vsel %vm6384, %v6443, %v6442
    %v6445 = vrot.slane %v6115, 3
    %v6446 = vsel %vm6387, %v6445, %v6444
    %v6447 = vrot.slane %v6116, 2
    %v6448 = vsel %vm6390, %v6447, %v6446
    %v6449 = vrot.slane %v6117, 1
    %v6450 = vsel %vm6393, %v6449, %v6448
    %v6451 = vrot.slane %v6119, 7
    %v6452 = vsel %vm6375, %v6451, %v6118
    %v6453 = vrot.slane %v6120, 6
    %v6454 = vsel %vm6378, %v6453, %v6452
    %v6455 = vrot.slane %v6121, 5
    %v6456 = vsel %vm6381, %v6455, %v6454
    %v6457 = vrot.slane %v6122, 4
    %v6458 = vsel %vm6384, %v6457, %v6456
    %v6459 = vrot.slane %v6123, 3
    %v6460 = vsel %vm6387, %v6459, %v6458
    %v6461 = vrot.slane %v6124, 2
    %v6462 = vsel %vm6390, %v6461, %v6460
    %v6463 = vrot.slane %v6125, 1
    %v6464 = vsel %vm6393, %v6463, %v6462
    %v6465 = vrot.slane %v6127, 7
    %v6466 = vsel %vm6375, %v6465, %v6126
    %v6467 = vrot.slane %v6128, 6
    %v6468 = vsel %vm6378, %v6467, %v6466
    %v6469 = vrot.slane %v6129, 5
    %v6470 = vsel %vm6381, %v6469, %v6468
    %v6471 = vrot.slane %v6130, 4
    %v6472 = vsel %vm6384, %v6471, %v6470
    %v6473 = vrot.slane %v6131, 3
    %v6474 = vsel %vm6387, %v6473, %v6472
    %v6475 = vrot.slane %v6132, 2
    %v6476 = vsel %vm6390, %v6475, %v6474
    %v6477 = vrot.slane %v6133, 1
    %v6478 = vsel %vm6393, %v6477, %v6476
    %v6479 = vrot.slane %v6135, 7
    %v6480 = vsel %vm6375, %v6479, %v6134
    %v6481 = vrot.slane %v6136, 6
    %v6482 = vsel %vm6378, %v6481, %v6480
    %v6483 = vrot.slane %v6137, 5
    %v6484 = vsel %vm6381, %v6483, %v6482
    %v6485 = vrot.slane %v6138, 4
    %v6486 = vsel %vm6384, %v6485, %v6484
    %v6487 = vrot.slane %v6139, 3
    %v6488 = vsel %vm6387, %v6487, %v6486
    %v6489 = vrot.slane %v6140, 2
    %v6490 = vsel %vm6390, %v6489, %v6488
    %v6491 = vrot.slane %v6141, 1
    %v6492 = vsel %vm6393, %v6491, %v6490
    %v6493 = vrot.slane %v6143, 7
    %v6494 = vsel %vm6375, %v6493, %v6142
    %v6495 = vrot.slane %v6144, 6
    %v6496 = vsel %vm6378, %v6495, %v6494
    %v6497 = vrot.slane %v6145, 5
    %v6498 = vsel %vm6381, %v6497, %v6496
    %v6499 = vrot.slane %v6146, 4
    %v6500 = vsel %vm6384, %v6499, %v6498
    %v6501 = vrot.slane %v6147, 3
    %v6502 = vsel %vm6387, %v6501, %v6500
    %v6503 = vrot.slane %v6148, 2
    %v6504 = vsel %vm6390, %v6503, %v6502
    %v6505 = vrot.slane %v6149, 1
    %v6506 = vsel %vm6393, %v6505, %v6504
    %v6507 = vrot.slane %v6151, 7
    %v6508 = vsel %vm6375, %v6507, %v6150
    %v6509 = vrot.slane %v6152, 6
    %v6510 = vsel %vm6378, %v6509, %v6508
    %v6511 = vrot.slane %v6153, 5
    %v6512 = vsel %vm6381, %v6511, %v6510
    %v6513 = vrot.slane %v6154, 4
    %v6514 = vsel %vm6384, %v6513, %v6512
    %v6515 = vrot.slane %v6155, 3
    %v6516 = vsel %vm6387, %v6515, %v6514
    %v6517 = vrot.slane %v6156, 2
    %v6518 = vsel %vm6390, %v6517, %v6516
    %v6519 = vrot.slane %v6157, 1
    %v6520 = vsel %vm6393, %v6519, %v6518
    %v6521 = vrot.slane %v6159, 7
    %v6522 = vsel %vm6375, %v6521, %v6158
    %v6523 = vrot.slane %v6160, 6
    %v6524 = vsel %vm6378, %v6523, %v6522
    %v6525 = vrot.slane %v6161, 5
    %v6526 = vsel %vm6381, %v6525, %v6524
    %v6527 = vrot.slane %v6162, 4
    %v6528 = vsel %vm6384, %v6527, %v6526
    %v6529 = vrot.slane %v6163, 3
    %v6530 = vsel %vm6387, %v6529, %v6528
    %v6531 = vrot.slane %v6164, 2
    %v6532 = vsel %vm6390, %v6531, %v6530
    %v6533 = vrot.slane %v6165, 1
    %v6534 = vsel %vm6393, %v6533, %v6532
    %v6535 = vrot.slane %v6167, 7
    %v6536 = vsel %vm6375, %v6535, %v6166
    %v6537 = vrot.slane %v6168, 6
    %v6538 = vsel %vm6378, %v6537, %v6536
    %v6539 = vrot.slane %v6169, 5
    %v6540 = vsel %vm6381, %v6539, %v6538
    %v6541 = vrot.slane %v6170, 4
    %v6542 = vsel %vm6384, %v6541, %v6540
    %v6543 = vrot.slane %v6171, 3
    %v6544 = vsel %vm6387, %v6543, %v6542
    %v6545 = vrot.slane %v6172, 2
    %v6546 = vsel %vm6390, %v6545, %v6544
    %v6547 = vrot.slane %v6173, 1
    %v6548 = vsel %vm6393, %v6547, %v6546
    %v6549 = vrot.slane %v6175, 7
    %v6550 = vsel %vm6375, %v6549, %v6174
    %v6551 = vrot.slane %v6176, 6
    %v6552 = vsel %vm6378, %v6551, %v6550
    %v6553 = vrot.slane %v6177, 5
    %v6554 = vsel %vm6381, %v6553, %v6552
    %v6555 = vrot.slane %v6178, 4
    %v6556 = vsel %vm6384, %v6555, %v6554
    %v6557 = vrot.slane %v6179, 3
    %v6558 = vsel %vm6387, %v6557, %v6556
    %v6559 = vrot.slane %v6180, 2
    %v6560 = vsel %vm6390, %v6559, %v6558
    %v6561 = vrot.slane %v6181, 1
    %v6562 = vsel %vm6393, %v6561, %v6560
    %v6563 = vrot.slane %v6183, 7
    %v6564 = vsel %vm6375, %v6563, %v6182
    %v6565 = vrot.slane %v6184, 6
    %v6566 = vsel %vm6378, %v6565, %v6564
    %v6567 = vrot.slane %v6185, 5
    %v6568 = vsel %vm6381, %v6567, %v6566
    %v6569 = vrot.slane %v6186, 4
    %v6570 = vsel %vm6384, %v6569, %v6568
    %v6571 = vrot.slane %v6187, 3
    %v6572 = vsel %vm6387, %v6571, %v6570
    %v6573 = vrot.slane %v6188, 2
    %v6574 = vsel %vm6390, %v6573, %v6572
    %v6575 = vrot.slane %v6189, 1
    %v6576 = vsel %vm6393, %v6575, %v6574
    %v6577 = vrot.slane %v6191, 7
    %v6578 = vsel %vm6375, %v6577, %v6190
    %v6579 = vrot.slane %v6192, 6
    %v6580 = vsel %vm6378, %v6579, %v6578
    %v6581 = vrot.slane %v6193, 5
    %v6582 = vsel %vm6381, %v6581, %v6580
    %v6583 = vrot.slane %v6194, 4
    %v6584 = vsel %vm6384, %v6583, %v6582
    %v6585 = vrot.slane %v6195, 3
    %v6586 = vsel %vm6387, %v6585, %v6584
    %v6587 = vrot.slane %v6196, 2
    %v6588 = vsel %vm6390, %v6587, %v6586
    %v6589 = vrot.slane %v6197, 1
    %v6590 = vsel %vm6393, %v6589, %v6588
    %v6591 = vrot.slane %v6199, 7
    %v6592 = vsel %vm6375, %v6591, %v6198
    %v6593 = vrot.slane %v6200, 6
    %v6594 = vsel %vm6378, %v6593, %v6592
    %v6595 = vrot.slane %v6201, 5
    %v6596 = vsel %vm6381, %v6595, %v6594
    %v6597 = vrot.slane %v6202, 4
    %v6598 = vsel %vm6384, %v6597, %v6596
    %v6599 = vrot.slane %v6203, 3
    %v6600 = vsel %vm6387, %v6599, %v6598
    %v6601 = vrot.slane %v6204, 2
    %v6602 = vsel %vm6390, %v6601, %v6600
    %v6603 = vrot.slane %v6205, 1
    %v6604 = vsel %vm6393, %v6603, %v6602
    %s6621 = scalar_lea.vmem [#allocation3], 16
    %6622 = vst.msk [vmem:[%s6621 + $0x1] sm:$0xff] %vm2456, %v6394
    %6623 = vst.msk [vmem:[%s6621 + $0x11] sm:$0xff] %vm2456, %v6408
    %6624 = vst.msk [vmem:[%s6621 + $0x21] sm:$0xff] %vm2456, %v6422
    %6625 = vst.msk [vmem:[%s6621 + $0x31] sm:$0xff] %vm2456, %v6436
    %6626 = vst.msk [vmem:[%s6621 + $0x41] sm:$0xff] %vm2456, %v6450
    %6627 = vst.msk [vmem:[%s6621 + $0x51] sm:$0xff] %vm2456, %v6464
    %6628 = vst.msk [vmem:[%s6621 + $0x61] sm:$0xff] %vm2456, %v6478
    %6629 = vst.msk [vmem:[%s6621 + $0x71] sm:$0xff] %vm2456, %v6492
    %6630 = vst.msk [vmem:[%s6621 + $0xa1] sm:$0xff] %vm2456, %v6506
    %6631 = vst.msk [vmem:[%s6621 + $0xb1] sm:$0xff] %vm2456, %v6520
    %6632 = vst.msk [vmem:[%s6621 + $0xc1] sm:$0xff] %vm2456, %v6534
    %6633 = vst.msk [vmem:[%s6621 + $0xd1] sm:$0xff] %vm2456, %v6548
    %6634 = vst.msk [vmem:[%s6621 + $0xe1] sm:$0xff] %vm2456, %v6562
    %6635 = vst.msk [vmem:[%s6621 + $0xf1] sm:$0xff] %vm2456, %v6576
    %6636 = vst.msk [vmem:[%s6621 + $0x101] sm:$0xff] %vm2456, %v6590
    %6637 = vst.msk [vmem:[%s6621 + $0x111] sm:$0xff] %vm2456, %v6604
    %v6638 = vld [vmem:[#allocation3] sm:$0xff]
    %v6639 = vld [vmem:[#allocation3 + $0x8] sm:$0x3]
    %v6640 = vld [vmem:[#allocation3 + $0x10] sm:$0xff]
    %v6641 = vld [vmem:[#allocation3 + $0x18] sm:$0x3]
    %v6642 = vld [vmem:[#allocation3 + $0x20] sm:$0xff]
    %v6643 = vld [vmem:[#allocation3 + $0x28] sm:$0x3]
    %v6644 = vld [vmem:[#allocation3 + $0x30] sm:$0xff]
    %v6645 = vld [vmem:[#allocation3 + $0x38] sm:$0x3]
    %v6646 = vld [vmem:[#allocation3 + $0x40] sm:$0xff]
    %v6647 = vld [vmem:[#allocation3 + $0x48] sm:$0x3]
    %v6648 = vld [vmem:[#allocation3 + $0x50] sm:$0xff]
    %v6649 = vld [vmem:[#allocation3 + $0x58] sm:$0x3]
    %v6650 = vld [vmem:[#allocation3 + $0x60] sm:$0xff]
    %v6651 = vld [vmem:[#allocation3 + $0x68] sm:$0x3]
    %v6652 = vld [vmem:[#allocation3 + $0x70] sm:$0xff]
    %v6653 = vld [vmem:[#allocation3 + $0x78] sm:$0x3]
    %v6654 = vld [vmem:[#allocation3 + $0x80] sm:$0xff]
    %v6655 = vld [vmem:[#allocation3 + $0x88] sm:$0x3]
    %v6656 = vld [vmem:[#allocation3 + $0x90] sm:$0xff]
    %v6657 = vld [vmem:[#allocation3 + $0x98] sm:$0x3]
    %v6658 = vld [vmem:[#allocation3 + $0xa0] sm:$0xff]
    %v6659 = vld [vmem:[#allocation3 + $0xa8] sm:$0x3]
    %v6660 = vld [vmem:[#allocation3 + $0xb0] sm:$0xff]
    %v6661 = vld [vmem:[#allocation3 + $0xb8] sm:$0x3]
    %v6662 = vld [vmem:[#allocation3 + $0xc0] sm:$0xff]
    %v6663 = vld [vmem:[#allocation3 + $0xc8] sm:$0x3]
    %v6664 = vld [vmem:[#allocation3 + $0xd0] sm:$0xff]
    %v6665 = vld [vmem:[#allocation3 + $0xd8] sm:$0x3]
    %v6666 = vld [vmem:[#allocation3 + $0xe0] sm:$0xff]
    %v6667 = vld [vmem:[#allocation3 + $0xe8] sm:$0x3]
    %v6668 = vld [vmem:[#allocation3 + $0xf0] sm:$0xff]
    %v6669 = vld [vmem:[#allocation3 + $0xf8] sm:$0x3]
    %v6670 = vld [vmem:[#allocation3 + $0x100] sm:$0xff]
    %v6671 = vld [vmem:[#allocation3 + $0x108] sm:$0x3]
    %v6672 = vld [vmem:[#allocation3 + $0x110] sm:$0xff]
    %v6673 = vld [vmem:[#allocation3 + $0x118] sm:$0x3]
    %v6674 = vld [vmem:[#allocation3 + $0x120] sm:$0xff]
    %v6675 = vld [vmem:[#allocation3 + $0x128] sm:$0x3]
    %v6676 = vld [vmem:[#allocation3 + $0x130] sm:$0xff]
    %v6677 = vld [vmem:[#allocation3 + $0x138] sm:$0x3]
    %v6710 = vrot.slane %v6638, 1
    %v6711 = vrot.slane %v6639, 1
    %v6712 = vsel %vm482, %v6710, %v6711
    %v6713 = vrot.slane %v6640, 1
    %v6714 = vrot.slane %v6641, 1
    %v6715 = vsel %vm482, %v6713, %v6714
    %v6716 = vrot.slane %v6642, 1
    %v6717 = vrot.slane %v6643, 1
    %v6718 = vsel %vm482, %v6716, %v6717
    %v6719 = vrot.slane %v6644, 1
    %v6720 = vrot.slane %v6645, 1
    %v6721 = vsel %vm482, %v6719, %v6720
    %v6722 = vrot.slane %v6646, 1
    %v6723 = vrot.slane %v6647, 1
    %v6724 = vsel %vm482, %v6722, %v6723
    %v6725 = vrot.slane %v6648, 1
    %v6726 = vrot.slane %v6649, 1
    %v6727 = vsel %vm482, %v6725, %v6726
    %v6728 = vrot.slane %v6650, 1
    %v6729 = vrot.slane %v6651, 1
    %v6730 = vsel %vm482, %v6728, %v6729
    %v6731 = vrot.slane %v6652, 1
    %v6732 = vrot.slane %v6653, 1
    %v6733 = vsel %vm482, %v6731, %v6732
    %v6734 = vrot.slane %v6658, 1
    %v6735 = vrot.slane %v6659, 1
    %v6736 = vsel %vm482, %v6734, %v6735
    %v6737 = vrot.slane %v6660, 1
    %v6738 = vrot.slane %v6661, 1
    %v6739 = vsel %vm482, %v6737, %v6738
    %v6740 = vrot.slane %v6662, 1
    %v6741 = vrot.slane %v6663, 1
    %v6742 = vsel %vm482, %v6740, %v6741
    %v6743 = vrot.slane %v6664, 1
    %v6744 = vrot.slane %v6665, 1
    %v6745 = vsel %vm482, %v6743, %v6744
    %v6746 = vrot.slane %v6666, 1
    %v6747 = vrot.slane %v6667, 1
    %v6748 = vsel %vm482, %v6746, %v6747
    %v6749 = vrot.slane %v6668, 1
    %v6750 = vrot.slane %v6669, 1
    %v6751 = vsel %vm482, %v6749, %v6750
    %v6752 = vrot.slane %v6670, 1
    %v6753 = vrot.slane %v6671, 1
    %v6754 = vsel %vm482, %v6752, %v6753
    %v6755 = vrot.slane %v6672, 1
    %v6756 = vrot.slane %v6673, 1
    %v6757 = vsel %vm482, %v6755, %v6756
    %v6758 = vrot.slane %v6638, 2
    %v6759 = vrot.slane %v6639, 2
    %v6760 = vsel %vm643, %v6758, %v6759
    %v6761 = vrot.slane %v6640, 2
    %v6762 = vrot.slane %v6641, 2
    %v6763 = vsel %vm643, %v6761, %v6762
    %v6764 = vrot.slane %v6642, 2
    %v6765 = vrot.slane %v6643, 2
    %v6766 = vsel %vm643, %v6764, %v6765
    %v6767 = vrot.slane %v6644, 2
    %v6768 = vrot.slane %v6645, 2
    %v6769 = vsel %vm643, %v6767, %v6768
    %v6770 = vrot.slane %v6646, 2
    %v6771 = vrot.slane %v6647, 2
    %v6772 = vsel %vm643, %v6770, %v6771
    %v6773 = vrot.slane %v6648, 2
    %v6774 = vrot.slane %v6649, 2
    %v6775 = vsel %vm643, %v6773, %v6774
    %v6776 = vrot.slane %v6650, 2
    %v6777 = vrot.slane %v6651, 2
    %v6778 = vsel %vm643, %v6776, %v6777
    %v6779 = vrot.slane %v6652, 2
    %v6780 = vrot.slane %v6653, 2
    %v6781 = vsel %vm643, %v6779, %v6780
    %v6782 = vrot.slane %v6658, 2
    %v6783 = vrot.slane %v6659, 2
    %v6784 = vsel %vm643, %v6782, %v6783
    %v6785 = vrot.slane %v6660, 2
    %v6786 = vrot.slane %v6661, 2
    %v6787 = vsel %vm643, %v6785, %v6786
    %v6788 = vrot.slane %v6662, 2
    %v6789 = vrot.slane %v6663, 2
    %v6790 = vsel %vm643, %v6788, %v6789
    %v6791 = vrot.slane %v6664, 2
    %v6792 = vrot.slane %v6665, 2
    %v6793 = vsel %vm643, %v6791, %v6792
    %v6794 = vrot.slane %v6666, 2
    %v6795 = vrot.slane %v6667, 2
    %v6796 = vsel %vm643, %v6794, %v6795
    %v6797 = vrot.slane %v6668, 2
    %v6798 = vrot.slane %v6669, 2
    %v6799 = vsel %vm643, %v6797, %v6798
    %v6800 = vrot.slane %v6670, 2
    %v6801 = vrot.slane %v6671, 2
    %v6802 = vsel %vm643, %v6800, %v6801
    %v6803 = vrot.slane %v6672, 2
    %v6804 = vrot.slane %v6673, 2
    %v6805 = vsel %vm643, %v6803, %v6804
    %v6810 = vrot.slane %v6654, 1
    %v6811 = vrot.slane %v6655, 1
    %v6812 = vsel %vm482, %v6810, %v6811
    %v6813 = vrot.slane %v6674, 1
    %v6814 = vrot.slane %v6675, 1
    %v6815 = vsel %vm482, %v6813, %v6814
    %v6816 = vrot.slane %v6654, 2
    %v6817 = vrot.slane %v6655, 2
    %v6818 = vsel %vm643, %v6816, %v6817
    %v6819 = vrot.slane %v6674, 2
    %v6820 = vrot.slane %v6675, 2
    %v6821 = vsel %vm643, %v6819, %v6820
    %v6826 = vrot.slane %v6656, 1
    %v6827 = vrot.slane %v6657, 1
    %v6828 = vsel %vm482, %v6826, %v6827
    %v6829 = vrot.slane %v6676, 1
    %v6830 = vrot.slane %v6677, 1
    %v6831 = vsel %vm482, %v6829, %v6830
    %v6832 = vrot.slane %v6656, 2
    %v6833 = vrot.slane %v6657, 2
    %v6834 = vsel %vm643, %v6832, %v6833
    %v6835 = vrot.slane %v6676, 2
    %v6836 = vrot.slane %v6677, 2
    %v6837 = vsel %vm643, %v6835, %v6836
    %6838 = vrot.lane.b32.xlu0 %v6712, 6
    %v6839 = vpop.permute.xlu0 %6838
    %6840 = vrot.lane.b32.xlu0 %v6715, 6
    %v6841 = vpop.permute.xlu0 %6840
    %6842 = vrot.lane.b32.xlu0 %v6718, 6
    %v6843 = vpop.permute.xlu0 %6842
    %6844 = vrot.lane.b32.xlu0 %v6721, 6
    %v6845 = vpop.permute.xlu0 %6844
    %6846 = vrot.lane.b32.xlu0 %v6724, 6
    %v6847 = vpop.permute.xlu0 %6846
    %6848 = vrot.lane.b32.xlu0 %v6727, 6
    %v6849 = vpop.permute.xlu0 %6848
    %6850 = vrot.lane.b32.xlu0 %v6730, 6
    %v6851 = vpop.permute.xlu0 %6850
    %6852 = vrot.lane.b32.xlu0 %v6733, 6
    %v6853 = vpop.permute.xlu0 %6852
    %6854 = vrot.lane.b32.xlu0 %v6736, 6
    %v6855 = vpop.permute.xlu0 %6854
    %6856 = vrot.lane.b32.xlu0 %v6739, 6
    %v6857 = vpop.permute.xlu0 %6856
    %6858 = vrot.lane.b32.xlu0 %v6742, 6
    %v6859 = vpop.permute.xlu0 %6858
    %6860 = vrot.lane.b32.xlu0 %v6745, 6
    %v6861 = vpop.permute.xlu0 %6860
    %6862 = vrot.lane.b32.xlu0 %v6748, 6
    %v6863 = vpop.permute.xlu0 %6862
    %6864 = vrot.lane.b32.xlu0 %v6751, 6
    %v6865 = vpop.permute.xlu0 %6864
    %6866 = vrot.lane.b32.xlu0 %v6754, 6
    %v6867 = vpop.permute.xlu0 %6866
    %6868 = vrot.lane.b32.xlu0 %v6757, 6
    %v6869 = vpop.permute.xlu0 %6868
    %6886 = vrot.lane.b32.xlu0 %v6760, 12
    %v6887 = vpop.permute.xlu0 %6886
    %6888 = vrot.lane.b32.xlu0 %v6763, 12
    %v6889 = vpop.permute.xlu0 %6888
    %6890 = vrot.lane.b32.xlu0 %v6766, 12
    %v6891 = vpop.permute.xlu0 %6890
    %6892 = vrot.lane.b32.xlu0 %v6769, 12
    %v6893 = vpop.permute.xlu0 %6892
    %6894 = vrot.lane.b32.xlu0 %v6772, 12
    %v6895 = vpop.permute.xlu0 %6894
    %6896 = vrot.lane.b32.xlu0 %v6775, 12
    %v6897 = vpop.permute.xlu0 %6896
    %6898 = vrot.lane.b32.xlu0 %v6778, 12
    %v6899 = vpop.permute.xlu0 %6898
    %6900 = vrot.lane.b32.xlu0 %v6781, 12
    %v6901 = vpop.permute.xlu0 %6900
    %6902 = vrot.lane.b32.xlu0 %v6784, 12
    %v6903 = vpop.permute.xlu0 %6902
    %6904 = vrot.lane.b32.xlu0 %v6787, 12
    %v6905 = vpop.permute.xlu0 %6904
    %6906 = vrot.lane.b32.xlu0 %v6790, 12
    %v6907 = vpop.permute.xlu0 %6906
    %6908 = vrot.lane.b32.xlu0 %v6793, 12
    %v6909 = vpop.permute.xlu0 %6908
    %6910 = vrot.lane.b32.xlu0 %v6796, 12
    %v6911 = vpop.permute.xlu0 %6910
    %6912 = vrot.lane.b32.xlu0 %v6799, 12
    %v6913 = vpop.permute.xlu0 %6912
    %6914 = vrot.lane.b32.xlu0 %v6802, 12
    %v6915 = vpop.permute.xlu0 %6914
    %6916 = vrot.lane.b32.xlu0 %v6805, 12
    %v6917 = vpop.permute.xlu0 %6916
    %6934 = vrot.lane.b32.xlu0 %v6640, 18
    %v6935 = vpop.permute.xlu0 %6934
    %6936 = vrot.lane.b32.xlu0 %v6642, 18
    %v6937 = vpop.permute.xlu0 %6936
    %6938 = vrot.lane.b32.xlu0 %v6644, 18
    %v6939 = vpop.permute.xlu0 %6938
    %6940 = vrot.lane.b32.xlu0 %v6646, 18
    %v6941 = vpop.permute.xlu0 %6940
    %6942 = vrot.lane.b32.xlu0 %v6648, 18
    %v6943 = vpop.permute.xlu0 %6942
    %6944 = vrot.lane.b32.xlu0 %v6650, 18
    %v6945 = vpop.permute.xlu0 %6944
    %6946 = vrot.lane.b32.xlu0 %v6652, 18
    %v6947 = vpop.permute.xlu0 %6946
    %6948 = vrot.lane.b32.xlu0 %v6654, 18
    %v6949 = vpop.permute.xlu0 %6948
    %6950 = vrot.lane.b32.xlu0 %v6660, 18
    %v6951 = vpop.permute.xlu0 %6950
    %6952 = vrot.lane.b32.xlu0 %v6662, 18
    %v6953 = vpop.permute.xlu0 %6952
    %6954 = vrot.lane.b32.xlu0 %v6664, 18
    %v6955 = vpop.permute.xlu0 %6954
    %6956 = vrot.lane.b32.xlu0 %v6666, 18
    %v6957 = vpop.permute.xlu0 %6956
    %6958 = vrot.lane.b32.xlu0 %v6668, 18
    %v6959 = vpop.permute.xlu0 %6958
    %6960 = vrot.lane.b32.xlu0 %v6670, 18
    %v6961 = vpop.permute.xlu0 %6960
    %6962 = vrot.lane.b32.xlu0 %v6672, 18
    %v6963 = vpop.permute.xlu0 %6962
    %6964 = vrot.lane.b32.xlu0 %v6674, 18
    %v6965 = vpop.permute.xlu0 %6964
    %6982 = vrot.lane.b32.xlu0 %v6715, 24
    %v6983 = vpop.permute.xlu0 %6982
    %6984 = vrot.lane.b32.xlu0 %v6718, 24
    %v6985 = vpop.permute.xlu0 %6984
    %6986 = vrot.lane.b32.xlu0 %v6721, 24
    %v6987 = vpop.permute.xlu0 %6986
    %6988 = vrot.lane.b32.xlu0 %v6724, 24
    %v6989 = vpop.permute.xlu0 %6988
    %6990 = vrot.lane.b32.xlu0 %v6727, 24
    %v6991 = vpop.permute.xlu0 %6990
    %6992 = vrot.lane.b32.xlu0 %v6730, 24
    %v6993 = vpop.permute.xlu0 %6992
    %6994 = vrot.lane.b32.xlu0 %v6733, 24
    %v6995 = vpop.permute.xlu0 %6994
    %6996 = vrot.lane.b32.xlu0 %v6812, 24
    %v6997 = vpop.permute.xlu0 %6996
    %6998 = vrot.lane.b32.xlu0 %v6739, 24
    %v6999 = vpop.permute.xlu0 %6998
    %7000 = vrot.lane.b32.xlu0 %v6742, 24
    %v7001 = vpop.permute.xlu0 %7000
    %7002 = vrot.lane.b32.xlu0 %v6745, 24
    %v7003 = vpop.permute.xlu0 %7002
    %7004 = vrot.lane.b32.xlu0 %v6748, 24
    %v7005 = vpop.permute.xlu0 %7004
    %7006 = vrot.lane.b32.xlu0 %v6751, 24
    %v7007 = vpop.permute.xlu0 %7006
    %7008 = vrot.lane.b32.xlu0 %v6754, 24
    %v7009 = vpop.permute.xlu0 %7008
    %7010 = vrot.lane.b32.xlu0 %v6757, 24
    %v7011 = vpop.permute.xlu0 %7010
    %7012 = vrot.lane.b32.xlu0 %v6815, 24
    %v7013 = vpop.permute.xlu0 %7012
    %7030 = vrot.lane.b32.xlu0 %v6763, 30
    %v7031 = vpop.permute.xlu0 %7030
    %7032 = vrot.lane.b32.xlu0 %v6766, 30
    %v7033 = vpop.permute.xlu0 %7032
    %7034 = vrot.lane.b32.xlu0 %v6769, 30
    %v7035 = vpop.permute.xlu0 %7034
    %7036 = vrot.lane.b32.xlu0 %v6772, 30
    %v7037 = vpop.permute.xlu0 %7036
    %7038 = vrot.lane.b32.xlu0 %v6775, 30
    %v7039 = vpop.permute.xlu0 %7038
    %7040 = vrot.lane.b32.xlu0 %v6778, 30
    %v7041 = vpop.permute.xlu0 %7040
    %7042 = vrot.lane.b32.xlu0 %v6781, 30
    %v7043 = vpop.permute.xlu0 %7042
    %7044 = vrot.lane.b32.xlu0 %v6818, 30
    %v7045 = vpop.permute.xlu0 %7044
    %7046 = vrot.lane.b32.xlu0 %v6787, 30
    %v7047 = vpop.permute.xlu0 %7046
    %7048 = vrot.lane.b32.xlu0 %v6790, 30
    %v7049 = vpop.permute.xlu0 %7048
    %7050 = vrot.lane.b32.xlu0 %v6793, 30
    %v7051 = vpop.permute.xlu0 %7050
    %7052 = vrot.lane.b32.xlu0 %v6796, 30
    %v7053 = vpop.permute.xlu0 %7052
    %7054 = vrot.lane.b32.xlu0 %v6799, 30
    %v7055 = vpop.permute.xlu0 %7054
    %7056 = vrot.lane.b32.xlu0 %v6802, 30
    %v7057 = vpop.permute.xlu0 %7056
    %7058 = vrot.lane.b32.xlu0 %v6805, 30
    %v7059 = vpop.permute.xlu0 %7058
    %7060 = vrot.lane.b32.xlu0 %v6821, 30
    %v7061 = vpop.permute.xlu0 %7060
    %7078 = vrot.lane.b32.xlu0 %v6642, 36
    %v7079 = vpop.permute.xlu0 %7078
    %7080 = vrot.lane.b32.xlu0 %v6644, 36
    %v7081 = vpop.permute.xlu0 %7080
    %7082 = vrot.lane.b32.xlu0 %v6646, 36
    %v7083 = vpop.permute.xlu0 %7082
    %7084 = vrot.lane.b32.xlu0 %v6648, 36
    %v7085 = vpop.permute.xlu0 %7084
    %7086 = vrot.lane.b32.xlu0 %v6650, 36
    %v7087 = vpop.permute.xlu0 %7086
    %7088 = vrot.lane.b32.xlu0 %v6652, 36
    %v7089 = vpop.permute.xlu0 %7088
    %7090 = vrot.lane.b32.xlu0 %v6654, 36
    %v7091 = vpop.permute.xlu0 %7090
    %7092 = vrot.lane.b32.xlu0 %v6656, 36
    %v7093 = vpop.permute.xlu0 %7092
    %7094 = vrot.lane.b32.xlu0 %v6662, 36
    %v7095 = vpop.permute.xlu0 %7094
    %7096 = vrot.lane.b32.xlu0 %v6664, 36
    %v7097 = vpop.permute.xlu0 %7096
    %7098 = vrot.lane.b32.xlu0 %v6666, 36
    %v7099 = vpop.permute.xlu0 %7098
    %7100 = vrot.lane.b32.xlu0 %v6668, 36
    %v7101 = vpop.permute.xlu0 %7100
    %7102 = vrot.lane.b32.xlu0 %v6670, 36
    %v7103 = vpop.permute.xlu0 %7102
    %7104 = vrot.lane.b32.xlu0 %v6672, 36
    %v7105 = vpop.permute.xlu0 %7104
    %7106 = vrot.lane.b32.xlu0 %v6674, 36
    %v7107 = vpop.permute.xlu0 %7106
    %7108 = vrot.lane.b32.xlu0 %v6676, 36
    %v7109 = vpop.permute.xlu0 %7108
    %7126 = vrot.lane.b32.xlu0 %v6718, 42
    %v7127 = vpop.permute.xlu0 %7126
    %7128 = vrot.lane.b32.xlu0 %v6721, 42
    %v7129 = vpop.permute.xlu0 %7128
    %7130 = vrot.lane.b32.xlu0 %v6724, 42
    %v7131 = vpop.permute.xlu0 %7130
    %7132 = vrot.lane.b32.xlu0 %v6727, 42
    %v7133 = vpop.permute.xlu0 %7132
    %7134 = vrot.lane.b32.xlu0 %v6730, 42
    %v7135 = vpop.permute.xlu0 %7134
    %7136 = vrot.lane.b32.xlu0 %v6733, 42
    %v7137 = vpop.permute.xlu0 %7136
    %7138 = vrot.lane.b32.xlu0 %v6812, 42
    %v7139 = vpop.permute.xlu0 %7138
    %7140 = vrot.lane.b32.xlu0 %v6828, 42
    %v7141 = vpop.permute.xlu0 %7140
    %7142 = vrot.lane.b32.xlu0 %v6742, 42
    %v7143 = vpop.permute.xlu0 %7142
    %7144 = vrot.lane.b32.xlu0 %v6745, 42
    %v7145 = vpop.permute.xlu0 %7144
    %7146 = vrot.lane.b32.xlu0 %v6748, 42
    %v7147 = vpop.permute.xlu0 %7146
    %7148 = vrot.lane.b32.xlu0 %v6751, 42
    %v7149 = vpop.permute.xlu0 %7148
    %7150 = vrot.lane.b32.xlu0 %v6754, 42
    %v7151 = vpop.permute.xlu0 %7150
    %7152 = vrot.lane.b32.xlu0 %v6757, 42
    %v7153 = vpop.permute.xlu0 %7152
    %7154 = vrot.lane.b32.xlu0 %v6815, 42
    %v7155 = vpop.permute.xlu0 %7154
    %7156 = vrot.lane.b32.xlu0 %v6831, 42
    %v7157 = vpop.permute.xlu0 %7156
    %7174 = vrot.lane.b32.xlu0 %v6766, 48
    %v7175 = vpop.permute.xlu0 %7174
    %7176 = vrot.lane.b32.xlu0 %v6769, 48
    %v7177 = vpop.permute.xlu0 %7176
    %7178 = vrot.lane.b32.xlu0 %v6772, 48
    %v7179 = vpop.permute.xlu0 %7178
    %7180 = vrot.lane.b32.xlu0 %v6775, 48
    %v7181 = vpop.permute.xlu0 %7180
    %7182 = vrot.lane.b32.xlu0 %v6778, 48
    %v7183 = vpop.permute.xlu0 %7182
    %7184 = vrot.lane.b32.xlu0 %v6781, 48
    %v7185 = vpop.permute.xlu0 %7184
    %7186 = vrot.lane.b32.xlu0 %v6818, 48
    %v7187 = vpop.permute.xlu0 %7186
    %7188 = vrot.lane.b32.xlu0 %v6834, 48
    %v7189 = vpop.permute.xlu0 %7188
    %7190 = vrot.lane.b32.xlu0 %v6790, 48
    %v7191 = vpop.permute.xlu0 %7190
    %7192 = vrot.lane.b32.xlu0 %v6793, 48
    %v7193 = vpop.permute.xlu0 %7192
    %7194 = vrot.lane.b32.xlu0 %v6796, 48
    %v7195 = vpop.permute.xlu0 %7194
    %7196 = vrot.lane.b32.xlu0 %v6799, 48
    %v7197 = vpop.permute.xlu0 %7196
    %7198 = vrot.lane.b32.xlu0 %v6802, 48
    %v7199 = vpop.permute.xlu0 %7198
    %7200 = vrot.lane.b32.xlu0 %v6805, 48
    %v7201 = vpop.permute.xlu0 %7200
    %7202 = vrot.lane.b32.xlu0 %v6821, 48
    %v7203 = vpop.permute.xlu0 %7202
    %7204 = vrot.lane.b32.xlu0 %v6837, 48
    %v7205 = vpop.permute.xlu0 %7204
    %v7222 = vsel %vm2456, %v6638, %v6839
    %v7223 = vsel %vm2456, %v6640, %v6841
    %v7224 = vsel %vm2456, %v6642, %v6843
    %v7225 = vsel %vm2456, %v6644, %v6845
    %v7226 = vsel %vm2456, %v6646, %v6847
    %v7227 = vsel %vm2456, %v6648, %v6849
    %v7228 = vsel %vm2456, %v6650, %v6851
    %v7229 = vsel %vm2456, %v6652, %v6853
    %v7230 = vsel %vm2456, %v6658, %v6855
    %v7231 = vsel %vm2456, %v6660, %v6857
    %v7232 = vsel %vm2456, %v6662, %v6859
    %v7233 = vsel %vm2456, %v6664, %v6861
    %v7234 = vsel %vm2456, %v6666, %v6863
    %v7235 = vsel %vm2456, %v6668, %v6865
    %v7236 = vsel %vm2456, %v6670, %v6867
    %v7237 = vsel %vm2456, %v6672, %v6869
    %v7238 = vsel %vm2586, %v7222, %v6887
    %v7239 = vsel %vm2586, %v7223, %v6889
    %v7240 = vsel %vm2586, %v7224, %v6891
    %v7241 = vsel %vm2586, %v7225, %v6893
    %v7242 = vsel %vm2586, %v7226, %v6895
    %v7243 = vsel %vm2586, %v7227, %v6897
    %v7244 = vsel %vm2586, %v7228, %v6899
    %v7245 = vsel %vm2586, %v7229, %v6901
    %v7246 = vsel %vm2586, %v7230, %v6903
    %v7247 = vsel %vm2586, %v7231, %v6905
    %v7248 = vsel %vm2586, %v7232, %v6907
    %v7249 = vsel %vm2586, %v7233, %v6909
    %v7250 = vsel %vm2586, %v7234, %v6911
    %v7251 = vsel %vm2586, %v7235, %v6913
    %v7252 = vsel %vm2586, %v7236, %v6915
    %v7253 = vsel %vm2586, %v7237, %v6917
    %v7254 = vsel %vm2716, %v7238, %v6935
    %v7255 = vsel %vm2716, %v7239, %v6937
    %v7256 = vsel %vm2716, %v7240, %v6939
    %v7257 = vsel %vm2716, %v7241, %v6941
    %v7258 = vsel %vm2716, %v7242, %v6943
    %v7259 = vsel %vm2716, %v7243, %v6945
    %v7260 = vsel %vm2716, %v7244, %v6947
    %v7261 = vsel %vm2716, %v7245, %v6949
    %v7262 = vsel %vm2716, %v7246, %v6951
    %v7263 = vsel %vm2716, %v7247, %v6953
    %v7264 = vsel %vm2716, %v7248, %v6955
    %v7265 = vsel %vm2716, %v7249, %v6957
    %v7266 = vsel %vm2716, %v7250, %v6959
    %v7267 = vsel %vm2716, %v7251, %v6961
    %v7268 = vsel %vm2716, %v7252, %v6963
    %v7269 = vsel %vm2716, %v7253, %v6965
    %v7270 = vsel %vm2846, %v7254, %v6983
    %v7271 = vsel %vm2846, %v7255, %v6985
    %v7272 = vsel %vm2846, %v7256, %v6987
    %v7273 = vsel %vm2846, %v7257, %v6989
    %v7274 = vsel %vm2846, %v7258, %v6991
    %v7275 = vsel %vm2846, %v7259, %v6993
    %v7276 = vsel %vm2846, %v7260, %v6995
    %v7277 = vsel %vm2846, %v7261, %v6997
    %v7278 = vsel %vm2846, %v7262, %v6999
    %v7279 = vsel %vm2846, %v7263, %v7001
    %v7280 = vsel %vm2846, %v7264, %v7003
    %v7281 = vsel %vm2846, %v7265, %v7005
    %v7282 = vsel %vm2846, %v7266, %v7007
    %v7283 = vsel %vm2846, %v7267, %v7009
    %v7284 = vsel %vm2846, %v7268, %v7011
    %v7285 = vsel %vm2846, %v7269, %v7013
    %vm7286 = vcmask 244736
    %v7287 = vsel %vm7286, %v7270, %v7031
    %v7288 = vsel %vm7286, %v7271, %v7033
    %v7289 = vsel %vm7286, %v7272, %v7035
    %v7290 = vsel %vm7286, %v7273, %v7037
    %v7291 = vsel %vm7286, %v7274, %v7039
    %v7292 = vsel %vm7286, %v7275, %v7041
    %v7293 = vsel %vm7286, %v7276, %v7043
    %v7294 = vsel %vm7286, %v7277, %v7045
    %v7295 = vsel %vm7286, %v7278, %v7047
    %v7296 = vsel %vm7286, %v7279, %v7049
    %v7297 = vsel %vm7286, %v7280, %v7051
    %v7298 = vsel %vm7286, %v7281, %v7053
    %v7299 = vsel %vm7286, %v7282, %v7055
    %v7300 = vsel %vm7286, %v7283, %v7057
    %v7301 = vsel %vm7286, %v7284, %v7059
    %v7302 = vsel %vm7286, %v7285, %v7061
    %vm7303 = vcmask 293888
    %v7304 = vsel %vm7303, %v7287, %v7079
    %v7305 = vsel %vm7303, %v7288, %v7081
    %v7306 = vsel %vm7303, %v7289, %v7083
    %v7307 = vsel %vm7303, %v7290, %v7085
    %v7308 = vsel %vm7303, %v7291, %v7087
    %v7309 = vsel %vm7303, %v7292, %v7089
    %v7310 = vsel %vm7303, %v7293, %v7091
    %v7311 = vsel %vm7303, %v7294, %v7093
    %v7312 = vsel %vm7303, %v7295, %v7095
    %v7313 = vsel %vm7303, %v7296, %v7097
    %v7314 = vsel %vm7303, %v7297, %v7099
    %v7315 = vsel %vm7303, %v7298, %v7101
    %v7316 = vsel %vm7303, %v7299, %v7103
    %v7317 = vsel %vm7303, %v7300, %v7105
    %v7318 = vsel %vm7303, %v7301, %v7107
    %v7319 = vsel %vm7303, %v7302, %v7109
    %vm7320 = vcmask 343040
    %v7321 = vsel %vm7320, %v7304, %v7127
    %v7322 = vsel %vm7320, %v7305, %v7129
    %v7323 = vsel %vm7320, %v7306, %v7131
    %v7324 = vsel %vm7320, %v7307, %v7133
    %v7325 = vsel %vm7320, %v7308, %v7135
    %v7326 = vsel %vm7320, %v7309, %v7137
    %v7327 = vsel %vm7320, %v7310, %v7139
    %v7328 = vsel %vm7320, %v7311, %v7141
    %v7329 = vsel %vm7320, %v7312, %v7143
    %v7330 = vsel %vm7320, %v7313, %v7145
    %v7331 = vsel %vm7320, %v7314, %v7147
    %v7332 = vsel %vm7320, %v7315, %v7149
    %v7333 = vsel %vm7320, %v7316, %v7151
    %v7334 = vsel %vm7320, %v7317, %v7153
    %v7335 = vsel %vm7320, %v7318, %v7155
    %v7336 = vsel %vm7320, %v7319, %v7157
    %vm7337 = vcmask 392192
    %v7338 = vsel %vm7337, %v7321, %v7175
    %v7339 = vsel %vm7337, %v7322, %v7177
    %v7340 = vsel %vm7337, %v7323, %v7179
    %v7341 = vsel %vm7337, %v7324, %v7181
    %v7342 = vsel %vm7337, %v7325, %v7183
    %v7343 = vsel %vm7337, %v7326, %v7185
    %v7344 = vsel %vm7337, %v7327, %v7187
    %v7345 = vsel %vm7337, %v7328, %v7189
    %v7346 = vsel %vm7337, %v7329, %v7191
    %v7347 = vsel %vm7337, %v7330, %v7193
    %v7348 = vsel %vm7337, %v7331, %v7195
    %v7349 = vsel %vm7337, %v7332, %v7197
    %v7350 = vsel %vm7337, %v7333, %v7199
    %v7351 = vsel %vm7337, %v7334, %v7201
    %v7352 = vsel %vm7337, %v7335, %v7203
    %v7353 = vsel %vm7337, %v7336, %v7205
    %v7354 = vld [vmem:[%s3] sm:$0xff]
    %v7355 = vld [vmem:[%s3 + $0x8] sm:$0xff]
    %v7356 = vld [vmem:[%s3 + $0x10] sm:$0xff]
    %v7357 = vld [vmem:[%s3 + $0x18] sm:$0xff]
    %v7358 = vld [vmem:[%s3 + $0x20] sm:$0xff]
    %v7359 = vld [vmem:[%s3 + $0x28] sm:$0xff]
    %v7360 = vld [vmem:[%s3 + $0x30] sm:$0x3f]
    %vm7361 = vcmask 441344
    %v7363 = vsel %vm7361, %v7338, 0
    %v7366 = vsel %vm7361, %v7339, 0
    %v7369 = vsel %vm7361, %v7340, 0
    %v7372 = vsel %vm7361, %v7341, 0
    %v7375 = vsel %vm7361, %v7342, 0
    %v7378 = vsel %vm7361, %v7343, 0
    %v7381 = vsel %vm7361, %v7344, 0
    %v7384 = vsel %vm7361, %v7345, 0
    %v7387 = vsel %vm7361, %v7346, 0
    %v7390 = vsel %vm7361, %v7347, 0
    %v7393 = vsel %vm7361, %v7348, 0
    %v7396 = vsel %vm7361, %v7349, 0
    %v7399 = vsel %vm7361, %v7350, 0
    %v7402 = vsel %vm7361, %v7351, 0
    %v7405 = vsel %vm7361, %v7352, 0
    %v7408 = vsel %vm7361, %v7353, 0
    %v7411 = vsel %vm643, %v7360, 0
    %7413 = vmatpush.msra.mxu0 0.0
    %7414 = vmatpush.msra.mxu0 0.0
    %7415 = vmatpush.msra.mxu0 0.0
    %7416 = vmatpush.msra.mxu0 0.0
    %7417 = vmatpush.msra.mxu0 0.0
    %7418 = vmatpush.msra.mxu0 0.0
    %7419 = vmatpush.msra.mxu0 0.0
    %7420 = vmatpush.msra.mxu0 0.0
    %7421 = vmatpush.msra.mxu0 0.0
    %7422 = vmatpush.msra.mxu0 %v7411
    %7423 = vmatpush.msra.mxu0 %v7359
    %7424 = vmatpush.msra.mxu0 %v7358
    %7425 = vmatpush.msra.mxu0 %v7357
    %7426 = vmatpush.msra.mxu0 %v7356
    %7427 = vmatpush.msra.mxu0 %v7355
    %7428 = vmatpush.msra.mxu0 %v7354
    %7429 = vmatmul.f32.gmra.mxu0 %v7363
    %v7430 = vpop.f32.mrf.mxu0
    %v7431 = vadd.f32 0.0, %v7430
    %7432 = vmatmul.f32.gmra.mxu0 %v7366
    %v7433 = vpop.f32.mrf.mxu0
    %v7434 = vadd.f32 0.0, %v7433
    %7435 = vmatmul.f32.gmra.mxu0 %v7369
    %v7436 = vpop.f32.mrf.mxu0
    %v7437 = vadd.f32 0.0, %v7436
    %7438 = vmatmul.f32.gmra.mxu0 %v7372
    %v7439 = vpop.f32.mrf.mxu0
    %v7440 = vadd.f32 0.0, %v7439
    %7441 = vmatmul.f32.gmra.mxu0 %v7375
    %v7442 = vpop.f32.mrf.mxu0
    %v7443 = vadd.f32 0.0, %v7442
    %7444 = vmatmul.f32.gmra.mxu0 %v7378
    %v7445 = vpop.f32.mrf.mxu0
    %v7446 = vadd.f32 0.0, %v7445
    %7447 = vmatmul.f32.gmra.mxu0 %v7381
    %v7448 = vpop.f32.mrf.mxu0
    %v7449 = vadd.f32 0.0, %v7448
    %7450 = vmatmul.f32.gmra.mxu0 %v7384
    %v7451 = vpop.f32.mrf.mxu0
    %v7452 = vadd.f32 0.0, %v7451
    %7453 = vmatmul.f32.gmra.mxu0 %v7387
    %v7454 = vpop.f32.mrf.mxu0
    %v7455 = vadd.f32 0.0, %v7454
    %7456 = vmatmul.f32.gmra.mxu0 %v7390
    %v7457 = vpop.f32.mrf.mxu0
    %v7458 = vadd.f32 0.0, %v7457
    %7459 = vmatmul.f32.gmra.mxu0 %v7393
    %v7460 = vpop.f32.mrf.mxu0
    %v7461 = vadd.f32 0.0, %v7460
    %7462 = vmatmul.f32.gmra.mxu0 %v7396
    %v7463 = vpop.f32.mrf.mxu0
    %v7464 = vadd.f32 0.0, %v7463
    %7465 = vmatmul.f32.gmra.mxu0 %v7399
    %v7466 = vpop.f32.mrf.mxu0
    %v7467 = vadd.f32 0.0, %v7466
    %7468 = vmatmul.f32.gmra.mxu0 %v7402
    %v7469 = vpop.f32.mrf.mxu0
    %v7470 = vadd.f32 0.0, %v7469
    %7471 = vmatmul.f32.gmra.mxu0 %v7405
    %v7472 = vpop.f32.mrf.mxu0
    %v7473 = vadd.f32 0.0, %v7472
    %7474 = vmatmul.f32.gmra.mxu0 %v7408
    %v7475 = vpop.f32.mrf.mxu0
    %v7476 = vadd.f32 0.0, %v7475
    %7477 = vdwg.mxu0
    %v7494 = vrot.slane %v7431, 2
    %v7495 = vrot.slane %v7431, 4
    %v7496 = vrot.slane %v7431, 6
    %v7497 = vrot.slane %v7434, 2
    %v7498 = vrot.slane %v7434, 4
    %v7499 = vrot.slane %v7434, 6
    %v7500 = vrot.slane %v7437, 2
    %v7501 = vrot.slane %v7437, 4
    %v7502 = vrot.slane %v7437, 6
    %v7503 = vrot.slane %v7440, 2
    %v7504 = vrot.slane %v7440, 4
    %v7505 = vrot.slane %v7440, 6
    %v7506 = vrot.slane %v7443, 2
    %v7507 = vrot.slane %v7443, 4
    %v7508 = vrot.slane %v7443, 6
    %v7509 = vrot.slane %v7446, 2
    %v7510 = vrot.slane %v7446, 4
    %v7511 = vrot.slane %v7446, 6
    %v7512 = vrot.slane %v7449, 2
    %v7513 = vrot.slane %v7449, 4
    %v7514 = vrot.slane %v7449, 6
    %v7515 = vrot.slane %v7452, 2
    %v7516 = vrot.slane %v7452, 4
    %v7517 = vrot.slane %v7452, 6
    %v7518 = vrot.slane %v7455, 2
    %v7519 = vrot.slane %v7455, 4
    %v7520 = vrot.slane %v7455, 6
    %v7521 = vrot.slane %v7458, 2
    %v7522 = vrot.slane %v7458, 4
    %v7523 = vrot.slane %v7458, 6
    %v7524 = vrot.slane %v7461, 2
    %v7525 = vrot.slane %v7461, 4
    %v7526 = vrot.slane %v7461, 6
    %v7527 = vrot.slane %v7464, 2
    %v7528 = vrot.slane %v7464, 4
    %v7529 = vrot.slane %v7464, 6
    %v7530 = vrot.slane %v7467, 2
    %v7531 = vrot.slane %v7467, 4
    %v7532 = vrot.slane %v7467, 6
    %v7533 = vrot.slane %v7470, 2
    %v7534 = vrot.slane %v7470, 4
    %v7535 = vrot.slane %v7470, 6
    %v7536 = vrot.slane %v7473, 2
    %v7537 = vrot.slane %v7473, 4
    %v7538 = vrot.slane %v7473, 6
    %v7539 = vrot.slane %v7476, 2
    %v7540 = vrot.slane %v7476, 4
    %v7541 = vrot.slane %v7476, 6
    %vm7590 = vcmask 123904
    %v7591 = vsel %vm7590, %v7431, -inf
    %v7592 = vrot.slane %v7591, 4
    %v7593 = vmax.f32 %v7591, %v7592
    %v7594 = vrot.slane %v7593, 2
    %v7595 = vmax.f32 %v7593, %v7594
    %v7596 = vrot.slane %v7595, 1
    %v7597 = vmax.f32 %v7595, %v7596
    %v7598 = vsel %vm7590, %v7494, -inf
    %v7599 = vrot.slane %v7598, 4
    %v7600 = vmax.f32 %v7598, %v7599
    %v7601 = vrot.slane %v7600, 2
    %v7602 = vmax.f32 %v7600, %v7601
    %v7603 = vrot.slane %v7602, 1
    %v7604 = vmax.f32 %v7602, %v7603
    %v7605 = vsel %vm7590, %v7495, -inf
    %v7606 = vrot.slane %v7605, 4
    %v7607 = vmax.f32 %v7605, %v7606
    %v7608 = vrot.slane %v7607, 2
    %v7609 = vmax.f32 %v7607, %v7608
    %v7610 = vrot.slane %v7609, 1
    %v7611 = vmax.f32 %v7609, %v7610
    %v7612 = vsel %vm7590, %v7496, -inf
    %v7613 = vrot.slane %v7612, 4
    %v7614 = vmax.f32 %v7612, %v7613
    %v7615 = vrot.slane %v7614, 2
    %v7616 = vmax.f32 %v7614, %v7615
    %v7617 = vrot.slane %v7616, 1
    %v7618 = vmax.f32 %v7616, %v7617
    %v7619 = vsel %vm7590, %v7434, -inf
    %v7620 = vrot.slane %v7619, 4
    %v7621 = vmax.f32 %v7619, %v7620
    %v7622 = vrot.slane %v7621, 2
    %v7623 = vmax.f32 %v7621, %v7622
    %v7624 = vrot.slane %v7623, 1
    %v7625 = vmax.f32 %v7623, %v7624
    %v7626 = vsel %vm7590, %v7497, -inf
    %v7627 = vrot.slane %v7626, 4
    %v7628 = vmax.f32 %v7626, %v7627
    %v7629 = vrot.slane %v7628, 2
    %v7630 = vmax.f32 %v7628, %v7629
    %v7631 = vrot.slane %v7630, 1
    %v7632 = vmax.f32 %v7630, %v7631
    %v7633 = vsel %vm7590, %v7498, -inf
    %v7634 = vrot.slane %v7633, 4
    %v7635 = vmax.f32 %v7633, %v7634
    %v7636 = vrot.slane %v7635, 2
    %v7637 = vmax.f32 %v7635, %v7636
    %v7638 = vrot.slane %v7637, 1
    %v7639 = vmax.f32 %v7637, %v7638
    %v7640 = vsel %vm7590, %v7499, -inf
    %v7641 = vrot.slane %v7640, 4
    %v7642 = vmax.f32 %v7640, %v7641
    %v7643 = vrot.slane %v7642, 2
    %v7644 = vmax.f32 %v7642, %v7643
    %v7645 = vrot.slane %v7644, 1
    %v7646 = vmax.f32 %v7644, %v7645
    %v7647 = vsel %vm7590, %v7437, -inf
    %v7648 = vrot.slane %v7647, 4
    %v7649 = vmax.f32 %v7647, %v7648
    %v7650 = vrot.slane %v7649, 2
    %v7651 = vmax.f32 %v7649, %v7650
    %v7652 = vrot.slane %v7651, 1
    %v7653 = vmax.f32 %v7651, %v7652
    %v7654 = vsel %vm7590, %v7500, -inf
    %v7655 = vrot.slane %v7654, 4
    %v7656 = vmax.f32 %v7654, %v7655
    %v7657 = vrot.slane %v7656, 2
    %v7658 = vmax.f32 %v7656, %v7657
    %v7659 = vrot.slane %v7658, 1
    %v7660 = vmax.f32 %v7658, %v7659
    %v7661 = vsel %vm7590, %v7501, -inf
    %v7662 = vrot.slane %v7661, 4
    %v7663 = vmax.f32 %v7661, %v7662
    %v7664 = vrot.slane %v7663, 2
    %v7665 = vmax.f32 %v7663, %v7664
    %v7666 = vrot.slane %v7665, 1
    %v7667 = vmax.f32 %v7665, %v7666
    %v7668 = vsel %vm7590, %v7502, -inf
    %v7669 = vrot.slane %v7668, 4
    %v7670 = vmax.f32 %v7668, %v7669
    %v7671 = vrot.slane %v7670, 2
    %v7672 = vmax.f32 %v7670, %v7671
    %v7673 = vrot.slane %v7672, 1
    %v7674 = vmax.f32 %v7672, %v7673
    %v7675 = vsel %vm7590, %v7440, -inf
    %v7676 = vrot.slane %v7675, 4
    %v7677 = vmax.f32 %v7675, %v7676
    %v7678 = vrot.slane %v7677, 2
    %v7679 = vmax.f32 %v7677, %v7678
    %v7680 = vrot.slane %v7679, 1
    %v7681 = vmax.f32 %v7679, %v7680
    %v7682 = vsel %vm7590, %v7503, -inf
    %v7683 = vrot.slane %v7682, 4
    %v7684 = vmax.f32 %v7682, %v7683
    %v7685 = vrot.slane %v7684, 2
    %v7686 = vmax.f32 %v7684, %v7685
    %v7687 = vrot.slane %v7686, 1
    %v7688 = vmax.f32 %v7686, %v7687
    %v7689 = vsel %vm7590, %v7504, -inf
    %v7690 = vrot.slane %v7689, 4
    %v7691 = vmax.f32 %v7689, %v7690
    %v7692 = vrot.slane %v7691, 2
    %v7693 = vmax.f32 %v7691, %v7692
    %v7694 = vrot.slane %v7693, 1
    %v7695 = vmax.f32 %v7693, %v7694
    %v7696 = vsel %vm7590, %v7505, -inf
    %v7697 = vrot.slane %v7696, 4
    %v7698 = vmax.f32 %v7696, %v7697
    %v7699 = vrot.slane %v7698, 2
    %v7700 = vmax.f32 %v7698, %v7699
    %v7701 = vrot.slane %v7700, 1
    %v7702 = vmax.f32 %v7700, %v7701
    %v7703 = vsel %vm7590, %v7443, -inf
    %v7704 = vrot.slane %v7703, 4
    %v7705 = vmax.f32 %v7703, %v7704
    %v7706 = vrot.slane %v7705, 2
    %v7707 = vmax.f32 %v7705, %v7706
    %v7708 = vrot.slane %v7707, 1
    %v7709 = vmax.f32 %v7707, %v7708
    %v7710 = vsel %vm7590, %v7506, -inf
    %v7711 = vrot.slane %v7710, 4
    %v7712 = vmax.f32 %v7710, %v7711
    %v7713 = vrot.slane %v7712, 2
    %v7714 = vmax.f32 %v7712, %v7713
    %v7715 = vrot.slane %v7714, 1
    %v7716 = vmax.f32 %v7714, %v7715
    %v7717 = vsel %vm7590, %v7507, -inf
    %v7718 = vrot.slane %v7717, 4
    %v7719 = vmax.f32 %v7717, %v7718
    %v7720 = vrot.slane %v7719, 2
    %v7721 = vmax.f32 %v7719, %v7720
    %v7722 = vrot.slane %v7721, 1
    %v7723 = vmax.f32 %v7721, %v7722
    %v7724 = vsel %vm7590, %v7508, -inf
    %v7725 = vrot.slane %v7724, 4
    %v7726 = vmax.f32 %v7724, %v7725
    %v7727 = vrot.slane %v7726, 2
    %v7728 = vmax.f32 %v7726, %v7727
    %v7729 = vrot.slane %v7728, 1
    %v7730 = vmax.f32 %v7728, %v7729
    %v7731 = vsel %vm7590, %v7446, -inf
    %v7732 = vrot.slane %v7731, 4
    %v7733 = vmax.f32 %v7731, %v7732
    %v7734 = vrot.slane %v7733, 2
    %v7735 = vmax.f32 %v7733, %v7734
    %v7736 = vrot.slane %v7735, 1
    %v7737 = vmax.f32 %v7735, %v7736
    %v7738 = vsel %vm7590, %v7509, -inf
    %v7739 = vrot.slane %v7738, 4
    %v7740 = vmax.f32 %v7738, %v7739
    %v7741 = vrot.slane %v7740, 2
    %v7742 = vmax.f32 %v7740, %v7741
    %v7743 = vrot.slane %v7742, 1
    %v7744 = vmax.f32 %v7742, %v7743
    %v7745 = vsel %vm7590, %v7510, -inf
    %v7746 = vrot.slane %v7745, 4
    %v7747 = vmax.f32 %v7745, %v7746
    %v7748 = vrot.slane %v7747, 2
    %v7749 = vmax.f32 %v7747, %v7748
    %v7750 = vrot.slane %v7749, 1
    %v7751 = vmax.f32 %v7749, %v7750
    %v7752 = vsel %vm7590, %v7511, -inf
    %v7753 = vrot.slane %v7752, 4
    %v7754 = vmax.f32 %v7752, %v7753
    %v7755 = vrot.slane %v7754, 2
    %v7756 = vmax.f32 %v7754, %v7755
    %v7757 = vrot.slane %v7756, 1
    %v7758 = vmax.f32 %v7756, %v7757
    %v7759 = vsel %vm7590, %v7449, -inf
    %v7760 = vrot.slane %v7759, 4
    %v7761 = vmax.f32 %v7759, %v7760
    %v7762 = vrot.slane %v7761, 2
    %v7763 = vmax.f32 %v7761, %v7762
    %v7764 = vrot.slane %v7763, 1
    %v7765 = vmax.f32 %v7763, %v7764
    %v7766 = vsel %vm7590, %v7512, -inf
    %v7767 = vrot.slane %v7766, 4
    %v7768 = vmax.f32 %v7766, %v7767
    %v7769 = vrot.slane %v7768, 2
    %v7770 = vmax.f32 %v7768, %v7769
    %v7771 = vrot.slane %v7770, 1
    %v7772 = vmax.f32 %v7770, %v7771
    %v7773 = vsel %vm7590, %v7513, -inf
    %v7774 = vrot.slane %v7773, 4
    %v7775 = vmax.f32 %v7773, %v7774
    %v7776 = vrot.slane %v7775, 2
    %v7777 = vmax.f32 %v7775, %v7776
    %v7778 = vrot.slane %v7777, 1
    %v7779 = vmax.f32 %v7777, %v7778
    %v7780 = vsel %vm7590, %v7514, -inf
    %v7781 = vrot.slane %v7780, 4
    %v7782 = vmax.f32 %v7780, %v7781
    %v7783 = vrot.slane %v7782, 2
    %v7784 = vmax.f32 %v7782, %v7783
    %v7785 = vrot.slane %v7784, 1
    %v7786 = vmax.f32 %v7784, %v7785
    %v7787 = vsel %vm7590, %v7452, -inf
    %v7788 = vrot.slane %v7787, 4
    %v7789 = vmax.f32 %v7787, %v7788
    %v7790 = vrot.slane %v7789, 2
    %v7791 = vmax.f32 %v7789, %v7790
    %v7792 = vrot.slane %v7791, 1
    %v7793 = vmax.f32 %v7791, %v7792
    %v7794 = vsel %vm7590, %v7515, -inf
    %v7795 = vrot.slane %v7794, 4
    %v7796 = vmax.f32 %v7794, %v7795
    %v7797 = vrot.slane %v7796, 2
    %v7798 = vmax.f32 %v7796, %v7797
    %v7799 = vrot.slane %v7798, 1
    %v7800 = vmax.f32 %v7798, %v7799
    %v7801 = vsel %vm7590, %v7516, -inf
    %v7802 = vrot.slane %v7801, 4
    %v7803 = vmax.f32 %v7801, %v7802
    %v7804 = vrot.slane %v7803, 2
    %v7805 = vmax.f32 %v7803, %v7804
    %v7806 = vrot.slane %v7805, 1
    %v7807 = vmax.f32 %v7805, %v7806
    %v7808 = vsel %vm7590, %v7517, -inf
    %v7809 = vrot.slane %v7808, 4
    %v7810 = vmax.f32 %v7808, %v7809
    %v7811 = vrot.slane %v7810, 2
    %v7812 = vmax.f32 %v7810, %v7811
    %v7813 = vrot.slane %v7812, 1
    %v7814 = vmax.f32 %v7812, %v7813
    %v7815 = vsel %vm7590, %v7455, -inf
    %v7816 = vrot.slane %v7815, 4
    %v7817 = vmax.f32 %v7815, %v7816
    %v7818 = vrot.slane %v7817, 2
    %v7819 = vmax.f32 %v7817, %v7818
    %v7820 = vrot.slane %v7819, 1
    %v7821 = vmax.f32 %v7819, %v7820
    %v7822 = vsel %vm7590, %v7518, -inf
    %v7823 = vrot.slane %v7822, 4
    %v7824 = vmax.f32 %v7822, %v7823
    %v7825 = vrot.slane %v7824, 2
    %v7826 = vmax.f32 %v7824, %v7825
    %v7827 = vrot.slane %v7826, 1
    %v7828 = vmax.f32 %v7826, %v7827
    %v7829 = vsel %vm7590, %v7519, -inf
    %v7830 = vrot.slane %v7829, 4
    %v7831 = vmax.f32 %v7829, %v7830
    %v7832 = vrot.slane %v7831, 2
    %v7833 = vmax.f32 %v7831, %v7832
    %v7834 = vrot.slane %v7833, 1
    %v7835 = vmax.f32 %v7833, %v7834
    %v7836 = vsel %vm7590, %v7520, -inf
    %v7837 = vrot.slane %v7836, 4
    %v7838 = vmax.f32 %v7836, %v7837
    %v7839 = vrot.slane %v7838, 2
    %v7840 = vmax.f32 %v7838, %v7839
    %v7841 = vrot.slane %v7840, 1
    %v7842 = vmax.f32 %v7840, %v7841
    %v7843 = vsel %vm7590, %v7458, -inf
    %v7844 = vrot.slane %v7843, 4
    %v7845 = vmax.f32 %v7843, %v7844
    %v7846 = vrot.slane %v7845, 2
    %v7847 = vmax.f32 %v7845, %v7846
    %v7848 = vrot.slane %v7847, 1
    %v7849 = vmax.f32 %v7847, %v7848
    %v7850 = vsel %vm7590, %v7521, -inf
    %v7851 = vrot.slane %v7850, 4
    %v7852 = vmax.f32 %v7850, %v7851
    %v7853 = vrot.slane %v7852, 2
    %v7854 = vmax.f32 %v7852, %v7853
    %v7855 = vrot.slane %v7854, 1
    %v7856 = vmax.f32 %v7854, %v7855
    %v7857 = vsel %vm7590, %v7522, -inf
    %v7858 = vrot.slane %v7857, 4
    %v7859 = vmax.f32 %v7857, %v7858
    %v7860 = vrot.slane %v7859, 2
    %v7861 = vmax.f32 %v7859, %v7860
    %v7862 = vrot.slane %v7861, 1
    %v7863 = vmax.f32 %v7861, %v7862
    %v7864 = vsel %vm7590, %v7523, -inf
    %v7865 = vrot.slane %v7864, 4
    %v7866 = vmax.f32 %v7864, %v7865
    %v7867 = vrot.slane %v7866, 2
    %v7868 = vmax.f32 %v7866, %v7867
    %v7869 = vrot.slane %v7868, 1
    %v7870 = vmax.f32 %v7868, %v7869
    %v7871 = vsel %vm7590, %v7461, -inf
    %v7872 = vrot.slane %v7871, 4
    %v7873 = vmax.f32 %v7871, %v7872
    %v7874 = vrot.slane %v7873, 2
    %v7875 = vmax.f32 %v7873, %v7874
    %v7876 = vrot.slane %v7875, 1
    %v7877 = vmax.f32 %v7875, %v7876
    %v7878 = vsel %vm7590, %v7524, -inf
    %v7879 = vrot.slane %v7878, 4
    %v7880 = vmax.f32 %v7878, %v7879
    %v7881 = vrot.slane %v7880, 2
    %v7882 = vmax.f32 %v7880, %v7881
    %v7883 = vrot.slane %v7882, 1
    %v7884 = vmax.f32 %v7882, %v7883
    %v7885 = vsel %vm7590, %v7525, -inf
    %v7886 = vrot.slane %v7885, 4
    %v7887 = vmax.f32 %v7885, %v7886
    %v7888 = vrot.slane %v7887, 2
    %v7889 = vmax.f32 %v7887, %v7888
    %v7890 = vrot.slane %v7889, 1
    %v7891 = vmax.f32 %v7889, %v7890
    %v7892 = vsel %vm7590, %v7526, -inf
    %v7893 = vrot.slane %v7892, 4
    %v7894 = vmax.f32 %v7892, %v7893
    %v7895 = vrot.slane %v7894, 2
    %v7896 = vmax.f32 %v7894, %v7895
    %v7897 = vrot.slane %v7896, 1
    %v7898 = vmax.f32 %v7896, %v7897
    %v7899 = vsel %vm7590, %v7464, -inf
    %v7900 = vrot.slane %v7899, 4
    %v7901 = vmax.f32 %v7899, %v7900
    %v7902 = vrot.slane %v7901, 2
    %v7903 = vmax.f32 %v7901, %v7902
    %v7904 = vrot.slane %v7903, 1
    %v7905 = vmax.f32 %v7903, %v7904
    %v7906 = vsel %vm7590, %v7527, -inf
    %v7907 = vrot.slane %v7906, 4
    %v7908 = vmax.f32 %v7906, %v7907
    %v7909 = vrot.slane %v7908, 2
    %v7910 = vmax.f32 %v7908, %v7909
    %v7911 = vrot.slane %v7910, 1
    %v7912 = vmax.f32 %v7910, %v7911
    %v7913 = vsel %vm7590, %v7528, -inf
    %v7914 = vrot.slane %v7913, 4
    %v7915 = vmax.f32 %v7913, %v7914
    %v7916 = vrot.slane %v7915, 2
    %v7917 = vmax.f32 %v7915, %v7916
    %v7918 = vrot.slane %v7917, 1
    %v7919 = vmax.f32 %v7917, %v7918
    %v7920 = vsel %vm7590, %v7529, -inf
    %v7921 = vrot.slane %v7920, 4
    %v7922 = vmax.f32 %v7920, %v7921
    %v7923 = vrot.slane %v7922, 2
    %v7924 = vmax.f32 %v7922, %v7923
    %v7925 = vrot.slane %v7924, 1
    %v7926 = vmax.f32 %v7924, %v7925
    %v7927 = vsel %vm7590, %v7467, -inf
    %v7928 = vrot.slane %v7927, 4
    %v7929 = vmax.f32 %v7927, %v7928
    %v7930 = vrot.slane %v7929, 2
    %v7931 = vmax.f32 %v7929, %v7930
    %v7932 = vrot.slane %v7931, 1
    %v7933 = vmax.f32 %v7931, %v7932
    %v7934 = vsel %vm7590, %v7530, -inf
    %v7935 = vrot.slane %v7934, 4
    %v7936 = vmax.f32 %v7934, %v7935
    %v7937 = vrot.slane %v7936, 2
    %v7938 = vmax.f32 %v7936, %v7937
    %v7939 = vrot.slane %v7938, 1
    %v7940 = vmax.f32 %v7938, %v7939
    %v7941 = vsel %vm7590, %v7531, -inf
    %v7942 = vrot.slane %v7941, 4
    %v7943 = vmax.f32 %v7941, %v7942
    %v7944 = vrot.slane %v7943, 2
    %v7945 = vmax.f32 %v7943, %v7944
    %v7946 = vrot.slane %v7945, 1
    %v7947 = vmax.f32 %v7945, %v7946
    %v7948 = vsel %vm7590, %v7532, -inf
    %v7949 = vrot.slane %v7948, 4
    %v7950 = vmax.f32 %v7948, %v7949
    %v7951 = vrot.slane %v7950, 2
    %v7952 = vmax.f32 %v7950, %v7951
    %v7953 = vrot.slane %v7952, 1
    %v7954 = vmax.f32 %v7952, %v7953
    %v7955 = vsel %vm7590, %v7470, -inf
    %v7956 = vrot.slane %v7955, 4
    %v7957 = vmax.f32 %v7955, %v7956
    %v7958 = vrot.slane %v7957, 2
    %v7959 = vmax.f32 %v7957, %v7958
    %v7960 = vrot.slane %v7959, 1
    %v7961 = vmax.f32 %v7959, %v7960
    %v7962 = vsel %vm7590, %v7533, -inf
    %v7963 = vrot.slane %v7962, 4
    %v7964 = vmax.f32 %v7962, %v7963
    %v7965 = vrot.slane %v7964, 2
    %v7966 = vmax.f32 %v7964, %v7965
    %v7967 = vrot.slane %v7966, 1
    %v7968 = vmax.f32 %v7966, %v7967
    %v7969 = vsel %vm7590, %v7534, -inf
    %v7970 = vrot.slane %v7969, 4
    %v7971 = vmax.f32 %v7969, %v7970
    %v7972 = vrot.slane %v7971, 2
    %v7973 = vmax.f32 %v7971, %v7972
    %v7974 = vrot.slane %v7973, 1
    %v7975 = vmax.f32 %v7973, %v7974
    %v7976 = vsel %vm7590, %v7535, -inf
    %v7977 = vrot.slane %v7976, 4
    %v7978 = vmax.f32 %v7976, %v7977
    %v7979 = vrot.slane %v7978, 2
    %v7980 = vmax.f32 %v7978, %v7979
    %v7981 = vrot.slane %v7980, 1
    %v7982 = vmax.f32 %v7980, %v7981
    %v7983 = vsel %vm7590, %v7473, -inf
    %v7984 = vrot.slane %v7983, 4
    %v7985 = vmax.f32 %v7983, %v7984
    %v7986 = vrot.slane %v7985, 2
    %v7987 = vmax.f32 %v7985, %v7986
    %v7988 = vrot.slane %v7987, 1
    %v7989 = vmax.f32 %v7987, %v7988
    %v7990 = vsel %vm7590, %v7536, -inf
    %v7991 = vrot.slane %v7990, 4
    %v7992 = vmax.f32 %v7990, %v7991
    %v7993 = vrot.slane %v7992, 2
    %v7994 = vmax.f32 %v7992, %v7993
    %v7995 = vrot.slane %v7994, 1
    %v7996 = vmax.f32 %v7994, %v7995
    %v7997 = vsel %vm7590, %v7537, -inf
    %v7998 = vrot.slane %v7997, 4
    %v7999 = vmax.f32 %v7997, %v7998
    %v8000 = vrot.slane %v7999, 2
    %v8001 = vmax.f32 %v7999, %v8000
    %v8002 = vrot.slane %v8001, 1
    %v8003 = vmax.f32 %v8001, %v8002
    %v8004 = vsel %vm7590, %v7538, -inf
    %v8005 = vrot.slane %v8004, 4
    %v8006 = vmax.f32 %v8004, %v8005
    %v8007 = vrot.slane %v8006, 2
    %v8008 = vmax.f32 %v8006, %v8007
    %v8009 = vrot.slane %v8008, 1
    %v8010 = vmax.f32 %v8008, %v8009
    %v8011 = vsel %vm7590, %v7476, -inf
    %v8012 = vrot.slane %v8011, 4
    %v8013 = vmax.f32 %v8011, %v8012
    %v8014 = vrot.slane %v8013, 2
    %v8015 = vmax.f32 %v8013, %v8014
    %v8016 = vrot.slane %v8015, 1
    %v8017 = vmax.f32 %v8015, %v8016
    %v8018 = vsel %vm7590, %v7539, -inf
    %v8019 = vrot.slane %v8018, 4
    %v8020 = vmax.f32 %v8018, %v8019
    %v8021 = vrot.slane %v8020, 2
    %v8022 = vmax.f32 %v8020, %v8021
    %v8023 = vrot.slane %v8022, 1
    %v8024 = vmax.f32 %v8022, %v8023
    %v8025 = vsel %vm7590, %v7540, -inf
    %v8026 = vrot.slane %v8025, 4
    %v8027 = vmax.f32 %v8025, %v8026
    %v8028 = vrot.slane %v8027, 2
    %v8029 = vmax.f32 %v8027, %v8028
    %v8030 = vrot.slane %v8029, 1
    %v8031 = vmax.f32 %v8029, %v8030
    %v8032 = vsel %vm7590, %v7541, -inf
    %v8033 = vrot.slane %v8032, 4
    %v8034 = vmax.f32 %v8032, %v8033
    %v8035 = vrot.slane %v8034, 2
    %v8036 = vmax.f32 %v8034, %v8035
    %v8037 = vrot.slane %v8036, 1
    %v8038 = vmax.f32 %v8036, %v8037
    %vm8039 = vcmask 130048
    %v8040 = vsel %vm8039, %v7597, -inf
    %v8041 = vsel %vm8039, %v7625, -inf
    %v8042 = vmax.f32 %v8040, %v8041
    %v8043 = vsel %vm8039, %v7604, -inf
    %v8044 = vsel %vm8039, %v7632, -inf
    %v8045 = vmax.f32 %v8043, %v8044
    %v8046 = vsel %vm8039, %v7611, -inf
    %v8047 = vsel %vm8039, %v7639, -inf
    %v8048 = vmax.f32 %v8046, %v8047
    %v8049 = vsel %vm8039, %v7618, -inf
    %v8050 = vsel %vm8039, %v7646, -inf
    %v8051 = vmax.f32 %v8049, %v8050
    %v8052 = vsel %vm8039, %v7653, -inf
    %v8053 = vsel %vm8039, %v7681, -inf
    %v8054 = vmax.f32 %v8052, %v8053
    %v8055 = vsel %vm8039, %v7660, -inf
    %v8056 = vsel %vm8039, %v7688, -inf
    %v8057 = vmax.f32 %v8055, %v8056
    %v8058 = vsel %vm8039, %v7667, -inf
    %v8059 = vsel %vm8039, %v7695, -inf
    %v8060 = vmax.f32 %v8058, %v8059
    %v8061 = vsel %vm8039, %v7674, -inf
    %v8062 = vsel %vm8039, %v7702, -inf
    %v8063 = vmax.f32 %v8061, %v8062
    %v8064 = vsel %vm8039, %v7709, -inf
    %v8065 = vsel %vm8039, %v7737, -inf
    %v8066 = vmax.f32 %v8064, %v8065
    %v8067 = vsel %vm8039, %v7716, -inf
    %v8068 = vsel %vm8039, %v7744, -inf
    %v8069 = vmax.f32 %v8067, %v8068
    %v8070 = vsel %vm8039, %v7723, -inf
    %v8071 = vsel %vm8039, %v7751, -inf
    %v8072 = vmax.f32 %v8070, %v8071
    %v8073 = vsel %vm8039, %v7730, -inf
    %v8074 = vsel %vm8039, %v7758, -inf
    %v8075 = vmax.f32 %v8073, %v8074
    %v8076 = vsel %vm8039, %v7765, -inf
    %v8077 = vsel %vm8039, %v7793, -inf
    %v8078 = vmax.f32 %v8076, %v8077
    %v8079 = vsel %vm8039, %v7772, -inf
    %v8080 = vsel %vm8039, %v7800, -inf
    %v8081 = vmax.f32 %v8079, %v8080
    %v8082 = vsel %vm8039, %v7779, -inf
    %v8083 = vsel %vm8039, %v7807, -inf
    %v8084 = vmax.f32 %v8082, %v8083
    %v8085 = vsel %vm8039, %v7786, -inf
    %v8086 = vsel %vm8039, %v7814, -inf
    %v8087 = vmax.f32 %v8085, %v8086
    %v8088 = vsel %vm8039, %v7821, -inf
    %v8089 = vsel %vm8039, %v7849, -inf
    %v8090 = vmax.f32 %v8088, %v8089
    %v8091 = vsel %vm8039, %v7828, -inf
    %v8092 = vsel %vm8039, %v7856, -inf
    %v8093 = vmax.f32 %v8091, %v8092
    %v8094 = vsel %vm8039, %v7835, -inf
    %v8095 = vsel %vm8039, %v7863, -inf
    %v8096 = vmax.f32 %v8094, %v8095
    %v8097 = vsel %vm8039, %v7842, -inf
    %v8098 = vsel %vm8039, %v7870, -inf
    %v8099 = vmax.f32 %v8097, %v8098
    %v8100 = vsel %vm8039, %v7877, -inf
    %v8101 = vsel %vm8039, %v7905, -inf
    %v8102 = vmax.f32 %v8100, %v8101
    %v8103 = vsel %vm8039, %v7884, -inf
    %v8104 = vsel %vm8039, %v7912, -inf
    %v8105 = vmax.f32 %v8103, %v8104
    %v8106 = vsel %vm8039, %v7891, -inf
    %v8107 = vsel %vm8039, %v7919, -inf
    %v8108 = vmax.f32 %v8106, %v8107
    %v8109 = vsel %vm8039, %v7898, -inf
    %v8110 = vsel %vm8039, %v7926, -inf
    %v8111 = vmax.f32 %v8109, %v8110
    %v8112 = vsel %vm8039, %v7933, -inf
    %v8113 = vsel %vm8039, %v7961, -inf
    %v8114 = vmax.f32 %v8112, %v8113
    %v8115 = vsel %vm8039, %v7940, -inf
    %v8116 = vsel %vm8039, %v7968, -inf
    %v8117 = vmax.f32 %v8115, %v8116
    %v8118 = vsel %vm8039, %v7947, -inf
    %v8119 = vsel %vm8039, %v7975, -inf
    %v8120 = vmax.f32 %v8118, %v8119
    %v8121 = vsel %vm8039, %v7954, -inf
    %v8122 = vsel %vm8039, %v7982, -inf
    %v8123 = vmax.f32 %v8121, %v8122
    %v8124 = vsel %vm8039, %v7989, -inf
    %v8125 = vsel %vm8039, %v8017, -inf
    %v8126 = vmax.f32 %v8124, %v8125
    %v8127 = vsel %vm8039, %v7996, -inf
    %v8128 = vsel %vm8039, %v8024, -inf
    %v8129 = vmax.f32 %v8127, %v8128
    %v8130 = vsel %vm8039, %v8003, -inf
    %v8131 = vsel %vm8039, %v8031, -inf
    %v8132 = vmax.f32 %v8130, %v8131
    %v8133 = vsel %vm8039, %v8010, -inf
    %v8134 = vsel %vm8039, %v8038, -inf
    %v8135 = vmax.f32 %v8133, %v8134
    %v8136 = vld [vmem:[%s4] sm:$0x1]
    %v8138 = vperm.slane %v8136, 0
    %v8140 = vadd.f32 %v8042, %v8138
    %v8141 = vadd.f32 %v8045, %v8138
    %v8142 = vadd.f32 %v8048, %v8138
    %v8143 = vadd.f32 %v8051, %v8138
    %v8144 = vadd.f32 %v8054, %v8138
    %v8145 = vadd.f32 %v8057, %v8138
    %v8146 = vadd.f32 %v8060, %v8138
    %v8147 = vadd.f32 %v8063, %v8138
    %v8148 = vadd.f32 %v8066, %v8138
    %v8149 = vadd.f32 %v8069, %v8138
    %v8150 = vadd.f32 %v8072, %v8138
    %v8151 = vadd.f32 %v8075, %v8138
    %v8152 = vadd.f32 %v8078, %v8138
    %v8153 = vadd.f32 %v8081, %v8138
    %v8154 = vadd.f32 %v8084, %v8138
    %v8155 = vadd.f32 %v8087, %v8138
    %v8156 = vadd.f32 %v8090, %v8138
    %v8157 = vadd.f32 %v8093, %v8138
    %v8158 = vadd.f32 %v8096, %v8138
    %v8159 = vadd.f32 %v8099, %v8138
    %v8160 = vadd.f32 %v8102, %v8138
    %v8161 = vadd.f32 %v8105, %v8138
    %v8162 = vadd.f32 %v8108, %v8138
    %v8163 = vadd.f32 %v8111, %v8138
    %v8164 = vadd.f32 %v8114, %v8138
    %v8165 = vadd.f32 %v8117, %v8138
    %v8166 = vadd.f32 %v8120, %v8138
    %v8167 = vadd.f32 %v8123, %v8138
    %v8168 = vadd.f32 %v8126, %v8138
    %v8169 = vadd.f32 %v8129, %v8138
    %v8170 = vadd.f32 %v8132, %v8138
    %v8171 = vadd.f32 %v8135, %v8138
    %v8172 = vmax.f32 %v8140, 0.0
    %v8173 = vmax.f32 %v8141, 0.0
    %v8174 = vmax.f32 %v8142, 0.0
    %v8175 = vmax.f32 %v8143, 0.0
    %v8176 = vmax.f32 %v8144, 0.0
    %v8177 = vmax.f32 %v8145, 0.0
    %v8178 = vmax.f32 %v8146, 0.0
    %v8179 = vmax.f32 %v8147, 0.0
    %v8180 = vmax.f32 %v8148, 0.0
    %v8181 = vmax.f32 %v8149, 0.0
    %v8182 = vmax.f32 %v8150, 0.0
    %v8183 = vmax.f32 %v8151, 0.0
    %v8184 = vmax.f32 %v8152, 0.0
    %v8185 = vmax.f32 %v8153, 0.0
    %v8186 = vmax.f32 %v8154, 0.0
    %v8187 = vmax.f32 %v8155, 0.0
    %v8188 = vmax.f32 %v8156, 0.0
    %v8189 = vmax.f32 %v8157, 0.0
    %v8190 = vmax.f32 %v8158, 0.0
    %v8191 = vmax.f32 %v8159, 0.0
    %v8192 = vmax.f32 %v8160, 0.0
    %v8193 = vmax.f32 %v8161, 0.0
    %v8194 = vmax.f32 %v8162, 0.0
    %v8195 = vmax.f32 %v8163, 0.0
    %v8196 = vmax.f32 %v8164, 0.0
    %v8197 = vmax.f32 %v8165, 0.0
    %v8198 = vmax.f32 %v8166, 0.0
    %v8199 = vmax.f32 %v8167, 0.0
    %v8200 = vmax.f32 %v8168, 0.0
    %v8201 = vmax.f32 %v8169, 0.0
    %v8202 = vmax.f32 %v8170, 0.0
    %v8203 = vmax.f32 %v8171, 0.0
    %v8206 = vrot.slane %v8188, 7
    %v8207 = vsel %vm6375, %v8206, %v8172
    %v8211 = vrot.slane %v8189, 7
    %v8212 = vsel %vm6375, %v8211, %v8173
    %8213 = vrot.lane.b32.xlu0 %v8212, 16
    %v8214 = vpop.permute.xlu0 %8213
    %v8218 = vrot.slane %v8190, 7
    %v8219 = vsel %vm6375, %v8218, %v8174
    %8220 = vrot.lane.b32.xlu0 %v8219, 32
    %v8221 = vpop.permute.xlu0 %8220
    %v8225 = vrot.slane %v8191, 7
    %v8226 = vsel %vm6375, %v8225, %v8175
    %8227 = vrot.lane.b32.xlu0 %v8226, 48
    %v8228 = vpop.permute.xlu0 %8227
    %v8232 = vrot.slane %v8192, 7
    %v8233 = vsel %vm6375, %v8232, %v8176
    %8234 = vrot.lane.b32.xlu0 %v8233, 64
    %v8235 = vpop.permute.xlu0 %8234
    %v8239 = vrot.slane %v8193, 7
    %v8240 = vsel %vm6375, %v8239, %v8177
    %8241 = vrot.lane.b32.xlu0 %v8240, 80
    %v8242 = vpop.permute.xlu0 %8241
    %v8246 = vrot.slane %v8194, 7
    %v8247 = vsel %vm6375, %v8246, %v8178
    %8248 = vrot.lane.b32.xlu0 %v8247, 96
    %v8249 = vpop.permute.xlu0 %8248
    %v8253 = vrot.slane %v8195, 7
    %v8254 = vsel %vm6375, %v8253, %v8179
    %8255 = vrot.lane.b32.xlu0 %v8254, 112
    %v8256 = vpop.permute.xlu0 %8255
    %v8260 = vrot.slane %v8196, 7
    %v8261 = vsel %vm6375, %v8260, %v8180
    %v8265 = vrot.slane %v8197, 7
    %v8266 = vsel %vm6375, %v8265, %v8181
    %8267 = vrot.lane.b32.xlu0 %v8266, 16
    %v8268 = vpop.permute.xlu0 %8267
    %v8272 = vrot.slane %v8198, 7
    %v8273 = vsel %vm6375, %v8272, %v8182
    %8274 = vrot.lane.b32.xlu0 %v8273, 32
    %v8275 = vpop.permute.xlu0 %8274
    %v8279 = vrot.slane %v8199, 7
    %v8280 = vsel %vm6375, %v8279, %v8183
    %8281 = vrot.lane.b32.xlu0 %v8280, 48
    %v8282 = vpop.permute.xlu0 %8281
    %v8286 = vrot.slane %v8200, 7
    %v8287 = vsel %vm6375, %v8286, %v8184
    %8288 = vrot.lane.b32.xlu0 %v8287, 64
    %v8289 = vpop.permute.xlu0 %8288
    %v8293 = vrot.slane %v8201, 7
    %v8294 = vsel %vm6375, %v8293, %v8185
    %8295 = vrot.lane.b32.xlu0 %v8294, 80
    %v8296 = vpop.permute.xlu0 %8295
    %v8300 = vrot.slane %v8202, 7
    %v8301 = vsel %vm6375, %v8300, %v8186
    %8302 = vrot.lane.b32.xlu0 %v8301, 96
    %v8303 = vpop.permute.xlu0 %8302
    %v8307 = vrot.slane %v8203, 7
    %v8308 = vsel %vm6375, %v8307, %v8187
    %8309 = vrot.lane.b32.xlu0 %v8308, 112
    %v8310 = vpop.permute.xlu0 %8309
    %v8312 = vsel %vm8039, %v8207, %v8214
    %vm8313 = vcmask 261120
    %v8314 = vsel %vm8313, %v8312, %v8221
    %v8315 = vsel %vm7337, %v8314, %v8228
    %vm8316 = vcmask 523264
    %v8317 = vsel %vm8316, %v8315, %v8235
    %vm8318 = vcmask 654336
    %v8319 = vsel %vm8318, %v8317, %v8242
    %vm8320 = vcmask 785408
    %v8321 = vsel %vm8320, %v8319, %v8249
    %vm8322 = vcmask 916480
    %v8323 = vsel %vm8322, %v8321, %v8256
    %v8324 = vsel %vm8039, %v8261, %v8268
    %v8325 = vsel %vm8313, %v8324, %v8275
    %v8326 = vsel %vm7337, %v8325, %v8282
    %v8327 = vsel %vm8316, %v8326, %v8289
    %v8328 = vsel %vm8318, %v8327, %v8296
    %v8329 = vsel %vm8320, %v8328, %v8303
    %v8330 = vsel %vm8322, %v8329, %v8310
    %v8331 = vld [vmem:[%s5] sm:$0xff]
    %v8332 = vld [vmem:[%s5 + $0x8] sm:$0xff]
    %v8333 = vld [vmem:[%s5 + $0x10] sm:$0xff]
    %v8334 = vld [vmem:[%s5 + $0x18] sm:$0xff]
    %v8335 = vld [vmem:[%s5 + $0x20] sm:$0xff]
    %v8336 = vld [vmem:[%s5 + $0x28] sm:$0xff]
    %v8337 = vld [vmem:[%s5 + $0x30] sm:$0xff]
    %v8338 = vld [vmem:[%s5 + $0x38] sm:$0xff]
    %v8339 = vld [vmem:[%s5 + $0x40] sm:$0xff]
    %v8340 = vld [vmem:[%s5 + $0x48] sm:$0xff]
    %v8341 = vld [vmem:[%s5 + $0x50] sm:$0xff]
    %v8342 = vld [vmem:[%s5 + $0x58] sm:$0xff]
    %v8343 = vld [vmem:[%s5 + $0x60] sm:$0xff]
    %v8344 = vld [vmem:[%s5 + $0x68] sm:$0xff]
    %v8345 = vld [vmem:[%s5 + $0x70] sm:$0xff]
    %v8346 = vld [vmem:[%s5 + $0x78] sm:$0xff]
    %v8347 = vld [vmem:[%s5 + $0x80] sm:$0xff]
    %v8348 = vld [vmem:[%s5 + $0x88] sm:$0xff]
    %v8349 = vld [vmem:[%s5 + $0x90] sm:$0xff]
    %v8350 = vld [vmem:[%s5 + $0x98] sm:$0xff]
    %v8351 = vld [vmem:[%s5 + $0xa0] sm:$0xff]
    %v8352 = vld [vmem:[%s5 + $0xa8] sm:$0xff]
    %v8353 = vld [vmem:[%s5 + $0xb0] sm:$0xff]
    %v8354 = vld [vmem:[%s5 + $0xb8] sm:$0xff]
    %v8355 = vld [vmem:[%s5 + $0xc0] sm:$0xff]
    %v8356 = vld [vmem:[%s5 + $0xc8] sm:$0xff]
    %v8357 = vld [vmem:[%s5 + $0xd0] sm:$0xff]
    %v8358 = vld [vmem:[%s5 + $0xd8] sm:$0xff]
    %v8359 = vld [vmem:[%s5 + $0xe0] sm:$0xff]
    %v8360 = vld [vmem:[%s5 + $0xe8] sm:$0xff]
    %v8361 = vld [vmem:[%s5 + $0xf0] sm:$0xff]
    %v8362 = vld [vmem:[%s5 + $0xf8] sm:$0xff]
    %v8363 = vld [vmem:[%s6] sm:$0x1]
    %v8365 = vperm.slane %v8363, 0
    %8367 = vmatpush.msra.mxu0 %v8346
    %8368 = vmatpush.msra.mxu0 %v8345
    %8369 = vmatpush.msra.mxu0 %v8344
    %8370 = vmatpush.msra.mxu0 %v8343
    %8371 = vmatpush.msra.mxu0 %v8342
    %8372 = vmatpush.msra.mxu0 %v8341
    %8373 = vmatpush.msra.mxu0 %v8340
    %8374 = vmatpush.msra.mxu0 %v8339
    %8375 = vmatpush.msra.mxu0 %v8338
    %8376 = vmatpush.msra.mxu0 %v8337
    %8377 = vmatpush.msra.mxu0 %v8336
    %8378 = vmatpush.msra.mxu0 %v8335
    %8379 = vmatpush.msra.mxu0 %v8334
    %8380 = vmatpush.msra.mxu0 %v8333
    %8381 = vmatpush.msra.mxu0 %v8332
    %8382 = vmatpush.msra.mxu0 %v8331
    %8383 = vmatmul.f32.gmra.mxu0 %v8323
    %v8384 = vpop.f32.mrf.mxu0
    %v8385 = vadd.f32 %v8365, %v8384
    %8386 = vdwg.mxu0
    %8387 = vmatpush.msra.mxu0 %v8362
    %8388 = vmatpush.msra.mxu0 %v8361
    %8389 = vmatpush.msra.mxu0 %v8360
    %8390 = vmatpush.msra.mxu0 %v8359
    %8391 = vmatpush.msra.mxu0 %v8358
    %8392 = vmatpush.msra.mxu0 %v8357
    %8393 = vmatpush.msra.mxu0 %v8356
    %8394 = vmatpush.msra.mxu0 %v8355
    %8395 = vmatpush.msra.mxu0 %v8354
    %8396 = vmatpush.msra.mxu0 %v8353
    %8397 = vmatpush.msra.mxu0 %v8352
    %8398 = vmatpush.msra.mxu0 %v8351
    %8399 = vmatpush.msra.mxu0 %v8350
    %8400 = vmatpush.msra.mxu0 %v8349
    %8401 = vmatpush.msra.mxu0 %v8348
    %8402 = vmatpush.msra.mxu0 %v8347
    %8403 = vmatmul.f32.gmra.mxu0 %v8330
    %v8404 = vpop.f32.mrf.mxu0
    %v8405 = vadd.f32 %v8385, %v8404
    %8406 = vdwg.mxu0
    %v8407 = vmax.f32 %v8405, 0.0
    %v8408 = vld [vmem:[%s7] sm:$0xff]
    %v8409 = vld [vmem:[%s7 + $0x8] sm:$0xff]
    %v8410 = vld [vmem:[%s7 + $0x10] sm:$0xff]
    %v8411 = vld [vmem:[%s7 + $0x18] sm:$0xff]
    %v8412 = vld [vmem:[%s7 + $0x20] sm:$0xff]
    %v8413 = vld [vmem:[%s7 + $0x28] sm:$0xff]
    %v8414 = vld [vmem:[%s7 + $0x30] sm:$0xff]
    %v8415 = vld [vmem:[%s7 + $0x38] sm:$0xff]
    %v8416 = vld [vmem:[%s7 + $0x40] sm:$0xff]
    %v8417 = vld [vmem:[%s7 + $0x48] sm:$0xff]
    %v8418 = vld [vmem:[%s7 + $0x50] sm:$0xff]
    %v8419 = vld [vmem:[%s7 + $0x58] sm:$0xff]
    %v8420 = vld [vmem:[%s7 + $0x60] sm:$0xff]
    %v8421 = vld [vmem:[%s7 + $0x68] sm:$0xff]
    %v8422 = vld [vmem:[%s7 + $0x70] sm:$0xff]
    %v8423 = vld [vmem:[%s7 + $0x78] sm:$0xff]
    %v8424 = vld [vmem:[%s8] sm:$0x1]
    %v8426 = vperm.slane %v8424, 0
    %8428 = vmatpush.msra.mxu0 %v8423
    %8429 = vmatpush.msra.mxu0 %v8422
    %8430 = vmatpush.msra.mxu0 %v8421
    %8431 = vmatpush.msra.mxu0 %v8420
    %8432 = vmatpush.msra.mxu0 %v8419
    %8433 = vmatpush.msra.mxu0 %v8418
    %8434 = vmatpush.msra.mxu0 %v8417
    %8435 = vmatpush.msra.mxu0 %v8416
    %8436 = vmatpush.msra.mxu0 %v8415
    %8437 = vmatpush.msra.mxu0 %v8414
    %8438 = vmatpush.msra.mxu0 %v8413
    %8439 = vmatpush.msra.mxu0 %v8412
    %8440 = vmatpush.msra.mxu0 %v8411
    %8441 = vmatpush.msra.mxu0 %v8410
    %8442 = vmatpush.msra.mxu0 %v8409
    %8443 = vmatpush.msra.mxu0 %v8408
    %8444 = vmatmul.f32.gmra.mxu0 %v8407
    %v8445 = vpop.f32.mrf.mxu0
    %v8446 = vadd.f32 %v8426, %v8445
    %8447 = vdwg.mxu0
    %v8448 = vmax.f32 %v8446, 0.0
    %v8449 = vld [vmem:[%s9] sm:$0xff]
    %v8450 = vld [vmem:[%s9 + $0x8] sm:$0xff]
    %v8451 = vld [vmem:[%s9 + $0x10] sm:$0xff]
    %v8452 = vld [vmem:[%s9 + $0x18] sm:$0xff]
    %v8453 = vld [vmem:[%s9 + $0x20] sm:$0xff]
    %v8454 = vld [vmem:[%s9 + $0x28] sm:$0xff]
    %v8455 = vld [vmem:[%s9 + $0x30] sm:$0xff]
    %v8456 = vld [vmem:[%s9 + $0x38] sm:$0xff]
    %v8457 = vld [vmem:[%s9 + $0x40] sm:$0xff]
    %v8458 = vld [vmem:[%s9 + $0x48] sm:$0xff]
    %v8459 = vld [vmem:[%s9 + $0x50] sm:$0xff]
    %v8460 = vld [vmem:[%s9 + $0x58] sm:$0xff]
    %v8461 = vld [vmem:[%s9 + $0x60] sm:$0xff]
    %v8462 = vld [vmem:[%s9 + $0x68] sm:$0xff]
    %v8463 = vld [vmem:[%s9 + $0x70] sm:$0xff]
    %v8464 = vld [vmem:[%s9 + $0x78] sm:$0xff]
    %v8465 = vld [vmem:[%s10] sm:$0x1]
    %v8467 = vperm.slane %v8465, 0
    %8469 = vmatpush.msra.mxu0 %v8464
    %8470 = vmatpush.msra.mxu0 %v8463
    %8471 = vmatpush.msra.mxu0 %v8462
    %8472 = vmatpush.msra.mxu0 %v8461
    %8473 = vmatpush.msra.mxu0 %v8460
    %8474 = vmatpush.msra.mxu0 %v8459
    %8475 = vmatpush.msra.mxu0 %v8458
    %8476 = vmatpush.msra.mxu0 %v8457
    %8477 = vmatpush.msra.mxu0 %v8456
    %8478 = vmatpush.msra.mxu0 %v8455
    %8479 = vmatpush.msra.mxu0 %v8454
    %8480 = vmatpush.msra.mxu0 %v8453
    %8481 = vmatpush.msra.mxu0 %v8452
    %8482 = vmatpush.msra.mxu0 %v8451
    %8483 = vmatpush.msra.mxu0 %v8450
    %8484 = vmatpush.msra.mxu0 %v8449
    %8485 = vmatmul.f32.gmra.mxu0 %v8448
    %v8486 = vpop.f32.mrf.mxu0
    %v8487 = vadd.f32 %v8467, %v8486
    %8488 = vdwg.mxu0
    %8489 = vst [vmem:[#allocation4] sm:$0x3] %v8487
    // Predicated region
    $region46: #{net_forward.1} parent=1 // pred_check
      _
    $region47: #{net_forward.1} parent=1 // pred_check_branch
      %8491 = sbr.rel (0) target = $region49
    $region48: #{net_forward.1} parent=1 // pred_region
      %8493 = vsyncadd [#allocation5], 0
      %s8495 = sshll.u32 [#allocation4], 4
      %s8496 = int_to_ptr.vmem [resolvable:$true] %s8495
      %s8497 = sshll.u32 %s11, 4
      %s8498 = int_to_ptr.hbm [resolvable:$true] %s8497
      %8500 = dma.vmem_to_hbm [thread:$0]  %s8496, 32, %s8498, [#allocation5]
    $region49: #{net_forward.1} parent=1 // pred_fallthru
      _
    // Predicated region
    $region50: #{net_forward.1} parent=1 // pred_check
      _
    $region51: #{net_forward.1} parent=1 // pred_check_branch
      %8502 = sbr.rel (0) target = $region53
    $region52: #{net_forward.1} parent=1 // pred_region
      %8504 = dma.done [#allocation5], 32
    $region53: #{net_forward.1} parent=1 // pred_fallthru
      _
    %8505 = vsyncpa [#allocation5], 1

</llo_original>
